<compile_context>
chip_gen: v7x
topology: tpu7x:2x2x1
jax: 0.10.0
libtpu: 0.0.40
codegen_flags: <defaults>
</compile_context>

<pallas_src>
import functools

import jax
import jax.numpy as jnp
from jax.experimental import pallas as pl
from jax.experimental.pallas import tpu as pltpu


# ----------------------------------------------------------------------------
# Model / padding configuration
# ----------------------------------------------------------------------------
NUM_OPCODES = 120
OPCODE_DIM = 64
NODE_FEATURE_DIM = 126 + OPCODE_DIM                     # 190
NODE_FEATURE_EXPAND = 2
MLP_HIDDEN = NODE_FEATURE_DIM * NODE_FEATURE_EXPAND     # 380
GRAPHSAGE_IN = 256
GRAPHSAGE_HIDDEN = 512
GRAPHSAGE_LAYERS = 3

# Feature-axis padding (weights are <=512 wide, so N / K are single tiles).
K0_PAD = 256            # input feature dim 190 -> 256
H1_PAD = 512            # mlp hidden 380 -> 512
TN = 512
TK = 512

# Node-axis (M) tile.  1024 amortizes the ~0.35us/step pipeline overhead on
# v6e/v7x while staying comfortably inside v7x's 64 MiB VMEM; on v5e the
# kernels are already compute-bound at 512 so 1024 is a safe middle ground.
MAX_TM = 1024

PAIRNORM_EPS = 1e-5
GLN_EPS = 1e-5


def _round_up(x, m):
    return (x + m - 1) // m * m


def _pad_nodes(n):
    """Padded node count and M tile.

    Small graphs: one full-array tile (padded to a multiple of 16).
    Large graphs: pad at 512 granularity (decoupled from the tile size, so at
    most 511 dead rows) and pick a tile <= MAX_TM that yields >= 2 M tiles
    (keeps both v7x TensorCores busy under the 'parallel' M axis).
    """
    if n <= MAX_TM:
        mp = _round_up(max(n, 16), 16)
        return mp, mp
    mp = _round_up(n, 512)
    for tm in (MAX_TM, 512):
        if mp % tm == 0 and mp // tm >= 2:
            return mp, tm
    return mp, 512


def _compiler_params(sems, tile_bytes):
    # tile_bytes already includes double-buffering; 1.4x headroom for compiler
    # internal scratch, floored at 32 MiB and capped at 48 MiB so we never
    # claim v7x's entire 64 MiB physical VMEM.
    limit = int(min(max(int(1.4 * tile_bytes), 32 << 20), 48 << 20))
    return pltpu.CompilerParams(dimension_semantics=sems,
                                vmem_limit_bytes=limit)


# ----------------------------------------------------------------------------
# Pallas kernels (K and N always fit in one tile here -> single-shot matmuls,
# no f32 accumulator scratch, 1-D grid over the node axis M)
# ----------------------------------------------------------------------------
def _linear_kernel(x_ref, w_ref, b_ref, o_ref, *, act):
    """o = act(x @ w + b)."""
    out = jnp.dot(x_ref[...], w_ref[...],
                  preferred_element_type=jnp.float32) + b_ref[...]
    if act == "leaky_relu":
        out = jnp.where(out > 0, out, 0.01 * out)
    elif act == "relu":
        out = jnp.maximum(out, 0.0)
    o_ref[...] = out.astype(o_ref.dtype)


def _linear_rowstats_kernel(x_ref, w_ref, b_ref, o_ref, rs_ref, rq_ref, *, act):
    """Linear + activation with a fused GraphwiseLayerNorm stats epilogue:
    per-row sum and per-row sum-of-squares (f32) of the activation output."""
    out = jnp.dot(x_ref[...], w_ref[...],
                  preferred_element_type=jnp.float32) + b_ref[...]
    if act == "leaky_relu":
        out = jnp.where(out > 0, out, 0.01 * out)
    elif act == "relu":
        out = jnp.maximum(out, 0.0)
    o_ref[...] = out.astype(o_ref.dtype)
    # padded feature columns are exactly zero (zero-padded weights + bias,
    # leaky_relu(0)=0), so the full-width row sums equal the valid-width sums.
    rs_ref[...] = jnp.sum(out, axis=1, keepdims=True)
    rq_ref[...] = jnp.sum(out * out, axis=1, keepdims=True)


def _sage_stats_kernel(agg_ref, x_ref, wl_ref, wr_ref, b_ref,
                       o_ref, cs_ref, cq_ref, *, n_valid, tm):
    """SAGEConv('mean'): o = agg @ W_l + x @ W_r + b, with PairNorm pass-1
    stats fused as per-M-tile partial column sums / sums-of-squares (8, d)."""
    out = jnp.dot(agg_ref[...], wl_ref[...], preferred_element_type=jnp.float32)
    out = out + jnp.dot(x_ref[...], wr_ref[...],
                        preferred_element_type=jnp.float32)
    out = out + b_ref[...]
    o_ref[...] = out.astype(o_ref.dtype)

    i = pl.program_id(0)
    rows = jax.lax.broadcasted_iota(jnp.int32, (tm, 1), 0) + i * tm
    masked = jnp.where(rows < n_valid, out, 0.0)     # drop padded rows
    d = masked.shape[1]
    m3 = masked.reshape(tm // 8, 8, d)               # sublane-group partials
    cs_ref[...] = jnp.sum(m3, axis=0)
    cq_ref[...] = jnp.sum(m3 * m3, axis=0)


def _sage_score_kernel(agg_ref, x_ref, wl_ref, wr_ref, b_ref, fcw_ref,
                       score_ref):
    """Last SAGEConv fused with the Linear(512->1) classifier as a VPU
    multiply + lane reduction: score = sum((agg@W_l + x@W_r + b) * fc_w)."""
    out = jnp.dot(agg_ref[...], wl_ref[...], preferred_element_type=jnp.float32)
    out = out + jnp.dot(x_ref[...], wr_ref[...],
                        preferred_element_type=jnp.float32)
    out = out + b_ref[...]
    score_ref[...] = jnp.sum(out * fcw_ref[...], axis=1, keepdims=True)


def _pairnorm_apply_kernel(x_ref, mean_ref, scale_ref, o_ref, *, apply_relu):
    """PairNorm pass 2: y = (x - colmean) * scale, optional fused ReLU."""
    y = (x_ref[...].astype(jnp.float32) - mean_ref[...]) * scale_ref[...]
    if apply_relu:
        y = jnp.maximum(y, 0.0)
    o_ref[...] = y.astype(o_ref.dtype)


def _gln_norm_kernel(x_ref, mean_ref, inv_ref, g_ref, b_ref, o_ref):
    """GraphwiseLayerNorm normalize pass: y = (x - m) * inv * gamma + beta,
    with per-node (per-graph, gathered) mean / inv-std."""
    x = x_ref[...].astype(jnp.float32)
    y = (x - mean_ref[...]) * inv_ref[...] * g_ref[...] + b_ref[...]
    o_ref[...] = y.astype(o_ref.dtype)


# ----------------------------------------------------------------------------
# Kernel wrappers (inputs already padded / lane-aligned, bf16 matmul operands)
# ----------------------------------------------------------------------------
def pallas_linear(x, w, b, tm, act="none", row_stats=False):
    mp, kp = x.shape
    kw, np_ = w.shape
    assert kp == kw and kp <= TK and np_ <= TN
    grid = (mp // tm,)
    x_spec = pl.BlockSpec((tm, kp), lambda i: (i, 0))
    w_spec = pl.BlockSpec((kp, np_), lambda i: (0, 0))
    b_spec = pl.BlockSpec((1, np_), lambda i: (0, 0))
    o_spec = pl.BlockSpec((tm, np_), lambda i: (i, 0))
    tile_bytes = 2 * (tm * kp * 2 + kp * np_ * 2 + np_ * 4
                      + tm * np_ * 2 + 2 * tm * 4)
    cp = _compiler_params(("parallel",), tile_bytes)
    xb = x.astype(jnp.bfloat16)

    if not row_stats:
        return pl.pallas_call(
            functools.partial(_linear_kernel, act=act),
            out_shape=jax.ShapeDtypeStruct((mp, np_), jnp.bfloat16),
            grid=grid, in_specs=[x_spec, w_spec, b_spec], out_specs=o_spec,
            compiler_params=cp,
        )(xb, w, b)

    return pl.pallas_call(
        functools.partial(_linear_rowstats_kernel, act=act),
        out_shape=(jax.ShapeDtypeStruct((mp, np_), jnp.bfloat16),
                   jax.ShapeDtypeStruct((mp, 1), jnp.float32),
                   jax.ShapeDtypeStruct((mp, 1), jnp.float32)),
        grid=grid,
        in_specs=[x_spec, w_spec, b_spec],
        out_specs=(o_spec,
                   pl.BlockSpec((tm, 1), lambda i: (i, 0)),
                   pl.BlockSpec((tm, 1), lambda i: (i, 0))),
        compiler_params=cp,
    )(xb, w, b)


def pallas_sage_conv_stats(agg, x, w_l, w_r, b, tm, n_valid):
    """SAGE conv returning (y, colsum_partials, colssq_partials)."""
    mp, kp = x.shape
    np_ = w_l.shape[1]
    assert kp <= TK and np_ <= TN
    grid = (mp // tm,)
    nt = mp // tm
    tile_bytes = 2 * (2 * tm * kp * 2 + 2 * kp * np_ * 2 + np_ * 4
                      + tm * np_ * 2 + 2 * 8 * np_ * 4)
    return pl.pallas_call(
        functools.partial(_sage_stats_kernel, n_valid=n_valid, tm=tm),
        out_shape=(jax.ShapeDtypeStruct((mp, np_), jnp.bfloat16),
                   jax.ShapeDtypeStruct((nt * 8, np_), jnp.float32),
                   jax.ShapeDtypeStruct((nt * 8, np_), jnp.float32)),
        grid=grid,
        in_specs=[pl.BlockSpec((tm, kp), lambda i: (i, 0)),
                  pl.BlockSpec((tm, kp), lambda i: (i, 0)),
                  pl.BlockSpec((kp, np_), lambda i: (0, 0)),
                  pl.BlockSpec((kp, np_), lambda i: (0, 0)),
                  pl.BlockSpec((1, np_), lambda i: (0, 0))],
        out_specs=(pl.BlockSpec((tm, np_), lambda i: (i, 0)),
                   pl.BlockSpec((8, np_), lambda i: (i, 0)),
                   pl.BlockSpec((8, np_), lambda i: (i, 0))),
        compiler_params=_compiler_params(("parallel",), tile_bytes),
    )(agg.astype(jnp.bfloat16), x.astype(jnp.bfloat16), w_l, w_r, b)


def pallas_sage_conv_scores(agg, x, w_l, w_r, b, fc_w, tm):
    """Last SAGE conv fused with the 512->1 classifier; emits [mp,1] scores."""
    mp, kp = x.shape
    np_ = w_l.shape[1]
    grid = (mp // tm,)
    tile_bytes = 2 * (2 * tm * kp * 2 + 2 * kp * np_ * 2 + 2 * np_ * 4
                      + tm * 4)
    return pl.pallas_call(
        _sage_score_kernel,
        out_shape=jax.ShapeDtypeStruct((mp, 1), jnp.float32),
        grid=grid,
        in_specs=[pl.BlockSpec((tm, kp), lambda i: (i, 0)),
                  pl.BlockSpec((tm, kp), lambda i: (i, 0)),
                  pl.BlockSpec((kp, np_), lambda i: (0, 0)),
                  pl.BlockSpec((kp, np_), lambda i: (0, 0)),
                  pl.BlockSpec((1, np_), lambda i: (0, 0)),
                  pl.BlockSpec((1, np_), lambda i: (0, 0))],
        out_specs=pl.BlockSpec((tm, 1), lambda i: (i, 0)),
        compiler_params=_compiler_params(("parallel",), tile_bytes),
    )(agg.astype(jnp.bfloat16), x.astype(jnp.bfloat16), w_l, w_r, b, fc_w)


def pairnorm_apply(x, colsum_partials, colssq_partials, n_valid, apply_relu,
                   tm):
    """torch_geometric PairNorm (batch=None, scale=1, scale_individually=False)
    using the column stats produced by the SAGE conv epilogue, with the
    inter-layer ReLU fused into the normalize pass."""
    mp, d = x.shape
    colsum = jnp.sum(colsum_partials, axis=0, keepdims=True)      # [1, d] f32
    colssq = jnp.sum(colssq_partials, axis=0, keepdims=True)
    inv_n = 1.0 / float(n_valid)
    mean = colsum * inv_n
    css = jnp.maximum(colssq - float(n_valid) * mean * mean, 0.0)
    inv = jax.lax.rsqrt(PAIRNORM_EPS + jnp.sum(css) * inv_n)      # scalar
    scale = jnp.broadcast_to(inv, (1, d)).astype(jnp.float32)

    grid = (mp // tm,)
    return pl.pallas_call(
        functools.partial(_pairnorm_apply_kernel, apply_relu=apply_relu),
        out_shape=jax.ShapeDtypeStruct((mp, d), jnp.bfloat16),
        grid=grid,
        in_specs=[pl.BlockSpec((tm, d), lambda i: (i, 0)),
                  pl.BlockSpec((1, d), lambda i: (0, 0)),
                  pl.BlockSpec((1, d), lambda i: (0, 0))],
        out_specs=pl.BlockSpec((tm, d), lambda i: (i, 0)),
        compiler_params=_compiler_params(("parallel",),
                                         2 * (2 * tm * d * 2 + 2 * d * 4)),
    )(x, mean, scale)


def graphwise_layer_norm(x, rowsum, rowssq, seg_ids, num_segs, gamma, beta,
                         d_valid, tm, eps=GLN_EPS):
    # TODO(synk): GraphwiseLayerNorm source not provided; assuming per-graph
    # normalization over (nodes, features) of each segment with a learned
    # per-feature affine.  Sufficient stats (per-row sum / sum-of-squares)
    # come from the preceding Linear kernel; only tiny [N]-sized segment
    # reductions happen in plain JAX, then one Pallas normalize pass.
    mp, d = x.shape
    ones = jnp.ones((mp,), jnp.float32)
    cnt = jnp.maximum(jax.ops.segment_sum(ones, seg_ids,
                                          num_segments=num_segs), 1.0)
    cnt = cnt * float(d_valid)
    s = jax.ops.segment_sum(rowsum[:, 0], seg_ids, num_segments=num_segs)
    q = jax.ops.segment_sum(rowssq[:, 0], seg_ids, num_segments=num_segs)
    mean_g = s / cnt
    var_g = jnp.maximum(q / cnt - mean_g * mean_g, 0.0)
    inv_g = jax.lax.rsqrt(var_g + eps)
    mean_n = mean_g[seg_ids][:, None].astype(jnp.float32)   # [mp, 1]
    inv_n = inv_g[seg_ids][:, None].astype(jnp.float32)     # [mp, 1]

    grid = (mp // tm,)
    return pl.pallas_call(
        _gln_norm_kernel,
        out_shape=jax.ShapeDtypeStruct((mp, d), jnp.bfloat16),
        grid=grid,
        in_specs=[pl.BlockSpec((tm, d), lambda i: (i, 0)),
                  pl.BlockSpec((tm, 1), lambda i: (i, 0)),
                  pl.BlockSpec((tm, 1), lambda i: (i, 0)),
                  pl.BlockSpec((1, d), lambda i: (0, 0)),
                  pl.BlockSpec((1, d), lambda i: (0, 0))],
        out_specs=pl.BlockSpec((tm, d), lambda i: (i, 0)),
        compiler_params=_compiler_params(
            ("parallel",), 2 * (2 * tm * d * 2 + 2 * tm * 4 + 2 * d * 4)),
    )(x, mean_n, inv_n, gamma, beta)


# ----------------------------------------------------------------------------
# Plain-JAX glue (data-dependent edge / segment bookkeeping)
# ----------------------------------------------------------------------------
def mean_aggregate(x, src, dst, inv_deg):
    # SAGEConv aggr='mean' over incoming edges (src -> dst).  bf16 gather,
    # f32 scatter-add accumulation (precision for high-degree nodes).
    # TODO(synk): a sorted-by-dst CSR + scalar-prefetch Pallas gather kernel
    # would avoid materializing the [E, F] message tensor entirely.
    msg = x[src]                                                   # [E,F] bf16
    agg = jax.ops.segment_sum(msg.astype(jnp.float32), dst,
                              num_segments=inv_deg.shape[0])
    return (agg * inv_deg[:, None]).astype(jnp.bfloat16)


# ----------------------------------------------------------------------------
# Model parameters (deterministic synthetic init, pre-padded & pre-transposed)
# ----------------------------------------------------------------------------
def init_params(key):
    keys = jax.random.split(key, 24)

    def pad_mat(k, real_in, real_out, pad_in, pad_out, scale=0.05):
        w = scale * jax.random.normal(k, (real_in, real_out), jnp.float32)
        wp = jnp.zeros((pad_in, pad_out), jnp.float32)
        wp = wp.at[:real_in, :real_out].set(w)
        return wp.astype(jnp.bfloat16)          # bf16 MXU operands

    def pad_bias(k, real_out, pad_out, scale=0.01):
        b = scale * jax.random.normal(k, (real_out,), jnp.float32)
        return jnp.zeros((1, pad_out), jnp.float32).at[0, :real_out].set(b)

    params = {
        "opcode_emb": 0.05 * jax.random.normal(
            keys[0], (NUM_OPCODES, OPCODE_DIM), jnp.float32),
        "mlp_w1": pad_mat(keys[1], NODE_FEATURE_DIM, MLP_HIDDEN, K0_PAD, H1_PAD),
        "mlp_b1": pad_bias(keys[2], MLP_HIDDEN, H1_PAD),
        "gln1_g": jnp.zeros((1, H1_PAD), jnp.float32).at[0, :MLP_HIDDEN].set(1.0),
        "gln1_b": jnp.zeros((1, H1_PAD), jnp.float32),
        "mlp_w2": pad_mat(keys[3], MLP_HIDDEN, GRAPHSAGE_IN, H1_PAD,
                          GRAPHSAGE_IN),
        "mlp_b2": pad_bias(keys[4], GRAPHSAGE_IN, GRAPHSAGE_IN),
        "gln2_g": jnp.ones((1, GRAPHSAGE_IN), jnp.float32),
        "gln2_b": jnp.zeros((1, GRAPHSAGE_IN), jnp.float32),
        # final classifier weight as a [1, 512] f32 row vector (VPU epilogue).
        "fc_w": 0.05 * jax.random.normal(keys[5], (1, GRAPHSAGE_HIDDEN),
                                         jnp.float32),
        "fc_b": jnp.zeros((), jnp.float32),
        "sage": [],
    }
    in_d = GRAPHSAGE_IN
    kidx = 6
    for _ in range(GRAPHSAGE_LAYERS):
        params["sage"].append({
            "w_l": pad_mat(keys[kidx], in_d, GRAPHSAGE_HIDDEN, in_d,
                           GRAPHSAGE_HIDDEN),      # neighbor transform
            "w_r": pad_mat(keys[kidx + 1], in_d, GRAPHSAGE_HIDDEN, in_d,
                           GRAPHSAGE_HIDDEN),      # root transform
            "b_l": pad_bias(keys[kidx + 2], GRAPHSAGE_HIDDEN, GRAPHSAGE_HIDDEN),
        })
        kidx += 3
        in_d = GRAPHSAGE_HIDDEN
    return params


# ----------------------------------------------------------------------------
# Forward pass (mirrors LayoutGraphModel.forward, eval mode)
# ----------------------------------------------------------------------------
def layout_graph_model_forward(params, node_features, node_config_features,
                               node_separation, node_ops, edges, batches,
                               num_batches):
    n = node_features.shape[0]
    num_segs = node_separation.shape[0]
    mp, tm = _pad_nodes(n)

    # opcode embedding lookup (embed_drop is identity in eval) + feature concat,
    # padded ONCE to [mp, K0_PAD] bf16 and kept padded for the whole forward.
    opcode_embed = params["opcode_emb"][node_ops]                     # [n, 64]
    x0 = jnp.concatenate(
        [node_features, node_config_features, opcode_embed], axis=1)  # [n,190]
    x = jnp.zeros((mp, K0_PAD), jnp.bfloat16)
    x = x.at[:n, :NODE_FEATURE_DIM].set(x0.astype(jnp.bfloat16))

    # segment id per padded node; padded rows map to num_segs and are dropped
    # by every segment_sum (and masked out of the PairNorm stats).
    seg_ids = jnp.searchsorted(node_separation, jnp.arange(mp), side="right")

    # node_features_mlp: Linear -> LeakyReLU (fused, + GLN row stats)
    #                    -> GraphwiseLayerNorm -> (repeat)
    x, rs, rq = pallas_linear(x, params["mlp_w1"], params["mlp_b1"], tm,
                              act="leaky_relu", row_stats=True)
    x = graphwise_layer_norm(x, rs, rq, seg_ids, num_segs, params["gln1_g"],
                             params["gln1_b"], d_valid=MLP_HIDDEN, tm=tm)
    x, rs, rq = pallas_linear(x, params["mlp_w2"], params["mlp_b2"], tm,
                              act="leaky_relu", row_stats=True)
    x = graphwise_layer_norm(x, rs, rq, seg_ids, num_segs, params["gln2_g"],
                             params["gln2_b"], d_valid=GRAPHSAGE_IN, tm=tm)

    # Edge bookkeeping hoisted out of the layer loop (edges identical per layer).
    src, dst = edges[0], edges[1]
    deg = jax.ops.segment_sum(jnp.ones(dst.shape, jnp.float32), dst,
                              num_segments=mp)
    inv_deg = 1.0 / jnp.maximum(deg, 1.0)

    # GraphSAGE encoder: conv (+ fused PairNorm stats) -> PairNorm+ReLU per
    # layer; last layer is a bare conv with the 512->1 classifier fused.
    scores = None
    for li, p in enumerate(params["sage"]):
        agg = mean_aggregate(x, src, dst, inv_deg)
        if li < GRAPHSAGE_LAYERS - 1:
            x, cs, cq = pallas_sage_conv_stats(agg, x, p["w_l"], p["w_r"],
                                               p["b_l"], tm, n_valid=n)
            x = pairnorm_apply(x, cs, cq, n_valid=n, apply_relu=True, tm=tm)
        else:
            scores = pallas_sage_conv_scores(agg, x, p["w_l"], p["w_r"],
                                             p["b_l"], params["fc_w"], tm)

    # post_encoder_mlp empty, project_after_graph_encoder=False, subgraphs=None.

    # Per-graph sum of node scores + classifier bias (Linear distributes over
    # the segment sum; the bias is applied once per graph, matching
    # final_classifier(pooled) in the reference), then group segments by batch
    # id (stable order, equal #segments per batch as torch.stack requires).
    seg_scores = jax.ops.segment_sum(scores[:, 0], seg_ids,
                                     num_segments=num_segs) + params["fc_b"]
    order = jnp.argsort(batches, stable=True)
    segs_per_batch = num_segs // num_batches
    return seg_scores[order].reshape(num_batches, segs_per_batch)


# ----------------------------------------------------------------------------
if __name__ == "__main__":
    key = jax.random.PRNGKey(0)
    k_param, k_nf, k_cf, k_ops, k_edges = jax.random.split(key, 5)

    params = init_params(k_param)

    # synthetic graph batch: 32 nodes, 4 graph segments, 2 batches (2 segs each)
    num_nodes = 32
    node_features = jax.random.normal(k_nf, (num_nodes, 112), jnp.float32)
    node_config_features = jax.random.normal(k_cf, (num_nodes, 14), jnp.float32)
    node_ops = jax.random.randint(k_ops, (num_nodes,), 0, NUM_OPCODES)
    edges = jax.random.randint(k_edges, (2, 64), 0, num_nodes)
    node_separation = jnp.array([8, 16, 24, 32], jnp.int32)
    batches = jnp.array([0, 0, 1, 1], jnp.int32)

    fwd = jax.jit(layout_graph_model_forward, static_argnames=("num_batches",))
    out = fwd(params, node_features, node_config_features, node_separation,
              node_ops, edges, batches, num_batches=2)
    out = jax.block_until_ready(out)
    assert out.shape == (2, 2), out.shape
    print("KERNEL_OK")
</pallas_src>

<mosaic_0001>
module attributes {stable_mosaic.version = 11 : i64} {
  func.func private @main(%arg0: i32) attributes {dimension_semantics = [#tpu.dimension_semantics<core_parallel>], iteration_bounds = array<i64: 2>, tpu.core_type = #tpu.core_type<sc_scalar_subcore>, window_params = []} {
    return
  }
}

module attributes {stable_mosaic.version = 11 : i64} {
  func.func private @main(%arg0: i32) attributes {dimension_semantics = [#tpu.dimension_semantics<core_parallel>], iteration_bounds = array<i64: 2>, tpu.core_type = #tpu.core_type<sc_scalar_subcore>, window_params = []} {
    return
  }
}

module attributes {stable_mosaic.version = 11 : i64} {
  func.func @_linear_rowstats_kernel(%arg0: i32, %arg1: memref<32x256xbf16, #tpu.memory_space<vmem>>, %arg2: memref<256x512xbf16, #tpu.memory_space<vmem>>, %arg3: memref<1x512xf32, #tpu.memory_space<vmem>>, %arg4: memref<32x512xbf16, #tpu.memory_space<vmem>>, %arg5: memref<32x1xf32, #tpu.memory_space<vmem>>, %arg6: memref<32x1xf32, #tpu.memory_space<vmem>>) attributes {dimension_semantics = [#tpu.dimension_semantics<parallel>], iteration_bounds = array<i64: 1>, scalar_prefetch = 0 : i64, scratch_operands = 0 : i64, tpu.core_type = #tpu.core_type<tc>, window_params = [{transform_indices = @transform_0, window_bounds = array<i64: 32, 256>}, {pipeline_mode = #tpu.pipeline_mode<synchronous>, transform_indices = @transform_1, window_bounds = array<i64: 256, 512>}, {pipeline_mode = #tpu.pipeline_mode<synchronous>, transform_indices = @transform_2, window_bounds = array<i64: 1, 512>}, {transform_indices = @transform_3, window_bounds = array<i64: 32, 512>}, {transform_indices = @transform_4, window_bounds = array<i64: 32, 1>}, {transform_indices = @transform_5, window_bounds = array<i64: 32, 1>}]} {
    %c0 = arith.constant 0 : index
    %c0_0 = arith.constant 0 : index
    %0 = vector.load %arg1[%c0, %c0_0] : memref<32x256xbf16, #tpu.memory_space<vmem>>, vector<32x256xbf16>
    %c0_1 = arith.constant 0 : index
    %c0_2 = arith.constant 0 : index
    %1 = vector.load %arg2[%c0_1, %c0_2] : memref<256x512xbf16, #tpu.memory_space<vmem>>, vector<256x512xbf16>
    %cst = arith.constant dense<0.000000e+00> : vector<32x512xf32>
    %2 = tpu.matmul %0, %1, %cst {dimension_numbers = #tpu.dot_dimension_numbers<[1], [0], [0], [1], [0, 0, 1, 1], [], []>} : vector<32x256xbf16>, vector<256x512xbf16>, vector<32x512xf32> -> vector<32x512xf32>
    %c0_3 = arith.constant 0 : index
    %c0_4 = arith.constant 0 : index
    %3 = vector.load %arg3[%c0_3, %c0_4] : memref<1x512xf32, #tpu.memory_space<vmem>>, vector<1x512xf32>
    %4 = vector.broadcast %3 : vector<1x512xf32> to vector<32x512xf32>
    %5 = arith.addf %2, %4 : vector<32x512xf32>
    %cst_5 = arith.constant 0.000000e+00 : f32
    %6 = vector.broadcast %cst_5 : f32 to vector<32x512xf32>
    %7 = arith.cmpf ogt, %5, %6 : vector<32x512xf32>
    %cst_6 = arith.constant 0.00999999977 : f32
    %8 = vector.broadcast %cst_6 : f32 to vector<32x512xf32>
    %9 = arith.mulf %8, %5 : vector<32x512xf32>
    %10 = arith.select %7, %5, %9 : vector<32x512xi1>, vector<32x512xf32>
    %11 = arith.truncf %10 : vector<32x512xf32> to vector<32x512xbf16>
    %c0_7 = arith.constant 0 : index
    %c0_8 = arith.constant 0 : index
    %12 = vector.load %arg4[%c0_7, %c0_8] : memref<32x512xbf16, #tpu.memory_space<vmem>>, vector<32x512xbf16>
    tpu.vector_store %arg4[%c0_7, %c0_8], %11 {strides = array<i32>} : memref<32x512xbf16, #tpu.memory_space<vmem>>, vector<32x512xbf16>,
    %cst_9 = arith.constant dense<0.000000e+00> : vector<32xf32>
    %13 = vector.multi_reduction <add>, %10, %cst_9 [1] : vector<32x512xf32> to vector<32xf32>
    %14 = vector.shape_cast %13 : vector<32xf32> to vector<32x1xf32>
    %c0_10 = arith.constant 0 : index
    %c0_11 = arith.constant 0 : index
    %15 = vector.load %arg5[%c0_10, %c0_11] : memref<32x1xf32, #tpu.memory_space<vmem>>, vector<32x1xf32>
    tpu.vector_store %arg5[%c0_10, %c0_11], %14 {strides = array<i32>} : memref<32x1xf32, #tpu.memory_space<vmem>>, vector<32x1xf32>,
    %16 = arith.mulf %10, %10 : vector<32x512xf32>
    %cst_12 = arith.constant dense<0.000000e+00> : vector<32xf32>
    %17 = vector.multi_reduction <add>, %16, %cst_12 [1] : vector<32x512xf32> to vector<32xf32>
    %18 = vector.shape_cast %17 : vector<32xf32> to vector<32x1xf32>
    %c0_13 = arith.constant 0 : index
    %c0_14 = arith.constant 0 : index
    %19 = vector.load %arg6[%c0_13, %c0_14] : memref<32x1xf32, #tpu.memory_space<vmem>>, vector<32x1xf32>
    tpu.vector_store %arg6[%c0_13, %c0_14], %18 {strides = array<i32>} : memref<32x1xf32, #tpu.memory_space<vmem>>, vector<32x1xf32>,
    return
  }
  func.func @transform_0(%arg0: i32) -> (i32, i32) {
    %c0_i32 = arith.constant 0 : i32
    %c0_i32_0 = arith.constant 0 : i32
    return %arg0, %c0_i32 : i32, i32
  }
  func.func @transform_1(%arg0: i32) -> (i32, i32) {
    %c0_i32 = arith.constant 0 : i32
    %c0_i32_0 = arith.constant 0 : i32
    %c0_i32_1 = arith.constant 0 : i32
    return %c0_i32, %c0_i32_0 : i32, i32
  }
  func.func @transform_2(%arg0: i32) -> (i32, i32) {
    %c0_i32 = arith.constant 0 : i32
    %c0_i32_0 = arith.constant 0 : i32
    %c0_i32_1 = arith.constant 0 : i32
    return %c0_i32, %c0_i32_0 : i32, i32
  }
  func.func @transform_3(%arg0: i32) -> (i32, i32) {
    %c0_i32 = arith.constant 0 : i32
    %c0_i32_0 = arith.constant 0 : i32
    return %arg0, %c0_i32 : i32, i32
  }
  func.func @transform_4(%arg0: i32) -> (i32, i32) {
    %c0_i32 = arith.constant 0 : i32
    %c0_i32_0 = arith.constant 0 : i32
    return %arg0, %c0_i32 : i32, i32
  }
  func.func @transform_5(%arg0: i32) -> (i32, i32) {
    %c0_i32 = arith.constant 0 : i32
    %c0_i32_0 = arith.constant 0 : i32
    return %arg0, %c0_i32 : i32, i32
  }
}

module attributes {stable_mosaic.version = 11 : i64} {
  func.func @_gln_norm_kernel(%arg0: i32, %arg1: memref<32x512xbf16, #tpu.memory_space<vmem>>, %arg2: memref<32x1xf32, #tpu.memory_space<vmem>>, %arg3: memref<32x1xf32, #tpu.memory_space<vmem>>, %arg4: memref<1x512xf32, #tpu.memory_space<vmem>>, %arg5: memref<1x512xf32, #tpu.memory_space<vmem>>, %arg6: memref<32x512xbf16, #tpu.memory_space<vmem>>) attributes {dimension_semantics = [#tpu.dimension_semantics<parallel>], iteration_bounds = array<i64: 1>, scalar_prefetch = 0 : i64, scratch_operands = 0 : i64, tpu.core_type = #tpu.core_type<tc>, window_params = [{transform_indices = @transform_0, window_bounds = array<i64: 32, 512>}, {transform_indices = @transform_1, window_bounds = array<i64: 32, 1>}, {transform_indices = @transform_2, window_bounds = array<i64: 32, 1>}, {pipeline_mode = #tpu.pipeline_mode<synchronous>, transform_indices = @transform_3, window_bounds = array<i64: 1, 512>}, {pipeline_mode = #tpu.pipeline_mode<synchronous>, transform_indices = @transform_4, window_bounds = array<i64: 1, 512>}, {transform_indices = @transform_5, window_bounds = array<i64: 32, 512>}]} {
    %c0 = arith.constant 0 : index
    %c0_0 = arith.constant 0 : index
    %0 = vector.load %arg1[%c0, %c0_0] : memref<32x512xbf16, #tpu.memory_space<vmem>>, vector<32x512xbf16>
    %1 = arith.extf %0 : vector<32x512xbf16> to vector<32x512xf32>
    %c0_1 = arith.constant 0 : index
    %c0_2 = arith.constant 0 : index
    %2 = vector.load %arg2[%c0_1, %c0_2] : memref<32x1xf32, #tpu.memory_space<vmem>>, vector<32x1xf32>
    %3 = vector.broadcast %2 : vector<32x1xf32> to vector<32x512xf32>
    %4 = arith.subf %1, %3 : vector<32x512xf32>
    %c0_3 = arith.constant 0 : index
    %c0_4 = arith.constant 0 : index
    %5 = vector.load %arg3[%c0_3, %c0_4] : memref<32x1xf32, #tpu.memory_space<vmem>>, vector<32x1xf32>
    %6 = vector.broadcast %5 : vector<32x1xf32> to vector<32x512xf32>
    %7 = arith.mulf %4, %6 : vector<32x512xf32>
    %c0_5 = arith.constant 0 : index
    %c0_6 = arith.constant 0 : index
    %8 = vector.load %arg4[%c0_5, %c0_6] : memref<1x512xf32, #tpu.memory_space<vmem>>, vector<1x512xf32>
    %9 = vector.broadcast %8 : vector<1x512xf32> to vector<32x512xf32>
    %10 = arith.mulf %7, %9 : vector<32x512xf32>
    %c0_7 = arith.constant 0 : index
    %c0_8 = arith.constant 0 : index
    %11 = vector.load %arg5[%c0_7, %c0_8] : memref<1x512xf32, #tpu.memory_space<vmem>>, vector<1x512xf32>
    %12 = vector.broadcast %11 : vector<1x512xf32> to vector<32x512xf32>
    %13 = arith.addf %10, %12 : vector<32x512xf32>
    %14 = arith.truncf %13 : vector<32x512xf32> to vector<32x512xbf16>
    %c0_9 = arith.constant 0 : index
    %c0_10 = arith.constant 0 : index
    %15 = vector.load %arg6[%c0_9, %c0_10] : memref<32x512xbf16, #tpu.memory_space<vmem>>, vector<32x512xbf16>
    tpu.vector_store %arg6[%c0_9, %c0_10], %14 {strides = array<i32>} : memref<32x512xbf16, #tpu.memory_space<vmem>>, vector<32x512xbf16>,
    return
  }
  func.func @transform_0(%arg0: i32) -> (i32, i32) {
    %c0_i32 = arith.constant 0 : i32
    %c0_i32_0 = arith.constant 0 : i32
    return %arg0, %c0_i32 : i32, i32
  }
  func.func @transform_1(%arg0: i32) -> (i32, i32) {
    %c0_i32 = arith.constant 0 : i32
    %c0_i32_0 = arith.constant 0 : i32
    return %arg0, %c0_i32 : i32, i32
  }
  func.func @transform_2(%arg0: i32) -> (i32, i32) {
    %c0_i32 = arith.constant 0 : i32
    %c0_i32_0 = arith.constant 0 : i32
    return %arg0, %c0_i32 : i32, i32
  }
  func.func @transform_3(%arg0: i32) -> (i32, i32) {
    %c0_i32 = arith.constant 0 : i32
    %c0_i32_0 = arith.constant 0 : i32
    %c0_i32_1 = arith.constant 0 : i32
    return %c0_i32, %c0_i32_0 : i32, i32
  }
  func.func @transform_4(%arg0: i32) -> (i32, i32) {
    %c0_i32 = arith.constant 0 : i32
    %c0_i32_0 = arith.constant 0 : i32
    %c0_i32_1 = arith.constant 0 : i32
    return %c0_i32, %c0_i32_0 : i32, i32
  }
  func.func @transform_5(%arg0: i32) -> (i32, i32) {
    %c0_i32 = arith.constant 0 : i32
    %c0_i32_0 = arith.constant 0 : i32
    return %arg0, %c0_i32 : i32, i32
  }
}

module attributes {stable_mosaic.version = 11 : i64} {
  func.func @_linear_rowstats_kernel(%arg0: i32, %arg1: memref<32x512xbf16, #tpu.memory_space<vmem>>, %arg2: memref<512x256xbf16, #tpu.memory_space<vmem>>, %arg3: memref<1x256xf32, #tpu.memory_space<vmem>>, %arg4: memref<32x256xbf16, #tpu.memory_space<vmem>>, %arg5: memref<32x1xf32, #tpu.memory_space<vmem>>, %arg6: memref<32x1xf32, #tpu.memory_space<vmem>>) attributes {dimension_semantics = [#tpu.dimension_semantics<parallel>], iteration_bounds = array<i64: 1>, scalar_prefetch = 0 : i64, scratch_operands = 0 : i64, tpu.core_type = #tpu.core_type<tc>, window_params = [{transform_indices = @transform_0, window_bounds = array<i64: 32, 512>}, {pipeline_mode = #tpu.pipeline_mode<synchronous>, transform_indices = @transform_1, window_bounds = array<i64: 512, 256>}, {pipeline_mode = #tpu.pipeline_mode<synchronous>, transform_indices = @transform_2, window_bounds = array<i64: 1, 256>}, {transform_indices = @transform_3, window_bounds = array<i64: 32, 256>}, {transform_indices = @transform_4, window_bounds = array<i64: 32, 1>}, {transform_indices = @transform_5, window_bounds = array<i64: 32, 1>}]} {
    %c0 = arith.constant 0 : index
    %c0_0 = arith.constant 0 : index
    %0 = vector.load %arg1[%c0, %c0_0] : memref<32x512xbf16, #tpu.memory_space<vmem>>, vector<32x512xbf16>
    %c0_1 = arith.constant 0 : index
    %c0_2 = arith.constant 0 : index
    %1 = vector.load %arg2[%c0_1, %c0_2] : memref<512x256xbf16, #tpu.memory_space<vmem>>, vector<512x256xbf16>
    %cst = arith.constant dense<0.000000e+00> : vector<32x256xf32>
    %2 = tpu.matmul %0, %1, %cst {dimension_numbers = #tpu.dot_dimension_numbers<[1], [0], [0], [1], [0, 0, 1, 1], [], []>} : vector<32x512xbf16>, vector<512x256xbf16>, vector<32x256xf32> -> vector<32x256xf32>
    %c0_3 = arith.constant 0 : index
    %c0_4 = arith.constant 0 : index
    %3 = vector.load %arg3[%c0_3, %c0_4] : memref<1x256xf32, #tpu.memory_space<vmem>>, vector<1x256xf32>
    %4 = vector.broadcast %3 : vector<1x256xf32> to vector<32x256xf32>
    %5 = arith.addf %2, %4 : vector<32x256xf32>
    %cst_5 = arith.constant 0.000000e+00 : f32
    %6 = vector.broadcast %cst_5 : f32 to vector<32x256xf32>
    %7 = arith.cmpf ogt, %5, %6 : vector<32x256xf32>
    %cst_6 = arith.constant 0.00999999977 : f32
    %8 = vector.broadcast %cst_6 : f32 to vector<32x256xf32>
    %9 = arith.mulf %8, %5 : vector<32x256xf32>
    %10 = arith.select %7, %5, %9 : vector<32x256xi1>, vector<32x256xf32>
    %11 = arith.truncf %10 : vector<32x256xf32> to vector<32x256xbf16>
    %c0_7 = arith.constant 0 : index
    %c0_8 = arith.constant 0 : index
    %12 = vector.load %arg4[%c0_7, %c0_8] : memref<32x256xbf16, #tpu.memory_space<vmem>>, vector<32x256xbf16>
    tpu.vector_store %arg4[%c0_7, %c0_8], %11 {strides = array<i32>} : memref<32x256xbf16, #tpu.memory_space<vmem>>, vector<32x256xbf16>,
    %cst_9 = arith.constant dense<0.000000e+00> : vector<32xf32>
    %13 = vector.multi_reduction <add>, %10, %cst_9 [1] : vector<32x256xf32> to vector<32xf32>
    %14 = vector.shape_cast %13 : vector<32xf32> to vector<32x1xf32>
    %c0_10 = arith.constant 0 : index
    %c0_11 = arith.constant 0 : index
    %15 = vector.load %arg5[%c0_10, %c0_11] : memref<32x1xf32, #tpu.memory_space<vmem>>, vector<32x1xf32>
    tpu.vector_store %arg5[%c0_10, %c0_11], %14 {strides = array<i32>} : memref<32x1xf32, #tpu.memory_space<vmem>>, vector<32x1xf32>,
    %16 = arith.mulf %10, %10 : vector<32x256xf32>
    %cst_12 = arith.constant dense<0.000000e+00> : vector<32xf32>
    %17 = vector.multi_reduction <add>, %16, %cst_12 [1] : vector<32x256xf32> to vector<32xf32>
    %18 = vector.shape_cast %17 : vector<32xf32> to vector<32x1xf32>
    %c0_13 = arith.constant 0 : index
    %c0_14 = arith.constant 0 : index
    %19 = vector.load %arg6[%c0_13, %c0_14] : memref<32x1xf32, #tpu.memory_space<vmem>>, vector<32x1xf32>
    tpu.vector_store %arg6[%c0_13, %c0_14], %18 {strides = array<i32>} : memref<32x1xf32, #tpu.memory_space<vmem>>, vector<32x1xf32>,
    return
  }
  func.func @transform_0(%arg0: i32) -> (i32, i32) {
    %c0_i32 = arith.constant 0 : i32
    %c0_i32_0 = arith.constant 0 : i32
    return %arg0, %c0_i32 : i32, i32
  }
  func.func @transform_1(%arg0: i32) -> (i32, i32) {
    %c0_i32 = arith.constant 0 : i32
    %c0_i32_0 = arith.constant 0 : i32
    %c0_i32_1 = arith.constant 0 : i32
    return %c0_i32, %c0_i32_0 : i32, i32
  }
  func.func @transform_2(%arg0: i32) -> (i32, i32) {
    %c0_i32 = arith.constant 0 : i32
    %c0_i32_0 = arith.constant 0 : i32
    %c0_i32_1 = arith.constant 0 : i32
    return %c0_i32, %c0_i32_0 : i32, i32
  }
  func.func @transform_3(%arg0: i32) -> (i32, i32) {
    %c0_i32 = arith.constant 0 : i32
    %c0_i32_0 = arith.constant 0 : i32
    return %arg0, %c0_i32 : i32, i32
  }
  func.func @transform_4(%arg0: i32) -> (i32, i32) {
    %c0_i32 = arith.constant 0 : i32
    %c0_i32_0 = arith.constant 0 : i32
    return %arg0, %c0_i32 : i32, i32
  }
  func.func @transform_5(%arg0: i32) -> (i32, i32) {
    %c0_i32 = arith.constant 0 : i32
    %c0_i32_0 = arith.constant 0 : i32
    return %arg0, %c0_i32 : i32, i32
  }
}

module attributes {stable_mosaic.version = 11 : i64} {
  func.func @_gln_norm_kernel(%arg0: i32, %arg1: memref<32x256xbf16, #tpu.memory_space<vmem>>, %arg2: memref<32x1xf32, #tpu.memory_space<vmem>>, %arg3: memref<32x1xf32, #tpu.memory_space<vmem>>, %arg4: memref<1x256xf32, #tpu.memory_space<vmem>>, %arg5: memref<1x256xf32, #tpu.memory_space<vmem>>, %arg6: memref<32x256xbf16, #tpu.memory_space<vmem>>) attributes {dimension_semantics = [#tpu.dimension_semantics<parallel>], iteration_bounds = array<i64: 1>, scalar_prefetch = 0 : i64, scratch_operands = 0 : i64, tpu.core_type = #tpu.core_type<tc>, window_params = [{transform_indices = @transform_0, window_bounds = array<i64: 32, 256>}, {transform_indices = @transform_1, window_bounds = array<i64: 32, 1>}, {transform_indices = @transform_2, window_bounds = array<i64: 32, 1>}, {pipeline_mode = #tpu.pipeline_mode<synchronous>, transform_indices = @transform_3, window_bounds = array<i64: 1, 256>}, {pipeline_mode = #tpu.pipeline_mode<synchronous>, transform_indices = @transform_4, window_bounds = array<i64: 1, 256>}, {transform_indices = @transform_5, window_bounds = array<i64: 32, 256>}]} {
    %c0 = arith.constant 0 : index
    %c0_0 = arith.constant 0 : index
    %0 = vector.load %arg1[%c0, %c0_0] : memref<32x256xbf16, #tpu.memory_space<vmem>>, vector<32x256xbf16>
    %1 = arith.extf %0 : vector<32x256xbf16> to vector<32x256xf32>
    %c0_1 = arith.constant 0 : index
    %c0_2 = arith.constant 0 : index
    %2 = vector.load %arg2[%c0_1, %c0_2] : memref<32x1xf32, #tpu.memory_space<vmem>>, vector<32x1xf32>
    %3 = vector.broadcast %2 : vector<32x1xf32> to vector<32x256xf32>
    %4 = arith.subf %1, %3 : vector<32x256xf32>
    %c0_3 = arith.constant 0 : index
    %c0_4 = arith.constant 0 : index
    %5 = vector.load %arg3[%c0_3, %c0_4] : memref<32x1xf32, #tpu.memory_space<vmem>>, vector<32x1xf32>
    %6 = vector.broadcast %5 : vector<32x1xf32> to vector<32x256xf32>
    %7 = arith.mulf %4, %6 : vector<32x256xf32>
    %c0_5 = arith.constant 0 : index
    %c0_6 = arith.constant 0 : index
    %8 = vector.load %arg4[%c0_5, %c0_6] : memref<1x256xf32, #tpu.memory_space<vmem>>, vector<1x256xf32>
    %9 = vector.broadcast %8 : vector<1x256xf32> to vector<32x256xf32>
    %10 = arith.mulf %7, %9 : vector<32x256xf32>
    %c0_7 = arith.constant 0 : index
    %c0_8 = arith.constant 0 : index
    %11 = vector.load %arg5[%c0_7, %c0_8] : memref<1x256xf32, #tpu.memory_space<vmem>>, vector<1x256xf32>
    %12 = vector.broadcast %11 : vector<1x256xf32> to vector<32x256xf32>
    %13 = arith.addf %10, %12 : vector<32x256xf32>
    %14 = arith.truncf %13 : vector<32x256xf32> to vector<32x256xbf16>
    %c0_9 = arith.constant 0 : index
    %c0_10 = arith.constant 0 : index
    %15 = vector.load %arg6[%c0_9, %c0_10] : memref<32x256xbf16, #tpu.memory_space<vmem>>, vector<32x256xbf16>
    tpu.vector_store %arg6[%c0_9, %c0_10], %14 {strides = array<i32>} : memref<32x256xbf16, #tpu.memory_space<vmem>>, vector<32x256xbf16>,
    return
  }
  func.func @transform_0(%arg0: i32) -> (i32, i32) {
    %c0_i32 = arith.constant 0 : i32
    %c0_i32_0 = arith.constant 0 : i32
    return %arg0, %c0_i32 : i32, i32
  }
  func.func @transform_1(%arg0: i32) -> (i32, i32) {
    %c0_i32 = arith.constant 0 : i32
    %c0_i32_0 = arith.constant 0 : i32
    return %arg0, %c0_i32 : i32, i32
  }
  func.func @transform_2(%arg0: i32) -> (i32, i32) {
    %c0_i32 = arith.constant 0 : i32
    %c0_i32_0 = arith.constant 0 : i32
    return %arg0, %c0_i32 : i32, i32
  }
  func.func @transform_3(%arg0: i32) -> (i32, i32) {
    %c0_i32 = arith.constant 0 : i32
    %c0_i32_0 = arith.constant 0 : i32
    %c0_i32_1 = arith.constant 0 : i32
    return %c0_i32, %c0_i32_0 : i32, i32
  }
  func.func @transform_4(%arg0: i32) -> (i32, i32) {
    %c0_i32 = arith.constant 0 : i32
    %c0_i32_0 = arith.constant 0 : i32
    %c0_i32_1 = arith.constant 0 : i32
    return %c0_i32, %c0_i32_0 : i32, i32
  }
  func.func @transform_5(%arg0: i32) -> (i32, i32) {
    %c0_i32 = arith.constant 0 : i32
    %c0_i32_0 = arith.constant 0 : i32
    return %arg0, %c0_i32 : i32, i32
  }
}

module attributes {stable_mosaic.version = 11 : i64} {
  func.func @_sage_stats_kernel(%arg0: i32, %arg1: memref<32x256xbf16, #tpu.memory_space<vmem>>, %arg2: memref<32x256xbf16, #tpu.memory_space<vmem>>, %arg3: memref<256x512xbf16, #tpu.memory_space<vmem>>, %arg4: memref<256x512xbf16, #tpu.memory_space<vmem>>, %arg5: memref<1x512xf32, #tpu.memory_space<vmem>>, %arg6: memref<32x512xbf16, #tpu.memory_space<vmem>>, %arg7: memref<8x512xf32, #tpu.memory_space<vmem>>, %arg8: memref<8x512xf32, #tpu.memory_space<vmem>>) attributes {dimension_semantics = [#tpu.dimension_semantics<parallel>], iteration_bounds = array<i64: 1>, scalar_prefetch = 0 : i64, scratch_operands = 0 : i64, tpu.core_type = #tpu.core_type<tc>, window_params = [{transform_indices = @transform_0, window_bounds = array<i64: 32, 256>}, {transform_indices = @transform_1, window_bounds = array<i64: 32, 256>}, {pipeline_mode = #tpu.pipeline_mode<synchronous>, transform_indices = @transform_2, window_bounds = array<i64: 256, 512>}, {pipeline_mode = #tpu.pipeline_mode<synchronous>, transform_indices = @transform_3, window_bounds = array<i64: 256, 512>}, {pipeline_mode = #tpu.pipeline_mode<synchronous>, transform_indices = @transform_4, window_bounds = array<i64: 1, 512>}, {transform_indices = @transform_5, window_bounds = array<i64: 32, 512>}, {transform_indices = @transform_6, window_bounds = array<i64: 8, 512>}, {transform_indices = @transform_7, window_bounds = array<i64: 8, 512>}]} {
    %c0 = arith.constant 0 : index
    %c0_0 = arith.constant 0 : index
    %0 = vector.load %arg1[%c0, %c0_0] : memref<32x256xbf16, #tpu.memory_space<vmem>>, vector<32x256xbf16>
    %c0_1 = arith.constant 0 : index
    %c0_2 = arith.constant 0 : index
    %1 = vector.load %arg3[%c0_1, %c0_2] : memref<256x512xbf16, #tpu.memory_space<vmem>>, vector<256x512xbf16>
    %cst = arith.constant dense<0.000000e+00> : vector<32x512xf32>
    %2 = tpu.matmul %0, %1, %cst {dimension_numbers = #tpu.dot_dimension_numbers<[1], [0], [0], [1], [0, 0, 1, 1], [], []>} : vector<32x256xbf16>, vector<256x512xbf16>, vector<32x512xf32> -> vector<32x512xf32>
    %c0_3 = arith.constant 0 : index
    %c0_4 = arith.constant 0 : index
    %3 = vector.load %arg2[%c0_3, %c0_4] : memref<32x256xbf16, #tpu.memory_space<vmem>>, vector<32x256xbf16>
    %c0_5 = arith.constant 0 : index
    %c0_6 = arith.constant 0 : index
    %4 = vector.load %arg4[%c0_5, %c0_6] : memref<256x512xbf16, #tpu.memory_space<vmem>>, vector<256x512xbf16>
    %cst_7 = arith.constant dense<0.000000e+00> : vector<32x512xf32>
    %5 = tpu.matmul %3, %4, %cst_7 {dimension_numbers = #tpu.dot_dimension_numbers<[1], [0], [0], [1], [0, 0, 1, 1], [], []>} : vector<32x256xbf16>, vector<256x512xbf16>, vector<32x512xf32> -> vector<32x512xf32>
    %6 = arith.addf %2, %5 : vector<32x512xf32>
    %c0_8 = arith.constant 0 : index
    %c0_9 = arith.constant 0 : index
    %7 = vector.load %arg5[%c0_8, %c0_9] : memref<1x512xf32, #tpu.memory_space<vmem>>, vector<1x512xf32>
    %8 = vector.broadcast %7 : vector<1x512xf32> to vector<32x512xf32>
    %9 = arith.addf %6, %8 : vector<32x512xf32>
    %10 = arith.truncf %9 : vector<32x512xf32> to vector<32x512xbf16>
    %c0_10 = arith.constant 0 : index
    %c0_11 = arith.constant 0 : index
    %11 = vector.load %arg6[%c0_10, %c0_11] : memref<32x512xbf16, #tpu.memory_space<vmem>>, vector<32x512xbf16>
    tpu.vector_store %arg6[%c0_10, %c0_11], %10 {strides = array<i32>} : memref<32x512xbf16, #tpu.memory_space<vmem>>, vector<32x512xbf16>,
    %12 = tpu.iota {dimensions = array<i32: 0>} : vector<32x1xi32>
    %c32_i32 = arith.constant 32 : i32
    %13 = arith.muli %arg0, %c32_i32 : i32
    %14 = vector.broadcast %13 : i32 to vector<32x1xi32>
    %15 = arith.addi %12, %14 : vector<32x1xi32>
    %c32_i32_12 = arith.constant 32 : i32
    %16 = vector.broadcast %c32_i32_12 : i32 to vector<32x1xi32>
    %17 = arith.cmpi slt, %15, %16 : vector<32x1xi32>
    %cst_13 = arith.constant 0.000000e+00 : f32
    %18 = vector.shape_cast %17 : vector<32x1xi1> to vector<32x1xi1>
    %19 = vector.broadcast %18 : vector<32x1xi1> to vector<32x512xi1>
    %20 = vector.broadcast %cst_13 : f32 to vector<32x512xf32>
    %21 = arith.select %19, %9, %20 : vector<32x512xi1>, vector<32x512xf32>
    %22 = vector.shape_cast %21 : vector<32x512xf32> to vector<4x8x512xf32>
    %cst_14 = arith.constant dense<0.000000e+00> : vector<8x512xf32>
    %23 = vector.multi_reduction <add>, %22, %cst_14 [0] : vector<4x8x512xf32> to vector<8x512xf32>
    %c0_15 = arith.constant 0 : index
    %c0_16 = arith.constant 0 : index
    %24 = vector.load %arg7[%c0_15, %c0_16] : memref<8x512xf32, #tpu.memory_space<vmem>>, vector<8x512xf32>
    tpu.vector_store %arg7[%c0_15, %c0_16], %23 {strides = array<i32>} : memref<8x512xf32, #tpu.memory_space<vmem>>, vector<8x512xf32>,
    %25 = arith.mulf %22, %22 : vector<4x8x512xf32>
    %cst_17 = arith.constant dense<0.000000e+00> : vector<8x512xf32>
    %26 = vector.multi_reduction <add>, %25, %cst_17 [0] : vector<4x8x512xf32> to vector<8x512xf32>
    %c0_18 = arith.constant 0 : index
    %c0_19 = arith.constant 0 : index
    %27 = vector.load %arg8[%c0_18, %c0_19] : memref<8x512xf32, #tpu.memory_space<vmem>>, vector<8x512xf32>
    tpu.vector_store %arg8[%c0_18, %c0_19], %26 {strides = array<i32>} : memref<8x512xf32, #tpu.memory_space<vmem>>, vector<8x512xf32>,
    return
  }
  func.func @transform_0(%arg0: i32) -> (i32, i32) {
    %c0_i32 = arith.constant 0 : i32
    %c0_i32_0 = arith.constant 0 : i32
    return %arg0, %c0_i32 : i32, i32
  }
  func.func @transform_1(%arg0: i32) -> (i32, i32) {
    %c0_i32 = arith.constant 0 : i32
    %c0_i32_0 = arith.constant 0 : i32
    return %arg0, %c0_i32 : i32, i32
  }
  func.func @transform_2(%arg0: i32) -> (i32, i32) {
    %c0_i32 = arith.constant 0 : i32
    %c0_i32_0 = arith.constant 0 : i32
    %c0_i32_1 = arith.constant 0 : i32
    return %c0_i32, %c0_i32_0 : i32, i32
  }
  func.func @transform_3(%arg0: i32) -> (i32, i32) {
    %c0_i32 = arith.constant 0 : i32
    %c0_i32_0 = arith.constant 0 : i32
    %c0_i32_1 = arith.constant 0 : i32
    return %c0_i32, %c0_i32_0 : i32, i32
  }
  func.func @transform_4(%arg0: i32) -> (i32, i32) {
    %c0_i32 = arith.constant 0 : i32
    %c0_i32_0 = arith.constant 0 : i32
    %c0_i32_1 = arith.constant 0 : i32
    return %c0_i32, %c0_i32_0 : i32, i32
  }
  func.func @transform_5(%arg0: i32) -> (i32, i32) {
    %c0_i32 = arith.constant 0 : i32
    %c0_i32_0 = arith.constant 0 : i32
    return %arg0, %c0_i32 : i32, i32
  }
  func.func @transform_6(%arg0: i32) -> (i32, i32) {
    %c0_i32 = arith.constant 0 : i32
    %c0_i32_0 = arith.constant 0 : i32
    return %arg0, %c0_i32 : i32, i32
  }
  func.func @transform_7(%arg0: i32) -> (i32, i32) {
    %c0_i32 = arith.constant 0 : i32
    %c0_i32_0 = arith.constant 0 : i32
    return %arg0, %c0_i32 : i32, i32
  }
}

module attributes {stable_mosaic.version = 11 : i64} {
  func.func @_pairnorm_apply_kernel(%arg0: i32, %arg1: memref<32x512xbf16, #tpu.memory_space<vmem>>, %arg2: memref<1x512xf32, #tpu.memory_space<vmem>>, %arg3: memref<1x512xf32, #tpu.memory_space<vmem>>, %arg4: memref<32x512xbf16, #tpu.memory_space<vmem>>) attributes {dimension_semantics = [#tpu.dimension_semantics<parallel>], iteration_bounds = array<i64: 1>, scalar_prefetch = 0 : i64, scratch_operands = 0 : i64, tpu.core_type = #tpu.core_type<tc>, window_params = [{transform_indices = @transform_0, window_bounds = array<i64: 32, 512>}, {pipeline_mode = #tpu.pipeline_mode<synchronous>, transform_indices = @transform_1, window_bounds = array<i64: 1, 512>}, {pipeline_mode = #tpu.pipeline_mode<synchronous>, transform_indices = @transform_2, window_bounds = array<i64: 1, 512>}, {transform_indices = @transform_3, window_bounds = array<i64: 32, 512>}]} {
    %c0 = arith.constant 0 : index
    %c0_0 = arith.constant 0 : index
    %0 = vector.load %arg1[%c0, %c0_0] : memref<32x512xbf16, #tpu.memory_space<vmem>>, vector<32x512xbf16>
    %1 = arith.extf %0 : vector<32x512xbf16> to vector<32x512xf32>
    %c0_1 = arith.constant 0 : index
    %c0_2 = arith.constant 0 : index
    %2 = vector.load %arg2[%c0_1, %c0_2] : memref<1x512xf32, #tpu.memory_space<vmem>>, vector<1x512xf32>
    %3 = vector.broadcast %2 : vector<1x512xf32> to vector<32x512xf32>
    %4 = arith.subf %1, %3 : vector<32x512xf32>
    %c0_3 = arith.constant 0 : index
    %c0_4 = arith.constant 0 : index
    %5 = vector.load %arg3[%c0_3, %c0_4] : memref<1x512xf32, #tpu.memory_space<vmem>>, vector<1x512xf32>
    %6 = vector.broadcast %5 : vector<1x512xf32> to vector<32x512xf32>
    %7 = arith.mulf %4, %6 : vector<32x512xf32>
    %cst = arith.constant 0.000000e+00 : f32
    %8 = vector.broadcast %cst : f32 to vector<32x512xf32>
    %9 = arith.maximumf %7, %8 : vector<32x512xf32>
    %10 = arith.truncf %9 : vector<32x512xf32> to vector<32x512xbf16>
    %c0_5 = arith.constant 0 : index
    %c0_6 = arith.constant 0 : index
    %11 = vector.load %arg4[%c0_5, %c0_6] : memref<32x512xbf16, #tpu.memory_space<vmem>>, vector<32x512xbf16>
    tpu.vector_store %arg4[%c0_5, %c0_6], %10 {strides = array<i32>} : memref<32x512xbf16, #tpu.memory_space<vmem>>, vector<32x512xbf16>,
    return
  }
  func.func @transform_0(%arg0: i32) -> (i32, i32) {
    %c0_i32 = arith.constant 0 : i32
    %c0_i32_0 = arith.constant 0 : i32
    return %arg0, %c0_i32 : i32, i32
  }
  func.func @transform_1(%arg0: i32) -> (i32, i32) {
    %c0_i32 = arith.constant 0 : i32
    %c0_i32_0 = arith.constant 0 : i32
    %c0_i32_1 = arith.constant 0 : i32
    return %c0_i32, %c0_i32_0 : i32, i32
  }
  func.func @transform_2(%arg0: i32) -> (i32, i32) {
    %c0_i32 = arith.constant 0 : i32
    %c0_i32_0 = arith.constant 0 : i32
    %c0_i32_1 = arith.constant 0 : i32
    return %c0_i32, %c0_i32_0 : i32, i32
  }
  func.func @transform_3(%arg0: i32) -> (i32, i32) {
    %c0_i32 = arith.constant 0 : i32
    %c0_i32_0 = arith.constant 0 : i32
    return %arg0, %c0_i32 : i32, i32
  }
}

module attributes {stable_mosaic.version = 11 : i64} {
  func.func @_sage_stats_kernel(%arg0: i32, %arg1: memref<32x512xbf16, #tpu.memory_space<vmem>>, %arg2: memref<32x512xbf16, #tpu.memory_space<vmem>>, %arg3: memref<512x512xbf16, #tpu.memory_space<vmem>>, %arg4: memref<512x512xbf16, #tpu.memory_space<vmem>>, %arg5: memref<1x512xf32, #tpu.memory_space<vmem>>, %arg6: memref<32x512xbf16, #tpu.memory_space<vmem>>, %arg7: memref<8x512xf32, #tpu.memory_space<vmem>>, %arg8: memref<8x512xf32, #tpu.memory_space<vmem>>) attributes {dimension_semantics = [#tpu.dimension_semantics<parallel>], iteration_bounds = array<i64: 1>, scalar_prefetch = 0 : i64, scratch_operands = 0 : i64, tpu.core_type = #tpu.core_type<tc>, window_params = [{transform_indices = @transform_0, window_bounds = array<i64: 32, 512>}, {transform_indices = @transform_1, window_bounds = array<i64: 32, 512>}, {pipeline_mode = #tpu.pipeline_mode<synchronous>, transform_indices = @transform_2, window_bounds = array<i64: 512, 512>}, {pipeline_mode = #tpu.pipeline_mode<synchronous>, transform_indices = @transform_3, window_bounds = array<i64: 512, 512>}, {pipeline_mode = #tpu.pipeline_mode<synchronous>, transform_indices = @transform_4, window_bounds = array<i64: 1, 512>}, {transform_indices = @transform_5, window_bounds = array<i64: 32, 512>}, {transform_indices = @transform_6, window_bounds = array<i64: 8, 512>}, {transform_indices = @transform_7, window_bounds = array<i64: 8, 512>}]} {
    %c0 = arith.constant 0 : index
    %c0_0 = arith.constant 0 : index
    %0 = vector.load %arg1[%c0, %c0_0] : memref<32x512xbf16, #tpu.memory_space<vmem>>, vector<32x512xbf16>
    %c0_1 = arith.constant 0 : index
    %c0_2 = arith.constant 0 : index
    %1 = vector.load %arg3[%c0_1, %c0_2] : memref<512x512xbf16, #tpu.memory_space<vmem>>, vector<512x512xbf16>
    %cst = arith.constant dense<0.000000e+00> : vector<32x512xf32>
    %2 = tpu.matmul %0, %1, %cst {dimension_numbers = #tpu.dot_dimension_numbers<[1], [0], [0], [1], [0, 0, 1, 1], [], []>} : vector<32x512xbf16>, vector<512x512xbf16>, vector<32x512xf32> -> vector<32x512xf32>
    %c0_3 = arith.constant 0 : index
    %c0_4 = arith.constant 0 : index
    %3 = vector.load %arg2[%c0_3, %c0_4] : memref<32x512xbf16, #tpu.memory_space<vmem>>, vector<32x512xbf16>
    %c0_5 = arith.constant 0 : index
    %c0_6 = arith.constant 0 : index
    %4 = vector.load %arg4[%c0_5, %c0_6] : memref<512x512xbf16, #tpu.memory_space<vmem>>, vector<512x512xbf16>
    %cst_7 = arith.constant dense<0.000000e+00> : vector<32x512xf32>
    %5 = tpu.matmul %3, %4, %cst_7 {dimension_numbers = #tpu.dot_dimension_numbers<[1], [0], [0], [1], [0, 0, 1, 1], [], []>} : vector<32x512xbf16>, vector<512x512xbf16>, vector<32x512xf32> -> vector<32x512xf32>
    %6 = arith.addf %2, %5 : vector<32x512xf32>
    %c0_8 = arith.constant 0 : index
    %c0_9 = arith.constant 0 : index
    %7 = vector.load %arg5[%c0_8, %c0_9] : memref<1x512xf32, #tpu.memory_space<vmem>>, vector<1x512xf32>
    %8 = vector.broadcast %7 : vector<1x512xf32> to vector<32x512xf32>
    %9 = arith.addf %6, %8 : vector<32x512xf32>
    %10 = arith.truncf %9 : vector<32x512xf32> to vector<32x512xbf16>
    %c0_10 = arith.constant 0 : index
    %c0_11 = arith.constant 0 : index
    %11 = vector.load %arg6[%c0_10, %c0_11] : memref<32x512xbf16, #tpu.memory_space<vmem>>, vector<32x512xbf16>
    tpu.vector_store %arg6[%c0_10, %c0_11], %10 {strides = array<i32>} : memref<32x512xbf16, #tpu.memory_space<vmem>>, vector<32x512xbf16>,
    %12 = tpu.iota {dimensions = array<i32: 0>} : vector<32x1xi32>
    %c32_i32 = arith.constant 32 : i32
    %13 = arith.muli %arg0, %c32_i32 : i32
    %14 = vector.broadcast %13 : i32 to vector<32x1xi32>
    %15 = arith.addi %12, %14 : vector<32x1xi32>
    %c32_i32_12 = arith.constant 32 : i32
    %16 = vector.broadcast %c32_i32_12 : i32 to vector<32x1xi32>
    %17 = arith.cmpi slt, %15, %16 : vector<32x1xi32>
    %cst_13 = arith.constant 0.000000e+00 : f32
    %18 = vector.shape_cast %17 : vector<32x1xi1> to vector<32x1xi1>
    %19 = vector.broadcast %18 : vector<32x1xi1> to vector<32x512xi1>
    %20 = vector.broadcast %cst_13 : f32 to vector<32x512xf32>
    %21 = arith.select %19, %9, %20 : vector<32x512xi1>, vector<32x512xf32>
    %22 = vector.shape_cast %21 : vector<32x512xf32> to vector<4x8x512xf32>
    %cst_14 = arith.constant dense<0.000000e+00> : vector<8x512xf32>
    %23 = vector.multi_reduction <add>, %22, %cst_14 [0] : vector<4x8x512xf32> to vector<8x512xf32>
    %c0_15 = arith.constant 0 : index
    %c0_16 = arith.constant 0 : index
    %24 = vector.load %arg7[%c0_15, %c0_16] : memref<8x512xf32, #tpu.memory_space<vmem>>, vector<8x512xf32>
    tpu.vector_store %arg7[%c0_15, %c0_16], %23 {strides = array<i32>} : memref<8x512xf32, #tpu.memory_space<vmem>>, vector<8x512xf32>,
    %25 = arith.mulf %22, %22 : vector<4x8x512xf32>
    %cst_17 = arith.constant dense<0.000000e+00> : vector<8x512xf32>
    %26 = vector.multi_reduction <add>, %25, %cst_17 [0] : vector<4x8x512xf32> to vector<8x512xf32>
    %c0_18 = arith.constant 0 : index
    %c0_19 = arith.constant 0 : index
    %27 = vector.load %arg8[%c0_18, %c0_19] : memref<8x512xf32, #tpu.memory_space<vmem>>, vector<8x512xf32>
    tpu.vector_store %arg8[%c0_18, %c0_19], %26 {strides = array<i32>} : memref<8x512xf32, #tpu.memory_space<vmem>>, vector<8x512xf32>,
    return
  }
  func.func @transform_0(%arg0: i32) -> (i32, i32) {
    %c0_i32 = arith.constant 0 : i32
    %c0_i32_0 = arith.constant 0 : i32
    return %arg0, %c0_i32 : i32, i32
  }
  func.func @transform_1(%arg0: i32) -> (i32, i32) {
    %c0_i32 = arith.constant 0 : i32
    %c0_i32_0 = arith.constant 0 : i32
    return %arg0, %c0_i32 : i32, i32
  }
  func.func @transform_2(%arg0: i32) -> (i32, i32) {
    %c0_i32 = arith.constant 0 : i32
    %c0_i32_0 = arith.constant 0 : i32
    %c0_i32_1 = arith.constant 0 : i32
    return %c0_i32, %c0_i32_0 : i32, i32
  }
  func.func @transform_3(%arg0: i32) -> (i32, i32) {
    %c0_i32 = arith.constant 0 : i32
    %c0_i32_0 = arith.constant 0 : i32
    %c0_i32_1 = arith.constant 0 : i32
    return %c0_i32, %c0_i32_0 : i32, i32
  }
  func.func @transform_4(%arg0: i32) -> (i32, i32) {
    %c0_i32 = arith.constant 0 : i32
    %c0_i32_0 = arith.constant 0 : i32
    %c0_i32_1 = arith.constant 0 : i32
    return %c0_i32, %c0_i32_0 : i32, i32
  }
  func.func @transform_5(%arg0: i32) -> (i32, i32) {
    %c0_i32 = arith.constant 0 : i32
    %c0_i32_0 = arith.constant 0 : i32
    return %arg0, %c0_i32 : i32, i32
  }
  func.func @transform_6(%arg0: i32) -> (i32, i32) {
    %c0_i32 = arith.constant 0 : i32
    %c0_i32_0 = arith.constant 0 : i32
    return %arg0, %c0_i32 : i32, i32
  }
  func.func @transform_7(%arg0: i32) -> (i32, i32) {
    %c0_i32 = arith.constant 0 : i32
    %c0_i32_0 = arith.constant 0 : i32
    return %arg0, %c0_i32 : i32, i32
  }
}

module attributes {stable_mosaic.version = 11 : i64} {
  func.func @_sage_score_kernel(%arg0: i32, %arg1: memref<32x512xbf16, #tpu.memory_space<vmem>>, %arg2: memref<32x512xbf16, #tpu.memory_space<vmem>>, %arg3: memref<512x512xbf16, #tpu.memory_space<vmem>>, %arg4: memref<512x512xbf16, #tpu.memory_space<vmem>>, %arg5: memref<1x512xf32, #tpu.memory_space<vmem>>, %arg6: memref<1x512xf32, #tpu.memory_space<vmem>>, %arg7: memref<32x1xf32, #tpu.memory_space<vmem>>) attributes {dimension_semantics = [#tpu.dimension_semantics<parallel>], iteration_bounds = array<i64: 1>, scalar_prefetch = 0 : i64, scratch_operands = 0 : i64, tpu.core_type = #tpu.core_type<tc>, window_params = [{transform_indices = @transform_0, window_bounds = array<i64: 32, 512>}, {transform_indices = @transform_1, window_bounds = array<i64: 32, 512>}, {pipeline_mode = #tpu.pipeline_mode<synchronous>, transform_indices = @transform_2, window_bounds = array<i64: 512, 512>}, {pipeline_mode = #tpu.pipeline_mode<synchronous>, transform_indices = @transform_3, window_bounds = array<i64: 512, 512>}, {pipeline_mode = #tpu.pipeline_mode<synchronous>, transform_indices = @transform_4, window_bounds = array<i64: 1, 512>}, {pipeline_mode = #tpu.pipeline_mode<synchronous>, transform_indices = @transform_5, window_bounds = array<i64: 1, 512>}, {transform_indices = @transform_6, window_bounds = array<i64: 32, 1>}]} {
    %c0 = arith.constant 0 : index
    %c0_0 = arith.constant 0 : index
    %0 = vector.load %arg1[%c0, %c0_0] : memref<32x512xbf16, #tpu.memory_space<vmem>>, vector<32x512xbf16>
    %c0_1 = arith.constant 0 : index
    %c0_2 = arith.constant 0 : index
    %1 = vector.load %arg3[%c0_1, %c0_2] : memref<512x512xbf16, #tpu.memory_space<vmem>>, vector<512x512xbf16>
    %cst = arith.constant dense<0.000000e+00> : vector<32x512xf32>
    %2 = tpu.matmul %0, %1, %cst {dimension_numbers = #tpu.dot_dimension_numbers<[1], [0], [0], [1], [0, 0, 1, 1], [], []>} : vector<32x512xbf16>, vector<512x512xbf16>, vector<32x512xf32> -> vector<32x512xf32>
    %c0_3 = arith.constant 0 : index
    %c0_4 = arith.constant 0 : index
    %3 = vector.load %arg2[%c0_3, %c0_4] : memref<32x512xbf16, #tpu.memory_space<vmem>>, vector<32x512xbf16>
    %c0_5 = arith.constant 0 : index
    %c0_6 = arith.constant 0 : index
    %4 = vector.load %arg4[%c0_5, %c0_6] : memref<512x512xbf16, #tpu.memory_space<vmem>>, vector<512x512xbf16>
    %cst_7 = arith.constant dense<0.000000e+00> : vector<32x512xf32>
    %5 = tpu.matmul %3, %4, %cst_7 {dimension_numbers = #tpu.dot_dimension_numbers<[1], [0], [0], [1], [0, 0, 1, 1], [], []>} : vector<32x512xbf16>, vector<512x512xbf16>, vector<32x512xf32> -> vector<32x512xf32>
    %6 = arith.addf %2, %5 : vector<32x512xf32>
    %c0_8 = arith.constant 0 : index
    %c0_9 = arith.constant 0 : index
    %7 = vector.load %arg5[%c0_8, %c0_9] : memref<1x512xf32, #tpu.memory_space<vmem>>, vector<1x512xf32>
    %8 = vector.broadcast %7 : vector<1x512xf32> to vector<32x512xf32>
    %9 = arith.addf %6, %8 : vector<32x512xf32>
    %c0_10 = arith.constant 0 : index
    %c0_11 = arith.constant 0 : index
    %10 = vector.load %arg6[%c0_10, %c0_11] : memref<1x512xf32, #tpu.memory_space<vmem>>, vector<1x512xf32>
    %11 = vector.broadcast %10 : vector<1x512xf32> to vector<32x512xf32>
    %12 = arith.mulf %9, %11 : vector<32x512xf32>
    %cst_12 = arith.constant dense<0.000000e+00> : vector<32xf32>
    %13 = vector.multi_reduction <add>, %12, %cst_12 [1] : vector<32x512xf32> to vector<32xf32>
    %14 = vector.shape_cast %13 : vector<32xf32> to vector<32x1xf32>
    %c0_13 = arith.constant 0 : index
    %c0_14 = arith.constant 0 : index
    %15 = vector.load %arg7[%c0_13, %c0_14] : memref<32x1xf32, #tpu.memory_space<vmem>>, vector<32x1xf32>
    tpu.vector_store %arg7[%c0_13, %c0_14], %14 {strides = array<i32>} : memref<32x1xf32, #tpu.memory_space<vmem>>, vector<32x1xf32>,
    return
  }
  func.func @transform_0(%arg0: i32) -> (i32, i32) {
    %c0_i32 = arith.constant 0 : i32
    %c0_i32_0 = arith.constant 0 : i32
    return %arg0, %c0_i32 : i32, i32
  }
  func.func @transform_1(%arg0: i32) -> (i32, i32) {
    %c0_i32 = arith.constant 0 : i32
    %c0_i32_0 = arith.constant 0 : i32
    return %arg0, %c0_i32 : i32, i32
  }
  func.func @transform_2(%arg0: i32) -> (i32, i32) {
    %c0_i32 = arith.constant 0 : i32
    %c0_i32_0 = arith.constant 0 : i32
    %c0_i32_1 = arith.constant 0 : i32
    return %c0_i32, %c0_i32_0 : i32, i32
  }
  func.func @transform_3(%arg0: i32) -> (i32, i32) {
    %c0_i32 = arith.constant 0 : i32
    %c0_i32_0 = arith.constant 0 : i32
    %c0_i32_1 = arith.constant 0 : i32
    return %c0_i32, %c0_i32_0 : i32, i32
  }
  func.func @transform_4(%arg0: i32) -> (i32, i32) {
    %c0_i32 = arith.constant 0 : i32
    %c0_i32_0 = arith.constant 0 : i32
    %c0_i32_1 = arith.constant 0 : i32
    return %c0_i32, %c0_i32_0 : i32, i32
  }
  func.func @transform_5(%arg0: i32) -> (i32, i32) {
    %c0_i32 = arith.constant 0 : i32
    %c0_i32_0 = arith.constant 0 : i32
    %c0_i32_1 = arith.constant 0 : i32
    return %c0_i32, %c0_i32_0 : i32, i32
  }
  func.func @transform_6(%arg0: i32) -> (i32, i32) {
    %c0_i32 = arith.constant 0 : i32
    %c0_i32_0 = arith.constant 0 : i32
    return %arg0, %c0_i32 : i32, i32
  }
}

</mosaic_0001>

<llo_original>
// kernel: custom-call
$region0: #{custom-call}
  %s0 = inlined_call_operand.vmem [shape: u32[32], index: 0, kind: output, shape index: {}]

// kernel: layout_graph_model_forward.9
$region0: #{layout_graph_model_forward.9}
  #allocation0 [shape = 'u32[]', space=smem, size = 0x4, offset = 0x4, fixed_abs, tag = 'smem constant byte address 0x4 - core index']
  #allocation1 [shape = 'u32[144,128]{1,0:T(1,128)}', space=vmem, size = 0x12000, scoped, tag = 'internal scratch']
  %s0 = inlined_call_operand.vmem [shape: bf16[32,256], index: 0, kind: input, shape index: {}]
  %s1 = inlined_call_operand.vmem [shape: bf16[256,512], index: 1, kind: input, shape index: {}]
  %s2 = inlined_call_operand.vmem [shape: f32[1,512], index: 2, kind: input, shape index: {}]
  %s3 = inlined_call_operand.vmem [shape: bf16[32,512], index: 3, kind: output, shape index: {0}]
  %s4 = inlined_call_operand.vmem [shape: f32[32,1], index: 4, kind: output, shape index: {1}]
  %s5 = inlined_call_operand.vmem [shape: f32[32,1], index: 5, kind: output, shape index: {2}]
  %6 = xla_tuple %s3, %s4, %s5
  %s7 = sld [smem:[#allocation0]]
  $region38: #{layout_graph_model_forward.9} parent=0
    _
  %s9 = ssub.s32 1, %s7
  %s10 = scalar_select 0, %s9, %s7
  // Predicated region
  $region2: #{layout_graph_model_forward.9} parent=0 // pred_check
    _
  $region3: #{layout_graph_model_forward.9} parent=0 // pred_check_branch
    %12 = sbr.rel (0) target = $region5
  $region4: #{layout_graph_model_forward.9} parent=0 // pred_region
    _
  $region5: #{layout_graph_model_forward.9} parent=0 // pred_fallthru
    _
  // Predicated region
  $region6: #{layout_graph_model_forward.9} parent=0 // pred_check
    _
  $region7: #{layout_graph_model_forward.9} parent=0 // pred_check_branch
    %14 = sbr.rel (0) target = $region9
  $region8: #{layout_graph_model_forward.9} parent=0 // pred_region
    _
  $region9: #{layout_graph_model_forward.9} parent=0 // pred_fallthru
    _
  // Predicated region
  $region10: #{layout_graph_model_forward.9} parent=0 // pred_check
    _
  $region11: #{layout_graph_model_forward.9} parent=0 // pred_check_branch
    %16 = sbr.rel (0) target = $region13
  $region12: #{layout_graph_model_forward.9} parent=0 // pred_region
    _
  $region13: #{layout_graph_model_forward.9} parent=0 // pred_fallthru
    _
  %v17 = vld [vmem:[%s0] sm:$0xff]
  %v18 = vld [vmem:[%s0 + $0x8] sm:$0xff]
  %v19 = vld [vmem:[%s0 + $0x10] sm:$0xff]
  %v20 = vld [vmem:[%s0 + $0x18] sm:$0xff]
  %v21 = vld [vmem:[%s1] sm:$0xff]
  %v22 = vld [vmem:[%s1 + $0x8] sm:$0xff]
  %v23 = vld [vmem:[%s1 + $0x10] sm:$0xff]
  %v24 = vld [vmem:[%s1 + $0x18] sm:$0xff]
  %v25 = vld [vmem:[%s1 + $0x20] sm:$0xff]
  %v26 = vld [vmem:[%s1 + $0x28] sm:$0xff]
  %v27 = vld [vmem:[%s1 + $0x30] sm:$0xff]
  %v28 = vld [vmem:[%s1 + $0x38] sm:$0xff]
  %v29 = vld [vmem:[%s1 + $0x40] sm:$0xff]
  %v30 = vld [vmem:[%s1 + $0x48] sm:$0xff]
  %v31 = vld [vmem:[%s1 + $0x50] sm:$0xff]
  %v32 = vld [vmem:[%s1 + $0x58] sm:$0xff]
  %v33 = vld [vmem:[%s1 + $0x60] sm:$0xff]
  %v34 = vld [vmem:[%s1 + $0x68] sm:$0xff]
  %v35 = vld [vmem:[%s1 + $0x70] sm:$0xff]
  %v36 = vld [vmem:[%s1 + $0x78] sm:$0xff]
  %v37 = vld [vmem:[%s1 + $0x80] sm:$0xff]
  %v38 = vld [vmem:[%s1 + $0x88] sm:$0xff]
  %v39 = vld [vmem:[%s1 + $0x90] sm:$0xff]
  %v40 = vld [vmem:[%s1 + $0x98] sm:$0xff]
  %v41 = vld [vmem:[%s1 + $0xa0] sm:$0xff]
  %v42 = vld [vmem:[%s1 + $0xa8] sm:$0xff]
  %v43 = vld [vmem:[%s1 + $0xb0] sm:$0xff]
  %v44 = vld [vmem:[%s1 + $0xb8] sm:$0xff]
  %v45 = vld [vmem:[%s1 + $0xc0] sm:$0xff]
  %v46 = vld [vmem:[%s1 + $0xc8] sm:$0xff]
  %v47 = vld [vmem:[%s1 + $0xd0] sm:$0xff]
  %v48 = vld [vmem:[%s1 + $0xd8] sm:$0xff]
  %v49 = vld [vmem:[%s1 + $0xe0] sm:$0xff]
  %v50 = vld [vmem:[%s1 + $0xe8] sm:$0xff]
  %v51 = vld [vmem:[%s1 + $0xf0] sm:$0xff]
  %v52 = vld [vmem:[%s1 + $0xf8] sm:$0xff]
  %v53 = vld [vmem:[%s1 + $0x100] sm:$0xff]
  %v54 = vld [vmem:[%s1 + $0x108] sm:$0xff]
  %v55 = vld [vmem:[%s1 + $0x110] sm:$0xff]
  %v56 = vld [vmem:[%s1 + $0x118] sm:$0xff]
  %v57 = vld [vmem:[%s1 + $0x120] sm:$0xff]
  %v58 = vld [vmem:[%s1 + $0x128] sm:$0xff]
  %v59 = vld [vmem:[%s1 + $0x130] sm:$0xff]
  %v60 = vld [vmem:[%s1 + $0x138] sm:$0xff]
  %v61 = vld [vmem:[%s1 + $0x140] sm:$0xff]
  %v62 = vld [vmem:[%s1 + $0x148] sm:$0xff]
  %v63 = vld [vmem:[%s1 + $0x150] sm:$0xff]
  %v64 = vld [vmem:[%s1 + $0x158] sm:$0xff]
  %v65 = vld [vmem:[%s1 + $0x160] sm:$0xff]
  %v66 = vld [vmem:[%s1 + $0x168] sm:$0xff]
  %v67 = vld [vmem:[%s1 + $0x170] sm:$0xff]
  %v68 = vld [vmem:[%s1 + $0x178] sm:$0xff]
  %v69 = vld [vmem:[%s1 + $0x180] sm:$0xff]
  %v70 = vld [vmem:[%s1 + $0x188] sm:$0xff]
  %v71 = vld [vmem:[%s1 + $0x190] sm:$0xff]
  %v72 = vld [vmem:[%s1 + $0x198] sm:$0xff]
  %v73 = vld [vmem:[%s1 + $0x1a0] sm:$0xff]
  %v74 = vld [vmem:[%s1 + $0x1a8] sm:$0xff]
  %v75 = vld [vmem:[%s1 + $0x1b0] sm:$0xff]
  %v76 = vld [vmem:[%s1 + $0x1b8] sm:$0xff]
  %v77 = vld [vmem:[%s1 + $0x1c0] sm:$0xff]
  %v78 = vld [vmem:[%s1 + $0x1c8] sm:$0xff]
  %v79 = vld [vmem:[%s1 + $0x1d0] sm:$0xff]
  %v80 = vld [vmem:[%s1 + $0x1d8] sm:$0xff]
  %v81 = vld [vmem:[%s1 + $0x1e0] sm:$0xff]
  %v82 = vld [vmem:[%s1 + $0x1e8] sm:$0xff]
  %v83 = vld [vmem:[%s1 + $0x1f0] sm:$0xff]
  %v84 = vld [vmem:[%s1 + $0x1f8] sm:$0xff]
  %v85 = vld [vmem:[%s2] sm:$0xf]
  %v87 = vlaneseq
  %v88 = vshrl.u32 %v87, 7
  %v89 = vsub.s32 0, %v88
  %v90 = vrot.slane %v85, %v89
  %v91 = vlaneseq
  %v92 = vshrl.u32 %v91, 7
  %v93 = vsub.s32 1, %v92
  %v94 = vrot.slane %v85, %v93
  %v95 = vlaneseq
  %v96 = vshrl.u32 %v95, 7
  %v97 = vsub.s32 2, %v96
  %v98 = vrot.slane %v85, %v97
  %v99 = vlaneseq
  %v100 = vshrl.u32 %v99, 7
  %v101 = vsub.s32 3, %v100
  %v102 = vrot.slane %v85, %v101
  %v111 = vunpack.c.l.b16 %v17
  %v112 = vunpack.c.h.b16 %v17
  %v113 = vunpack.c.l.b16 %v18
  %v114 = vunpack.c.h.b16 %v18
  %v115 = vunpack.c.l.b16 %v19
  %v116 = vunpack.c.h.b16 %v19
  %v117 = vunpack.c.l.b16 %v20
  %v118 = vunpack.c.h.b16 %v20
  %v119 = vpack.c.b16 %v113, %v111
  %v120 = vpack.c.b16 %v114, %v112
  %v121 = vpack.c.b16 %v117, %v115
  %v122 = vpack.c.b16 %v118, %v116
  %v191 = vunpack.c.l.b16 %v21
  %v192 = vunpack.c.h.b16 %v21
  %v193 = vunpack.c.l.b16 %v22
  %v194 = vunpack.c.h.b16 %v22
  %v195 = vunpack.c.l.b16 %v23
  %v196 = vunpack.c.h.b16 %v23
  %v197 = vunpack.c.l.b16 %v24
  %v198 = vunpack.c.h.b16 %v24
  %v199 = vunpack.c.l.b16 %v25
  %v200 = vunpack.c.h.b16 %v25
  %v201 = vunpack.c.l.b16 %v26
  %v202 = vunpack.c.h.b16 %v26
  %v203 = vunpack.c.l.b16 %v27
  %v204 = vunpack.c.h.b16 %v27
  %v205 = vunpack.c.l.b16 %v28
  %v206 = vunpack.c.h.b16 %v28
  %v207 = vunpack.c.l.b16 %v29
  %v208 = vunpack.c.h.b16 %v29
  %v209 = vunpack.c.l.b16 %v30
  %v210 = vunpack.c.h.b16 %v30
  %v211 = vunpack.c.l.b16 %v31
  %v212 = vunpack.c.h.b16 %v31
  %v213 = vunpack.c.l.b16 %v32
  %v214 = vunpack.c.h.b16 %v32
  %v215 = vunpack.c.l.b16 %v33
  %v216 = vunpack.c.h.b16 %v33
  %v217 = vunpack.c.l.b16 %v34
  %v218 = vunpack.c.h.b16 %v34
  %v219 = vunpack.c.l.b16 %v35
  %v220 = vunpack.c.h.b16 %v35
  %v221 = vunpack.c.l.b16 %v36
  %v222 = vunpack.c.h.b16 %v36
  %v223 = vunpack.c.l.b16 %v37
  %v224 = vunpack.c.h.b16 %v37
  %v225 = vunpack.c.l.b16 %v38
  %v226 = vunpack.c.h.b16 %v38
  %v227 = vunpack.c.l.b16 %v39
  %v228 = vunpack.c.h.b16 %v39
  %v229 = vunpack.c.l.b16 %v40
  %v230 = vunpack.c.h.b16 %v40
  %v231 = vunpack.c.l.b16 %v41
  %v232 = vunpack.c.h.b16 %v41
  %v233 = vunpack.c.l.b16 %v42
  %v234 = vunpack.c.h.b16 %v42
  %v235 = vunpack.c.l.b16 %v43
  %v236 = vunpack.c.h.b16 %v43
  %v237 = vunpack.c.l.b16 %v44
  %v238 = vunpack.c.h.b16 %v44
  %v239 = vunpack.c.l.b16 %v45
  %v240 = vunpack.c.h.b16 %v45
  %v241 = vunpack.c.l.b16 %v46
  %v242 = vunpack.c.h.b16 %v46
  %v243 = vunpack.c.l.b16 %v47
  %v244 = vunpack.c.h.b16 %v47
  %v245 = vunpack.c.l.b16 %v48
  %v246 = vunpack.c.h.b16 %v48
  %v247 = vunpack.c.l.b16 %v49
  %v248 = vunpack.c.h.b16 %v49
  %v249 = vunpack.c.l.b16 %v50
  %v250 = vunpack.c.h.b16 %v50
  %v251 = vunpack.c.l.b16 %v51
  %v252 = vunpack.c.h.b16 %v51
  %v253 = vunpack.c.l.b16 %v52
  %v254 = vunpack.c.h.b16 %v52
  %v255 = vunpack.c.l.b16 %v53
  %v256 = vunpack.c.h.b16 %v53
  %v257 = vunpack.c.l.b16 %v54
  %v258 = vunpack.c.h.b16 %v54
  %v259 = vunpack.c.l.b16 %v55
  %v260 = vunpack.c.h.b16 %v55
  %v261 = vunpack.c.l.b16 %v56
  %v262 = vunpack.c.h.b16 %v56
  %v263 = vunpack.c.l.b16 %v57
  %v264 = vunpack.c.h.b16 %v57
  %v265 = vunpack.c.l.b16 %v58
  %v266 = vunpack.c.h.b16 %v58
  %v267 = vunpack.c.l.b16 %v59
  %v268 = vunpack.c.h.b16 %v59
  %v269 = vunpack.c.l.b16 %v60
  %v270 = vunpack.c.h.b16 %v60
  %v271 = vunpack.c.l.b16 %v61
  %v272 = vunpack.c.h.b16 %v61
  %v273 = vunpack.c.l.b16 %v62
  %v274 = vunpack.c.h.b16 %v62
  %v275 = vunpack.c.l.b16 %v63
  %v276 = vunpack.c.h.b16 %v63
  %v277 = vunpack.c.l.b16 %v64
  %v278 = vunpack.c.h.b16 %v64
  %v279 = vunpack.c.l.b16 %v65
  %v280 = vunpack.c.h.b16 %v65
  %v281 = vunpack.c.l.b16 %v66
  %v282 = vunpack.c.h.b16 %v66
  %v283 = vunpack.c.l.b16 %v67
  %v284 = vunpack.c.h.b16 %v67
  %v285 = vunpack.c.l.b16 %v68
  %v286 = vunpack.c.h.b16 %v68
  %v287 = vunpack.c.l.b16 %v69
  %v288 = vunpack.c.h.b16 %v69
  %v289 = vunpack.c.l.b16 %v70
  %v290 = vunpack.c.h.b16 %v70
  %v291 = vunpack.c.l.b16 %v71
  %v292 = vunpack.c.h.b16 %v71
  %v293 = vunpack.c.l.b16 %v72
  %v294 = vunpack.c.h.b16 %v72
  %v295 = vunpack.c.l.b16 %v73
  %v296 = vunpack.c.h.b16 %v73
  %v297 = vunpack.c.l.b16 %v74
  %v298 = vunpack.c.h.b16 %v74
  %v299 = vunpack.c.l.b16 %v75
  %v300 = vunpack.c.h.b16 %v75
  %v301 = vunpack.c.l.b16 %v76
  %v302 = vunpack.c.h.b16 %v76
  %v303 = vunpack.c.l.b16 %v77
  %v304 = vunpack.c.h.b16 %v77
  %v305 = vunpack.c.l.b16 %v78
  %v306 = vunpack.c.h.b16 %v78
  %v307 = vunpack.c.l.b16 %v79
  %v308 = vunpack.c.h.b16 %v79
  %v309 = vunpack.c.l.b16 %v80
  %v310 = vunpack.c.h.b16 %v80
  %v311 = vunpack.c.l.b16 %v81
  %v312 = vunpack.c.h.b16 %v81
  %v313 = vunpack.c.l.b16 %v82
  %v314 = vunpack.c.h.b16 %v82
  %v315 = vunpack.c.l.b16 %v83
  %v316 = vunpack.c.h.b16 %v83
  %v317 = vunpack.c.l.b16 %v84
  %v318 = vunpack.c.h.b16 %v84
  %v319 = vpack.c.b16 %v195, %v191
  %v320 = vpack.c.b16 %v196, %v192
  %v321 = vpack.c.b16 %v197, %v193
  %v322 = vpack.c.b16 %v198, %v194
  %v323 = vpack.c.b16 %v203, %v199
  %v324 = vpack.c.b16 %v204, %v200
  %v325 = vpack.c.b16 %v205, %v201
  %v326 = vpack.c.b16 %v206, %v202
  %v327 = vpack.c.b16 %v211, %v207
  %v328 = vpack.c.b16 %v212, %v208
  %v329 = vpack.c.b16 %v213, %v209
  %v330 = vpack.c.b16 %v214, %v210
  %v331 = vpack.c.b16 %v219, %v215
  %v332 = vpack.c.b16 %v220, %v216
  %v333 = vpack.c.b16 %v221, %v217
  %v334 = vpack.c.b16 %v222, %v218
  %v335 = vpack.c.b16 %v227, %v223
  %v336 = vpack.c.b16 %v228, %v224
  %v337 = vpack.c.b16 %v229, %v225
  %v338 = vpack.c.b16 %v230, %v226
  %v339 = vpack.c.b16 %v235, %v231
  %v340 = vpack.c.b16 %v236, %v232
  %v341 = vpack.c.b16 %v237, %v233
  %v342 = vpack.c.b16 %v238, %v234
  %v343 = vpack.c.b16 %v243, %v239
  %v344 = vpack.c.b16 %v244, %v240
  %v345 = vpack.c.b16 %v245, %v241
  %v346 = vpack.c.b16 %v246, %v242
  %v347 = vpack.c.b16 %v251, %v247
  %v348 = vpack.c.b16 %v252, %v248
  %v349 = vpack.c.b16 %v253, %v249
  %v350 = vpack.c.b16 %v254, %v250
  %v351 = vpack.c.b16 %v259, %v255
  %v352 = vpack.c.b16 %v260, %v256
  %v353 = vpack.c.b16 %v261, %v257
  %v354 = vpack.c.b16 %v262, %v258
  %v355 = vpack.c.b16 %v267, %v263
  %v356 = vpack.c.b16 %v268, %v264
  %v357 = vpack.c.b16 %v269, %v265
  %v358 = vpack.c.b16 %v270, %v266
  %v359 = vpack.c.b16 %v275, %v271
  %v360 = vpack.c.b16 %v276, %v272
  %v361 = vpack.c.b16 %v277, %v273
  %v362 = vpack.c.b16 %v278, %v274
  %v363 = vpack.c.b16 %v283, %v279
  %v364 = vpack.c.b16 %v284, %v280
  %v365 = vpack.c.b16 %v285, %v281
  %v366 = vpack.c.b16 %v286, %v282
  %v367 = vpack.c.b16 %v291, %v287
  %v368 = vpack.c.b16 %v292, %v288
  %v369 = vpack.c.b16 %v293, %v289
  %v370 = vpack.c.b16 %v294, %v290
  %v371 = vpack.c.b16 %v299, %v295
  %v372 = vpack.c.b16 %v300, %v296
  %v373 = vpack.c.b16 %v301, %v297
  %v374 = vpack.c.b16 %v302, %v298
  %v375 = vpack.c.b16 %v307, %v303
  %v376 = vpack.c.b16 %v308, %v304
  %v377 = vpack.c.b16 %v309, %v305
  %v378 = vpack.c.b16 %v310, %v306
  %v379 = vpack.c.b16 %v315, %v311
  %v380 = vpack.c.b16 %v316, %v312
  %v381 = vpack.c.b16 %v317, %v313
  %v382 = vpack.c.b16 %v318, %v314
  %447 = vmatprep.subr.bf16.mxu0 %v320
  %448 = vmatpush1.bf16.msra.mxu0 %v319
  %449 = vmatprep.subr.bf16.mxu0 %v324
  %450 = vmatpush1.bf16.msra.mxu0 %v323
  %451 = vmatprep.subr.bf16.mxu0 %v328
  %452 = vmatpush1.bf16.msra.mxu0 %v327
  %453 = vmatprep.subr.bf16.mxu0 %v332
  %454 = vmatpush1.bf16.msra.mxu0 %v331
  %455 = vmatprep.subr.bf16.mxu0 %v336
  %456 = vmatpush1.bf16.msra.mxu0 %v335
  %457 = vmatprep.subr.bf16.mxu0 %v340
  %458 = vmatpush1.bf16.msra.mxu0 %v339
  %459 = vmatprep.subr.bf16.mxu0 %v344
  %460 = vmatpush1.bf16.msra.mxu0 %v343
  %461 = vmatprep.subr.bf16.mxu0 %v348
  %462 = vmatpush1.bf16.msra.mxu0 %v347
  %463 = vmatprep.subr.bf16.mxu0 %v352
  %464 = vmatpush1.bf16.msra.mxu0 %v351
  %465 = vmatprep.subr.bf16.mxu0 %v356
  %466 = vmatpush1.bf16.msra.mxu0 %v355
  %467 = vmatprep.subr.bf16.mxu0 %v360
  %468 = vmatpush1.bf16.msra.mxu0 %v359
  %469 = vmatprep.subr.bf16.mxu0 %v364
  %470 = vmatpush1.bf16.msra.mxu0 %v363
  %471 = vmatprep.subr.bf16.mxu0 %v368
  %472 = vmatpush1.bf16.msra.mxu0 %v367
  %473 = vmatprep.subr.bf16.mxu0 %v372
  %474 = vmatpush1.bf16.msra.mxu0 %v371
  %475 = vmatprep.subr.bf16.mxu0 %v376
  %476 = vmatpush1.bf16.msra.mxu0 %v375
  %477 = vmatprep.subr.bf16.mxu0 %v380
  %478 = vmatpush1.bf16.msra.mxu0 %v379
  %479 = vmatprep.mubr.bf16.mxu0 %v120
  %480 = vmatmul.mubr.bf16.gmra.mrb[0].mxu0 %v119
  %v481 = vpop.f32.mrb[0].mxu0
  %v482 = vadd.f32 %v90, %v481
  %v483 = vpop.f32.mrb[0].mxu0
  %v484 = vadd.f32 %v94, %v483
  %v485 = vpop.f32.mrb[0].mxu0
  %v486 = vadd.f32 %v90, %v485
  %v487 = vpop.f32.mrb[0].mxu0
  %v488 = vadd.f32 %v94, %v487
  %489 = vmatprep.mubr.bf16.mxu0 %v122
  %490 = vmatmul.mubr.bf16.gmra.mrb[0].mxu0 %v121
  %v491 = vpop.f32.mrb[0].mxu0
  %v492 = vadd.f32 %v90, %v491
  %v493 = vpop.f32.mrb[0].mxu0
  %v494 = vadd.f32 %v94, %v493
  %v495 = vpop.f32.mrb[0].mxu0
  %v496 = vadd.f32 %v90, %v495
  %v497 = vpop.f32.mrb[0].mxu0
  %v498 = vadd.f32 %v94, %v497
  %499 = vdwg.mxu0
  %500 = vmatprep.subr.bf16.mxu0 %v322
  %501 = vmatpush1.bf16.msra.mxu0 %v321
  %502 = vmatprep.subr.bf16.mxu0 %v326
  %503 = vmatpush1.bf16.msra.mxu0 %v325
  %504 = vmatprep.subr.bf16.mxu0 %v330
  %505 = vmatpush1.bf16.msra.mxu0 %v329
  %506 = vmatprep.subr.bf16.mxu0 %v334
  %507 = vmatpush1.bf16.msra.mxu0 %v333
  %508 = vmatprep.subr.bf16.mxu0 %v338
  %509 = vmatpush1.bf16.msra.mxu0 %v337
  %510 = vmatprep.subr.bf16.mxu0 %v342
  %511 = vmatpush1.bf16.msra.mxu0 %v341
  %512 = vmatprep.subr.bf16.mxu0 %v346
  %513 = vmatpush1.bf16.msra.mxu0 %v345
  %514 = vmatprep.subr.bf16.mxu0 %v350
  %515 = vmatpush1.bf16.msra.mxu0 %v349
  %516 = vmatprep.subr.bf16.mxu0 %v354
  %517 = vmatpush1.bf16.msra.mxu0 %v353
  %518 = vmatprep.subr.bf16.mxu0 %v358
  %519 = vmatpush1.bf16.msra.mxu0 %v357
  %520 = vmatprep.subr.bf16.mxu0 %v362
  %521 = vmatpush1.bf16.msra.mxu0 %v361
  %522 = vmatprep.subr.bf16.mxu0 %v366
  %523 = vmatpush1.bf16.msra.mxu0 %v365
  %524 = vmatprep.subr.bf16.mxu0 %v370
  %525 = vmatpush1.bf16.msra.mxu0 %v369
  %526 = vmatprep.subr.bf16.mxu0 %v374
  %527 = vmatpush1.bf16.msra.mxu0 %v373
  %528 = vmatprep.subr.bf16.mxu0 %v378
  %529 = vmatpush1.bf16.msra.mxu0 %v377
  %530 = vmatprep.subr.bf16.mxu0 %v382
  %531 = vmatpush1.bf16.msra.mxu0 %v381
  %532 = vmatprep.mubr.bf16.mxu0 %v120
  %533 = vmatmul.mubr.bf16.gmra.mrb[0].mxu0 %v119
  %v534 = vpop.f32.mrb[0].mxu0
  %v535 = vadd.f32 %v98, %v534
  %v536 = vpop.f32.mrb[0].mxu0
  %v537 = vadd.f32 %v102, %v536
  %v538 = vpop.f32.mrb[0].mxu0
  %v539 = vadd.f32 %v98, %v538
  %v540 = vpop.f32.mrb[0].mxu0
  %v541 = vadd.f32 %v102, %v540
  %542 = vmatprep.mubr.bf16.mxu0 %v122
  %543 = vmatmul.mubr.bf16.gmra.mrb[0].mxu0 %v121
  %v544 = vpop.f32.mrb[0].mxu0
  %v545 = vadd.f32 %v98, %v544
  %v546 = vpop.f32.mrb[0].mxu0
  %v547 = vadd.f32 %v102, %v546
  %v548 = vpop.f32.mrb[0].mxu0
  %v549 = vadd.f32 %v98, %v548
  %v550 = vpop.f32.mrb[0].mxu0
  %v551 = vadd.f32 %v102, %v550
  %552 = vdwg.mxu0
  %vm553 = vcmp.gt.f32.partialorder %v482, 0.0
  %vm554 = vcmp.gt.f32.partialorder %v484, 0.0
  %vm555 = vcmp.gt.f32.partialorder %v535, 0.0
  %vm556 = vcmp.gt.f32.partialorder %v537, 0.0
  %vm557 = vcmp.gt.f32.partialorder %v486, 0.0
  %vm558 = vcmp.gt.f32.partialorder %v488, 0.0
  %vm559 = vcmp.gt.f32.partialorder %v539, 0.0
  %vm560 = vcmp.gt.f32.partialorder %v541, 0.0
  %vm561 = vcmp.gt.f32.partialorder %v492, 0.0
  %vm562 = vcmp.gt.f32.partialorder %v494, 0.0
  %vm563 = vcmp.gt.f32.partialorder %v545, 0.0
  %vm564 = vcmp.gt.f32.partialorder %v547, 0.0
  %vm565 = vcmp.gt.f32.partialorder %v496, 0.0
  %vm566 = vcmp.gt.f32.partialorder %v498, 0.0
  %vm567 = vcmp.gt.f32.partialorder %v549, 0.0
  %vm568 = vcmp.gt.f32.partialorder %v551, 0.0
  %v569 = vmul.f32 %v482, 0.01
  %v570 = vmul.f32 %v484, 0.01
  %v571 = vmul.f32 %v535, 0.01
  %v572 = vmul.f32 %v537, 0.01
  %v573 = vmul.f32 %v486, 0.01
  %v574 = vmul.f32 %v488, 0.01
  %v575 = vmul.f32 %v539, 0.01
  %v576 = vmul.f32 %v541, 0.01
  %v577 = vmul.f32 %v492, 0.01
  %v578 = vmul.f32 %v494, 0.01
  %v579 = vmul.f32 %v545, 0.01
  %v580 = vmul.f32 %v547, 0.01
  %v581 = vmul.f32 %v496, 0.01
  %v582 = vmul.f32 %v498, 0.01
  %v583 = vmul.f32 %v549, 0.01
  %v584 = vmul.f32 %v551, 0.01
  %v585 = vsel %vm553, %v482, %v569
  %v586 = vsel %vm554, %v484, %v570
  %v587 = vsel %vm555, %v535, %v571
  %v588 = vsel %vm556, %v537, %v572
  %v589 = vsel %vm557, %v486, %v573
  %v590 = vsel %vm558, %v488, %v574
  %v591 = vsel %vm559, %v539, %v575
  %v592 = vsel %vm560, %v541, %v576
  %v593 = vsel %vm561, %v492, %v577
  %v594 = vsel %vm562, %v494, %v578
  %v595 = vsel %vm563, %v545, %v579
  %v596 = vsel %vm564, %v547, %v580
  %v597 = vsel %vm565, %v496, %v581
  %v598 = vsel %vm566, %v498, %v582
  %v599 = vsel %vm567, %v549, %v583
  %v600 = vsel %vm568, %v551, %v584
  %v601 = vpack.c.bf16 %v589, %v585
  %v602 = vpack.c.bf16 %v590, %v586
  %v603 = vpack.c.bf16 %v591, %v587
  %v604 = vpack.c.bf16 %v592, %v588
  %v605 = vpack.c.bf16 %v597, %v593
  %v606 = vpack.c.bf16 %v598, %v594
  %v607 = vpack.c.bf16 %v599, %v595
  %v608 = vpack.c.bf16 %v600, %v596
  %v617 = vunpack.c.l.b16 %v601
  %v618 = vunpack.c.l.b16 %v602
  %v619 = vunpack.c.l.b16 %v603
  %v620 = vunpack.c.l.b16 %v604
  %v621 = vunpack.c.h.b16 %v601
  %v622 = vunpack.c.h.b16 %v602
  %v623 = vunpack.c.h.b16 %v603
  %v624 = vunpack.c.h.b16 %v604
  %v625 = vunpack.c.l.b16 %v605
  %v626 = vunpack.c.l.b16 %v606
  %v627 = vunpack.c.l.b16 %v607
  %v628 = vunpack.c.l.b16 %v608
  %v629 = vunpack.c.h.b16 %v605
  %v630 = vunpack.c.h.b16 %v606
  %v631 = vunpack.c.h.b16 %v607
  %v632 = vunpack.c.h.b16 %v608
  %v633 = vpack.c.b16 %v618, %v617
  %v634 = vpack.c.b16 %v620, %v619
  %v635 = vpack.c.b16 %v622, %v621
  %v636 = vpack.c.b16 %v624, %v623
  %v637 = vpack.c.b16 %v626, %v625
  %v638 = vpack.c.b16 %v628, %v627
  %v639 = vpack.c.b16 %v630, %v629
  %v640 = vpack.c.b16 %v632, %v631
  %649 = vst [vmem:[%s3] sm:$0xff] %v633
  %650 = vst [vmem:[%s3 + $0x8] sm:$0xff] %v634
  %651 = vst [vmem:[%s3 + $0x10] sm:$0xff] %v635
  %652 = vst [vmem:[%s3 + $0x18] sm:$0xff] %v636
  %653 = vst [vmem:[%s3 + $0x20] sm:$0xff] %v637
  %654 = vst [vmem:[%s3 + $0x28] sm:$0xff] %v638
  %655 = vst [vmem:[%s3 + $0x30] sm:$0xff] %v639
  %656 = vst [vmem:[%s3 + $0x38] sm:$0xff] %v640
  %v657 = vadd.f32 %v585, %v586
  %v658 = vadd.f32 %v657, %v587
  %v659 = vadd.f32 %v658, %v588
  %660 = vadd.xlane.f32.xlu0 %v659
  %v661 = vpop.xlane.xlu0 %660
  %v662 = vadd.f32 %v589, %v590
  %v663 = vadd.f32 %v662, %v591
  %v664 = vadd.f32 %v663, %v592
  %665 = vadd.xlane.f32.xlu0 %v664
  %v666 = vpop.xlane.xlu0 %665
  %v667 = vadd.f32 %v593, %v594
  %v668 = vadd.f32 %v667, %v595
  %v669 = vadd.f32 %v668, %v596
  %670 = vadd.xlane.f32.xlu0 %v669
  %v671 = vpop.xlane.xlu0 %670
  %v672 = vadd.f32 %v597, %v598
  %v673 = vadd.f32 %v672, %v599
  %v674 = vadd.f32 %v673, %v600
  %675 = vadd.xlane.f32.xlu0 %v674
  %v676 = vpop.xlane.xlu0 %675
  %vm677 = vcmask 7168
  %678 = vst.msk [vmem:[%s4] sm:$0xff] %vm677, %v661
  %679 = vst.msk [vmem:[%s4 + $0x8] sm:$0xff] %vm677, %v666
  %680 = vst.msk [vmem:[%s4 + $0x10] sm:$0xff] %vm677, %v671
  %681 = vst.msk [vmem:[%s4 + $0x18] sm:$0xff] %vm677, %v676
  %v682 = vmul.f32 %v585, %v585
  %v683 = vmul.f32 %v586, %v586
  %v684 = vmul.f32 %v587, %v587
  %v685 = vmul.f32 %v588, %v588
  %v686 = vmul.f32 %v589, %v589
  %v687 = vmul.f32 %v590, %v590
  %v688 = vmul.f32 %v591, %v591
  %v689 = vmul.f32 %v592, %v592
  %v690 = vmul.f32 %v593, %v593
  %v691 = vmul.f32 %v594, %v594
  %v692 = vmul.f32 %v595, %v595
  %v693 = vmul.f32 %v596, %v596
  %v694 = vmul.f32 %v597, %v597
  %v695 = vmul.f32 %v598, %v598
  %v696 = vmul.f32 %v599, %v599
  %v697 = vmul.f32 %v600, %v600
  %v698 = vadd.f32 %v682, %v683
  %v699 = vadd.f32 %v698, %v684
  %v700 = vadd.f32 %v699, %v685
  %701 = vadd.xlane.f32.xlu0 %v700
  %v702 = vpop.xlane.xlu0 %701
  %v703 = vadd.f32 %v686, %v687
  %v704 = vadd.f32 %v703, %v688
  %v705 = vadd.f32 %v704, %v689
  %706 = vadd.xlane.f32.xlu0 %v705
  %v707 = vpop.xlane.xlu0 %706
  %v708 = vadd.f32 %v690, %v691
  %v709 = vadd.f32 %v708, %v692
  %v710 = vadd.f32 %v709, %v693
  %711 = vadd.xlane.f32.xlu0 %v710
  %v712 = vpop.xlane.xlu0 %711
  %v713 = vadd.f32 %v694, %v695
  %v714 = vadd.f32 %v713, %v696
  %v715 = vadd.f32 %v714, %v697
  %716 = vadd.xlane.f32.xlu0 %v715
  %v717 = vpop.xlane.xlu0 %716
  %718 = vst.msk [vmem:[%s5] sm:$0xff] %vm677, %v702
  %719 = vst.msk [vmem:[%s5 + $0x8] sm:$0xff] %vm677, %v707
  %720 = vst.msk [vmem:[%s5 + $0x10] sm:$0xff] %vm677, %v712
  %721 = vst.msk [vmem:[%s5 + $0x18] sm:$0xff] %vm677, %v717
  // Predicated region
  $region14: #{layout_graph_model_forward.9} parent=0 // pred_check
    _
  $region15: #{layout_graph_model_forward.9} parent=0 // pred_check_branch
    %723 = sbr.rel (0) target = $region17
  $region16: #{layout_graph_model_forward.9} parent=0 // pred_region
    _
  $region17: #{layout_graph_model_forward.9} parent=0 // pred_fallthru
    _
  // Predicated region
  $region18: #{layout_graph_model_forward.9} parent=0 // pred_check
    _
  $region19: #{layout_graph_model_forward.9} parent=0 // pred_check_branch
    %725 = sbr.rel (0) target = $region21
  $region20: #{layout_graph_model_forward.9} parent=0 // pred_region
    _
  $region21: #{layout_graph_model_forward.9} parent=0 // pred_fallthru
    _
  // Predicated region
  $region22: #{layout_graph_model_forward.9} parent=0 // pred_check
    _
  $region23: #{layout_graph_model_forward.9} parent=0 // pred_check_branch
    %727 = sbr.rel (0) target = $region25
  $region24: #{layout_graph_model_forward.9} parent=0 // pred_region
    _
  $region25: #{layout_graph_model_forward.9} parent=0 // pred_fallthru
    _
  // Predicated region
  $region26: #{layout_graph_model_forward.9} parent=0 // pred_check
    _
  $region27: #{layout_graph_model_forward.9} parent=0 // pred_check_branch
    %729 = sbr.rel (0) target = $region29
  $region28: #{layout_graph_model_forward.9} parent=0 // pred_region
    _
  $region29: #{layout_graph_model_forward.9} parent=0 // pred_fallthru
    _
  // Predicated region
  $region30: #{layout_graph_model_forward.9} parent=0 // pred_check
    _
  $region31: #{layout_graph_model_forward.9} parent=0 // pred_check_branch
    %731 = sbr.rel (0) target = $region33
  $region32: #{layout_graph_model_forward.9} parent=0 // pred_region
    _
  $region33: #{layout_graph_model_forward.9} parent=0 // pred_fallthru
    _
  // Predicated region
  $region34: #{layout_graph_model_forward.9} parent=0 // pred_check
    _
  $region35: #{layout_graph_model_forward.9} parent=0 // pred_check_branch
    %733 = sbr.rel (0) target = $region37
  $region36: #{layout_graph_model_forward.9} parent=0 // pred_region
    _
  $region37: #{layout_graph_model_forward.9} parent=0 // pred_fallthru
    _

// kernel: layout_graph_model_forward.10
$region0: #{layout_graph_model_forward.10}
  #allocation0 [shape = 'u32[]', space=smem, size = 0x4, offset = 0x4, fixed_abs, tag = 'smem constant byte address 0x4 - core index']
  #allocation1 [shape = 'u32[144,128]{1,0:T(1,128)}', space=vmem, size = 0x12000, scoped, tag = 'internal scratch']
  %s0 = inlined_call_operand.vmem [shape: bf16[32,512], index: 0, kind: input, shape index: {}]
  %s1 = inlined_call_operand.vmem [shape: f32[32,1], index: 1, kind: input, shape index: {}]
  %s2 = inlined_call_operand.vmem [shape: f32[32,1], index: 2, kind: input, shape index: {}]
  %s3 = inlined_call_operand.vmem [shape: f32[1,512], index: 3, kind: input, shape index: {}]
  %s4 = inlined_call_operand.vmem [shape: f32[1,512], index: 4, kind: input, shape index: {}]
  %s5 = inlined_call_operand.vmem [shape: bf16[32,512], index: 5, kind: output, shape index: {}]
  %s6 = sld [smem:[#allocation0]]
  $region30: #{layout_graph_model_forward.10} parent=0
    _
  %s8 = ssub.s32 1, %s6
  %s9 = scalar_select 0, %s8, %s6
  // Predicated region
  $region2: #{layout_graph_model_forward.10} parent=0 // pred_check
    _
  $region3: #{layout_graph_model_forward.10} parent=0 // pred_check_branch
    %11 = sbr.rel (0) target = $region5
  $region4: #{layout_graph_model_forward.10} parent=0 // pred_region
    _
  $region5: #{layout_graph_model_forward.10} parent=0 // pred_fallthru
    _
  // Predicated region
  $region6: #{layout_graph_model_forward.10} parent=0 // pred_check
    _
  $region7: #{layout_graph_model_forward.10} parent=0 // pred_check_branch
    %13 = sbr.rel (0) target = $region9
  $region8: #{layout_graph_model_forward.10} parent=0 // pred_region
    _
  $region9: #{layout_graph_model_forward.10} parent=0 // pred_fallthru
    _
  // Predicated region
  $region10: #{layout_graph_model_forward.10} parent=0 // pred_check
    _
  $region11: #{layout_graph_model_forward.10} parent=0 // pred_check_branch
    %15 = sbr.rel (0) target = $region13
  $region12: #{layout_graph_model_forward.10} parent=0 // pred_region
    _
  $region13: #{layout_graph_model_forward.10} parent=0 // pred_fallthru
    _
  // Predicated region
  $region14: #{layout_graph_model_forward.10} parent=0 // pred_check
    _
  $region15: #{layout_graph_model_forward.10} parent=0 // pred_check_branch
    %17 = sbr.rel (0) target = $region17
  $region16: #{layout_graph_model_forward.10} parent=0 // pred_region
    _
  $region17: #{layout_graph_model_forward.10} parent=0 // pred_fallthru
    _
  // Predicated region
  $region18: #{layout_graph_model_forward.10} parent=0 // pred_check
    _
  $region19: #{layout_graph_model_forward.10} parent=0 // pred_check_branch
    %19 = sbr.rel (0) target = $region21
  $region20: #{layout_graph_model_forward.10} parent=0 // pred_region
    _
  $region21: #{layout_graph_model_forward.10} parent=0 // pred_fallthru
    _
  %v20 = vld [vmem:[%s0] sm:$0xff]
  %v21 = vld [vmem:[%s0 + $0x8] sm:$0xff]
  %v22 = vld [vmem:[%s0 + $0x10] sm:$0xff]
  %v23 = vld [vmem:[%s0 + $0x18] sm:$0xff]
  %v24 = vld [vmem:[%s0 + $0x20] sm:$0xff]
  %v25 = vld [vmem:[%s0 + $0x28] sm:$0xff]
  %v26 = vld [vmem:[%s0 + $0x30] sm:$0xff]
  %v27 = vld [vmem:[%s0 + $0x38] sm:$0xff]
  %v28 = vunpack.c.l.bf16 %v20
  %v29 = vunpack.c.h.bf16 %v20
  %v30 = vunpack.c.l.bf16 %v21
  %v31 = vunpack.c.h.bf16 %v21
  %v32 = vunpack.c.l.bf16 %v22
  %v33 = vunpack.c.h.bf16 %v22
  %v34 = vunpack.c.l.bf16 %v23
  %v35 = vunpack.c.h.bf16 %v23
  %v36 = vunpack.c.l.bf16 %v24
  %v37 = vunpack.c.h.bf16 %v24
  %v38 = vunpack.c.l.bf16 %v25
  %v39 = vunpack.c.h.bf16 %v25
  %v40 = vunpack.c.l.bf16 %v26
  %v41 = vunpack.c.h.bf16 %v26
  %v42 = vunpack.c.l.bf16 %v27
  %v43 = vunpack.c.h.bf16 %v27
  %v44 = vld [vmem:[%s1] sm:$0xff]
  %v45 = vld [vmem:[%s1 + $0x8] sm:$0xff]
  %v46 = vld [vmem:[%s1 + $0x10] sm:$0xff]
  %v47 = vld [vmem:[%s1 + $0x18] sm:$0xff]
  %49 = vset.pattern.permute.xlu0 0
  %50 = vperm.xlu0 %49, %v44
  %v51 = vpop.permute.xlu0 %50
  %54 = vset.pattern.permute.xlu0 0
  %55 = vperm.xlu0 %54, %v45
  %v56 = vpop.permute.xlu0 %55
  %59 = vset.pattern.permute.xlu0 0
  %60 = vperm.xlu0 %59, %v46
  %v61 = vpop.permute.xlu0 %60
  %64 = vset.pattern.permute.xlu0 0
  %65 = vperm.xlu0 %64, %v47
  %v66 = vpop.permute.xlu0 %65
  %v68 = vsub.f32 %v28, %v51
  %v69 = vsub.f32 %v29, %v51
  %v70 = vsub.f32 %v30, %v51
  %v71 = vsub.f32 %v31, %v51
  %v72 = vsub.f32 %v32, %v56
  %v73 = vsub.f32 %v33, %v56
  %v74 = vsub.f32 %v34, %v56
  %v75 = vsub.f32 %v35, %v56
  %v76 = vsub.f32 %v36, %v61
  %v77 = vsub.f32 %v37, %v61
  %v78 = vsub.f32 %v38, %v61
  %v79 = vsub.f32 %v39, %v61
  %v80 = vsub.f32 %v40, %v66
  %v81 = vsub.f32 %v41, %v66
  %v82 = vsub.f32 %v42, %v66
  %v83 = vsub.f32 %v43, %v66
  %v84 = vld [vmem:[%s2] sm:$0xff]
  %v85 = vld [vmem:[%s2 + $0x8] sm:$0xff]
  %v86 = vld [vmem:[%s2 + $0x10] sm:$0xff]
  %v87 = vld [vmem:[%s2 + $0x18] sm:$0xff]
  %89 = vset.pattern.permute.xlu0 0
  %90 = vperm.xlu0 %89, %v84
  %v91 = vpop.permute.xlu0 %90
  %94 = vset.pattern.permute.xlu0 0
  %95 = vperm.xlu0 %94, %v85
  %v96 = vpop.permute.xlu0 %95
  %99 = vset.pattern.permute.xlu0 0
  %100 = vperm.xlu0 %99, %v86
  %v101 = vpop.permute.xlu0 %100
  %104 = vset.pattern.permute.xlu0 0
  %105 = vperm.xlu0 %104, %v87
  %v106 = vpop.permute.xlu0 %105
  %v108 = vmul.f32 %v68, %v91
  %v109 = vmul.f32 %v69, %v91
  %v110 = vmul.f32 %v70, %v91
  %v111 = vmul.f32 %v71, %v91
  %v112 = vmul.f32 %v72, %v96
  %v113 = vmul.f32 %v73, %v96
  %v114 = vmul.f32 %v74, %v96
  %v115 = vmul.f32 %v75, %v96
  %v116 = vmul.f32 %v76, %v101
  %v117 = vmul.f32 %v77, %v101
  %v118 = vmul.f32 %v78, %v101
  %v119 = vmul.f32 %v79, %v101
  %v120 = vmul.f32 %v80, %v106
  %v121 = vmul.f32 %v81, %v106
  %v122 = vmul.f32 %v82, %v106
  %v123 = vmul.f32 %v83, %v106
  %v124 = vld [vmem:[%s3] sm:$0xf]
  %v126 = vlaneseq
  %v127 = vshrl.u32 %v126, 7
  %v128 = vsub.s32 0, %v127
  %v129 = vrot.slane %v124, %v128
  %v130 = vlaneseq
  %v131 = vshrl.u32 %v130, 7
  %v132 = vsub.s32 1, %v131
  %v133 = vrot.slane %v124, %v132
  %v134 = vlaneseq
  %v135 = vshrl.u32 %v134, 7
  %v136 = vsub.s32 2, %v135
  %v137 = vrot.slane %v124, %v136
  %v138 = vlaneseq
  %v139 = vshrl.u32 %v138, 7
  %v140 = vsub.s32 3, %v139
  %v141 = vrot.slane %v124, %v140
  %v146 = vmul.f32 %v108, %v129
  %v147 = vmul.f32 %v109, %v133
  %v148 = vmul.f32 %v110, %v137
  %v149 = vmul.f32 %v111, %v141
  %v150 = vmul.f32 %v112, %v129
  %v151 = vmul.f32 %v113, %v133
  %v152 = vmul.f32 %v114, %v137
  %v153 = vmul.f32 %v115, %v141
  %v154 = vmul.f32 %v116, %v129
  %v155 = vmul.f32 %v117, %v133
  %v156 = vmul.f32 %v118, %v137
  %v157 = vmul.f32 %v119, %v141
  %v158 = vmul.f32 %v120, %v129
  %v159 = vmul.f32 %v121, %v133
  %v160 = vmul.f32 %v122, %v137
  %v161 = vmul.f32 %v123, %v141
  %v162 = vld [vmem:[%s4] sm:$0xf]
  %v164 = vlaneseq
  %v165 = vshrl.u32 %v164, 7
  %v166 = vsub.s32 0, %v165
  %v167 = vrot.slane %v162, %v166
  %v168 = vlaneseq
  %v169 = vshrl.u32 %v168, 7
  %v170 = vsub.s32 1, %v169
  %v171 = vrot.slane %v162, %v170
  %v172 = vlaneseq
  %v173 = vshrl.u32 %v172, 7
  %v174 = vsub.s32 2, %v173
  %v175 = vrot.slane %v162, %v174
  %v176 = vlaneseq
  %v177 = vshrl.u32 %v176, 7
  %v178 = vsub.s32 3, %v177
  %v179 = vrot.slane %v162, %v178
  %v184 = vadd.f32 %v146, %v167
  %v185 = vadd.f32 %v147, %v171
  %v186 = vadd.f32 %v148, %v175
  %v187 = vadd.f32 %v149, %v179
  %v188 = vadd.f32 %v150, %v167
  %v189 = vadd.f32 %v151, %v171
  %v190 = vadd.f32 %v152, %v175
  %v191 = vadd.f32 %v153, %v179
  %v192 = vadd.f32 %v154, %v167
  %v193 = vadd.f32 %v155, %v171
  %v194 = vadd.f32 %v156, %v175
  %v195 = vadd.f32 %v157, %v179
  %v196 = vadd.f32 %v158, %v167
  %v197 = vadd.f32 %v159, %v171
  %v198 = vadd.f32 %v160, %v175
  %v199 = vadd.f32 %v161, %v179
  %v200 = vpack.c.bf16 %v188, %v184
  %v201 = vpack.c.bf16 %v189, %v185
  %v202 = vpack.c.bf16 %v190, %v186
  %v203 = vpack.c.bf16 %v191, %v187
  %v204 = vpack.c.bf16 %v196, %v192
  %v205 = vpack.c.bf16 %v197, %v193
  %v206 = vpack.c.bf16 %v198, %v194
  %v207 = vpack.c.bf16 %v199, %v195
  %v216 = vunpack.c.l.b16 %v200
  %v217 = vunpack.c.l.b16 %v201
  %v218 = vunpack.c.l.b16 %v202
  %v219 = vunpack.c.l.b16 %v203
  %v220 = vunpack.c.h.b16 %v200
  %v221 = vunpack.c.h.b16 %v201
  %v222 = vunpack.c.h.b16 %v202
  %v223 = vunpack.c.h.b16 %v203
  %v224 = vunpack.c.l.b16 %v204
  %v225 = vunpack.c.l.b16 %v205
  %v226 = vunpack.c.l.b16 %v206
  %v227 = vunpack.c.l.b16 %v207
  %v228 = vunpack.c.h.b16 %v204
  %v229 = vunpack.c.h.b16 %v205
  %v230 = vunpack.c.h.b16 %v206
  %v231 = vunpack.c.h.b16 %v207
  %v232 = vpack.c.b16 %v217, %v216
  %v233 = vpack.c.b16 %v219, %v218
  %v234 = vpack.c.b16 %v221, %v220
  %v235 = vpack.c.b16 %v223, %v222
  %v236 = vpack.c.b16 %v225, %v224
  %v237 = vpack.c.b16 %v227, %v226
  %v238 = vpack.c.b16 %v229, %v228
  %v239 = vpack.c.b16 %v231, %v230
  %248 = vst [vmem:[%s5] sm:$0xff] %v232
  %249 = vst [vmem:[%s5 + $0x8] sm:$0xff] %v233
  %250 = vst [vmem:[%s5 + $0x10] sm:$0xff] %v234
  %251 = vst [vmem:[%s5 + $0x18] sm:$0xff] %v235
  %252 = vst [vmem:[%s5 + $0x20] sm:$0xff] %v236
  %253 = vst [vmem:[%s5 + $0x28] sm:$0xff] %v237
  %254 = vst [vmem:[%s5 + $0x30] sm:$0xff] %v238
  %255 = vst [vmem:[%s5 + $0x38] sm:$0xff] %v239
  // Predicated region
  $region22: #{layout_graph_model_forward.10} parent=0 // pred_check
    _
  $region23: #{layout_graph_model_forward.10} parent=0 // pred_check_branch
    %257 = sbr.rel (0) target = $region25
  $region24: #{layout_graph_model_forward.10} parent=0 // pred_region
    _
  $region25: #{layout_graph_model_forward.10} parent=0 // pred_fallthru
    _
  // Predicated region
  $region26: #{layout_graph_model_forward.10} parent=0 // pred_check
    _
  $region27: #{layout_graph_model_forward.10} parent=0 // pred_check_branch
    %259 = sbr.rel (0) target = $region29
  $region28: #{layout_graph_model_forward.10} parent=0 // pred_region
    _
  $region29: #{layout_graph_model_forward.10} parent=0 // pred_fallthru
    _

// kernel: layout_graph_model_forward.12
$region0: #{layout_graph_model_forward.12}
  #allocation0 [shape = 'u32[]', space=smem, size = 0x4, offset = 0x4, fixed_abs, tag = 'smem constant byte address 0x4 - core index']
  #allocation1 [shape = 'u32[144,128]{1,0:T(1,128)}', space=vmem, size = 0x12000, scoped, tag = 'internal scratch']
  %s0 = inlined_call_operand.vmem [shape: bf16[32,256], index: 0, kind: input, shape index: {}]
  %s1 = inlined_call_operand.vmem [shape: f32[32,1], index: 1, kind: input, shape index: {}]
  %s2 = inlined_call_operand.vmem [shape: f32[32,1], index: 2, kind: input, shape index: {}]
  %s3 = inlined_call_operand.vmem [shape: f32[1,256], index: 3, kind: input, shape index: {}]
  %s4 = inlined_call_operand.vmem [shape: f32[1,256], index: 4, kind: input, shape index: {}]
  %s5 = inlined_call_operand.vmem [shape: bf16[32,256], index: 5, kind: output, shape index: {}]
  %s6 = sld [smem:[#allocation0]]
  $region30: #{layout_graph_model_forward.12} parent=0
    _
  %s8 = ssub.s32 1, %s6
  %s9 = scalar_select 0, %s8, %s6
  // Predicated region
  $region2: #{layout_graph_model_forward.12} parent=0 // pred_check
    _
  $region3: #{layout_graph_model_forward.12} parent=0 // pred_check_branch
    %11 = sbr.rel (0) target = $region5
  $region4: #{layout_graph_model_forward.12} parent=0 // pred_region
    _
  $region5: #{layout_graph_model_forward.12} parent=0 // pred_fallthru
    _
  // Predicated region
  $region6: #{layout_graph_model_forward.12} parent=0 // pred_check
    _
  $region7: #{layout_graph_model_forward.12} parent=0 // pred_check_branch
    %13 = sbr.rel (0) target = $region9
  $region8: #{layout_graph_model_forward.12} parent=0 // pred_region
    _
  $region9: #{layout_graph_model_forward.12} parent=0 // pred_fallthru
    _
  // Predicated region
  $region10: #{layout_graph_model_forward.12} parent=0 // pred_check
    _
  $region11: #{layout_graph_model_forward.12} parent=0 // pred_check_branch
    %15 = sbr.rel (0) target = $region13
  $region12: #{layout_graph_model_forward.12} parent=0 // pred_region
    _
  $region13: #{layout_graph_model_forward.12} parent=0 // pred_fallthru
    _
  // Predicated region
  $region14: #{layout_graph_model_forward.12} parent=0 // pred_check
    _
  $region15: #{layout_graph_model_forward.12} parent=0 // pred_check_branch
    %17 = sbr.rel (0) target = $region17
  $region16: #{layout_graph_model_forward.12} parent=0 // pred_region
    _
  $region17: #{layout_graph_model_forward.12} parent=0 // pred_fallthru
    _
  // Predicated region
  $region18: #{layout_graph_model_forward.12} parent=0 // pred_check
    _
  $region19: #{layout_graph_model_forward.12} parent=0 // pred_check_branch
    %19 = sbr.rel (0) target = $region21
  $region20: #{layout_graph_model_forward.12} parent=0 // pred_region
    _
  $region21: #{layout_graph_model_forward.12} parent=0 // pred_fallthru
    _
  %v20 = vld [vmem:[%s0] sm:$0xff]
  %v21 = vld [vmem:[%s0 + $0x8] sm:$0xff]
  %v22 = vld [vmem:[%s0 + $0x10] sm:$0xff]
  %v23 = vld [vmem:[%s0 + $0x18] sm:$0xff]
  %v24 = vunpack.c.l.bf16 %v20
  %v25 = vunpack.c.h.bf16 %v20
  %v26 = vunpack.c.l.bf16 %v21
  %v27 = vunpack.c.h.bf16 %v21
  %v28 = vunpack.c.l.bf16 %v22
  %v29 = vunpack.c.h.bf16 %v22
  %v30 = vunpack.c.l.bf16 %v23
  %v31 = vunpack.c.h.bf16 %v23
  %v32 = vld [vmem:[%s1] sm:$0xff]
  %v33 = vld [vmem:[%s1 + $0x8] sm:$0xff]
  %v34 = vld [vmem:[%s1 + $0x10] sm:$0xff]
  %v35 = vld [vmem:[%s1 + $0x18] sm:$0xff]
  %37 = vset.pattern.permute.xlu0 0
  %38 = vperm.xlu0 %37, %v32
  %v39 = vpop.permute.xlu0 %38
  %42 = vset.pattern.permute.xlu0 0
  %43 = vperm.xlu0 %42, %v33
  %v44 = vpop.permute.xlu0 %43
  %47 = vset.pattern.permute.xlu0 0
  %48 = vperm.xlu0 %47, %v34
  %v49 = vpop.permute.xlu0 %48
  %52 = vset.pattern.permute.xlu0 0
  %53 = vperm.xlu0 %52, %v35
  %v54 = vpop.permute.xlu0 %53
  %v56 = vsub.f32 %v24, %v39
  %v57 = vsub.f32 %v25, %v39
  %v58 = vsub.f32 %v26, %v44
  %v59 = vsub.f32 %v27, %v44
  %v60 = vsub.f32 %v28, %v49
  %v61 = vsub.f32 %v29, %v49
  %v62 = vsub.f32 %v30, %v54
  %v63 = vsub.f32 %v31, %v54
  %v64 = vld [vmem:[%s2] sm:$0xff]
  %v65 = vld [vmem:[%s2 + $0x8] sm:$0xff]
  %v66 = vld [vmem:[%s2 + $0x10] sm:$0xff]
  %v67 = vld [vmem:[%s2 + $0x18] sm:$0xff]
  %69 = vset.pattern.permute.xlu0 0
  %70 = vperm.xlu0 %69, %v64
  %v71 = vpop.permute.xlu0 %70
  %74 = vset.pattern.permute.xlu0 0
  %75 = vperm.xlu0 %74, %v65
  %v76 = vpop.permute.xlu0 %75
  %79 = vset.pattern.permute.xlu0 0
  %80 = vperm.xlu0 %79, %v66
  %v81 = vpop.permute.xlu0 %80
  %84 = vset.pattern.permute.xlu0 0
  %85 = vperm.xlu0 %84, %v67
  %v86 = vpop.permute.xlu0 %85
  %v88 = vmul.f32 %v56, %v71
  %v89 = vmul.f32 %v57, %v71
  %v90 = vmul.f32 %v58, %v76
  %v91 = vmul.f32 %v59, %v76
  %v92 = vmul.f32 %v60, %v81
  %v93 = vmul.f32 %v61, %v81
  %v94 = vmul.f32 %v62, %v86
  %v95 = vmul.f32 %v63, %v86
  %v96 = vld [vmem:[%s3] sm:$0x3]
  %v98 = vlaneseq
  %v99 = vshrl.u32 %v98, 7
  %v100 = vsub.s32 0, %v99
  %v101 = vrot.slane %v96, %v100
  %v102 = vlaneseq
  %v103 = vshrl.u32 %v102, 7
  %v104 = vsub.s32 1, %v103
  %v105 = vrot.slane %v96, %v104
  %v108 = vmul.f32 %v88, %v101
  %v109 = vmul.f32 %v89, %v105
  %v110 = vmul.f32 %v90, %v101
  %v111 = vmul.f32 %v91, %v105
  %v112 = vmul.f32 %v92, %v101
  %v113 = vmul.f32 %v93, %v105
  %v114 = vmul.f32 %v94, %v101
  %v115 = vmul.f32 %v95, %v105
  %v116 = vld [vmem:[%s4] sm:$0x3]
  %v118 = vlaneseq
  %v119 = vshrl.u32 %v118, 7
  %v120 = vsub.s32 0, %v119
  %v121 = vrot.slane %v116, %v120
  %v122 = vlaneseq
  %v123 = vshrl.u32 %v122, 7
  %v124 = vsub.s32 1, %v123
  %v125 = vrot.slane %v116, %v124
  %v128 = vadd.f32 %v108, %v121
  %v129 = vadd.f32 %v109, %v125
  %v130 = vadd.f32 %v110, %v121
  %v131 = vadd.f32 %v111, %v125
  %v132 = vadd.f32 %v112, %v121
  %v133 = vadd.f32 %v113, %v125
  %v134 = vadd.f32 %v114, %v121
  %v135 = vadd.f32 %v115, %v125
  %v136 = vpack.c.bf16 %v130, %v128
  %v137 = vpack.c.bf16 %v131, %v129
  %v138 = vpack.c.bf16 %v134, %v132
  %v139 = vpack.c.bf16 %v135, %v133
  %v144 = vunpack.c.l.b16 %v136
  %v145 = vunpack.c.l.b16 %v137
  %v146 = vunpack.c.h.b16 %v136
  %v147 = vunpack.c.h.b16 %v137
  %v148 = vunpack.c.l.b16 %v138
  %v149 = vunpack.c.l.b16 %v139
  %v150 = vunpack.c.h.b16 %v138
  %v151 = vunpack.c.h.b16 %v139
  %v152 = vpack.c.b16 %v145, %v144
  %v153 = vpack.c.b16 %v147, %v146
  %v154 = vpack.c.b16 %v149, %v148
  %v155 = vpack.c.b16 %v151, %v150
  %160 = vst [vmem:[%s5] sm:$0xff] %v152
  %161 = vst [vmem:[%s5 + $0x8] sm:$0xff] %v153
  %162 = vst [vmem:[%s5 + $0x10] sm:$0xff] %v154
  %163 = vst [vmem:[%s5 + $0x18] sm:$0xff] %v155
  // Predicated region
  $region22: #{layout_graph_model_forward.12} parent=0 // pred_check
    _
  $region23: #{layout_graph_model_forward.12} parent=0 // pred_check_branch
    %165 = sbr.rel (0) target = $region25
  $region24: #{layout_graph_model_forward.12} parent=0 // pred_region
    _
  $region25: #{layout_graph_model_forward.12} parent=0 // pred_fallthru
    _
  // Predicated region
  $region26: #{layout_graph_model_forward.12} parent=0 // pred_check
    _
  $region27: #{layout_graph_model_forward.12} parent=0 // pred_check_branch
    %167 = sbr.rel (0) target = $region29
  $region28: #{layout_graph_model_forward.12} parent=0 // pred_region
    _
  $region29: #{layout_graph_model_forward.12} parent=0 // pred_fallthru
    _

// kernel: layout_graph_model_forward.11
$region0: #{layout_graph_model_forward.11}
  #allocation0 [shape = 'u32[]', space=smem, size = 0x4, offset = 0x4, fixed_abs, tag = 'smem constant byte address 0x4 - core index']
  #allocation1 [shape = 'u32[144,128]{1,0:T(1,128)}', space=vmem, size = 0x12000, scoped, tag = 'internal scratch']
  %s0 = inlined_call_operand.vmem [shape: bf16[32,512], index: 0, kind: input, shape index: {}]
  %s1 = inlined_call_operand.vmem [shape: bf16[512,256], index: 1, kind: input, shape index: {}]
  %s2 = inlined_call_operand.vmem [shape: f32[1,256], index: 2, kind: input, shape index: {}]
  %s3 = inlined_call_operand.vmem [shape: bf16[32,256], index: 3, kind: output, shape index: {0}]
  %s4 = inlined_call_operand.vmem [shape: f32[32,1], index: 4, kind: output, shape index: {1}]
  %s5 = inlined_call_operand.vmem [shape: f32[32,1], index: 5, kind: output, shape index: {2}]
  %6 = xla_tuple %s3, %s4, %s5
  %s7 = sld [smem:[#allocation0]]
  $region38: #{layout_graph_model_forward.11} parent=0
    _
  %s9 = ssub.s32 1, %s7
  %s10 = scalar_select 0, %s9, %s7
  // Predicated region
  $region2: #{layout_graph_model_forward.11} parent=0 // pred_check
    _
  $region3: #{layout_graph_model_forward.11} parent=0 // pred_check_branch
    %12 = sbr.rel (0) target = $region5
  $region4: #{layout_graph_model_forward.11} parent=0 // pred_region
    _
  $region5: #{layout_graph_model_forward.11} parent=0 // pred_fallthru
    _
  // Predicated region
  $region6: #{layout_graph_model_forward.11} parent=0 // pred_check
    _
  $region7: #{layout_graph_model_forward.11} parent=0 // pred_check_branch
    %14 = sbr.rel (0) target = $region9
  $region8: #{layout_graph_model_forward.11} parent=0 // pred_region
    _
  $region9: #{layout_graph_model_forward.11} parent=0 // pred_fallthru
    _
  // Predicated region
  $region10: #{layout_graph_model_forward.11} parent=0 // pred_check
    _
  $region11: #{layout_graph_model_forward.11} parent=0 // pred_check_branch
    %16 = sbr.rel (0) target = $region13
  $region12: #{layout_graph_model_forward.11} parent=0 // pred_region
    _
  $region13: #{layout_graph_model_forward.11} parent=0 // pred_fallthru
    _
  %v17 = vld [vmem:[%s0] sm:$0xff]
  %v18 = vld [vmem:[%s0 + $0x8] sm:$0xff]
  %v19 = vld [vmem:[%s0 + $0x10] sm:$0xff]
  %v20 = vld [vmem:[%s0 + $0x18] sm:$0xff]
  %v21 = vld [vmem:[%s0 + $0x20] sm:$0xff]
  %v22 = vld [vmem:[%s0 + $0x28] sm:$0xff]
  %v23 = vld [vmem:[%s0 + $0x30] sm:$0xff]
  %v24 = vld [vmem:[%s0 + $0x38] sm:$0xff]
  %v25 = vld [vmem:[%s1] sm:$0xff]
  %v26 = vld [vmem:[%s1 + $0x8] sm:$0xff]
  %v27 = vld [vmem:[%s1 + $0x10] sm:$0xff]
  %v28 = vld [vmem:[%s1 + $0x18] sm:$0xff]
  %v29 = vld [vmem:[%s1 + $0x20] sm:$0xff]
  %v30 = vld [vmem:[%s1 + $0x28] sm:$0xff]
  %v31 = vld [vmem:[%s1 + $0x30] sm:$0xff]
  %v32 = vld [vmem:[%s1 + $0x38] sm:$0xff]
  %v33 = vld [vmem:[%s1 + $0x40] sm:$0xff]
  %v34 = vld [vmem:[%s1 + $0x48] sm:$0xff]
  %v35 = vld [vmem:[%s1 + $0x50] sm:$0xff]
  %v36 = vld [vmem:[%s1 + $0x58] sm:$0xff]
  %v37 = vld [vmem:[%s1 + $0x60] sm:$0xff]
  %v38 = vld [vmem:[%s1 + $0x68] sm:$0xff]
  %v39 = vld [vmem:[%s1 + $0x70] sm:$0xff]
  %v40 = vld [vmem:[%s1 + $0x78] sm:$0xff]
  %v41 = vld [vmem:[%s1 + $0x80] sm:$0xff]
  %v42 = vld [vmem:[%s1 + $0x88] sm:$0xff]
  %v43 = vld [vmem:[%s1 + $0x90] sm:$0xff]
  %v44 = vld [vmem:[%s1 + $0x98] sm:$0xff]
  %v45 = vld [vmem:[%s1 + $0xa0] sm:$0xff]
  %v46 = vld [vmem:[%s1 + $0xa8] sm:$0xff]
  %v47 = vld [vmem:[%s1 + $0xb0] sm:$0xff]
  %v48 = vld [vmem:[%s1 + $0xb8] sm:$0xff]
  %v49 = vld [vmem:[%s1 + $0xc0] sm:$0xff]
  %v50 = vld [vmem:[%s1 + $0xc8] sm:$0xff]
  %v51 = vld [vmem:[%s1 + $0xd0] sm:$0xff]
  %v52 = vld [vmem:[%s1 + $0xd8] sm:$0xff]
  %v53 = vld [vmem:[%s1 + $0xe0] sm:$0xff]
  %v54 = vld [vmem:[%s1 + $0xe8] sm:$0xff]
  %v55 = vld [vmem:[%s1 + $0xf0] sm:$0xff]
  %v56 = vld [vmem:[%s1 + $0xf8] sm:$0xff]
  %v57 = vld [vmem:[%s1 + $0x100] sm:$0xff]
  %v58 = vld [vmem:[%s1 + $0x108] sm:$0xff]
  %v59 = vld [vmem:[%s1 + $0x110] sm:$0xff]
  %v60 = vld [vmem:[%s1 + $0x118] sm:$0xff]
  %v61 = vld [vmem:[%s1 + $0x120] sm:$0xff]
  %v62 = vld [vmem:[%s1 + $0x128] sm:$0xff]
  %v63 = vld [vmem:[%s1 + $0x130] sm:$0xff]
  %v64 = vld [vmem:[%s1 + $0x138] sm:$0xff]
  %v65 = vld [vmem:[%s1 + $0x140] sm:$0xff]
  %v66 = vld [vmem:[%s1 + $0x148] sm:$0xff]
  %v67 = vld [vmem:[%s1 + $0x150] sm:$0xff]
  %v68 = vld [vmem:[%s1 + $0x158] sm:$0xff]
  %v69 = vld [vmem:[%s1 + $0x160] sm:$0xff]
  %v70 = vld [vmem:[%s1 + $0x168] sm:$0xff]
  %v71 = vld [vmem:[%s1 + $0x170] sm:$0xff]
  %v72 = vld [vmem:[%s1 + $0x178] sm:$0xff]
  %v73 = vld [vmem:[%s1 + $0x180] sm:$0xff]
  %v74 = vld [vmem:[%s1 + $0x188] sm:$0xff]
  %v75 = vld [vmem:[%s1 + $0x190] sm:$0xff]
  %v76 = vld [vmem:[%s1 + $0x198] sm:$0xff]
  %v77 = vld [vmem:[%s1 + $0x1a0] sm:$0xff]
  %v78 = vld [vmem:[%s1 + $0x1a8] sm:$0xff]
  %v79 = vld [vmem:[%s1 + $0x1b0] sm:$0xff]
  %v80 = vld [vmem:[%s1 + $0x1b8] sm:$0xff]
  %v81 = vld [vmem:[%s1 + $0x1c0] sm:$0xff]
  %v82 = vld [vmem:[%s1 + $0x1c8] sm:$0xff]
  %v83 = vld [vmem:[%s1 + $0x1d0] sm:$0xff]
  %v84 = vld [vmem:[%s1 + $0x1d8] sm:$0xff]
  %v85 = vld [vmem:[%s1 + $0x1e0] sm:$0xff]
  %v86 = vld [vmem:[%s1 + $0x1e8] sm:$0xff]
  %v87 = vld [vmem:[%s1 + $0x1f0] sm:$0xff]
  %v88 = vld [vmem:[%s1 + $0x1f8] sm:$0xff]
  %v89 = vld [vmem:[%s2] sm:$0x3]
  %v91 = vlaneseq
  %v92 = vshrl.u32 %v91, 7
  %v93 = vsub.s32 0, %v92
  %v94 = vrot.slane %v89, %v93
  %v95 = vlaneseq
  %v96 = vshrl.u32 %v95, 7
  %v97 = vsub.s32 1, %v96
  %v98 = vrot.slane %v89, %v97
  %v109 = vunpack.c.l.b16 %v17
  %v110 = vunpack.c.h.b16 %v17
  %v111 = vunpack.c.l.b16 %v18
  %v112 = vunpack.c.h.b16 %v18
  %v113 = vunpack.c.l.b16 %v19
  %v114 = vunpack.c.h.b16 %v19
  %v115 = vunpack.c.l.b16 %v20
  %v116 = vunpack.c.h.b16 %v20
  %v117 = vunpack.c.l.b16 %v21
  %v118 = vunpack.c.h.b16 %v21
  %v119 = vunpack.c.l.b16 %v22
  %v120 = vunpack.c.h.b16 %v22
  %v121 = vunpack.c.l.b16 %v23
  %v122 = vunpack.c.h.b16 %v23
  %v123 = vunpack.c.l.b16 %v24
  %v124 = vunpack.c.h.b16 %v24
  %v125 = vpack.c.b16 %v113, %v109
  %v126 = vpack.c.b16 %v114, %v110
  %v127 = vpack.c.b16 %v115, %v111
  %v128 = vpack.c.b16 %v116, %v112
  %v129 = vpack.c.b16 %v121, %v117
  %v130 = vpack.c.b16 %v122, %v118
  %v131 = vpack.c.b16 %v123, %v119
  %v132 = vpack.c.b16 %v124, %v120
  %v205 = vunpack.c.l.b16 %v25
  %v206 = vunpack.c.h.b16 %v25
  %v207 = vunpack.c.l.b16 %v26
  %v208 = vunpack.c.h.b16 %v26
  %v209 = vunpack.c.l.b16 %v27
  %v210 = vunpack.c.h.b16 %v27
  %v211 = vunpack.c.l.b16 %v28
  %v212 = vunpack.c.h.b16 %v28
  %v213 = vunpack.c.l.b16 %v29
  %v214 = vunpack.c.h.b16 %v29
  %v215 = vunpack.c.l.b16 %v30
  %v216 = vunpack.c.h.b16 %v30
  %v217 = vunpack.c.l.b16 %v31
  %v218 = vunpack.c.h.b16 %v31
  %v219 = vunpack.c.l.b16 %v32
  %v220 = vunpack.c.h.b16 %v32
  %v221 = vunpack.c.l.b16 %v33
  %v222 = vunpack.c.h.b16 %v33
  %v223 = vunpack.c.l.b16 %v34
  %v224 = vunpack.c.h.b16 %v34
  %v225 = vunpack.c.l.b16 %v35
  %v226 = vunpack.c.h.b16 %v35
  %v227 = vunpack.c.l.b16 %v36
  %v228 = vunpack.c.h.b16 %v36
  %v229 = vunpack.c.l.b16 %v37
  %v230 = vunpack.c.h.b16 %v37
  %v231 = vunpack.c.l.b16 %v38
  %v232 = vunpack.c.h.b16 %v38
  %v233 = vunpack.c.l.b16 %v39
  %v234 = vunpack.c.h.b16 %v39
  %v235 = vunpack.c.l.b16 %v40
  %v236 = vunpack.c.h.b16 %v40
  %v237 = vunpack.c.l.b16 %v41
  %v238 = vunpack.c.h.b16 %v41
  %v239 = vunpack.c.l.b16 %v42
  %v240 = vunpack.c.h.b16 %v42
  %v241 = vunpack.c.l.b16 %v43
  %v242 = vunpack.c.h.b16 %v43
  %v243 = vunpack.c.l.b16 %v44
  %v244 = vunpack.c.h.b16 %v44
  %v245 = vunpack.c.l.b16 %v45
  %v246 = vunpack.c.h.b16 %v45
  %v247 = vunpack.c.l.b16 %v46
  %v248 = vunpack.c.h.b16 %v46
  %v249 = vunpack.c.l.b16 %v47
  %v250 = vunpack.c.h.b16 %v47
  %v251 = vunpack.c.l.b16 %v48
  %v252 = vunpack.c.h.b16 %v48
  %v253 = vunpack.c.l.b16 %v49
  %v254 = vunpack.c.h.b16 %v49
  %v255 = vunpack.c.l.b16 %v50
  %v256 = vunpack.c.h.b16 %v50
  %v257 = vunpack.c.l.b16 %v51
  %v258 = vunpack.c.h.b16 %v51
  %v259 = vunpack.c.l.b16 %v52
  %v260 = vunpack.c.h.b16 %v52
  %v261 = vunpack.c.l.b16 %v53
  %v262 = vunpack.c.h.b16 %v53
  %v263 = vunpack.c.l.b16 %v54
  %v264 = vunpack.c.h.b16 %v54
  %v265 = vunpack.c.l.b16 %v55
  %v266 = vunpack.c.h.b16 %v55
  %v267 = vunpack.c.l.b16 %v56
  %v268 = vunpack.c.h.b16 %v56
  %v269 = vunpack.c.l.b16 %v57
  %v270 = vunpack.c.h.b16 %v57
  %v271 = vunpack.c.l.b16 %v58
  %v272 = vunpack.c.h.b16 %v58
  %v273 = vunpack.c.l.b16 %v59
  %v274 = vunpack.c.h.b16 %v59
  %v275 = vunpack.c.l.b16 %v60
  %v276 = vunpack.c.h.b16 %v60
  %v277 = vunpack.c.l.b16 %v61
  %v278 = vunpack.c.h.b16 %v61
  %v279 = vunpack.c.l.b16 %v62
  %v280 = vunpack.c.h.b16 %v62
  %v281 = vunpack.c.l.b16 %v63
  %v282 = vunpack.c.h.b16 %v63
  %v283 = vunpack.c.l.b16 %v64
  %v284 = vunpack.c.h.b16 %v64
  %v285 = vunpack.c.l.b16 %v65
  %v286 = vunpack.c.h.b16 %v65
  %v287 = vunpack.c.l.b16 %v66
  %v288 = vunpack.c.h.b16 %v66
  %v289 = vunpack.c.l.b16 %v67
  %v290 = vunpack.c.h.b16 %v67
  %v291 = vunpack.c.l.b16 %v68
  %v292 = vunpack.c.h.b16 %v68
  %v293 = vunpack.c.l.b16 %v69
  %v294 = vunpack.c.h.b16 %v69
  %v295 = vunpack.c.l.b16 %v70
  %v296 = vunpack.c.h.b16 %v70
  %v297 = vunpack.c.l.b16 %v71
  %v298 = vunpack.c.h.b16 %v71
  %v299 = vunpack.c.l.b16 %v72
  %v300 = vunpack.c.h.b16 %v72
  %v301 = vunpack.c.l.b16 %v73
  %v302 = vunpack.c.h.b16 %v73
  %v303 = vunpack.c.l.b16 %v74
  %v304 = vunpack.c.h.b16 %v74
  %v305 = vunpack.c.l.b16 %v75
  %v306 = vunpack.c.h.b16 %v75
  %v307 = vunpack.c.l.b16 %v76
  %v308 = vunpack.c.h.b16 %v76
  %v309 = vunpack.c.l.b16 %v77
  %v310 = vunpack.c.h.b16 %v77
  %v311 = vunpack.c.l.b16 %v78
  %v312 = vunpack.c.h.b16 %v78
  %v313 = vunpack.c.l.b16 %v79
  %v314 = vunpack.c.h.b16 %v79
  %v315 = vunpack.c.l.b16 %v80
  %v316 = vunpack.c.h.b16 %v80
  %v317 = vunpack.c.l.b16 %v81
  %v318 = vunpack.c.h.b16 %v81
  %v319 = vunpack.c.l.b16 %v82
  %v320 = vunpack.c.h.b16 %v82
  %v321 = vunpack.c.l.b16 %v83
  %v322 = vunpack.c.h.b16 %v83
  %v323 = vunpack.c.l.b16 %v84
  %v324 = vunpack.c.h.b16 %v84
  %v325 = vunpack.c.l.b16 %v85
  %v326 = vunpack.c.h.b16 %v85
  %v327 = vunpack.c.l.b16 %v86
  %v328 = vunpack.c.h.b16 %v86
  %v329 = vunpack.c.l.b16 %v87
  %v330 = vunpack.c.h.b16 %v87
  %v331 = vunpack.c.l.b16 %v88
  %v332 = vunpack.c.h.b16 %v88
  %v333 = vpack.c.b16 %v207, %v205
  %v334 = vpack.c.b16 %v208, %v206
  %v335 = vpack.c.b16 %v211, %v209
  %v336 = vpack.c.b16 %v212, %v210
  %v337 = vpack.c.b16 %v215, %v213
  %v338 = vpack.c.b16 %v216, %v214
  %v339 = vpack.c.b16 %v219, %v217
  %v340 = vpack.c.b16 %v220, %v218
  %v341 = vpack.c.b16 %v223, %v221
  %v342 = vpack.c.b16 %v224, %v222
  %v343 = vpack.c.b16 %v227, %v225
  %v344 = vpack.c.b16 %v228, %v226
  %v345 = vpack.c.b16 %v231, %v229
  %v346 = vpack.c.b16 %v232, %v230
  %v347 = vpack.c.b16 %v235, %v233
  %v348 = vpack.c.b16 %v236, %v234
  %v349 = vpack.c.b16 %v239, %v237
  %v350 = vpack.c.b16 %v240, %v238
  %v351 = vpack.c.b16 %v243, %v241
  %v352 = vpack.c.b16 %v244, %v242
  %v353 = vpack.c.b16 %v247, %v245
  %v354 = vpack.c.b16 %v248, %v246
  %v355 = vpack.c.b16 %v251, %v249
  %v356 = vpack.c.b16 %v252, %v250
  %v357 = vpack.c.b16 %v255, %v253
  %v358 = vpack.c.b16 %v256, %v254
  %v359 = vpack.c.b16 %v259, %v257
  %v360 = vpack.c.b16 %v260, %v258
  %v361 = vpack.c.b16 %v263, %v261
  %v362 = vpack.c.b16 %v264, %v262
  %v363 = vpack.c.b16 %v267, %v265
  %v364 = vpack.c.b16 %v268, %v266
  %v365 = vpack.c.b16 %v271, %v269
  %v366 = vpack.c.b16 %v272, %v270
  %v367 = vpack.c.b16 %v275, %v273
  %v368 = vpack.c.b16 %v276, %v274
  %v369 = vpack.c.b16 %v279, %v277
  %v370 = vpack.c.b16 %v280, %v278
  %v371 = vpack.c.b16 %v283, %v281
  %v372 = vpack.c.b16 %v284, %v282
  %v373 = vpack.c.b16 %v287, %v285
  %v374 = vpack.c.b16 %v288, %v286
  %v375 = vpack.c.b16 %v291, %v289
  %v376 = vpack.c.b16 %v292, %v290
  %v377 = vpack.c.b16 %v295, %v293
  %v378 = vpack.c.b16 %v296, %v294
  %v379 = vpack.c.b16 %v299, %v297
  %v380 = vpack.c.b16 %v300, %v298
  %v381 = vpack.c.b16 %v303, %v301
  %v382 = vpack.c.b16 %v304, %v302
  %v383 = vpack.c.b16 %v307, %v305
  %v384 = vpack.c.b16 %v308, %v306
  %v385 = vpack.c.b16 %v311, %v309
  %v386 = vpack.c.b16 %v312, %v310
  %v387 = vpack.c.b16 %v315, %v313
  %v388 = vpack.c.b16 %v316, %v314
  %v389 = vpack.c.b16 %v319, %v317
  %v390 = vpack.c.b16 %v320, %v318
  %v391 = vpack.c.b16 %v323, %v321
  %v392 = vpack.c.b16 %v324, %v322
  %v393 = vpack.c.b16 %v327, %v325
  %v394 = vpack.c.b16 %v328, %v326
  %v395 = vpack.c.b16 %v331, %v329
  %v396 = vpack.c.b16 %v332, %v330
  %461 = vmatprep.subr.bf16.mxu0 %v334
  %462 = vmatpush1.bf16.msra.mxu0 %v333
  %463 = vmatprep.subr.bf16.mxu0 %v336
  %464 = vmatpush1.bf16.msra.mxu0 %v335
  %465 = vmatprep.subr.bf16.mxu0 %v338
  %466 = vmatpush1.bf16.msra.mxu0 %v337
  %467 = vmatprep.subr.bf16.mxu0 %v340
  %468 = vmatpush1.bf16.msra.mxu0 %v339
  %469 = vmatprep.subr.bf16.mxu0 %v342
  %470 = vmatpush1.bf16.msra.mxu0 %v341
  %471 = vmatprep.subr.bf16.mxu0 %v344
  %472 = vmatpush1.bf16.msra.mxu0 %v343
  %473 = vmatprep.subr.bf16.mxu0 %v346
  %474 = vmatpush1.bf16.msra.mxu0 %v345
  %475 = vmatprep.subr.bf16.mxu0 %v348
  %476 = vmatpush1.bf16.msra.mxu0 %v347
  %477 = vmatprep.subr.bf16.mxu0 %v350
  %478 = vmatpush1.bf16.msra.mxu0 %v349
  %479 = vmatprep.subr.bf16.mxu0 %v352
  %480 = vmatpush1.bf16.msra.mxu0 %v351
  %481 = vmatprep.subr.bf16.mxu0 %v354
  %482 = vmatpush1.bf16.msra.mxu0 %v353
  %483 = vmatprep.subr.bf16.mxu0 %v356
  %484 = vmatpush1.bf16.msra.mxu0 %v355
  %485 = vmatprep.subr.bf16.mxu0 %v358
  %486 = vmatpush1.bf16.msra.mxu0 %v357
  %487 = vmatprep.subr.bf16.mxu0 %v360
  %488 = vmatpush1.bf16.msra.mxu0 %v359
  %489 = vmatprep.subr.bf16.mxu0 %v362
  %490 = vmatpush1.bf16.msra.mxu0 %v361
  %491 = vmatprep.subr.bf16.mxu0 %v364
  %492 = vmatpush1.bf16.msra.mxu0 %v363
  %493 = vmatprep.mubr.bf16.mxu0 %v126
  %494 = vmatmul.mubr.bf16.gmra.mrb[0].mxu0 %v125
  %v495 = vpop.f32.mrb[0].mxu0
  %v496 = vadd.f32 %v94, %v495
  %v497 = vpop.f32.mrb[0].mxu0
  %v498 = vadd.f32 %v98, %v497
  %v499 = vpop.f32.mrb[0].mxu0
  %v500 = vadd.f32 %v94, %v499
  %v501 = vpop.f32.mrb[0].mxu0
  %v502 = vadd.f32 %v98, %v501
  %503 = vmatprep.mubr.bf16.mxu0 %v130
  %504 = vmatmul.mubr.bf16.gmra.mrb[0].mxu0 %v129
  %v505 = vpop.f32.mrb[0].mxu0
  %v506 = vadd.f32 %v94, %v505
  %v507 = vpop.f32.mrb[0].mxu0
  %v508 = vadd.f32 %v98, %v507
  %v509 = vpop.f32.mrb[0].mxu0
  %v510 = vadd.f32 %v94, %v509
  %v511 = vpop.f32.mrb[0].mxu0
  %v512 = vadd.f32 %v98, %v511
  %513 = vdwg.mxu0
  %514 = vmatprep.subr.bf16.mxu0 %v366
  %515 = vmatpush1.bf16.msra.mxu0 %v365
  %516 = vmatprep.subr.bf16.mxu0 %v368
  %517 = vmatpush1.bf16.msra.mxu0 %v367
  %518 = vmatprep.subr.bf16.mxu0 %v370
  %519 = vmatpush1.bf16.msra.mxu0 %v369
  %520 = vmatprep.subr.bf16.mxu0 %v372
  %521 = vmatpush1.bf16.msra.mxu0 %v371
  %522 = vmatprep.subr.bf16.mxu0 %v374
  %523 = vmatpush1.bf16.msra.mxu0 %v373
  %524 = vmatprep.subr.bf16.mxu0 %v376
  %525 = vmatpush1.bf16.msra.mxu0 %v375
  %526 = vmatprep.subr.bf16.mxu0 %v378
  %527 = vmatpush1.bf16.msra.mxu0 %v377
  %528 = vmatprep.subr.bf16.mxu0 %v380
  %529 = vmatpush1.bf16.msra.mxu0 %v379
  %530 = vmatprep.subr.bf16.mxu0 %v382
  %531 = vmatpush1.bf16.msra.mxu0 %v381
  %532 = vmatprep.subr.bf16.mxu0 %v384
  %533 = vmatpush1.bf16.msra.mxu0 %v383
  %534 = vmatprep.subr.bf16.mxu0 %v386
  %535 = vmatpush1.bf16.msra.mxu0 %v385
  %536 = vmatprep.subr.bf16.mxu0 %v388
  %537 = vmatpush1.bf16.msra.mxu0 %v387
  %538 = vmatprep.subr.bf16.mxu0 %v390
  %539 = vmatpush1.bf16.msra.mxu0 %v389
  %540 = vmatprep.subr.bf16.mxu0 %v392
  %541 = vmatpush1.bf16.msra.mxu0 %v391
  %542 = vmatprep.subr.bf16.mxu0 %v394
  %543 = vmatpush1.bf16.msra.mxu0 %v393
  %544 = vmatprep.subr.bf16.mxu0 %v396
  %545 = vmatpush1.bf16.msra.mxu0 %v395
  %546 = vmatprep.mubr.bf16.mxu0 %v128
  %547 = vmatmul.mubr.bf16.gmra.mrb[0].mxu0 %v127
  %v548 = vpop.f32.mrb[0].mxu0
  %v549 = vadd.f32 %v496, %v548
  %v550 = vpop.f32.mrb[0].mxu0
  %v551 = vadd.f32 %v498, %v550
  %v552 = vpop.f32.mrb[0].mxu0
  %v553 = vadd.f32 %v500, %v552
  %v554 = vpop.f32.mrb[0].mxu0
  %v555 = vadd.f32 %v502, %v554
  %556 = vmatprep.mubr.bf16.mxu0 %v132
  %557 = vmatmul.mubr.bf16.gmra.mrb[0].mxu0 %v131
  %v558 = vpop.f32.mrb[0].mxu0
  %v559 = vadd.f32 %v506, %v558
  %v560 = vpop.f32.mrb[0].mxu0
  %v561 = vadd.f32 %v508, %v560
  %v562 = vpop.f32.mrb[0].mxu0
  %v563 = vadd.f32 %v510, %v562
  %v564 = vpop.f32.mrb[0].mxu0
  %v565 = vadd.f32 %v512, %v564
  %566 = vdwg.mxu0
  %vm567 = vcmp.gt.f32.partialorder %v549, 0.0
  %vm568 = vcmp.gt.f32.partialorder %v551, 0.0
  %vm569 = vcmp.gt.f32.partialorder %v553, 0.0
  %vm570 = vcmp.gt.f32.partialorder %v555, 0.0
  %vm571 = vcmp.gt.f32.partialorder %v559, 0.0
  %vm572 = vcmp.gt.f32.partialorder %v561, 0.0
  %vm573 = vcmp.gt.f32.partialorder %v563, 0.0
  %vm574 = vcmp.gt.f32.partialorder %v565, 0.0
  %v575 = vmul.f32 %v549, 0.01
  %v576 = vmul.f32 %v551, 0.01
  %v577 = vmul.f32 %v553, 0.01
  %v578 = vmul.f32 %v555, 0.01
  %v579 = vmul.f32 %v559, 0.01
  %v580 = vmul.f32 %v561, 0.01
  %v581 = vmul.f32 %v563, 0.01
  %v582 = vmul.f32 %v565, 0.01
  %v583 = vsel %vm567, %v549, %v575
  %v584 = vsel %vm568, %v551, %v576
  %v585 = vsel %vm569, %v553, %v577
  %v586 = vsel %vm570, %v555, %v578
  %v587 = vsel %vm571, %v559, %v579
  %v588 = vsel %vm572, %v561, %v580
  %v589 = vsel %vm573, %v563, %v581
  %v590 = vsel %vm574, %v565, %v582
  %v591 = vpack.c.bf16 %v585, %v583
  %v592 = vpack.c.bf16 %v586, %v584
  %v593 = vpack.c.bf16 %v589, %v587
  %v594 = vpack.c.bf16 %v590, %v588
  %v599 = vunpack.c.l.b16 %v591
  %v600 = vunpack.c.l.b16 %v592
  %v601 = vunpack.c.h.b16 %v591
  %v602 = vunpack.c.h.b16 %v592
  %v603 = vunpack.c.l.b16 %v593
  %v604 = vunpack.c.l.b16 %v594
  %v605 = vunpack.c.h.b16 %v593
  %v606 = vunpack.c.h.b16 %v594
  %v607 = vpack.c.b16 %v600, %v599
  %v608 = vpack.c.b16 %v602, %v601
  %v609 = vpack.c.b16 %v604, %v603
  %v610 = vpack.c.b16 %v606, %v605
  %615 = vst [vmem:[%s3] sm:$0xff] %v607
  %616 = vst [vmem:[%s3 + $0x8] sm:$0xff] %v608
  %617 = vst [vmem:[%s3 + $0x10] sm:$0xff] %v609
  %618 = vst [vmem:[%s3 + $0x18] sm:$0xff] %v610
  %v619 = vadd.f32 %v583, %v584
  %620 = vadd.xlane.f32.xlu0 %v619
  %v621 = vpop.xlane.xlu0 %620
  %v622 = vadd.f32 %v585, %v586
  %623 = vadd.xlane.f32.xlu0 %v622
  %v624 = vpop.xlane.xlu0 %623
  %v625 = vadd.f32 %v587, %v588
  %626 = vadd.xlane.f32.xlu0 %v625
  %v627 = vpop.xlane.xlu0 %626
  %v628 = vadd.f32 %v589, %v590
  %629 = vadd.xlane.f32.xlu0 %v628
  %v630 = vpop.xlane.xlu0 %629
  %vm631 = vcmask 7168
  %632 = vst.msk [vmem:[%s4] sm:$0xff] %vm631, %v621
  %633 = vst.msk [vmem:[%s4 + $0x8] sm:$0xff] %vm631, %v624
  %634 = vst.msk [vmem:[%s4 + $0x10] sm:$0xff] %vm631, %v627
  %635 = vst.msk [vmem:[%s4 + $0x18] sm:$0xff] %vm631, %v630
  %v636 = vmul.f32 %v583, %v583
  %v637 = vmul.f32 %v584, %v584
  %v638 = vmul.f32 %v585, %v585
  %v639 = vmul.f32 %v586, %v586
  %v640 = vmul.f32 %v587, %v587
  %v641 = vmul.f32 %v588, %v588
  %v642 = vmul.f32 %v589, %v589
  %v643 = vmul.f32 %v590, %v590
  %v644 = vadd.f32 %v636, %v637
  %645 = vadd.xlane.f32.xlu0 %v644
  %v646 = vpop.xlane.xlu0 %645
  %v647 = vadd.f32 %v638, %v639
  %648 = vadd.xlane.f32.xlu0 %v647
  %v649 = vpop.xlane.xlu0 %648
  %v650 = vadd.f32 %v640, %v641
  %651 = vadd.xlane.f32.xlu0 %v650
  %v652 = vpop.xlane.xlu0 %651
  %v653 = vadd.f32 %v642, %v643
  %654 = vadd.xlane.f32.xlu0 %v653
  %v655 = vpop.xlane.xlu0 %654
  %656 = vst.msk [vmem:[%s5] sm:$0xff] %vm631, %v646
  %657 = vst.msk [vmem:[%s5 + $0x8] sm:$0xff] %vm631, %v649
  %658 = vst.msk [vmem:[%s5 + $0x10] sm:$0xff] %vm631, %v652
  %659 = vst.msk [vmem:[%s5 + $0x18] sm:$0xff] %vm631, %v655
  // Predicated region
  $region14: #{layout_graph_model_forward.11} parent=0 // pred_check
    _
  $region15: #{layout_graph_model_forward.11} parent=0 // pred_check_branch
    %661 = sbr.rel (0) target = $region17
  $region16: #{layout_graph_model_forward.11} parent=0 // pred_region
    _
  $region17: #{layout_graph_model_forward.11} parent=0 // pred_fallthru
    _
  // Predicated region
  $region18: #{layout_graph_model_forward.11} parent=0 // pred_check
    _
  $region19: #{layout_graph_model_forward.11} parent=0 // pred_check_branch
    %663 = sbr.rel (0) target = $region21
  $region20: #{layout_graph_model_forward.11} parent=0 // pred_region
    _
  $region21: #{layout_graph_model_forward.11} parent=0 // pred_fallthru
    _
  // Predicated region
  $region22: #{layout_graph_model_forward.11} parent=0 // pred_check
    _
  $region23: #{layout_graph_model_forward.11} parent=0 // pred_check_branch
    %665 = sbr.rel (0) target = $region25
  $region24: #{layout_graph_model_forward.11} parent=0 // pred_region
    _
  $region25: #{layout_graph_model_forward.11} parent=0 // pred_fallthru
    _
  // Predicated region
  $region26: #{layout_graph_model_forward.11} parent=0 // pred_check
    _
  $region27: #{layout_graph_model_forward.11} parent=0 // pred_check_branch
    %667 = sbr.rel (0) target = $region29
  $region28: #{layout_graph_model_forward.11} parent=0 // pred_region
    _
  $region29: #{layout_graph_model_forward.11} parent=0 // pred_fallthru
    _
  // Predicated region
  $region30: #{layout_graph_model_forward.11} parent=0 // pred_check
    _
  $region31: #{layout_graph_model_forward.11} parent=0 // pred_check_branch
    %669 = sbr.rel (0) target = $region33
  $region32: #{layout_graph_model_forward.11} parent=0 // pred_region
    _
  $region33: #{layout_graph_model_forward.11} parent=0 // pred_fallthru
    _
  // Predicated region
  $region34: #{layout_graph_model_forward.11} parent=0 // pred_check
    _
  $region35: #{layout_graph_model_forward.11} parent=0 // pred_check_branch
    %671 = sbr.rel (0) target = $region37
  $region36: #{layout_graph_model_forward.11} parent=0 // pred_region
    _
  $region37: #{layout_graph_model_forward.11} parent=0 // pred_fallthru
    _

// kernel: layout_graph_model_forward.14
$region0: #{layout_graph_model_forward.14}
  #allocation0 [shape = 'u32[]', space=smem, size = 0x4, offset = 0x4, fixed_abs, tag = 'smem constant byte address 0x4 - core index']
  #allocation1 [shape = 'u32[144,128]{1,0:T(1,128)}', space=vmem, size = 0x12000, scoped, tag = 'internal scratch']
  %s0 = inlined_call_operand.vmem [shape: bf16[32,512], index: 0, kind: input, shape index: {}]
  %s1 = inlined_call_operand.vmem [shape: f32[1,512], index: 1, kind: input, shape index: {}]
  %s2 = inlined_call_operand.vmem [shape: f32[1,512], index: 2, kind: input, shape index: {}]
  %s3 = inlined_call_operand.vmem [shape: bf16[32,512], index: 3, kind: output, shape index: {}]
  %s4 = sld [smem:[#allocation0]]
  $region22: #{layout_graph_model_forward.14} parent=0
    _
  %s6 = ssub.s32 1, %s4
  %s7 = scalar_select 0, %s6, %s4
  // Predicated region
  $region2: #{layout_graph_model_forward.14} parent=0 // pred_check
    _
  $region3: #{layout_graph_model_forward.14} parent=0 // pred_check_branch
    %9 = sbr.rel (0) target = $region5
  $region4: #{layout_graph_model_forward.14} parent=0 // pred_region
    _
  $region5: #{layout_graph_model_forward.14} parent=0 // pred_fallthru
    _
  // Predicated region
  $region6: #{layout_graph_model_forward.14} parent=0 // pred_check
    _
  $region7: #{layout_graph_model_forward.14} parent=0 // pred_check_branch
    %11 = sbr.rel (0) target = $region9
  $region8: #{layout_graph_model_forward.14} parent=0 // pred_region
    _
  $region9: #{layout_graph_model_forward.14} parent=0 // pred_fallthru
    _
  // Predicated region
  $region10: #{layout_graph_model_forward.14} parent=0 // pred_check
    _
  $region11: #{layout_graph_model_forward.14} parent=0 // pred_check_branch
    %13 = sbr.rel (0) target = $region13
  $region12: #{layout_graph_model_forward.14} parent=0 // pred_region
    _
  $region13: #{layout_graph_model_forward.14} parent=0 // pred_fallthru
    _
  %v14 = vld [vmem:[%s0] sm:$0xff]
  %v15 = vld [vmem:[%s0 + $0x8] sm:$0xff]
  %v16 = vld [vmem:[%s0 + $0x10] sm:$0xff]
  %v17 = vld [vmem:[%s0 + $0x18] sm:$0xff]
  %v18 = vld [vmem:[%s0 + $0x20] sm:$0xff]
  %v19 = vld [vmem:[%s0 + $0x28] sm:$0xff]
  %v20 = vld [vmem:[%s0 + $0x30] sm:$0xff]
  %v21 = vld [vmem:[%s0 + $0x38] sm:$0xff]
  %v22 = vunpack.c.l.bf16 %v14
  %v23 = vunpack.c.h.bf16 %v14
  %v24 = vunpack.c.l.bf16 %v15
  %v25 = vunpack.c.h.bf16 %v15
  %v26 = vunpack.c.l.bf16 %v16
  %v27 = vunpack.c.h.bf16 %v16
  %v28 = vunpack.c.l.bf16 %v17
  %v29 = vunpack.c.h.bf16 %v17
  %v30 = vunpack.c.l.bf16 %v18
  %v31 = vunpack.c.h.bf16 %v18
  %v32 = vunpack.c.l.bf16 %v19
  %v33 = vunpack.c.h.bf16 %v19
  %v34 = vunpack.c.l.bf16 %v20
  %v35 = vunpack.c.h.bf16 %v20
  %v36 = vunpack.c.l.bf16 %v21
  %v37 = vunpack.c.h.bf16 %v21
  %v38 = vld [vmem:[%s1] sm:$0xf]
  %v40 = vlaneseq
  %v41 = vshrl.u32 %v40, 7
  %v42 = vsub.s32 0, %v41
  %v43 = vrot.slane %v38, %v42
  %v44 = vlaneseq
  %v45 = vshrl.u32 %v44, 7
  %v46 = vsub.s32 1, %v45
  %v47 = vrot.slane %v38, %v46
  %v48 = vlaneseq
  %v49 = vshrl.u32 %v48, 7
  %v50 = vsub.s32 2, %v49
  %v51 = vrot.slane %v38, %v50
  %v52 = vlaneseq
  %v53 = vshrl.u32 %v52, 7
  %v54 = vsub.s32 3, %v53
  %v55 = vrot.slane %v38, %v54
  %v60 = vsub.f32 %v22, %v43
  %v61 = vsub.f32 %v23, %v47
  %v62 = vsub.f32 %v24, %v51
  %v63 = vsub.f32 %v25, %v55
  %v64 = vsub.f32 %v26, %v43
  %v65 = vsub.f32 %v27, %v47
  %v66 = vsub.f32 %v28, %v51
  %v67 = vsub.f32 %v29, %v55
  %v68 = vsub.f32 %v30, %v43
  %v69 = vsub.f32 %v31, %v47
  %v70 = vsub.f32 %v32, %v51
  %v71 = vsub.f32 %v33, %v55
  %v72 = vsub.f32 %v34, %v43
  %v73 = vsub.f32 %v35, %v47
  %v74 = vsub.f32 %v36, %v51
  %v75 = vsub.f32 %v37, %v55
  %v76 = vld [vmem:[%s2] sm:$0xf]
  %v78 = vlaneseq
  %v79 = vshrl.u32 %v78, 7
  %v80 = vsub.s32 0, %v79
  %v81 = vrot.slane %v76, %v80
  %v82 = vlaneseq
  %v83 = vshrl.u32 %v82, 7
  %v84 = vsub.s32 1, %v83
  %v85 = vrot.slane %v76, %v84
  %v86 = vlaneseq
  %v87 = vshrl.u32 %v86, 7
  %v88 = vsub.s32 2, %v87
  %v89 = vrot.slane %v76, %v88
  %v90 = vlaneseq
  %v91 = vshrl.u32 %v90, 7
  %v92 = vsub.s32 3, %v91
  %v93 = vrot.slane %v76, %v92
  %v98 = vmul.f32 %v60, %v81
  %v99 = vmul.f32 %v61, %v85
  %v100 = vmul.f32 %v62, %v89
  %v101 = vmul.f32 %v63, %v93
  %v102 = vmul.f32 %v64, %v81
  %v103 = vmul.f32 %v65, %v85
  %v104 = vmul.f32 %v66, %v89
  %v105 = vmul.f32 %v67, %v93
  %v106 = vmul.f32 %v68, %v81
  %v107 = vmul.f32 %v69, %v85
  %v108 = vmul.f32 %v70, %v89
  %v109 = vmul.f32 %v71, %v93
  %v110 = vmul.f32 %v72, %v81
  %v111 = vmul.f32 %v73, %v85
  %v112 = vmul.f32 %v74, %v89
  %v113 = vmul.f32 %v75, %v93
  %v114 = vmax.f32 %v98, 0.0
  %v115 = vmax.f32 %v99, 0.0
  %v116 = vmax.f32 %v100, 0.0
  %v117 = vmax.f32 %v101, 0.0
  %v118 = vmax.f32 %v102, 0.0
  %v119 = vmax.f32 %v103, 0.0
  %v120 = vmax.f32 %v104, 0.0
  %v121 = vmax.f32 %v105, 0.0
  %v122 = vmax.f32 %v106, 0.0
  %v123 = vmax.f32 %v107, 0.0
  %v124 = vmax.f32 %v108, 0.0
  %v125 = vmax.f32 %v109, 0.0
  %v126 = vmax.f32 %v110, 0.0
  %v127 = vmax.f32 %v111, 0.0
  %v128 = vmax.f32 %v112, 0.0
  %v129 = vmax.f32 %v113, 0.0
  %v130 = vpack.c.bf16 %v118, %v114
  %v131 = vpack.c.bf16 %v119, %v115
  %v132 = vpack.c.bf16 %v120, %v116
  %v133 = vpack.c.bf16 %v121, %v117
  %v134 = vpack.c.bf16 %v126, %v122
  %v135 = vpack.c.bf16 %v127, %v123
  %v136 = vpack.c.bf16 %v128, %v124
  %v137 = vpack.c.bf16 %v129, %v125
  %v146 = vunpack.c.l.b16 %v130
  %v147 = vunpack.c.l.b16 %v131
  %v148 = vunpack.c.l.b16 %v132
  %v149 = vunpack.c.l.b16 %v133
  %v150 = vunpack.c.h.b16 %v130
  %v151 = vunpack.c.h.b16 %v131
  %v152 = vunpack.c.h.b16 %v132
  %v153 = vunpack.c.h.b16 %v133
  %v154 = vunpack.c.l.b16 %v134
  %v155 = vunpack.c.l.b16 %v135
  %v156 = vunpack.c.l.b16 %v136
  %v157 = vunpack.c.l.b16 %v137
  %v158 = vunpack.c.h.b16 %v134
  %v159 = vunpack.c.h.b16 %v135
  %v160 = vunpack.c.h.b16 %v136
  %v161 = vunpack.c.h.b16 %v137
  %v162 = vpack.c.b16 %v147, %v146
  %v163 = vpack.c.b16 %v149, %v148
  %v164 = vpack.c.b16 %v151, %v150
  %v165 = vpack.c.b16 %v153, %v152
  %v166 = vpack.c.b16 %v155, %v154
  %v167 = vpack.c.b16 %v157, %v156
  %v168 = vpack.c.b16 %v159, %v158
  %v169 = vpack.c.b16 %v161, %v160
  %178 = vst [vmem:[%s3] sm:$0xff] %v162
  %179 = vst [vmem:[%s3 + $0x8] sm:$0xff] %v163
  %180 = vst [vmem:[%s3 + $0x10] sm:$0xff] %v164
  %181 = vst [vmem:[%s3 + $0x18] sm:$0xff] %v165
  %182 = vst [vmem:[%s3 + $0x20] sm:$0xff] %v166
  %183 = vst [vmem:[%s3 + $0x28] sm:$0xff] %v167
  %184 = vst [vmem:[%s3 + $0x30] sm:$0xff] %v168
  %185 = vst [vmem:[%s3 + $0x38] sm:$0xff] %v169
  // Predicated region
  $region14: #{layout_graph_model_forward.14} parent=0 // pred_check
    _
  $region15: #{layout_graph_model_forward.14} parent=0 // pred_check_branch
    %187 = sbr.rel (0) target = $region17
  $region16: #{layout_graph_model_forward.14} parent=0 // pred_region
    _
  $region17: #{layout_graph_model_forward.14} parent=0 // pred_fallthru
    _
  // Predicated region
  $region18: #{layout_graph_model_forward.14} parent=0 // pred_check
    _
  $region19: #{layout_graph_model_forward.14} parent=0 // pred_check_branch
    %189 = sbr.rel (0) target = $region21
  $region20: #{layout_graph_model_forward.14} parent=0 // pred_region
    _
  $region21: #{layout_graph_model_forward.14} parent=0 // pred_fallthru
    _

// kernel: layout_graph_model_forward.13
$region0: #{layout_graph_model_forward.13}
  #allocation0 [shape = 'u32[]', space=smem, size = 0x4, offset = 0x4, fixed_abs, tag = 'smem constant byte address 0x4 - core index']
  #allocation1 [shape = 'u32[144,128]{1,0:T(1,128)}', space=vmem, size = 0x12000, scoped, tag = 'internal scratch']
  %s0 = inlined_call_operand.vmem [shape: bf16[32,256], index: 0, kind: input, shape index: {}]
  %s1 = inlined_call_operand.vmem [shape: bf16[32,256], index: 1, kind: input, shape index: {}]
  %s2 = inlined_call_operand.vmem [shape: bf16[256,512], index: 2, kind: input, shape index: {}]
  %s3 = inlined_call_operand.vmem [shape: bf16[256,512], index: 3, kind: input, shape index: {}]
  %s4 = inlined_call_operand.vmem [shape: f32[1,512], index: 4, kind: input, shape index: {}]
  %s5 = inlined_call_operand.vmem [shape: bf16[32,512], index: 5, kind: output, shape index: {0}]
  %s6 = inlined_call_operand.vmem [shape: f32[8,512], index: 6, kind: output, shape index: {1}]
  %s7 = inlined_call_operand.vmem [shape: f32[8,512], index: 7, kind: output, shape index: {2}]
  %8 = xla_tuple %s5, %s6, %s7
  %s9 = sld [smem:[#allocation0]]
  $region46: #{layout_graph_model_forward.13} parent=0
    _
  %s11 = ssub.s32 1, %s9
  %s12 = scalar_select 0, %s11, %s9
  // Predicated region
  $region2: #{layout_graph_model_forward.13} parent=0 // pred_check
    _
  $region3: #{layout_graph_model_forward.13} parent=0 // pred_check_branch
    %14 = sbr.rel (0) target = $region5
  $region4: #{layout_graph_model_forward.13} parent=0 // pred_region
    _
  $region5: #{layout_graph_model_forward.13} parent=0 // pred_fallthru
    _
  // Predicated region
  $region6: #{layout_graph_model_forward.13} parent=0 // pred_check
    _
  $region7: #{layout_graph_model_forward.13} parent=0 // pred_check_branch
    %16 = sbr.rel (0) target = $region9
  $region8: #{layout_graph_model_forward.13} parent=0 // pred_region
    _
  $region9: #{layout_graph_model_forward.13} parent=0 // pred_fallthru
    _
  // Predicated region
  $region10: #{layout_graph_model_forward.13} parent=0 // pred_check
    _
  $region11: #{layout_graph_model_forward.13} parent=0 // pred_check_branch
    %18 = sbr.rel (0) target = $region13
  $region12: #{layout_graph_model_forward.13} parent=0 // pred_region
    _
  $region13: #{layout_graph_model_forward.13} parent=0 // pred_fallthru
    _
  // Predicated region
  $region14: #{layout_graph_model_forward.13} parent=0 // pred_check
    _
  $region15: #{layout_graph_model_forward.13} parent=0 // pred_check_branch
    %20 = sbr.rel (0) target = $region17
  $region16: #{layout_graph_model_forward.13} parent=0 // pred_region
    _
  $region17: #{layout_graph_model_forward.13} parent=0 // pred_fallthru
    _
  // Predicated region
  $region18: #{layout_graph_model_forward.13} parent=0 // pred_check
    _
  $region19: #{layout_graph_model_forward.13} parent=0 // pred_check_branch
    %22 = sbr.rel (0) target = $region21
  $region20: #{layout_graph_model_forward.13} parent=0 // pred_region
    _
  $region21: #{layout_graph_model_forward.13} parent=0 // pred_fallthru
    _
  %v23 = vld [vmem:[%s0] sm:$0xff]
  %v24 = vld [vmem:[%s0 + $0x8] sm:$0xff]
  %v25 = vld [vmem:[%s0 + $0x10] sm:$0xff]
  %v26 = vld [vmem:[%s0 + $0x18] sm:$0xff]
  %v27 = vld [vmem:[%s2] sm:$0xff]
  %v28 = vld [vmem:[%s2 + $0x8] sm:$0xff]
  %v29 = vld [vmem:[%s2 + $0x10] sm:$0xff]
  %v30 = vld [vmem:[%s2 + $0x18] sm:$0xff]
  %v31 = vld [vmem:[%s2 + $0x20] sm:$0xff]
  %v32 = vld [vmem:[%s2 + $0x28] sm:$0xff]
  %v33 = vld [vmem:[%s2 + $0x30] sm:$0xff]
  %v34 = vld [vmem:[%s2 + $0x38] sm:$0xff]
  %v35 = vld [vmem:[%s2 + $0x40] sm:$0xff]
  %v36 = vld [vmem:[%s2 + $0x48] sm:$0xff]
  %v37 = vld [vmem:[%s2 + $0x50] sm:$0xff]
  %v38 = vld [vmem:[%s2 + $0x58] sm:$0xff]
  %v39 = vld [vmem:[%s2 + $0x60] sm:$0xff]
  %v40 = vld [vmem:[%s2 + $0x68] sm:$0xff]
  %v41 = vld [vmem:[%s2 + $0x70] sm:$0xff]
  %v42 = vld [vmem:[%s2 + $0x78] sm:$0xff]
  %v43 = vld [vmem:[%s2 + $0x80] sm:$0xff]
  %v44 = vld [vmem:[%s2 + $0x88] sm:$0xff]
  %v45 = vld [vmem:[%s2 + $0x90] sm:$0xff]
  %v46 = vld [vmem:[%s2 + $0x98] sm:$0xff]
  %v47 = vld [vmem:[%s2 + $0xa0] sm:$0xff]
  %v48 = vld [vmem:[%s2 + $0xa8] sm:$0xff]
  %v49 = vld [vmem:[%s2 + $0xb0] sm:$0xff]
  %v50 = vld [vmem:[%s2 + $0xb8] sm:$0xff]
  %v51 = vld [vmem:[%s2 + $0xc0] sm:$0xff]
  %v52 = vld [vmem:[%s2 + $0xc8] sm:$0xff]
  %v53 = vld [vmem:[%s2 + $0xd0] sm:$0xff]
  %v54 = vld [vmem:[%s2 + $0xd8] sm:$0xff]
  %v55 = vld [vmem:[%s2 + $0xe0] sm:$0xff]
  %v56 = vld [vmem:[%s2 + $0xe8] sm:$0xff]
  %v57 = vld [vmem:[%s2 + $0xf0] sm:$0xff]
  %v58 = vld [vmem:[%s2 + $0xf8] sm:$0xff]
  %v59 = vld [vmem:[%s2 + $0x100] sm:$0xff]
  %v60 = vld [vmem:[%s2 + $0x108] sm:$0xff]
  %v61 = vld [vmem:[%s2 + $0x110] sm:$0xff]
  %v62 = vld [vmem:[%s2 + $0x118] sm:$0xff]
  %v63 = vld [vmem:[%s2 + $0x120] sm:$0xff]
  %v64 = vld [vmem:[%s2 + $0x128] sm:$0xff]
  %v65 = vld [vmem:[%s2 + $0x130] sm:$0xff]
  %v66 = vld [vmem:[%s2 + $0x138] sm:$0xff]
  %v67 = vld [vmem:[%s2 + $0x140] sm:$0xff]
  %v68 = vld [vmem:[%s2 + $0x148] sm:$0xff]
  %v69 = vld [vmem:[%s2 + $0x150] sm:$0xff]
  %v70 = vld [vmem:[%s2 + $0x158] sm:$0xff]
  %v71 = vld [vmem:[%s2 + $0x160] sm:$0xff]
  %v72 = vld [vmem:[%s2 + $0x168] sm:$0xff]
  %v73 = vld [vmem:[%s2 + $0x170] sm:$0xff]
  %v74 = vld [vmem:[%s2 + $0x178] sm:$0xff]
  %v75 = vld [vmem:[%s2 + $0x180] sm:$0xff]
  %v76 = vld [vmem:[%s2 + $0x188] sm:$0xff]
  %v77 = vld [vmem:[%s2 + $0x190] sm:$0xff]
  %v78 = vld [vmem:[%s2 + $0x198] sm:$0xff]
  %v79 = vld [vmem:[%s2 + $0x1a0] sm:$0xff]
  %v80 = vld [vmem:[%s2 + $0x1a8] sm:$0xff]
  %v81 = vld [vmem:[%s2 + $0x1b0] sm:$0xff]
  %v82 = vld [vmem:[%s2 + $0x1b8] sm:$0xff]
  %v83 = vld [vmem:[%s2 + $0x1c0] sm:$0xff]
  %v84 = vld [vmem:[%s2 + $0x1c8] sm:$0xff]
  %v85 = vld [vmem:[%s2 + $0x1d0] sm:$0xff]
  %v86 = vld [vmem:[%s2 + $0x1d8] sm:$0xff]
  %v87 = vld [vmem:[%s2 + $0x1e0] sm:$0xff]
  %v88 = vld [vmem:[%s2 + $0x1e8] sm:$0xff]
  %v89 = vld [vmem:[%s2 + $0x1f0] sm:$0xff]
  %v90 = vld [vmem:[%s2 + $0x1f8] sm:$0xff]
  %v91 = vld [vmem:[%s1] sm:$0xff]
  %v92 = vld [vmem:[%s1 + $0x8] sm:$0xff]
  %v93 = vld [vmem:[%s1 + $0x10] sm:$0xff]
  %v94 = vld [vmem:[%s1 + $0x18] sm:$0xff]
  %v95 = vld [vmem:[%s3] sm:$0xff]
  %v96 = vld [vmem:[%s3 + $0x8] sm:$0xff]
  %v97 = vld [vmem:[%s3 + $0x10] sm:$0xff]
  %v98 = vld [vmem:[%s3 + $0x18] sm:$0xff]
  %v99 = vld [vmem:[%s3 + $0x20] sm:$0xff]
  %v100 = vld [vmem:[%s3 + $0x28] sm:$0xff]
  %v101 = vld [vmem:[%s3 + $0x30] sm:$0xff]
  %v102 = vld [vmem:[%s3 + $0x38] sm:$0xff]
  %v103 = vld [vmem:[%s3 + $0x40] sm:$0xff]
  %v104 = vld [vmem:[%s3 + $0x48] sm:$0xff]
  %v105 = vld [vmem:[%s3 + $0x50] sm:$0xff]
  %v106 = vld [vmem:[%s3 + $0x58] sm:$0xff]
  %v107 = vld [vmem:[%s3 + $0x60] sm:$0xff]
  %v108 = vld [vmem:[%s3 + $0x68] sm:$0xff]
  %v109 = vld [vmem:[%s3 + $0x70] sm:$0xff]
  %v110 = vld [vmem:[%s3 + $0x78] sm:$0xff]
  %v111 = vld [vmem:[%s3 + $0x80] sm:$0xff]
  %v112 = vld [vmem:[%s3 + $0x88] sm:$0xff]
  %v113 = vld [vmem:[%s3 + $0x90] sm:$0xff]
  %v114 = vld [vmem:[%s3 + $0x98] sm:$0xff]
  %v115 = vld [vmem:[%s3 + $0xa0] sm:$0xff]
  %v116 = vld [vmem:[%s3 + $0xa8] sm:$0xff]
  %v117 = vld [vmem:[%s3 + $0xb0] sm:$0xff]
  %v118 = vld [vmem:[%s3 + $0xb8] sm:$0xff]
  %v119 = vld [vmem:[%s3 + $0xc0] sm:$0xff]
  %v120 = vld [vmem:[%s3 + $0xc8] sm:$0xff]
  %v121 = vld [vmem:[%s3 + $0xd0] sm:$0xff]
  %v122 = vld [vmem:[%s3 + $0xd8] sm:$0xff]
  %v123 = vld [vmem:[%s3 + $0xe0] sm:$0xff]
  %v124 = vld [vmem:[%s3 + $0xe8] sm:$0xff]
  %v125 = vld [vmem:[%s3 + $0xf0] sm:$0xff]
  %v126 = vld [vmem:[%s3 + $0xf8] sm:$0xff]
  %v127 = vld [vmem:[%s3 + $0x100] sm:$0xff]
  %v128 = vld [vmem:[%s3 + $0x108] sm:$0xff]
  %v129 = vld [vmem:[%s3 + $0x110] sm:$0xff]
  %v130 = vld [vmem:[%s3 + $0x118] sm:$0xff]
  %v131 = vld [vmem:[%s3 + $0x120] sm:$0xff]
  %v132 = vld [vmem:[%s3 + $0x128] sm:$0xff]
  %v133 = vld [vmem:[%s3 + $0x130] sm:$0xff]
  %v134 = vld [vmem:[%s3 + $0x138] sm:$0xff]
  %v135 = vld [vmem:[%s3 + $0x140] sm:$0xff]
  %v136 = vld [vmem:[%s3 + $0x148] sm:$0xff]
  %v137 = vld [vmem:[%s3 + $0x150] sm:$0xff]
  %v138 = vld [vmem:[%s3 + $0x158] sm:$0xff]
  %v139 = vld [vmem:[%s3 + $0x160] sm:$0xff]
  %v140 = vld [vmem:[%s3 + $0x168] sm:$0xff]
  %v141 = vld [vmem:[%s3 + $0x170] sm:$0xff]
  %v142 = vld [vmem:[%s3 + $0x178] sm:$0xff]
  %v143 = vld [vmem:[%s3 + $0x180] sm:$0xff]
  %v144 = vld [vmem:[%s3 + $0x188] sm:$0xff]
  %v145 = vld [vmem:[%s3 + $0x190] sm:$0xff]
  %v146 = vld [vmem:[%s3 + $0x198] sm:$0xff]
  %v147 = vld [vmem:[%s3 + $0x1a0] sm:$0xff]
  %v148 = vld [vmem:[%s3 + $0x1a8] sm:$0xff]
  %v149 = vld [vmem:[%s3 + $0x1b0] sm:$0xff]
  %v150 = vld [vmem:[%s3 + $0x1b8] sm:$0xff]
  %v151 = vld [vmem:[%s3 + $0x1c0] sm:$0xff]
  %v152 = vld [vmem:[%s3 + $0x1c8] sm:$0xff]
  %v153 = vld [vmem:[%s3 + $0x1d0] sm:$0xff]
  %v154 = vld [vmem:[%s3 + $0x1d8] sm:$0xff]
  %v155 = vld [vmem:[%s3 + $0x1e0] sm:$0xff]
  %v156 = vld [vmem:[%s3 + $0x1e8] sm:$0xff]
  %v157 = vld [vmem:[%s3 + $0x1f0] sm:$0xff]
  %v158 = vld [vmem:[%s3 + $0x1f8] sm:$0xff]
  %v163 = vunpack.c.l.b16 %v91
  %v164 = vunpack.c.h.b16 %v91
  %v165 = vunpack.c.l.b16 %v92
  %v166 = vunpack.c.h.b16 %v92
  %v167 = vunpack.c.l.b16 %v93
  %v168 = vunpack.c.h.b16 %v93
  %v169 = vunpack.c.l.b16 %v94
  %v170 = vunpack.c.h.b16 %v94
  %v171 = vpack.c.b16 %v165, %v163
  %v172 = vpack.c.b16 %v166, %v164
  %v173 = vpack.c.b16 %v169, %v167
  %v174 = vpack.c.b16 %v170, %v168
  %v243 = vunpack.c.l.b16 %v95
  %v244 = vunpack.c.h.b16 %v95
  %v245 = vunpack.c.l.b16 %v96
  %v246 = vunpack.c.h.b16 %v96
  %v247 = vunpack.c.l.b16 %v97
  %v248 = vunpack.c.h.b16 %v97
  %v249 = vunpack.c.l.b16 %v98
  %v250 = vunpack.c.h.b16 %v98
  %v251 = vunpack.c.l.b16 %v99
  %v252 = vunpack.c.h.b16 %v99
  %v253 = vunpack.c.l.b16 %v100
  %v254 = vunpack.c.h.b16 %v100
  %v255 = vunpack.c.l.b16 %v101
  %v256 = vunpack.c.h.b16 %v101
  %v257 = vunpack.c.l.b16 %v102
  %v258 = vunpack.c.h.b16 %v102
  %v259 = vunpack.c.l.b16 %v103
  %v260 = vunpack.c.h.b16 %v103
  %v261 = vunpack.c.l.b16 %v104
  %v262 = vunpack.c.h.b16 %v104
  %v263 = vunpack.c.l.b16 %v105
  %v264 = vunpack.c.h.b16 %v105
  %v265 = vunpack.c.l.b16 %v106
  %v266 = vunpack.c.h.b16 %v106
  %v267 = vunpack.c.l.b16 %v107
  %v268 = vunpack.c.h.b16 %v107
  %v269 = vunpack.c.l.b16 %v108
  %v270 = vunpack.c.h.b16 %v108
  %v271 = vunpack.c.l.b16 %v109
  %v272 = vunpack.c.h.b16 %v109
  %v273 = vunpack.c.l.b16 %v110
  %v274 = vunpack.c.h.b16 %v110
  %v275 = vunpack.c.l.b16 %v111
  %v276 = vunpack.c.h.b16 %v111
  %v277 = vunpack.c.l.b16 %v112
  %v278 = vunpack.c.h.b16 %v112
  %v279 = vunpack.c.l.b16 %v113
  %v280 = vunpack.c.h.b16 %v113
  %v281 = vunpack.c.l.b16 %v114
  %v282 = vunpack.c.h.b16 %v114
  %v283 = vunpack.c.l.b16 %v115
  %v284 = vunpack.c.h.b16 %v115
  %v285 = vunpack.c.l.b16 %v116
  %v286 = vunpack.c.h.b16 %v116
  %v287 = vunpack.c.l.b16 %v117
  %v288 = vunpack.c.h.b16 %v117
  %v289 = vunpack.c.l.b16 %v118
  %v290 = vunpack.c.h.b16 %v118
  %v291 = vunpack.c.l.b16 %v119
  %v292 = vunpack.c.h.b16 %v119
  %v293 = vunpack.c.l.b16 %v120
  %v294 = vunpack.c.h.b16 %v120
  %v295 = vunpack.c.l.b16 %v121
  %v296 = vunpack.c.h.b16 %v121
  %v297 = vunpack.c.l.b16 %v122
  %v298 = vunpack.c.h.b16 %v122
  %v299 = vunpack.c.l.b16 %v123
  %v300 = vunpack.c.h.b16 %v123
  %v301 = vunpack.c.l.b16 %v124
  %v302 = vunpack.c.h.b16 %v124
  %v303 = vunpack.c.l.b16 %v125
  %v304 = vunpack.c.h.b16 %v125
  %v305 = vunpack.c.l.b16 %v126
  %v306 = vunpack.c.h.b16 %v126
  %v307 = vunpack.c.l.b16 %v127
  %v308 = vunpack.c.h.b16 %v127
  %v309 = vunpack.c.l.b16 %v128
  %v310 = vunpack.c.h.b16 %v128
  %v311 = vunpack.c.l.b16 %v129
  %v312 = vunpack.c.h.b16 %v129
  %v313 = vunpack.c.l.b16 %v130
  %v314 = vunpack.c.h.b16 %v130
  %v315 = vunpack.c.l.b16 %v131
  %v316 = vunpack.c.h.b16 %v131
  %v317 = vunpack.c.l.b16 %v132
  %v318 = vunpack.c.h.b16 %v132
  %v319 = vunpack.c.l.b16 %v133
  %v320 = vunpack.c.h.b16 %v133
  %v321 = vunpack.c.l.b16 %v134
  %v322 = vunpack.c.h.b16 %v134
  %v323 = vunpack.c.l.b16 %v135
  %v324 = vunpack.c.h.b16 %v135
  %v325 = vunpack.c.l.b16 %v136
  %v326 = vunpack.c.h.b16 %v136
  %v327 = vunpack.c.l.b16 %v137
  %v328 = vunpack.c.h.b16 %v137
  %v329 = vunpack.c.l.b16 %v138
  %v330 = vunpack.c.h.b16 %v138
  %v331 = vunpack.c.l.b16 %v139
  %v332 = vunpack.c.h.b16 %v139
  %v333 = vunpack.c.l.b16 %v140
  %v334 = vunpack.c.h.b16 %v140
  %v335 = vunpack.c.l.b16 %v141
  %v336 = vunpack.c.h.b16 %v141
  %v337 = vunpack.c.l.b16 %v142
  %v338 = vunpack.c.h.b16 %v142
  %v339 = vunpack.c.l.b16 %v143
  %v340 = vunpack.c.h.b16 %v143
  %v341 = vunpack.c.l.b16 %v144
  %v342 = vunpack.c.h.b16 %v144
  %v343 = vunpack.c.l.b16 %v145
  %v344 = vunpack.c.h.b16 %v145
  %v345 = vunpack.c.l.b16 %v146
  %v346 = vunpack.c.h.b16 %v146
  %v347 = vunpack.c.l.b16 %v147
  %v348 = vunpack.c.h.b16 %v147
  %v349 = vunpack.c.l.b16 %v148
  %v350 = vunpack.c.h.b16 %v148
  %v351 = vunpack.c.l.b16 %v149
  %v352 = vunpack.c.h.b16 %v149
  %v353 = vunpack.c.l.b16 %v150
  %v354 = vunpack.c.h.b16 %v150
  %v355 = vunpack.c.l.b16 %v151
  %v356 = vunpack.c.h.b16 %v151
  %v357 = vunpack.c.l.b16 %v152
  %v358 = vunpack.c.h.b16 %v152
  %v359 = vunpack.c.l.b16 %v153
  %v360 = vunpack.c.h.b16 %v153
  %v361 = vunpack.c.l.b16 %v154
  %v362 = vunpack.c.h.b16 %v154
  %v363 = vunpack.c.l.b16 %v155
  %v364 = vunpack.c.h.b16 %v155
  %v365 = vunpack.c.l.b16 %v156
  %v366 = vunpack.c.h.b16 %v156
  %v367 = vunpack.c.l.b16 %v157
  %v368 = vunpack.c.h.b16 %v157
  %v369 = vunpack.c.l.b16 %v158
  %v370 = vunpack.c.h.b16 %v158
  %v371 = vpack.c.b16 %v247, %v243
  %v372 = vpack.c.b16 %v248, %v244
  %v373 = vpack.c.b16 %v249, %v245
  %v374 = vpack.c.b16 %v250, %v246
  %v375 = vpack.c.b16 %v255, %v251
  %v376 = vpack.c.b16 %v256, %v252
  %v377 = vpack.c.b16 %v257, %v253
  %v378 = vpack.c.b16 %v258, %v254
  %v379 = vpack.c.b16 %v263, %v259
  %v380 = vpack.c.b16 %v264, %v260
  %v381 = vpack.c.b16 %v265, %v261
  %v382 = vpack.c.b16 %v266, %v262
  %v383 = vpack.c.b16 %v271, %v267
  %v384 = vpack.c.b16 %v272, %v268
  %v385 = vpack.c.b16 %v273, %v269
  %v386 = vpack.c.b16 %v274, %v270
  %v387 = vpack.c.b16 %v279, %v275
  %v388 = vpack.c.b16 %v280, %v276
  %v389 = vpack.c.b16 %v281, %v277
  %v390 = vpack.c.b16 %v282, %v278
  %v391 = vpack.c.b16 %v287, %v283
  %v392 = vpack.c.b16 %v288, %v284
  %v393 = vpack.c.b16 %v289, %v285
  %v394 = vpack.c.b16 %v290, %v286
  %v395 = vpack.c.b16 %v295, %v291
  %v396 = vpack.c.b16 %v296, %v292
  %v397 = vpack.c.b16 %v297, %v293
  %v398 = vpack.c.b16 %v298, %v294
  %v399 = vpack.c.b16 %v303, %v299
  %v400 = vpack.c.b16 %v304, %v300
  %v401 = vpack.c.b16 %v305, %v301
  %v402 = vpack.c.b16 %v306, %v302
  %v403 = vpack.c.b16 %v311, %v307
  %v404 = vpack.c.b16 %v312, %v308
  %v405 = vpack.c.b16 %v313, %v309
  %v406 = vpack.c.b16 %v314, %v310
  %v407 = vpack.c.b16 %v319, %v315
  %v408 = vpack.c.b16 %v320, %v316
  %v409 = vpack.c.b16 %v321, %v317
  %v410 = vpack.c.b16 %v322, %v318
  %v411 = vpack.c.b16 %v327, %v323
  %v412 = vpack.c.b16 %v328, %v324
  %v413 = vpack.c.b16 %v329, %v325
  %v414 = vpack.c.b16 %v330, %v326
  %v415 = vpack.c.b16 %v335, %v331
  %v416 = vpack.c.b16 %v336, %v332
  %v417 = vpack.c.b16 %v337, %v333
  %v418 = vpack.c.b16 %v338, %v334
  %v419 = vpack.c.b16 %v343, %v339
  %v420 = vpack.c.b16 %v344, %v340
  %v421 = vpack.c.b16 %v345, %v341
  %v422 = vpack.c.b16 %v346, %v342
  %v423 = vpack.c.b16 %v351, %v347
  %v424 = vpack.c.b16 %v352, %v348
  %v425 = vpack.c.b16 %v353, %v349
  %v426 = vpack.c.b16 %v354, %v350
  %v427 = vpack.c.b16 %v359, %v355
  %v428 = vpack.c.b16 %v360, %v356
  %v429 = vpack.c.b16 %v361, %v357
  %v430 = vpack.c.b16 %v362, %v358
  %v431 = vpack.c.b16 %v367, %v363
  %v432 = vpack.c.b16 %v368, %v364
  %v433 = vpack.c.b16 %v369, %v365
  %v434 = vpack.c.b16 %v370, %v366
  %499 = vmatprep.subr.bf16.mxu0 %v372
  %500 = vmatpush1.bf16.msra.mxu0 %v371
  %501 = vmatprep.subr.bf16.mxu0 %v376
  %502 = vmatpush1.bf16.msra.mxu0 %v375
  %503 = vmatprep.subr.bf16.mxu0 %v380
  %504 = vmatpush1.bf16.msra.mxu0 %v379
  %505 = vmatprep.subr.bf16.mxu0 %v384
  %506 = vmatpush1.bf16.msra.mxu0 %v383
  %507 = vmatprep.subr.bf16.mxu0 %v388
  %508 = vmatpush1.bf16.msra.mxu0 %v387
  %509 = vmatprep.subr.bf16.mxu0 %v392
  %510 = vmatpush1.bf16.msra.mxu0 %v391
  %511 = vmatprep.subr.bf16.mxu0 %v396
  %512 = vmatpush1.bf16.msra.mxu0 %v395
  %513 = vmatprep.subr.bf16.mxu0 %v400
  %514 = vmatpush1.bf16.msra.mxu0 %v399
  %515 = vmatprep.subr.bf16.mxu0 %v404
  %516 = vmatpush1.bf16.msra.mxu0 %v403
  %517 = vmatprep.subr.bf16.mxu0 %v408
  %518 = vmatpush1.bf16.msra.mxu0 %v407
  %519 = vmatprep.subr.bf16.mxu0 %v412
  %520 = vmatpush1.bf16.msra.mxu0 %v411
  %521 = vmatprep.subr.bf16.mxu0 %v416
  %522 = vmatpush1.bf16.msra.mxu0 %v415
  %523 = vmatprep.subr.bf16.mxu0 %v420
  %524 = vmatpush1.bf16.msra.mxu0 %v419
  %525 = vmatprep.subr.bf16.mxu0 %v424
  %526 = vmatpush1.bf16.msra.mxu0 %v423
  %527 = vmatprep.subr.bf16.mxu0 %v428
  %528 = vmatpush1.bf16.msra.mxu0 %v427
  %529 = vmatprep.subr.bf16.mxu0 %v432
  %530 = vmatpush1.bf16.msra.mxu0 %v431
  %531 = vmatprep.mubr.bf16.mxu0 %v172
  %532 = vmatmul.mubr.bf16.gmra.mrb[0].mxu0 %v171
  %v533 = vpop.f32.mrb[0].mxu0
  %v534 = vadd.f32 0.0, %v533
  %v535 = vpop.f32.mrb[0].mxu0
  %v536 = vadd.f32 0.0, %v535
  %v537 = vpop.f32.mrb[0].mxu0
  %v538 = vadd.f32 0.0, %v537
  %v539 = vpop.f32.mrb[0].mxu0
  %v540 = vadd.f32 0.0, %v539
  %541 = vmatprep.mubr.bf16.mxu0 %v174
  %542 = vmatmul.mubr.bf16.gmra.mrb[0].mxu0 %v173
  %v543 = vpop.f32.mrb[0].mxu0
  %v544 = vadd.f32 0.0, %v543
  %v545 = vpop.f32.mrb[0].mxu0
  %v546 = vadd.f32 0.0, %v545
  %v547 = vpop.f32.mrb[0].mxu0
  %v548 = vadd.f32 0.0, %v547
  %v549 = vpop.f32.mrb[0].mxu0
  %v550 = vadd.f32 0.0, %v549
  %551 = vdwg.mxu0
  %552 = vmatprep.subr.bf16.mxu0 %v374
  %553 = vmatpush1.bf16.msra.mxu0 %v373
  %554 = vmatprep.subr.bf16.mxu0 %v378
  %555 = vmatpush1.bf16.msra.mxu0 %v377
  %556 = vmatprep.subr.bf16.mxu0 %v382
  %557 = vmatpush1.bf16.msra.mxu0 %v381
  %558 = vmatprep.subr.bf16.mxu0 %v386
  %559 = vmatpush1.bf16.msra.mxu0 %v385
  %560 = vmatprep.subr.bf16.mxu0 %v390
  %561 = vmatpush1.bf16.msra.mxu0 %v389
  %562 = vmatprep.subr.bf16.mxu0 %v394
  %563 = vmatpush1.bf16.msra.mxu0 %v393
  %564 = vmatprep.subr.bf16.mxu0 %v398
  %565 = vmatpush1.bf16.msra.mxu0 %v397
  %566 = vmatprep.subr.bf16.mxu0 %v402
  %567 = vmatpush1.bf16.msra.mxu0 %v401
  %568 = vmatprep.subr.bf16.mxu0 %v406
  %569 = vmatpush1.bf16.msra.mxu0 %v405
  %570 = vmatprep.subr.bf16.mxu0 %v410
  %571 = vmatpush1.bf16.msra.mxu0 %v409
  %572 = vmatprep.subr.bf16.mxu0 %v414
  %573 = vmatpush1.bf16.msra.mxu0 %v413
  %574 = vmatprep.subr.bf16.mxu0 %v418
  %575 = vmatpush1.bf16.msra.mxu0 %v417
  %576 = vmatprep.subr.bf16.mxu0 %v422
  %577 = vmatpush1.bf16.msra.mxu0 %v421
  %578 = vmatprep.subr.bf16.mxu0 %v426
  %579 = vmatpush1.bf16.msra.mxu0 %v425
  %580 = vmatprep.subr.bf16.mxu0 %v430
  %581 = vmatpush1.bf16.msra.mxu0 %v429
  %582 = vmatprep.subr.bf16.mxu0 %v434
  %583 = vmatpush1.bf16.msra.mxu0 %v433
  %584 = vmatprep.mubr.bf16.mxu0 %v172
  %585 = vmatmul.mubr.bf16.gmra.mrb[0].mxu0 %v171
  %v586 = vpop.f32.mrb[0].mxu0
  %v587 = vadd.f32 0.0, %v586
  %v588 = vpop.f32.mrb[0].mxu0
  %v589 = vadd.f32 0.0, %v588
  %v590 = vpop.f32.mrb[0].mxu0
  %v591 = vadd.f32 0.0, %v590
  %v592 = vpop.f32.mrb[0].mxu0
  %v593 = vadd.f32 0.0, %v592
  %594 = vmatprep.mubr.bf16.mxu0 %v174
  %595 = vmatmul.mubr.bf16.gmra.mrb[0].mxu0 %v173
  %v596 = vpop.f32.mrb[0].mxu0
  %v597 = vadd.f32 0.0, %v596
  %v598 = vpop.f32.mrb[0].mxu0
  %v599 = vadd.f32 0.0, %v598
  %v600 = vpop.f32.mrb[0].mxu0
  %v601 = vadd.f32 0.0, %v600
  %v602 = vpop.f32.mrb[0].mxu0
  %v603 = vadd.f32 0.0, %v602
  %604 = vdwg.mxu0
  %v609 = vunpack.c.l.b16 %v23
  %v610 = vunpack.c.h.b16 %v23
  %v611 = vunpack.c.l.b16 %v24
  %v612 = vunpack.c.h.b16 %v24
  %v613 = vunpack.c.l.b16 %v25
  %v614 = vunpack.c.h.b16 %v25
  %v615 = vunpack.c.l.b16 %v26
  %v616 = vunpack.c.h.b16 %v26
  %v617 = vpack.c.b16 %v611, %v609
  %v618 = vpack.c.b16 %v612, %v610
  %v619 = vpack.c.b16 %v615, %v613
  %v620 = vpack.c.b16 %v616, %v614
  %v689 = vunpack.c.l.b16 %v27
  %v690 = vunpack.c.h.b16 %v27
  %v691 = vunpack.c.l.b16 %v28
  %v692 = vunpack.c.h.b16 %v28
  %v693 = vunpack.c.l.b16 %v29
  %v694 = vunpack.c.h.b16 %v29
  %v695 = vunpack.c.l.b16 %v30
  %v696 = vunpack.c.h.b16 %v30
  %v697 = vunpack.c.l.b16 %v31
  %v698 = vunpack.c.h.b16 %v31
  %v699 = vunpack.c.l.b16 %v32
  %v700 = vunpack.c.h.b16 %v32
  %v701 = vunpack.c.l.b16 %v33
  %v702 = vunpack.c.h.b16 %v33
  %v703 = vunpack.c.l.b16 %v34
  %v704 = vunpack.c.h.b16 %v34
  %v705 = vunpack.c.l.b16 %v35
  %v706 = vunpack.c.h.b16 %v35
  %v707 = vunpack.c.l.b16 %v36
  %v708 = vunpack.c.h.b16 %v36
  %v709 = vunpack.c.l.b16 %v37
  %v710 = vunpack.c.h.b16 %v37
  %v711 = vunpack.c.l.b16 %v38
  %v712 = vunpack.c.h.b16 %v38
  %v713 = vunpack.c.l.b16 %v39
  %v714 = vunpack.c.h.b16 %v39
  %v715 = vunpack.c.l.b16 %v40
  %v716 = vunpack.c.h.b16 %v40
  %v717 = vunpack.c.l.b16 %v41
  %v718 = vunpack.c.h.b16 %v41
  %v719 = vunpack.c.l.b16 %v42
  %v720 = vunpack.c.h.b16 %v42
  %v721 = vunpack.c.l.b16 %v43
  %v722 = vunpack.c.h.b16 %v43
  %v723 = vunpack.c.l.b16 %v44
  %v724 = vunpack.c.h.b16 %v44
  %v725 = vunpack.c.l.b16 %v45
  %v726 = vunpack.c.h.b16 %v45
  %v727 = vunpack.c.l.b16 %v46
  %v728 = vunpack.c.h.b16 %v46
  %v729 = vunpack.c.l.b16 %v47
  %v730 = vunpack.c.h.b16 %v47
  %v731 = vunpack.c.l.b16 %v48
  %v732 = vunpack.c.h.b16 %v48
  %v733 = vunpack.c.l.b16 %v49
  %v734 = vunpack.c.h.b16 %v49
  %v735 = vunpack.c.l.b16 %v50
  %v736 = vunpack.c.h.b16 %v50
  %v737 = vunpack.c.l.b16 %v51
  %v738 = vunpack.c.h.b16 %v51
  %v739 = vunpack.c.l.b16 %v52
  %v740 = vunpack.c.h.b16 %v52
  %v741 = vunpack.c.l.b16 %v53
  %v742 = vunpack.c.h.b16 %v53
  %v743 = vunpack.c.l.b16 %v54
  %v744 = vunpack.c.h.b16 %v54
  %v745 = vunpack.c.l.b16 %v55
  %v746 = vunpack.c.h.b16 %v55
  %v747 = vunpack.c.l.b16 %v56
  %v748 = vunpack.c.h.b16 %v56
  %v749 = vunpack.c.l.b16 %v57
  %v750 = vunpack.c.h.b16 %v57
  %v751 = vunpack.c.l.b16 %v58
  %v752 = vunpack.c.h.b16 %v58
  %v753 = vunpack.c.l.b16 %v59
  %v754 = vunpack.c.h.b16 %v59
  %v755 = vunpack.c.l.b16 %v60
  %v756 = vunpack.c.h.b16 %v60
  %v757 = vunpack.c.l.b16 %v61
  %v758 = vunpack.c.h.b16 %v61
  %v759 = vunpack.c.l.b16 %v62
  %v760 = vunpack.c.h.b16 %v62
  %v761 = vunpack.c.l.b16 %v63
  %v762 = vunpack.c.h.b16 %v63
  %v763 = vunpack.c.l.b16 %v64
  %v764 = vunpack.c.h.b16 %v64
  %v765 = vunpack.c.l.b16 %v65
  %v766 = vunpack.c.h.b16 %v65
  %v767 = vunpack.c.l.b16 %v66
  %v768 = vunpack.c.h.b16 %v66
  %v769 = vunpack.c.l.b16 %v67
  %v770 = vunpack.c.h.b16 %v67
  %v771 = vunpack.c.l.b16 %v68
  %v772 = vunpack.c.h.b16 %v68
  %v773 = vunpack.c.l.b16 %v69
  %v774 = vunpack.c.h.b16 %v69
  %v775 = vunpack.c.l.b16 %v70
  %v776 = vunpack.c.h.b16 %v70
  %v777 = vunpack.c.l.b16 %v71
  %v778 = vunpack.c.h.b16 %v71
  %v779 = vunpack.c.l.b16 %v72
  %v780 = vunpack.c.h.b16 %v72
  %v781 = vunpack.c.l.b16 %v73
  %v782 = vunpack.c.h.b16 %v73
  %v783 = vunpack.c.l.b16 %v74
  %v784 = vunpack.c.h.b16 %v74
  %v785 = vunpack.c.l.b16 %v75
  %v786 = vunpack.c.h.b16 %v75
  %v787 = vunpack.c.l.b16 %v76
  %v788 = vunpack.c.h.b16 %v76
  %v789 = vunpack.c.l.b16 %v77
  %v790 = vunpack.c.h.b16 %v77
  %v791 = vunpack.c.l.b16 %v78
  %v792 = vunpack.c.h.b16 %v78
  %v793 = vunpack.c.l.b16 %v79
  %v794 = vunpack.c.h.b16 %v79
  %v795 = vunpack.c.l.b16 %v80
  %v796 = vunpack.c.h.b16 %v80
  %v797 = vunpack.c.l.b16 %v81
  %v798 = vunpack.c.h.b16 %v81
  %v799 = vunpack.c.l.b16 %v82
  %v800 = vunpack.c.h.b16 %v82
  %v801 = vunpack.c.l.b16 %v83
  %v802 = vunpack.c.h.b16 %v83
  %v803 = vunpack.c.l.b16 %v84
  %v804 = vunpack.c.h.b16 %v84
  %v805 = vunpack.c.l.b16 %v85
  %v806 = vunpack.c.h.b16 %v85
  %v807 = vunpack.c.l.b16 %v86
  %v808 = vunpack.c.h.b16 %v86
  %v809 = vunpack.c.l.b16 %v87
  %v810 = vunpack.c.h.b16 %v87
  %v811 = vunpack.c.l.b16 %v88
  %v812 = vunpack.c.h.b16 %v88
  %v813 = vunpack.c.l.b16 %v89
  %v814 = vunpack.c.h.b16 %v89
  %v815 = vunpack.c.l.b16 %v90
  %v816 = vunpack.c.h.b16 %v90
  %v817 = vpack.c.b16 %v693, %v689
  %v818 = vpack.c.b16 %v694, %v690
  %v819 = vpack.c.b16 %v695, %v691
  %v820 = vpack.c.b16 %v696, %v692
  %v821 = vpack.c.b16 %v701, %v697
  %v822 = vpack.c.b16 %v702, %v698
  %v823 = vpack.c.b16 %v703, %v699
  %v824 = vpack.c.b16 %v704, %v700
  %v825 = vpack.c.b16 %v709, %v705
  %v826 = vpack.c.b16 %v710, %v706
  %v827 = vpack.c.b16 %v711, %v707
  %v828 = vpack.c.b16 %v712, %v708
  %v829 = vpack.c.b16 %v717, %v713
  %v830 = vpack.c.b16 %v718, %v714
  %v831 = vpack.c.b16 %v719, %v715
  %v832 = vpack.c.b16 %v720, %v716
  %v833 = vpack.c.b16 %v725, %v721
  %v834 = vpack.c.b16 %v726, %v722
  %v835 = vpack.c.b16 %v727, %v723
  %v836 = vpack.c.b16 %v728, %v724
  %v837 = vpack.c.b16 %v733, %v729
  %v838 = vpack.c.b16 %v734, %v730
  %v839 = vpack.c.b16 %v735, %v731
  %v840 = vpack.c.b16 %v736, %v732
  %v841 = vpack.c.b16 %v741, %v737
  %v842 = vpack.c.b16 %v742, %v738
  %v843 = vpack.c.b16 %v743, %v739
  %v844 = vpack.c.b16 %v744, %v740
  %v845 = vpack.c.b16 %v749, %v745
  %v846 = vpack.c.b16 %v750, %v746
  %v847 = vpack.c.b16 %v751, %v747
  %v848 = vpack.c.b16 %v752, %v748
  %v849 = vpack.c.b16 %v757, %v753
  %v850 = vpack.c.b16 %v758, %v754
  %v851 = vpack.c.b16 %v759, %v755
  %v852 = vpack.c.b16 %v760, %v756
  %v853 = vpack.c.b16 %v765, %v761
  %v854 = vpack.c.b16 %v766, %v762
  %v855 = vpack.c.b16 %v767, %v763
  %v856 = vpack.c.b16 %v768, %v764
  %v857 = vpack.c.b16 %v773, %v769
  %v858 = vpack.c.b16 %v774, %v770
  %v859 = vpack.c.b16 %v775, %v771
  %v860 = vpack.c.b16 %v776, %v772
  %v861 = vpack.c.b16 %v781, %v777
  %v862 = vpack.c.b16 %v782, %v778
  %v863 = vpack.c.b16 %v783, %v779
  %v864 = vpack.c.b16 %v784, %v780
  %v865 = vpack.c.b16 %v789, %v785
  %v866 = vpack.c.b16 %v790, %v786
  %v867 = vpack.c.b16 %v791, %v787
  %v868 = vpack.c.b16 %v792, %v788
  %v869 = vpack.c.b16 %v797, %v793
  %v870 = vpack.c.b16 %v798, %v794
  %v871 = vpack.c.b16 %v799, %v795
  %v872 = vpack.c.b16 %v800, %v796
  %v873 = vpack.c.b16 %v805, %v801
  %v874 = vpack.c.b16 %v806, %v802
  %v875 = vpack.c.b16 %v807, %v803
  %v876 = vpack.c.b16 %v808, %v804
  %v877 = vpack.c.b16 %v813, %v809
  %v878 = vpack.c.b16 %v814, %v810
  %v879 = vpack.c.b16 %v815, %v811
  %v880 = vpack.c.b16 %v816, %v812
  %945 = vmatprep.subr.bf16.mxu0 %v818
  %946 = vmatpush1.bf16.msra.mxu0 %v817
  %947 = vmatprep.subr.bf16.mxu0 %v822
  %948 = vmatpush1.bf16.msra.mxu0 %v821
  %949 = vmatprep.subr.bf16.mxu0 %v826
  %950 = vmatpush1.bf16.msra.mxu0 %v825
  %951 = vmatprep.subr.bf16.mxu0 %v830
  %952 = vmatpush1.bf16.msra.mxu0 %v829
  %953 = vmatprep.subr.bf16.mxu0 %v834
  %954 = vmatpush1.bf16.msra.mxu0 %v833
  %955 = vmatprep.subr.bf16.mxu0 %v838
  %956 = vmatpush1.bf16.msra.mxu0 %v837
  %957 = vmatprep.subr.bf16.mxu0 %v842
  %958 = vmatpush1.bf16.msra.mxu0 %v841
  %959 = vmatprep.subr.bf16.mxu0 %v846
  %960 = vmatpush1.bf16.msra.mxu0 %v845
  %961 = vmatprep.subr.bf16.mxu0 %v850
  %962 = vmatpush1.bf16.msra.mxu0 %v849
  %963 = vmatprep.subr.bf16.mxu0 %v854
  %964 = vmatpush1.bf16.msra.mxu0 %v853
  %965 = vmatprep.subr.bf16.mxu0 %v858
  %966 = vmatpush1.bf16.msra.mxu0 %v857
  %967 = vmatprep.subr.bf16.mxu0 %v862
  %968 = vmatpush1.bf16.msra.mxu0 %v861
  %969 = vmatprep.subr.bf16.mxu0 %v866
  %970 = vmatpush1.bf16.msra.mxu0 %v865
  %971 = vmatprep.subr.bf16.mxu0 %v870
  %972 = vmatpush1.bf16.msra.mxu0 %v869
  %973 = vmatprep.subr.bf16.mxu0 %v874
  %974 = vmatpush1.bf16.msra.mxu0 %v873
  %975 = vmatprep.subr.bf16.mxu0 %v878
  %976 = vmatpush1.bf16.msra.mxu0 %v877
  %977 = vmatprep.mubr.bf16.mxu0 %v618
  %978 = vmatmul.mubr.bf16.gmra.mrb[0].mxu0 %v617
  %v979 = vpop.f32.mrb[0].mxu0
  %v980 = vadd.f32 %v534, %v979
  %v981 = vpop.f32.mrb[0].mxu0
  %v982 = vadd.f32 %v536, %v981
  %v983 = vpop.f32.mrb[0].mxu0
  %v984 = vadd.f32 %v538, %v983
  %v985 = vpop.f32.mrb[0].mxu0
  %v986 = vadd.f32 %v540, %v985
  %987 = vmatprep.mubr.bf16.mxu0 %v620
  %988 = vmatmul.mubr.bf16.gmra.mrb[0].mxu0 %v619
  %v989 = vpop.f32.mrb[0].mxu0
  %v990 = vadd.f32 %v544, %v989
  %v991 = vpop.f32.mrb[0].mxu0
  %v992 = vadd.f32 %v546, %v991
  %v993 = vpop.f32.mrb[0].mxu0
  %v994 = vadd.f32 %v548, %v993
  %v995 = vpop.f32.mrb[0].mxu0
  %v996 = vadd.f32 %v550, %v995
  %997 = vdwg.mxu0
  %998 = vmatprep.subr.bf16.mxu0 %v820
  %999 = vmatpush1.bf16.msra.mxu0 %v819
  %1000 = vmatprep.subr.bf16.mxu0 %v824
  %1001 = vmatpush1.bf16.msra.mxu0 %v823
  %1002 = vmatprep.subr.bf16.mxu0 %v828
  %1003 = vmatpush1.bf16.msra.mxu0 %v827
  %1004 = vmatprep.subr.bf16.mxu0 %v832
  %1005 = vmatpush1.bf16.msra.mxu0 %v831
  %1006 = vmatprep.subr.bf16.mxu0 %v836
  %1007 = vmatpush1.bf16.msra.mxu0 %v835
  %1008 = vmatprep.subr.bf16.mxu0 %v840
  %1009 = vmatpush1.bf16.msra.mxu0 %v839
  %1010 = vmatprep.subr.bf16.mxu0 %v844
  %1011 = vmatpush1.bf16.msra.mxu0 %v843
  %1012 = vmatprep.subr.bf16.mxu0 %v848
  %1013 = vmatpush1.bf16.msra.mxu0 %v847
  %1014 = vmatprep.subr.bf16.mxu0 %v852
  %1015 = vmatpush1.bf16.msra.mxu0 %v851
  %1016 = vmatprep.subr.bf16.mxu0 %v856
  %1017 = vmatpush1.bf16.msra.mxu0 %v855
  %1018 = vmatprep.subr.bf16.mxu0 %v860
  %1019 = vmatpush1.bf16.msra.mxu0 %v859
  %1020 = vmatprep.subr.bf16.mxu0 %v864
  %1021 = vmatpush1.bf16.msra.mxu0 %v863
  %1022 = vmatprep.subr.bf16.mxu0 %v868
  %1023 = vmatpush1.bf16.msra.mxu0 %v867
  %1024 = vmatprep.subr.bf16.mxu0 %v872
  %1025 = vmatpush1.bf16.msra.mxu0 %v871
  %1026 = vmatprep.subr.bf16.mxu0 %v876
  %1027 = vmatpush1.bf16.msra.mxu0 %v875
  %1028 = vmatprep.subr.bf16.mxu0 %v880
  %1029 = vmatpush1.bf16.msra.mxu0 %v879
  %1030 = vmatprep.mubr.bf16.mxu0 %v618
  %1031 = vmatmul.mubr.bf16.gmra.mrb[0].mxu0 %v617
  %v1032 = vpop.f32.mrb[0].mxu0
  %v1033 = vadd.f32 %v587, %v1032
  %v1034 = vpop.f32.mrb[0].mxu0
  %v1035 = vadd.f32 %v589, %v1034
  %v1036 = vpop.f32.mrb[0].mxu0
  %v1037 = vadd.f32 %v591, %v1036
  %v1038 = vpop.f32.mrb[0].mxu0
  %v1039 = vadd.f32 %v593, %v1038
  %1040 = vmatprep.mubr.bf16.mxu0 %v620
  %1041 = vmatmul.mubr.bf16.gmra.mrb[0].mxu0 %v619
  %v1042 = vpop.f32.mrb[0].mxu0
  %v1043 = vadd.f32 %v597, %v1042
  %v1044 = vpop.f32.mrb[0].mxu0
  %v1045 = vadd.f32 %v599, %v1044
  %v1046 = vpop.f32.mrb[0].mxu0
  %v1047 = vadd.f32 %v601, %v1046
  %v1048 = vpop.f32.mrb[0].mxu0
  %v1049 = vadd.f32 %v603, %v1048
  %1050 = vdwg.mxu0
  %v1051 = vld [vmem:[%s4] sm:$0xf]
  %v1053 = vlaneseq
  %v1054 = vshrl.u32 %v1053, 7
  %v1055 = vsub.s32 0, %v1054
  %v1056 = vrot.slane %v1051, %v1055
  %v1057 = vlaneseq
  %v1058 = vshrl.u32 %v1057, 7
  %v1059 = vsub.s32 1, %v1058
  %v1060 = vrot.slane %v1051, %v1059
  %v1061 = vlaneseq
  %v1062 = vshrl.u32 %v1061, 7
  %v1063 = vsub.s32 2, %v1062
  %v1064 = vrot.slane %v1051, %v1063
  %v1065 = vlaneseq
  %v1066 = vshrl.u32 %v1065, 7
  %v1067 = vsub.s32 3, %v1066
  %v1068 = vrot.slane %v1051, %v1067
  %v1073 = vadd.f32 %v980, %v1056
  %v1074 = vadd.f32 %v982, %v1060
  %v1075 = vadd.f32 %v1033, %v1064
  %v1076 = vadd.f32 %v1035, %v1068
  %v1077 = vadd.f32 %v984, %v1056
  %v1078 = vadd.f32 %v986, %v1060
  %v1079 = vadd.f32 %v1037, %v1064
  %v1080 = vadd.f32 %v1039, %v1068
  %v1081 = vadd.f32 %v990, %v1056
  %v1082 = vadd.f32 %v992, %v1060
  %v1083 = vadd.f32 %v1043, %v1064
  %v1084 = vadd.f32 %v1045, %v1068
  %v1085 = vadd.f32 %v994, %v1056
  %v1086 = vadd.f32 %v996, %v1060
  %v1087 = vadd.f32 %v1047, %v1064
  %v1088 = vadd.f32 %v1049, %v1068
  %v1089 = vpack.c.bf16 %v1077, %v1073
  %v1090 = vpack.c.bf16 %v1078, %v1074
  %v1091 = vpack.c.bf16 %v1079, %v1075
  %v1092 = vpack.c.bf16 %v1080, %v1076
  %v1093 = vpack.c.bf16 %v1085, %v1081
  %v1094 = vpack.c.bf16 %v1086, %v1082
  %v1095 = vpack.c.bf16 %v1087, %v1083
  %v1096 = vpack.c.bf16 %v1088, %v1084
  %v1105 = vunpack.c.l.b16 %v1089
  %v1106 = vunpack.c.l.b16 %v1090
  %v1107 = vunpack.c.l.b16 %v1091
  %v1108 = vunpack.c.l.b16 %v1092
  %v1109 = vunpack.c.h.b16 %v1089
  %v1110 = vunpack.c.h.b16 %v1090
  %v1111 = vunpack.c.h.b16 %v1091
  %v1112 = vunpack.c.h.b16 %v1092
  %v1113 = vunpack.c.l.b16 %v1093
  %v1114 = vunpack.c.l.b16 %v1094
  %v1115 = vunpack.c.l.b16 %v1095
  %v1116 = vunpack.c.l.b16 %v1096
  %v1117 = vunpack.c.h.b16 %v1093
  %v1118 = vunpack.c.h.b16 %v1094
  %v1119 = vunpack.c.h.b16 %v1095
  %v1120 = vunpack.c.h.b16 %v1096
  %v1121 = vpack.c.b16 %v1106, %v1105
  %v1122 = vpack.c.b16 %v1108, %v1107
  %v1123 = vpack.c.b16 %v1110, %v1109
  %v1124 = vpack.c.b16 %v1112, %v1111
  %v1125 = vpack.c.b16 %v1114, %v1113
  %v1126 = vpack.c.b16 %v1116, %v1115
  %v1127 = vpack.c.b16 %v1118, %v1117
  %v1128 = vpack.c.b16 %v1120, %v1119
  %1137 = vst [vmem:[%s5] sm:$0xff] %v1121
  %1138 = vst [vmem:[%s5 + $0x8] sm:$0xff] %v1122
  %1139 = vst [vmem:[%s5 + $0x10] sm:$0xff] %v1123
  %1140 = vst [vmem:[%s5 + $0x18] sm:$0xff] %v1124
  %1141 = vst [vmem:[%s5 + $0x20] sm:$0xff] %v1125
  %1142 = vst [vmem:[%s5 + $0x28] sm:$0xff] %v1126
  %1143 = vst [vmem:[%s5 + $0x30] sm:$0xff] %v1127
  %1144 = vst [vmem:[%s5 + $0x38] sm:$0xff] %v1128
  %v1145 = vlaneseq
  %v1146 = vshrl.u32 %v1145, 7
  %v1147 = vadd.s32 %v1146, 8
  %v1148 = vadd.s32 %v1146, 16
  %v1149 = vadd.s32 %v1146, 24
  %s1150 = smul.u32 0, 32
  %v1151 = vstv %s1150
  %v1152 = vadd.s32 %v1146, %v1151
  %v1153 = vadd.s32 %v1147, %v1151
  %v1154 = vadd.s32 %v1148, %v1151
  %v1155 = vadd.s32 %v1149, %v1151
  %vm1156 = vcmp.lt.s32.totalorder %v1152, 32
  %vm1157 = vcmp.lt.s32.totalorder %v1153, 32
  %vm1158 = vcmp.lt.s32.totalorder %v1154, 32
  %vm1159 = vcmp.lt.s32.totalorder %v1155, 32
  %v1160 = vsel %vm1156, 1, 0
  %v1161 = vsel %vm1157, 1, 0
  %v1162 = vsel %vm1158, 1, 0
  %v1163 = vsel %vm1159, 1, 0
  %vm1164 = vcmp.eq.s32.totalorder %v1160, 1
  %vm1165 = vcmp.eq.s32.totalorder %v1161, 1
  %vm1166 = vcmp.eq.s32.totalorder %v1162, 1
  %vm1167 = vcmp.eq.s32.totalorder %v1163, 1
  %v1168 = vsel %vm1164, %v1073, 0.0
  %v1169 = vsel %vm1164, %v1074, 0.0
  %v1170 = vsel %vm1164, %v1075, 0.0
  %v1171 = vsel %vm1164, %v1076, 0.0
  %v1172 = vsel %vm1165, %v1077, 0.0
  %v1173 = vsel %vm1165, %v1078, 0.0
  %v1174 = vsel %vm1165, %v1079, 0.0
  %v1175 = vsel %vm1165, %v1080, 0.0
  %v1176 = vsel %vm1166, %v1081, 0.0
  %v1177 = vsel %vm1166, %v1082, 0.0
  %v1178 = vsel %vm1166, %v1083, 0.0
  %v1179 = vsel %vm1166, %v1084, 0.0
  %v1180 = vsel %vm1167, %v1085, 0.0
  %v1181 = vsel %vm1167, %v1086, 0.0
  %v1182 = vsel %vm1167, %v1087, 0.0
  %v1183 = vsel %vm1167, %v1088, 0.0
  %v1184 = vadd.f32 %v1168, %v1172
  %v1185 = vadd.f32 %v1184, %v1176
  %v1186 = vadd.f32 %v1185, %v1180
  %v1187 = vadd.f32 %v1169, %v1173
  %v1188 = vadd.f32 %v1187, %v1177
  %v1189 = vadd.f32 %v1188, %v1181
  %v1190 = vadd.f32 %v1170, %v1174
  %v1191 = vadd.f32 %v1190, %v1178
  %v1192 = vadd.f32 %v1191, %v1182
  %v1193 = vadd.f32 %v1171, %v1175
  %v1194 = vadd.f32 %v1193, %v1179
  %v1195 = vadd.f32 %v1194, %v1183
  %1196 = vst [vmem:[%s6] sm:$0xff] %v1186
  %1197 = vst [vmem:[%s6 + $0x8] sm:$0xff] %v1189
  %1198 = vst [vmem:[%s6 + $0x10] sm:$0xff] %v1192
  %1199 = vst [vmem:[%s6 + $0x18] sm:$0xff] %v1195
  %v1200 = vmul.f32 %v1168, %v1168
  %v1201 = vmul.f32 %v1169, %v1169
  %v1202 = vmul.f32 %v1170, %v1170
  %v1203 = vmul.f32 %v1171, %v1171
  %v1204 = vmul.f32 %v1172, %v1172
  %v1205 = vmul.f32 %v1173, %v1173
  %v1206 = vmul.f32 %v1174, %v1174
  %v1207 = vmul.f32 %v1175, %v1175
  %v1208 = vmul.f32 %v1176, %v1176
  %v1209 = vmul.f32 %v1177, %v1177
  %v1210 = vmul.f32 %v1178, %v1178
  %v1211 = vmul.f32 %v1179, %v1179
  %v1212 = vmul.f32 %v1180, %v1180
  %v1213 = vmul.f32 %v1181, %v1181
  %v1214 = vmul.f32 %v1182, %v1182
  %v1215 = vmul.f32 %v1183, %v1183
  %v1216 = vadd.f32 %v1200, %v1204
  %v1217 = vadd.f32 %v1216, %v1208
  %v1218 = vadd.f32 %v1217, %v1212
  %v1219 = vadd.f32 %v1201, %v1205
  %v1220 = vadd.f32 %v1219, %v1209
  %v1221 = vadd.f32 %v1220, %v1213
  %v1222 = vadd.f32 %v1202, %v1206
  %v1223 = vadd.f32 %v1222, %v1210
  %v1224 = vadd.f32 %v1223, %v1214
  %v1225 = vadd.f32 %v1203, %v1207
  %v1226 = vadd.f32 %v1225, %v1211
  %v1227 = vadd.f32 %v1226, %v1215
  %1228 = vst [vmem:[%s7] sm:$0xff] %v1218
  %1229 = vst [vmem:[%s7 + $0x8] sm:$0xff] %v1221
  %1230 = vst [vmem:[%s7 + $0x10] sm:$0xff] %v1224
  %1231 = vst [vmem:[%s7 + $0x18] sm:$0xff] %v1227
  // Predicated region
  $region22: #{layout_graph_model_forward.13} parent=0 // pred_check
    _
  $region23: #{layout_graph_model_forward.13} parent=0 // pred_check_branch
    %1233 = sbr.rel (0) target = $region25
  $region24: #{layout_graph_model_forward.13} parent=0 // pred_region
    _
  $region25: #{layout_graph_model_forward.13} parent=0 // pred_fallthru
    _
  // Predicated region
  $region26: #{layout_graph_model_forward.13} parent=0 // pred_check
    _
  $region27: #{layout_graph_model_forward.13} parent=0 // pred_check_branch
    %1235 = sbr.rel (0) target = $region29
  $region28: #{layout_graph_model_forward.13} parent=0 // pred_region
    _
  $region29: #{layout_graph_model_forward.13} parent=0 // pred_fallthru
    _
  // Predicated region
  $region30: #{layout_graph_model_forward.13} parent=0 // pred_check
    _
  $region31: #{layout_graph_model_forward.13} parent=0 // pred_check_branch
    %1237 = sbr.rel (0) target = $region33
  $region32: #{layout_graph_model_forward.13} parent=0 // pred_region
    _
  $region33: #{layout_graph_model_forward.13} parent=0 // pred_fallthru
    _
  // Predicated region
  $region34: #{layout_graph_model_forward.13} parent=0 // pred_check
    _
  $region35: #{layout_graph_model_forward.13} parent=0 // pred_check_branch
    %1239 = sbr.rel (0) target = $region37
  $region36: #{layout_graph_model_forward.13} parent=0 // pred_region
    _
  $region37: #{layout_graph_model_forward.13} parent=0 // pred_fallthru
    _
  // Predicated region
  $region38: #{layout_graph_model_forward.13} parent=0 // pred_check
    _
  $region39: #{layout_graph_model_forward.13} parent=0 // pred_check_branch
    %1241 = sbr.rel (0) target = $region41
  $region40: #{layout_graph_model_forward.13} parent=0 // pred_region
    _
  $region41: #{layout_graph_model_forward.13} parent=0 // pred_fallthru
    _
  // Predicated region
  $region42: #{layout_graph_model_forward.13} parent=0 // pred_check
    _
  $region43: #{layout_graph_model_forward.13} parent=0 // pred_check_branch
    %1243 = sbr.rel (0) target = $region45
  $region44: #{layout_graph_model_forward.13} parent=0 // pred_region
    _
  $region45: #{layout_graph_model_forward.13} parent=0 // pred_fallthru
    _

// kernel: layout_graph_model_forward.15
$region0: #{layout_graph_model_forward.15}
  #allocation0 [shape = 'u32[]', space=smem, size = 0x4, offset = 0x4, fixed_abs, tag = 'smem constant byte address 0x4 - core index']
  #allocation1 [shape = 'u32[144,128]{1,0:T(1,128)}', space=vmem, size = 0x12000, scoped, tag = 'internal scratch']
  %s0 = inlined_call_operand.vmem [shape: bf16[32,512], index: 0, kind: input, shape index: {}]
  %s1 = inlined_call_operand.vmem [shape: bf16[32,512], index: 1, kind: input, shape index: {}]
  %s2 = inlined_call_operand.vmem [shape: bf16[512,512], index: 2, kind: input, shape index: {}]
  %s3 = inlined_call_operand.vmem [shape: bf16[512,512], index: 3, kind: input, shape index: {}]
  %s4 = inlined_call_operand.vmem [shape: f32[1,512], index: 4, kind: input, shape index: {}]
  %s5 = inlined_call_operand.vmem [shape: bf16[32,512], index: 5, kind: output, shape index: {0}]
  %s6 = inlined_call_operand.vmem [shape: f32[8,512], index: 6, kind: output, shape index: {1}]
  %s7 = inlined_call_operand.vmem [shape: f32[8,512], index: 7, kind: output, shape index: {2}]
  %8 = xla_tuple %s5, %s6, %s7
  %s9 = sld [smem:[#allocation0]]
  $region46: #{layout_graph_model_forward.15} parent=0
    _
  %s11 = ssub.s32 1, %s9
  %s12 = scalar_select 0, %s11, %s9
  // Predicated region
  $region2: #{layout_graph_model_forward.15} parent=0 // pred_check
    _
  $region3: #{layout_graph_model_forward.15} parent=0 // pred_check_branch
    %14 = sbr.rel (0) target = $region5
  $region4: #{layout_graph_model_forward.15} parent=0 // pred_region
    _
  $region5: #{layout_graph_model_forward.15} parent=0 // pred_fallthru
    _
  // Predicated region
  $region6: #{layout_graph_model_forward.15} parent=0 // pred_check
    _
  $region7: #{layout_graph_model_forward.15} parent=0 // pred_check_branch
    %16 = sbr.rel (0) target = $region9
  $region8: #{layout_graph_model_forward.15} parent=0 // pred_region
    _
  $region9: #{layout_graph_model_forward.15} parent=0 // pred_fallthru
    _
  // Predicated region
  $region10: #{layout_graph_model_forward.15} parent=0 // pred_check
    _
  $region11: #{layout_graph_model_forward.15} parent=0 // pred_check_branch
    %18 = sbr.rel (0) target = $region13
  $region12: #{layout_graph_model_forward.15} parent=0 // pred_region
    _
  $region13: #{layout_graph_model_forward.15} parent=0 // pred_fallthru
    _
  // Predicated region
  $region14: #{layout_graph_model_forward.15} parent=0 // pred_check
    _
  $region15: #{layout_graph_model_forward.15} parent=0 // pred_check_branch
    %20 = sbr.rel (0) target = $region17
  $region16: #{layout_graph_model_forward.15} parent=0 // pred_region
    _
  $region17: #{layout_graph_model_forward.15} parent=0 // pred_fallthru
    _
  // Predicated region
  $region18: #{layout_graph_model_forward.15} parent=0 // pred_check
    _
  $region19: #{layout_graph_model_forward.15} parent=0 // pred_check_branch
    %22 = sbr.rel (0) target = $region21
  $region20: #{layout_graph_model_forward.15} parent=0 // pred_region
    _
  $region21: #{layout_graph_model_forward.15} parent=0 // pred_fallthru
    _
  %v23 = vld [vmem:[%s0] sm:$0xff]
  %v24 = vld [vmem:[%s0 + $0x8] sm:$0xff]
  %v25 = vld [vmem:[%s0 + $0x10] sm:$0xff]
  %v26 = vld [vmem:[%s0 + $0x18] sm:$0xff]
  %v27 = vld [vmem:[%s0 + $0x20] sm:$0xff]
  %v28 = vld [vmem:[%s0 + $0x28] sm:$0xff]
  %v29 = vld [vmem:[%s0 + $0x30] sm:$0xff]
  %v30 = vld [vmem:[%s0 + $0x38] sm:$0xff]
  %v31 = vld [vmem:[%s2] sm:$0xff]
  %v32 = vld [vmem:[%s2 + $0x8] sm:$0xff]
  %v33 = vld [vmem:[%s2 + $0x10] sm:$0xff]
  %v34 = vld [vmem:[%s2 + $0x18] sm:$0xff]
  %v35 = vld [vmem:[%s2 + $0x20] sm:$0xff]
  %v36 = vld [vmem:[%s2 + $0x28] sm:$0xff]
  %v37 = vld [vmem:[%s2 + $0x30] sm:$0xff]
  %v38 = vld [vmem:[%s2 + $0x38] sm:$0xff]
  %v39 = vld [vmem:[%s2 + $0x40] sm:$0xff]
  %v40 = vld [vmem:[%s2 + $0x48] sm:$0xff]
  %v41 = vld [vmem:[%s2 + $0x50] sm:$0xff]
  %v42 = vld [vmem:[%s2 + $0x58] sm:$0xff]
  %v43 = vld [vmem:[%s2 + $0x60] sm:$0xff]
  %v44 = vld [vmem:[%s2 + $0x68] sm:$0xff]
  %v45 = vld [vmem:[%s2 + $0x70] sm:$0xff]
  %v46 = vld [vmem:[%s2 + $0x78] sm:$0xff]
  %v47 = vld [vmem:[%s2 + $0x80] sm:$0xff]
  %v48 = vld [vmem:[%s2 + $0x88] sm:$0xff]
  %v49 = vld [vmem:[%s2 + $0x90] sm:$0xff]
  %v50 = vld [vmem:[%s2 + $0x98] sm:$0xff]
  %v51 = vld [vmem:[%s2 + $0xa0] sm:$0xff]
  %v52 = vld [vmem:[%s2 + $0xa8] sm:$0xff]
  %v53 = vld [vmem:[%s2 + $0xb0] sm:$0xff]
  %v54 = vld [vmem:[%s2 + $0xb8] sm:$0xff]
  %v55 = vld [vmem:[%s2 + $0xc0] sm:$0xff]
  %v56 = vld [vmem:[%s2 + $0xc8] sm:$0xff]
  %v57 = vld [vmem:[%s2 + $0xd0] sm:$0xff]
  %v58 = vld [vmem:[%s2 + $0xd8] sm:$0xff]
  %v59 = vld [vmem:[%s2 + $0xe0] sm:$0xff]
  %v60 = vld [vmem:[%s2 + $0xe8] sm:$0xff]
  %v61 = vld [vmem:[%s2 + $0xf0] sm:$0xff]
  %v62 = vld [vmem:[%s2 + $0xf8] sm:$0xff]
  %v63 = vld [vmem:[%s2 + $0x100] sm:$0xff]
  %v64 = vld [vmem:[%s2 + $0x108] sm:$0xff]
  %v65 = vld [vmem:[%s2 + $0x110] sm:$0xff]
  %v66 = vld [vmem:[%s2 + $0x118] sm:$0xff]
  %v67 = vld [vmem:[%s2 + $0x120] sm:$0xff]
  %v68 = vld [vmem:[%s2 + $0x128] sm:$0xff]
  %v69 = vld [vmem:[%s2 + $0x130] sm:$0xff]
  %v70 = vld [vmem:[%s2 + $0x138] sm:$0xff]
  %v71 = vld [vmem:[%s2 + $0x140] sm:$0xff]
  %v72 = vld [vmem:[%s2 + $0x148] sm:$0xff]
  %v73 = vld [vmem:[%s2 + $0x150] sm:$0xff]
  %v74 = vld [vmem:[%s2 + $0x158] sm:$0xff]
  %v75 = vld [vmem:[%s2 + $0x160] sm:$0xff]
  %v76 = vld [vmem:[%s2 + $0x168] sm:$0xff]
  %v77 = vld [vmem:[%s2 + $0x170] sm:$0xff]
  %v78 = vld [vmem:[%s2 + $0x178] sm:$0xff]
  %v79 = vld [vmem:[%s2 + $0x180] sm:$0xff]
  %v80 = vld [vmem:[%s2 + $0x188] sm:$0xff]
  %v81 = vld [vmem:[%s2 + $0x190] sm:$0xff]
  %v82 = vld [vmem:[%s2 + $0x198] sm:$0xff]
  %v83 = vld [vmem:[%s2 + $0x1a0] sm:$0xff]
  %v84 = vld [vmem:[%s2 + $0x1a8] sm:$0xff]
  %v85 = vld [vmem:[%s2 + $0x1b0] sm:$0xff]
  %v86 = vld [vmem:[%s2 + $0x1b8] sm:$0xff]
  %v87 = vld [vmem:[%s2 + $0x1c0] sm:$0xff]
  %v88 = vld [vmem:[%s2 + $0x1c8] sm:$0xff]
  %v89 = vld [vmem:[%s2 + $0x1d0] sm:$0xff]
  %v90 = vld [vmem:[%s2 + $0x1d8] sm:$0xff]
  %v91 = vld [vmem:[%s2 + $0x1e0] sm:$0xff]
  %v92 = vld [vmem:[%s2 + $0x1e8] sm:$0xff]
  %v93 = vld [vmem:[%s2 + $0x1f0] sm:$0xff]
  %v94 = vld [vmem:[%s2 + $0x1f8] sm:$0xff]
  %v95 = vld [vmem:[%s2 + $0x200] sm:$0xff]
  %v96 = vld [vmem:[%s2 + $0x208] sm:$0xff]
  %v97 = vld [vmem:[%s2 + $0x210] sm:$0xff]
  %v98 = vld [vmem:[%s2 + $0x218] sm:$0xff]
  %v99 = vld [vmem:[%s2 + $0x220] sm:$0xff]
  %v100 = vld [vmem:[%s2 + $0x228] sm:$0xff]
  %v101 = vld [vmem:[%s2 + $0x230] sm:$0xff]
  %v102 = vld [vmem:[%s2 + $0x238] sm:$0xff]
  %v103 = vld [vmem:[%s2 + $0x240] sm:$0xff]
  %v104 = vld [vmem:[%s2 + $0x248] sm:$0xff]
  %v105 = vld [vmem:[%s2 + $0x250] sm:$0xff]
  %v106 = vld [vmem:[%s2 + $0x258] sm:$0xff]
  %v107 = vld [vmem:[%s2 + $0x260] sm:$0xff]
  %v108 = vld [vmem:[%s2 + $0x268] sm:$0xff]
  %v109 = vld [vmem:[%s2 + $0x270] sm:$0xff]
  %v110 = vld [vmem:[%s2 + $0x278] sm:$0xff]
  %v111 = vld [vmem:[%s2 + $0x280] sm:$0xff]
  %v112 = vld [vmem:[%s2 + $0x288] sm:$0xff]
  %v113 = vld [vmem:[%s2 + $0x290] sm:$0xff]
  %v114 = vld [vmem:[%s2 + $0x298] sm:$0xff]
  %v115 = vld [vmem:[%s2 + $0x2a0] sm:$0xff]
  %v116 = vld [vmem:[%s2 + $0x2a8] sm:$0xff]
  %v117 = vld [vmem:[%s2 + $0x2b0] sm:$0xff]
  %v118 = vld [vmem:[%s2 + $0x2b8] sm:$0xff]
  %v119 = vld [vmem:[%s2 + $0x2c0] sm:$0xff]
  %v120 = vld [vmem:[%s2 + $0x2c8] sm:$0xff]
  %v121 = vld [vmem:[%s2 + $0x2d0] sm:$0xff]
  %v122 = vld [vmem:[%s2 + $0x2d8] sm:$0xff]
  %v123 = vld [vmem:[%s2 + $0x2e0] sm:$0xff]
  %v124 = vld [vmem:[%s2 + $0x2e8] sm:$0xff]
  %v125 = vld [vmem:[%s2 + $0x2f0] sm:$0xff]
  %v126 = vld [vmem:[%s2 + $0x2f8] sm:$0xff]
  %v127 = vld [vmem:[%s2 + $0x300] sm:$0xff]
  %v128 = vld [vmem:[%s2 + $0x308] sm:$0xff]
  %v129 = vld [vmem:[%s2 + $0x310] sm:$0xff]
  %v130 = vld [vmem:[%s2 + $0x318] sm:$0xff]
  %v131 = vld [vmem:[%s2 + $0x320] sm:$0xff]
  %v132 = vld [vmem:[%s2 + $0x328] sm:$0xff]
  %v133 = vld [vmem:[%s2 + $0x330] sm:$0xff]
  %v134 = vld [vmem:[%s2 + $0x338] sm:$0xff]
  %v135 = vld [vmem:[%s2 + $0x340] sm:$0xff]
  %v136 = vld [vmem:[%s2 + $0x348] sm:$0xff]
  %v137 = vld [vmem:[%s2 + $0x350] sm:$0xff]
  %v138 = vld [vmem:[%s2 + $0x358] sm:$0xff]
  %v139 = vld [vmem:[%s2 + $0x360] sm:$0xff]
  %v140 = vld [vmem:[%s2 + $0x368] sm:$0xff]
  %v141 = vld [vmem:[%s2 + $0x370] sm:$0xff]
  %v142 = vld [vmem:[%s2 + $0x378] sm:$0xff]
  %v143 = vld [vmem:[%s2 + $0x380] sm:$0xff]
  %v144 = vld [vmem:[%s2 + $0x388] sm:$0xff]
  %v145 = vld [vmem:[%s2 + $0x390] sm:$0xff]
  %v146 = vld [vmem:[%s2 + $0x398] sm:$0xff]
  %v147 = vld [vmem:[%s2 + $0x3a0] sm:$0xff]
  %v148 = vld [vmem:[%s2 + $0x3a8] sm:$0xff]
  %v149 = vld [vmem:[%s2 + $0x3b0] sm:$0xff]
  %v150 = vld [vmem:[%s2 + $0x3b8] sm:$0xff]
  %v151 = vld [vmem:[%s2 + $0x3c0] sm:$0xff]
  %v152 = vld [vmem:[%s2 + $0x3c8] sm:$0xff]
  %v153 = vld [vmem:[%s2 + $0x3d0] sm:$0xff]
  %v154 = vld [vmem:[%s2 + $0x3d8] sm:$0xff]
  %v155 = vld [vmem:[%s2 + $0x3e0] sm:$0xff]
  %v156 = vld [vmem:[%s2 + $0x3e8] sm:$0xff]
  %v157 = vld [vmem:[%s2 + $0x3f0] sm:$0xff]
  %v158 = vld [vmem:[%s2 + $0x3f8] sm:$0xff]
  %v159 = vld [vmem:[%s1] sm:$0xff]
  %v160 = vld [vmem:[%s1 + $0x8] sm:$0xff]
  %v161 = vld [vmem:[%s1 + $0x10] sm:$0xff]
  %v162 = vld [vmem:[%s1 + $0x18] sm:$0xff]
  %v163 = vld [vmem:[%s1 + $0x20] sm:$0xff]
  %v164 = vld [vmem:[%s1 + $0x28] sm:$0xff]
  %v165 = vld [vmem:[%s1 + $0x30] sm:$0xff]
  %v166 = vld [vmem:[%s1 + $0x38] sm:$0xff]
  %v167 = vld [vmem:[%s3] sm:$0xff]
  %v168 = vld [vmem:[%s3 + $0x8] sm:$0xff]
  %v169 = vld [vmem:[%s3 + $0x10] sm:$0xff]
  %v170 = vld [vmem:[%s3 + $0x18] sm:$0xff]
  %v171 = vld [vmem:[%s3 + $0x20] sm:$0xff]
  %v172 = vld [vmem:[%s3 + $0x28] sm:$0xff]
  %v173 = vld [vmem:[%s3 + $0x30] sm:$0xff]
  %v174 = vld [vmem:[%s3 + $0x38] sm:$0xff]
  %v175 = vld [vmem:[%s3 + $0x40] sm:$0xff]
  %v176 = vld [vmem:[%s3 + $0x48] sm:$0xff]
  %v177 = vld [vmem:[%s3 + $0x50] sm:$0xff]
  %v178 = vld [vmem:[%s3 + $0x58] sm:$0xff]
  %v179 = vld [vmem:[%s3 + $0x60] sm:$0xff]
  %v180 = vld [vmem:[%s3 + $0x68] sm:$0xff]
  %v181 = vld [vmem:[%s3 + $0x70] sm:$0xff]
  %v182 = vld [vmem:[%s3 + $0x78] sm:$0xff]
  %v183 = vld [vmem:[%s3 + $0x80] sm:$0xff]
  %v184 = vld [vmem:[%s3 + $0x88] sm:$0xff]
  %v185 = vld [vmem:[%s3 + $0x90] sm:$0xff]
  %v186 = vld [vmem:[%s3 + $0x98] sm:$0xff]
  %v187 = vld [vmem:[%s3 + $0xa0] sm:$0xff]
  %v188 = vld [vmem:[%s3 + $0xa8] sm:$0xff]
  %v189 = vld [vmem:[%s3 + $0xb0] sm:$0xff]
  %v190 = vld [vmem:[%s3 + $0xb8] sm:$0xff]
  %v191 = vld [vmem:[%s3 + $0xc0] sm:$0xff]
  %v192 = vld [vmem:[%s3 + $0xc8] sm:$0xff]
  %v193 = vld [vmem:[%s3 + $0xd0] sm:$0xff]
  %v194 = vld [vmem:[%s3 + $0xd8] sm:$0xff]
  %v195 = vld [vmem:[%s3 + $0xe0] sm:$0xff]
  %v196 = vld [vmem:[%s3 + $0xe8] sm:$0xff]
  %v197 = vld [vmem:[%s3 + $0xf0] sm:$0xff]
  %v198 = vld [vmem:[%s3 + $0xf8] sm:$0xff]
  %v199 = vld [vmem:[%s3 + $0x100] sm:$0xff]
  %v200 = vld [vmem:[%s3 + $0x108] sm:$0xff]
  %v201 = vld [vmem:[%s3 + $0x110] sm:$0xff]
  %v202 = vld [vmem:[%s3 + $0x118] sm:$0xff]
  %v203 = vld [vmem:[%s3 + $0x120] sm:$0xff]
  %v204 = vld [vmem:[%s3 + $0x128] sm:$0xff]
  %v205 = vld [vmem:[%s3 + $0x130] sm:$0xff]
  %v206 = vld [vmem:[%s3 + $0x138] sm:$0xff]
  %v207 = vld [vmem:[%s3 + $0x140] sm:$0xff]
  %v208 = vld [vmem:[%s3 + $0x148] sm:$0xff]
  %v209 = vld [vmem:[%s3 + $0x150] sm:$0xff]
  %v210 = vld [vmem:[%s3 + $0x158] sm:$0xff]
  %v211 = vld [vmem:[%s3 + $0x160] sm:$0xff]
  %v212 = vld [vmem:[%s3 + $0x168] sm:$0xff]
  %v213 = vld [vmem:[%s3 + $0x170] sm:$0xff]
  %v214 = vld [vmem:[%s3 + $0x178] sm:$0xff]
  %v215 = vld [vmem:[%s3 + $0x180] sm:$0xff]
  %v216 = vld [vmem:[%s3 + $0x188] sm:$0xff]
  %v217 = vld [vmem:[%s3 + $0x190] sm:$0xff]
  %v218 = vld [vmem:[%s3 + $0x198] sm:$0xff]
  %v219 = vld [vmem:[%s3 + $0x1a0] sm:$0xff]
  %v220 = vld [vmem:[%s3 + $0x1a8] sm:$0xff]
  %v221 = vld [vmem:[%s3 + $0x1b0] sm:$0xff]
  %v222 = vld [vmem:[%s3 + $0x1b8] sm:$0xff]
  %v223 = vld [vmem:[%s3 + $0x1c0] sm:$0xff]
  %v224 = vld [vmem:[%s3 + $0x1c8] sm:$0xff]
  %v225 = vld [vmem:[%s3 + $0x1d0] sm:$0xff]
  %v226 = vld [vmem:[%s3 + $0x1d8] sm:$0xff]
  %v227 = vld [vmem:[%s3 + $0x1e0] sm:$0xff]
  %v228 = vld [vmem:[%s3 + $0x1e8] sm:$0xff]
  %v229 = vld [vmem:[%s3 + $0x1f0] sm:$0xff]
  %v230 = vld [vmem:[%s3 + $0x1f8] sm:$0xff]
  %v231 = vld [vmem:[%s3 + $0x200] sm:$0xff]
  %v232 = vld [vmem:[%s3 + $0x208] sm:$0xff]
  %v233 = vld [vmem:[%s3 + $0x210] sm:$0xff]
  %v234 = vld [vmem:[%s3 + $0x218] sm:$0xff]
  %v235 = vld [vmem:[%s3 + $0x220] sm:$0xff]
  %v236 = vld [vmem:[%s3 + $0x228] sm:$0xff]
  %v237 = vld [vmem:[%s3 + $0x230] sm:$0xff]
  %v238 = vld [vmem:[%s3 + $0x238] sm:$0xff]
  %v239 = vld [vmem:[%s3 + $0x240] sm:$0xff]
  %v240 = vld [vmem:[%s3 + $0x248] sm:$0xff]
  %v241 = vld [vmem:[%s3 + $0x250] sm:$0xff]
  %v242 = vld [vmem:[%s3 + $0x258] sm:$0xff]
  %v243 = vld [vmem:[%s3 + $0x260] sm:$0xff]
  %v244 = vld [vmem:[%s3 + $0x268] sm:$0xff]
  %v245 = vld [vmem:[%s3 + $0x270] sm:$0xff]
  %v246 = vld [vmem:[%s3 + $0x278] sm:$0xff]
  %v247 = vld [vmem:[%s3 + $0x280] sm:$0xff]
  %v248 = vld [vmem:[%s3 + $0x288] sm:$0xff]
  %v249 = vld [vmem:[%s3 + $0x290] sm:$0xff]
  %v250 = vld [vmem:[%s3 + $0x298] sm:$0xff]
  %v251 = vld [vmem:[%s3 + $0x2a0] sm:$0xff]
  %v252 = vld [vmem:[%s3 + $0x2a8] sm:$0xff]
  %v253 = vld [vmem:[%s3 + $0x2b0] sm:$0xff]
  %v254 = vld [vmem:[%s3 + $0x2b8] sm:$0xff]
  %v255 = vld [vmem:[%s3 + $0x2c0] sm:$0xff]
  %v256 = vld [vmem:[%s3 + $0x2c8] sm:$0xff]
  %v257 = vld [vmem:[%s3 + $0x2d0] sm:$0xff]
  %v258 = vld [vmem:[%s3 + $0x2d8] sm:$0xff]
  %v259 = vld [vmem:[%s3 + $0x2e0] sm:$0xff]
  %v260 = vld [vmem:[%s3 + $0x2e8] sm:$0xff]
  %v261 = vld [vmem:[%s3 + $0x2f0] sm:$0xff]
  %v262 = vld [vmem:[%s3 + $0x2f8] sm:$0xff]
  %v263 = vld [vmem:[%s3 + $0x300] sm:$0xff]
  %v264 = vld [vmem:[%s3 + $0x308] sm:$0xff]
  %v265 = vld [vmem:[%s3 + $0x310] sm:$0xff]
  %v266 = vld [vmem:[%s3 + $0x318] sm:$0xff]
  %v267 = vld [vmem:[%s3 + $0x320] sm:$0xff]
  %v268 = vld [vmem:[%s3 + $0x328] sm:$0xff]
  %v269 = vld [vmem:[%s3 + $0x330] sm:$0xff]
  %v270 = vld [vmem:[%s3 + $0x338] sm:$0xff]
  %v271 = vld [vmem:[%s3 + $0x340] sm:$0xff]
  %v272 = vld [vmem:[%s3 + $0x348] sm:$0xff]
  %v273 = vld [vmem:[%s3 + $0x350] sm:$0xff]
  %v274 = vld [vmem:[%s3 + $0x358] sm:$0xff]
  %v275 = vld [vmem:[%s3 + $0x360] sm:$0xff]
  %v276 = vld [vmem:[%s3 + $0x368] sm:$0xff]
  %v277 = vld [vmem:[%s3 + $0x370] sm:$0xff]
  %v278 = vld [vmem:[%s3 + $0x378] sm:$0xff]
  %v279 = vld [vmem:[%s3 + $0x380] sm:$0xff]
  %v280 = vld [vmem:[%s3 + $0x388] sm:$0xff]
  %v281 = vld [vmem:[%s3 + $0x390] sm:$0xff]
  %v282 = vld [vmem:[%s3 + $0x398] sm:$0xff]
  %v283 = vld [vmem:[%s3 + $0x3a0] sm:$0xff]
  %v284 = vld [vmem:[%s3 + $0x3a8] sm:$0xff]
  %v285 = vld [vmem:[%s3 + $0x3b0] sm:$0xff]
  %v286 = vld [vmem:[%s3 + $0x3b8] sm:$0xff]
  %v287 = vld [vmem:[%s3 + $0x3c0] sm:$0xff]
  %v288 = vld [vmem:[%s3 + $0x3c8] sm:$0xff]
  %v289 = vld [vmem:[%s3 + $0x3d0] sm:$0xff]
  %v290 = vld [vmem:[%s3 + $0x3d8] sm:$0xff]
  %v291 = vld [vmem:[%s3 + $0x3e0] sm:$0xff]
  %v292 = vld [vmem:[%s3 + $0x3e8] sm:$0xff]
  %v293 = vld [vmem:[%s3 + $0x3f0] sm:$0xff]
  %v294 = vld [vmem:[%s3 + $0x3f8] sm:$0xff]
  %v303 = vunpack.c.l.b16 %v159
  %v304 = vunpack.c.h.b16 %v159
  %v305 = vunpack.c.l.b16 %v160
  %v306 = vunpack.c.h.b16 %v160
  %v307 = vunpack.c.l.b16 %v161
  %v308 = vunpack.c.h.b16 %v161
  %v309 = vunpack.c.l.b16 %v162
  %v310 = vunpack.c.h.b16 %v162
  %v311 = vunpack.c.l.b16 %v163
  %v312 = vunpack.c.h.b16 %v163
  %v313 = vunpack.c.l.b16 %v164
  %v314 = vunpack.c.h.b16 %v164
  %v315 = vunpack.c.l.b16 %v165
  %v316 = vunpack.c.h.b16 %v165
  %v317 = vunpack.c.l.b16 %v166
  %v318 = vunpack.c.h.b16 %v166
  %v319 = vpack.c.b16 %v307, %v303
  %v320 = vpack.c.b16 %v308, %v304
  %v321 = vpack.c.b16 %v309, %v305
  %v322 = vpack.c.b16 %v310, %v306
  %v323 = vpack.c.b16 %v315, %v311
  %v324 = vpack.c.b16 %v316, %v312
  %v325 = vpack.c.b16 %v317, %v313
  %v326 = vpack.c.b16 %v318, %v314
  %v463 = vunpack.c.l.b16 %v167
  %v464 = vunpack.c.h.b16 %v167
  %v465 = vunpack.c.l.b16 %v168
  %v466 = vunpack.c.h.b16 %v168
  %v467 = vunpack.c.l.b16 %v169
  %v468 = vunpack.c.h.b16 %v169
  %v469 = vunpack.c.l.b16 %v170
  %v470 = vunpack.c.h.b16 %v170
  %v471 = vunpack.c.l.b16 %v171
  %v472 = vunpack.c.h.b16 %v171
  %v473 = vunpack.c.l.b16 %v172
  %v474 = vunpack.c.h.b16 %v172
  %v475 = vunpack.c.l.b16 %v173
  %v476 = vunpack.c.h.b16 %v173
  %v477 = vunpack.c.l.b16 %v174
  %v478 = vunpack.c.h.b16 %v174
  %v479 = vunpack.c.l.b16 %v175
  %v480 = vunpack.c.h.b16 %v175
  %v481 = vunpack.c.l.b16 %v176
  %v482 = vunpack.c.h.b16 %v176
  %v483 = vunpack.c.l.b16 %v177
  %v484 = vunpack.c.h.b16 %v177
  %v485 = vunpack.c.l.b16 %v178
  %v486 = vunpack.c.h.b16 %v178
  %v487 = vunpack.c.l.b16 %v179
  %v488 = vunpack.c.h.b16 %v179
  %v489 = vunpack.c.l.b16 %v180
  %v490 = vunpack.c.h.b16 %v180
  %v491 = vunpack.c.l.b16 %v181
  %v492 = vunpack.c.h.b16 %v181
  %v493 = vunpack.c.l.b16 %v182
  %v494 = vunpack.c.h.b16 %v182
  %v495 = vunpack.c.l.b16 %v183
  %v496 = vunpack.c.h.b16 %v183
  %v497 = vunpack.c.l.b16 %v184
  %v498 = vunpack.c.h.b16 %v184
  %v499 = vunpack.c.l.b16 %v185
  %v500 = vunpack.c.h.b16 %v185
  %v501 = vunpack.c.l.b16 %v186
  %v502 = vunpack.c.h.b16 %v186
  %v503 = vunpack.c.l.b16 %v187
  %v504 = vunpack.c.h.b16 %v187
  %v505 = vunpack.c.l.b16 %v188
  %v506 = vunpack.c.h.b16 %v188
  %v507 = vunpack.c.l.b16 %v189
  %v508 = vunpack.c.h.b16 %v189
  %v509 = vunpack.c.l.b16 %v190
  %v510 = vunpack.c.h.b16 %v190
  %v511 = vunpack.c.l.b16 %v191
  %v512 = vunpack.c.h.b16 %v191
  %v513 = vunpack.c.l.b16 %v192
  %v514 = vunpack.c.h.b16 %v192
  %v515 = vunpack.c.l.b16 %v193
  %v516 = vunpack.c.h.b16 %v193
  %v517 = vunpack.c.l.b16 %v194
  %v518 = vunpack.c.h.b16 %v194
  %v519 = vunpack.c.l.b16 %v195
  %v520 = vunpack.c.h.b16 %v195
  %v521 = vunpack.c.l.b16 %v196
  %v522 = vunpack.c.h.b16 %v196
  %v523 = vunpack.c.l.b16 %v197
  %v524 = vunpack.c.h.b16 %v197
  %v525 = vunpack.c.l.b16 %v198
  %v526 = vunpack.c.h.b16 %v198
  %v527 = vunpack.c.l.b16 %v199
  %v528 = vunpack.c.h.b16 %v199
  %v529 = vunpack.c.l.b16 %v200
  %v530 = vunpack.c.h.b16 %v200
  %v531 = vunpack.c.l.b16 %v201
  %v532 = vunpack.c.h.b16 %v201
  %v533 = vunpack.c.l.b16 %v202
  %v534 = vunpack.c.h.b16 %v202
  %v535 = vunpack.c.l.b16 %v203
  %v536 = vunpack.c.h.b16 %v203
  %v537 = vunpack.c.l.b16 %v204
  %v538 = vunpack.c.h.b16 %v204
  %v539 = vunpack.c.l.b16 %v205
  %v540 = vunpack.c.h.b16 %v205
  %v541 = vunpack.c.l.b16 %v206
  %v542 = vunpack.c.h.b16 %v206
  %v543 = vunpack.c.l.b16 %v207
  %v544 = vunpack.c.h.b16 %v207
  %v545 = vunpack.c.l.b16 %v208
  %v546 = vunpack.c.h.b16 %v208
  %v547 = vunpack.c.l.b16 %v209
  %v548 = vunpack.c.h.b16 %v209
  %v549 = vunpack.c.l.b16 %v210
  %v550 = vunpack.c.h.b16 %v210
  %v551 = vunpack.c.l.b16 %v211
  %v552 = vunpack.c.h.b16 %v211
  %v553 = vunpack.c.l.b16 %v212
  %v554 = vunpack.c.h.b16 %v212
  %v555 = vunpack.c.l.b16 %v213
  %v556 = vunpack.c.h.b16 %v213
  %v557 = vunpack.c.l.b16 %v214
  %v558 = vunpack.c.h.b16 %v214
  %v559 = vunpack.c.l.b16 %v215
  %v560 = vunpack.c.h.b16 %v215
  %v561 = vunpack.c.l.b16 %v216
  %v562 = vunpack.c.h.b16 %v216
  %v563 = vunpack.c.l.b16 %v217
  %v564 = vunpack.c.h.b16 %v217
  %v565 = vunpack.c.l.b16 %v218
  %v566 = vunpack.c.h.b16 %v218
  %v567 = vunpack.c.l.b16 %v219
  %v568 = vunpack.c.h.b16 %v219
  %v569 = vunpack.c.l.b16 %v220
  %v570 = vunpack.c.h.b16 %v220
  %v571 = vunpack.c.l.b16 %v221
  %v572 = vunpack.c.h.b16 %v221
  %v573 = vunpack.c.l.b16 %v222
  %v574 = vunpack.c.h.b16 %v222
  %v575 = vunpack.c.l.b16 %v223
  %v576 = vunpack.c.h.b16 %v223
  %v577 = vunpack.c.l.b16 %v224
  %v578 = vunpack.c.h.b16 %v224
  %v579 = vunpack.c.l.b16 %v225
  %v580 = vunpack.c.h.b16 %v225
  %v581 = vunpack.c.l.b16 %v226
  %v582 = vunpack.c.h.b16 %v226
  %v583 = vunpack.c.l.b16 %v227
  %v584 = vunpack.c.h.b16 %v227
  %v585 = vunpack.c.l.b16 %v228
  %v586 = vunpack.c.h.b16 %v228
  %v587 = vunpack.c.l.b16 %v229
  %v588 = vunpack.c.h.b16 %v229
  %v589 = vunpack.c.l.b16 %v230
  %v590 = vunpack.c.h.b16 %v230
  %v591 = vunpack.c.l.b16 %v231
  %v592 = vunpack.c.h.b16 %v231
  %v593 = vunpack.c.l.b16 %v232
  %v594 = vunpack.c.h.b16 %v232
  %v595 = vunpack.c.l.b16 %v233
  %v596 = vunpack.c.h.b16 %v233
  %v597 = vunpack.c.l.b16 %v234
  %v598 = vunpack.c.h.b16 %v234
  %v599 = vunpack.c.l.b16 %v235
  %v600 = vunpack.c.h.b16 %v235
  %v601 = vunpack.c.l.b16 %v236
  %v602 = vunpack.c.h.b16 %v236
  %v603 = vunpack.c.l.b16 %v237
  %v604 = vunpack.c.h.b16 %v237
  %v605 = vunpack.c.l.b16 %v238
  %v606 = vunpack.c.h.b16 %v238
  %v607 = vunpack.c.l.b16 %v239
  %v608 = vunpack.c.h.b16 %v239
  %v609 = vunpack.c.l.b16 %v240
  %v610 = vunpack.c.h.b16 %v240
  %v611 = vunpack.c.l.b16 %v241
  %v612 = vunpack.c.h.b16 %v241
  %v613 = vunpack.c.l.b16 %v242
  %v614 = vunpack.c.h.b16 %v242
  %v615 = vunpack.c.l.b16 %v243
  %v616 = vunpack.c.h.b16 %v243
  %v617 = vunpack.c.l.b16 %v244
  %v618 = vunpack.c.h.b16 %v244
  %v619 = vunpack.c.l.b16 %v245
  %v620 = vunpack.c.h.b16 %v245
  %v621 = vunpack.c.l.b16 %v246
  %v622 = vunpack.c.h.b16 %v246
  %v623 = vunpack.c.l.b16 %v247
  %v624 = vunpack.c.h.b16 %v247
  %v625 = vunpack.c.l.b16 %v248
  %v626 = vunpack.c.h.b16 %v248
  %v627 = vunpack.c.l.b16 %v249
  %v628 = vunpack.c.h.b16 %v249
  %v629 = vunpack.c.l.b16 %v250
  %v630 = vunpack.c.h.b16 %v250
  %v631 = vunpack.c.l.b16 %v251
  %v632 = vunpack.c.h.b16 %v251
  %v633 = vunpack.c.l.b16 %v252
  %v634 = vunpack.c.h.b16 %v252
  %v635 = vunpack.c.l.b16 %v253
  %v636 = vunpack.c.h.b16 %v253
  %v637 = vunpack.c.l.b16 %v254
  %v638 = vunpack.c.h.b16 %v254
  %v639 = vunpack.c.l.b16 %v255
  %v640 = vunpack.c.h.b16 %v255
  %v641 = vunpack.c.l.b16 %v256
  %v642 = vunpack.c.h.b16 %v256
  %v643 = vunpack.c.l.b16 %v257
  %v644 = vunpack.c.h.b16 %v257
  %v645 = vunpack.c.l.b16 %v258
  %v646 = vunpack.c.h.b16 %v258
  %v647 = vunpack.c.l.b16 %v259
  %v648 = vunpack.c.h.b16 %v259
  %v649 = vunpack.c.l.b16 %v260
  %v650 = vunpack.c.h.b16 %v260
  %v651 = vunpack.c.l.b16 %v261
  %v652 = vunpack.c.h.b16 %v261
  %v653 = vunpack.c.l.b16 %v262
  %v654 = vunpack.c.h.b16 %v262
  %v655 = vunpack.c.l.b16 %v263
  %v656 = vunpack.c.h.b16 %v263
  %v657 = vunpack.c.l.b16 %v264
  %v658 = vunpack.c.h.b16 %v264
  %v659 = vunpack.c.l.b16 %v265
  %v660 = vunpack.c.h.b16 %v265
  %v661 = vunpack.c.l.b16 %v266
  %v662 = vunpack.c.h.b16 %v266
  %v663 = vunpack.c.l.b16 %v267
  %v664 = vunpack.c.h.b16 %v267
  %v665 = vunpack.c.l.b16 %v268
  %v666 = vunpack.c.h.b16 %v268
  %v667 = vunpack.c.l.b16 %v269
  %v668 = vunpack.c.h.b16 %v269
  %v669 = vunpack.c.l.b16 %v270
  %v670 = vunpack.c.h.b16 %v270
  %v671 = vunpack.c.l.b16 %v271
  %v672 = vunpack.c.h.b16 %v271
  %v673 = vunpack.c.l.b16 %v272
  %v674 = vunpack.c.h.b16 %v272
  %v675 = vunpack.c.l.b16 %v273
  %v676 = vunpack.c.h.b16 %v273
  %v677 = vunpack.c.l.b16 %v274
  %v678 = vunpack.c.h.b16 %v274
  %v679 = vunpack.c.l.b16 %v275
  %v680 = vunpack.c.h.b16 %v275
  %v681 = vunpack.c.l.b16 %v276
  %v682 = vunpack.c.h.b16 %v276
  %v683 = vunpack.c.l.b16 %v277
  %v684 = vunpack.c.h.b16 %v277
  %v685 = vunpack.c.l.b16 %v278
  %v686 = vunpack.c.h.b16 %v278
  %v687 = vunpack.c.l.b16 %v279
  %v688 = vunpack.c.h.b16 %v279
  %v689 = vunpack.c.l.b16 %v280
  %v690 = vunpack.c.h.b16 %v280
  %v691 = vunpack.c.l.b16 %v281
  %v692 = vunpack.c.h.b16 %v281
  %v693 = vunpack.c.l.b16 %v282
  %v694 = vunpack.c.h.b16 %v282
  %v695 = vunpack.c.l.b16 %v283
  %v696 = vunpack.c.h.b16 %v283
  %v697 = vunpack.c.l.b16 %v284
  %v698 = vunpack.c.h.b16 %v284
  %v699 = vunpack.c.l.b16 %v285
  %v700 = vunpack.c.h.b16 %v285
  %v701 = vunpack.c.l.b16 %v286
  %v702 = vunpack.c.h.b16 %v286
  %v703 = vunpack.c.l.b16 %v287
  %v704 = vunpack.c.h.b16 %v287
  %v705 = vunpack.c.l.b16 %v288
  %v706 = vunpack.c.h.b16 %v288
  %v707 = vunpack.c.l.b16 %v289
  %v708 = vunpack.c.h.b16 %v289
  %v709 = vunpack.c.l.b16 %v290
  %v710 = vunpack.c.h.b16 %v290
  %v711 = vunpack.c.l.b16 %v291
  %v712 = vunpack.c.h.b16 %v291
  %v713 = vunpack.c.l.b16 %v292
  %v714 = vunpack.c.h.b16 %v292
  %v715 = vunpack.c.l.b16 %v293
  %v716 = vunpack.c.h.b16 %v293
  %v717 = vunpack.c.l.b16 %v294
  %v718 = vunpack.c.h.b16 %v294
  %v719 = vpack.c.b16 %v467, %v463
  %v720 = vpack.c.b16 %v468, %v464
  %v721 = vpack.c.b16 %v469, %v465
  %v722 = vpack.c.b16 %v470, %v466
  %v723 = vpack.c.b16 %v475, %v471
  %v724 = vpack.c.b16 %v476, %v472
  %v725 = vpack.c.b16 %v477, %v473
  %v726 = vpack.c.b16 %v478, %v474
  %v727 = vpack.c.b16 %v483, %v479
  %v728 = vpack.c.b16 %v484, %v480
  %v729 = vpack.c.b16 %v485, %v481
  %v730 = vpack.c.b16 %v486, %v482
  %v731 = vpack.c.b16 %v491, %v487
  %v732 = vpack.c.b16 %v492, %v488
  %v733 = vpack.c.b16 %v493, %v489
  %v734 = vpack.c.b16 %v494, %v490
  %v735 = vpack.c.b16 %v499, %v495
  %v736 = vpack.c.b16 %v500, %v496
  %v737 = vpack.c.b16 %v501, %v497
  %v738 = vpack.c.b16 %v502, %v498
  %v739 = vpack.c.b16 %v507, %v503
  %v740 = vpack.c.b16 %v508, %v504
  %v741 = vpack.c.b16 %v509, %v505
  %v742 = vpack.c.b16 %v510, %v506
  %v743 = vpack.c.b16 %v515, %v511
  %v744 = vpack.c.b16 %v516, %v512
  %v745 = vpack.c.b16 %v517, %v513
  %v746 = vpack.c.b16 %v518, %v514
  %v747 = vpack.c.b16 %v523, %v519
  %v748 = vpack.c.b16 %v524, %v520
  %v749 = vpack.c.b16 %v525, %v521
  %v750 = vpack.c.b16 %v526, %v522
  %v751 = vpack.c.b16 %v531, %v527
  %v752 = vpack.c.b16 %v532, %v528
  %v753 = vpack.c.b16 %v533, %v529
  %v754 = vpack.c.b16 %v534, %v530
  %v755 = vpack.c.b16 %v539, %v535
  %v756 = vpack.c.b16 %v540, %v536
  %v757 = vpack.c.b16 %v541, %v537
  %v758 = vpack.c.b16 %v542, %v538
  %v759 = vpack.c.b16 %v547, %v543
  %v760 = vpack.c.b16 %v548, %v544
  %v761 = vpack.c.b16 %v549, %v545
  %v762 = vpack.c.b16 %v550, %v546
  %v763 = vpack.c.b16 %v555, %v551
  %v764 = vpack.c.b16 %v556, %v552
  %v765 = vpack.c.b16 %v557, %v553
  %v766 = vpack.c.b16 %v558, %v554
  %v767 = vpack.c.b16 %v563, %v559
  %v768 = vpack.c.b16 %v564, %v560
  %v769 = vpack.c.b16 %v565, %v561
  %v770 = vpack.c.b16 %v566, %v562
  %v771 = vpack.c.b16 %v571, %v567
  %v772 = vpack.c.b16 %v572, %v568
  %v773 = vpack.c.b16 %v573, %v569
  %v774 = vpack.c.b16 %v574, %v570
  %v775 = vpack.c.b16 %v579, %v575
  %v776 = vpack.c.b16 %v580, %v576
  %v777 = vpack.c.b16 %v581, %v577
  %v778 = vpack.c.b16 %v582, %v578
  %v779 = vpack.c.b16 %v587, %v583
  %v780 = vpack.c.b16 %v588, %v584
  %v781 = vpack.c.b16 %v589, %v585
  %v782 = vpack.c.b16 %v590, %v586
  %v783 = vpack.c.b16 %v595, %v591
  %v784 = vpack.c.b16 %v596, %v592
  %v785 = vpack.c.b16 %v597, %v593
  %v786 = vpack.c.b16 %v598, %v594
  %v787 = vpack.c.b16 %v603, %v599
  %v788 = vpack.c.b16 %v604, %v600
  %v789 = vpack.c.b16 %v605, %v601
  %v790 = vpack.c.b16 %v606, %v602
  %v791 = vpack.c.b16 %v611, %v607
  %v792 = vpack.c.b16 %v612, %v608
  %v793 = vpack.c.b16 %v613, %v609
  %v794 = vpack.c.b16 %v614, %v610
  %v795 = vpack.c.b16 %v619, %v615
  %v796 = vpack.c.b16 %v620, %v616
  %v797 = vpack.c.b16 %v621, %v617
  %v798 = vpack.c.b16 %v622, %v618
  %v799 = vpack.c.b16 %v627, %v623
  %v800 = vpack.c.b16 %v628, %v624
  %v801 = vpack.c.b16 %v629, %v625
  %v802 = vpack.c.b16 %v630, %v626
  %v803 = vpack.c.b16 %v635, %v631
  %v804 = vpack.c.b16 %v636, %v632
  %v805 = vpack.c.b16 %v637, %v633
  %v806 = vpack.c.b16 %v638, %v634
  %v807 = vpack.c.b16 %v643, %v639
  %v808 = vpack.c.b16 %v644, %v640
  %v809 = vpack.c.b16 %v645, %v641
  %v810 = vpack.c.b16 %v646, %v642
  %v811 = vpack.c.b16 %v651, %v647
  %v812 = vpack.c.b16 %v652, %v648
  %v813 = vpack.c.b16 %v653, %v649
  %v814 = vpack.c.b16 %v654, %v650
  %v815 = vpack.c.b16 %v659, %v655
  %v816 = vpack.c.b16 %v660, %v656
  %v817 = vpack.c.b16 %v661, %v657
  %v818 = vpack.c.b16 %v662, %v658
  %v819 = vpack.c.b16 %v667, %v663
  %v820 = vpack.c.b16 %v668, %v664
  %v821 = vpack.c.b16 %v669, %v665
  %v822 = vpack.c.b16 %v670, %v666
  %v823 = vpack.c.b16 %v675, %v671
  %v824 = vpack.c.b16 %v676, %v672
  %v825 = vpack.c.b16 %v677, %v673
  %v826 = vpack.c.b16 %v678, %v674
  %v827 = vpack.c.b16 %v683, %v679
  %v828 = vpack.c.b16 %v684, %v680
  %v829 = vpack.c.b16 %v685, %v681
  %v830 = vpack.c.b16 %v686, %v682
  %v831 = vpack.c.b16 %v691, %v687
  %v832 = vpack.c.b16 %v692, %v688
  %v833 = vpack.c.b16 %v693, %v689
  %v834 = vpack.c.b16 %v694, %v690
  %v835 = vpack.c.b16 %v699, %v695
  %v836 = vpack.c.b16 %v700, %v696
  %v837 = vpack.c.b16 %v701, %v697
  %v838 = vpack.c.b16 %v702, %v698
  %v839 = vpack.c.b16 %v707, %v703
  %v840 = vpack.c.b16 %v708, %v704
  %v841 = vpack.c.b16 %v709, %v705
  %v842 = vpack.c.b16 %v710, %v706
  %v843 = vpack.c.b16 %v715, %v711
  %v844 = vpack.c.b16 %v716, %v712
  %v845 = vpack.c.b16 %v717, %v713
  %v846 = vpack.c.b16 %v718, %v714
  %975 = vmatprep.subr.bf16.mxu0 %v720
  %976 = vmatpush1.bf16.msra.mxu0 %v719
  %977 = vmatprep.subr.bf16.mxu0 %v724
  %978 = vmatpush1.bf16.msra.mxu0 %v723
  %979 = vmatprep.subr.bf16.mxu0 %v728
  %980 = vmatpush1.bf16.msra.mxu0 %v727
  %981 = vmatprep.subr.bf16.mxu0 %v732
  %982 = vmatpush1.bf16.msra.mxu0 %v731
  %983 = vmatprep.subr.bf16.mxu0 %v736
  %984 = vmatpush1.bf16.msra.mxu0 %v735
  %985 = vmatprep.subr.bf16.mxu0 %v740
  %986 = vmatpush1.bf16.msra.mxu0 %v739
  %987 = vmatprep.subr.bf16.mxu0 %v744
  %988 = vmatpush1.bf16.msra.mxu0 %v743
  %989 = vmatprep.subr.bf16.mxu0 %v748
  %990 = vmatpush1.bf16.msra.mxu0 %v747
  %991 = vmatprep.subr.bf16.mxu0 %v752
  %992 = vmatpush1.bf16.msra.mxu0 %v751
  %993 = vmatprep.subr.bf16.mxu0 %v756
  %994 = vmatpush1.bf16.msra.mxu0 %v755
  %995 = vmatprep.subr.bf16.mxu0 %v760
  %996 = vmatpush1.bf16.msra.mxu0 %v759
  %997 = vmatprep.subr.bf16.mxu0 %v764
  %998 = vmatpush1.bf16.msra.mxu0 %v763
  %999 = vmatprep.subr.bf16.mxu0 %v768
  %1000 = vmatpush1.bf16.msra.mxu0 %v767
  %1001 = vmatprep.subr.bf16.mxu0 %v772
  %1002 = vmatpush1.bf16.msra.mxu0 %v771
  %1003 = vmatprep.subr.bf16.mxu0 %v776
  %1004 = vmatpush1.bf16.msra.mxu0 %v775
  %1005 = vmatprep.subr.bf16.mxu0 %v780
  %1006 = vmatpush1.bf16.msra.mxu0 %v779
  %1007 = vmatprep.mubr.bf16.mxu0 %v320
  %1008 = vmatmul.mubr.bf16.gmra.mrb[0].mxu0 %v319
  %v1009 = vpop.f32.mrb[0].mxu0
  %v1010 = vadd.f32 0.0, %v1009
  %v1011 = vpop.f32.mrb[0].mxu0
  %v1012 = vadd.f32 0.0, %v1011
  %v1013 = vpop.f32.mrb[0].mxu0
  %v1014 = vadd.f32 0.0, %v1013
  %v1015 = vpop.f32.mrb[0].mxu0
  %v1016 = vadd.f32 0.0, %v1015
  %1017 = vmatprep.mubr.bf16.mxu0 %v324
  %1018 = vmatmul.mubr.bf16.gmra.mrb[0].mxu0 %v323
  %v1019 = vpop.f32.mrb[0].mxu0
  %v1020 = vadd.f32 0.0, %v1019
  %v1021 = vpop.f32.mrb[0].mxu0
  %v1022 = vadd.f32 0.0, %v1021
  %v1023 = vpop.f32.mrb[0].mxu0
  %v1024 = vadd.f32 0.0, %v1023
  %v1025 = vpop.f32.mrb[0].mxu0
  %v1026 = vadd.f32 0.0, %v1025
  %1027 = vdwg.mxu0
  %1028 = vmatprep.subr.bf16.mxu0 %v784
  %1029 = vmatpush1.bf16.msra.mxu0 %v783
  %1030 = vmatprep.subr.bf16.mxu0 %v788
  %1031 = vmatpush1.bf16.msra.mxu0 %v787
  %1032 = vmatprep.subr.bf16.mxu0 %v792
  %1033 = vmatpush1.bf16.msra.mxu0 %v791
  %1034 = vmatprep.subr.bf16.mxu0 %v796
  %1035 = vmatpush1.bf16.msra.mxu0 %v795
  %1036 = vmatprep.subr.bf16.mxu0 %v800
  %1037 = vmatpush1.bf16.msra.mxu0 %v799
  %1038 = vmatprep.subr.bf16.mxu0 %v804
  %1039 = vmatpush1.bf16.msra.mxu0 %v803
  %1040 = vmatprep.subr.bf16.mxu0 %v808
  %1041 = vmatpush1.bf16.msra.mxu0 %v807
  %1042 = vmatprep.subr.bf16.mxu0 %v812
  %1043 = vmatpush1.bf16.msra.mxu0 %v811
  %1044 = vmatprep.subr.bf16.mxu0 %v816
  %1045 = vmatpush1.bf16.msra.mxu0 %v815
  %1046 = vmatprep.subr.bf16.mxu0 %v820
  %1047 = vmatpush1.bf16.msra.mxu0 %v819
  %1048 = vmatprep.subr.bf16.mxu0 %v824
  %1049 = vmatpush1.bf16.msra.mxu0 %v823
  %1050 = vmatprep.subr.bf16.mxu0 %v828
  %1051 = vmatpush1.bf16.msra.mxu0 %v827
  %1052 = vmatprep.subr.bf16.mxu0 %v832
  %1053 = vmatpush1.bf16.msra.mxu0 %v831
  %1054 = vmatprep.subr.bf16.mxu0 %v836
  %1055 = vmatpush1.bf16.msra.mxu0 %v835
  %1056 = vmatprep.subr.bf16.mxu0 %v840
  %1057 = vmatpush1.bf16.msra.mxu0 %v839
  %1058 = vmatprep.subr.bf16.mxu0 %v844
  %1059 = vmatpush1.bf16.msra.mxu0 %v843
  %1060 = vmatprep.mubr.bf16.mxu0 %v322
  %1061 = vmatmul.mubr.bf16.gmra.mrb[0].mxu0 %v321
  %v1062 = vpop.f32.mrb[0].mxu0
  %v1063 = vadd.f32 %v1010, %v1062
  %v1064 = vpop.f32.mrb[0].mxu0
  %v1065 = vadd.f32 %v1012, %v1064
  %v1066 = vpop.f32.mrb[0].mxu0
  %v1067 = vadd.f32 %v1014, %v1066
  %v1068 = vpop.f32.mrb[0].mxu0
  %v1069 = vadd.f32 %v1016, %v1068
  %1070 = vmatprep.mubr.bf16.mxu0 %v326
  %1071 = vmatmul.mubr.bf16.gmra.mrb[0].mxu0 %v325
  %v1072 = vpop.f32.mrb[0].mxu0
  %v1073 = vadd.f32 %v1020, %v1072
  %v1074 = vpop.f32.mrb[0].mxu0
  %v1075 = vadd.f32 %v1022, %v1074
  %v1076 = vpop.f32.mrb[0].mxu0
  %v1077 = vadd.f32 %v1024, %v1076
  %v1078 = vpop.f32.mrb[0].mxu0
  %v1079 = vadd.f32 %v1026, %v1078
  %1080 = vdwg.mxu0
  %1081 = vmatprep.subr.bf16.mxu0 %v722
  %1082 = vmatpush1.bf16.msra.mxu0 %v721
  %1083 = vmatprep.subr.bf16.mxu0 %v726
  %1084 = vmatpush1.bf16.msra.mxu0 %v725
  %1085 = vmatprep.subr.bf16.mxu0 %v730
  %1086 = vmatpush1.bf16.msra.mxu0 %v729
  %1087 = vmatprep.subr.bf16.mxu0 %v734
  %1088 = vmatpush1.bf16.msra.mxu0 %v733
  %1089 = vmatprep.subr.bf16.mxu0 %v738
  %1090 = vmatpush1.bf16.msra.mxu0 %v737
  %1091 = vmatprep.subr.bf16.mxu0 %v742
  %1092 = vmatpush1.bf16.msra.mxu0 %v741
  %1093 = vmatprep.subr.bf16.mxu0 %v746
  %1094 = vmatpush1.bf16.msra.mxu0 %v745
  %1095 = vmatprep.subr.bf16.mxu0 %v750
  %1096 = vmatpush1.bf16.msra.mxu0 %v749
  %1097 = vmatprep.subr.bf16.mxu0 %v754
  %1098 = vmatpush1.bf16.msra.mxu0 %v753
  %1099 = vmatprep.subr.bf16.mxu0 %v758
  %1100 = vmatpush1.bf16.msra.mxu0 %v757
  %1101 = vmatprep.subr.bf16.mxu0 %v762
  %1102 = vmatpush1.bf16.msra.mxu0 %v761
  %1103 = vmatprep.subr.bf16.mxu0 %v766
  %1104 = vmatpush1.bf16.msra.mxu0 %v765
  %1105 = vmatprep.subr.bf16.mxu0 %v770
  %1106 = vmatpush1.bf16.msra.mxu0 %v769
  %1107 = vmatprep.subr.bf16.mxu0 %v774
  %1108 = vmatpush1.bf16.msra.mxu0 %v773
  %1109 = vmatprep.subr.bf16.mxu0 %v778
  %1110 = vmatpush1.bf16.msra.mxu0 %v777
  %1111 = vmatprep.subr.bf16.mxu0 %v782
  %1112 = vmatpush1.bf16.msra.mxu0 %v781
  %1113 = vmatprep.mubr.bf16.mxu0 %v320
  %1114 = vmatmul.mubr.bf16.gmra.mrb[0].mxu0 %v319
  %v1115 = vpop.f32.mrb[0].mxu0
  %v1116 = vadd.f32 0.0, %v1115
  %v1117 = vpop.f32.mrb[0].mxu0
  %v1118 = vadd.f32 0.0, %v1117
  %v1119 = vpop.f32.mrb[0].mxu0
  %v1120 = vadd.f32 0.0, %v1119
  %v1121 = vpop.f32.mrb[0].mxu0
  %v1122 = vadd.f32 0.0, %v1121
  %1123 = vmatprep.mubr.bf16.mxu0 %v324
  %1124 = vmatmul.mubr.bf16.gmra.mrb[0].mxu0 %v323
  %v1125 = vpop.f32.mrb[0].mxu0
  %v1126 = vadd.f32 0.0, %v1125
  %v1127 = vpop.f32.mrb[0].mxu0
  %v1128 = vadd.f32 0.0, %v1127
  %v1129 = vpop.f32.mrb[0].mxu0
  %v1130 = vadd.f32 0.0, %v1129
  %v1131 = vpop.f32.mrb[0].mxu0
  %v1132 = vadd.f32 0.0, %v1131
  %1133 = vdwg.mxu0
  %1134 = vmatprep.subr.bf16.mxu0 %v786
  %1135 = vmatpush1.bf16.msra.mxu0 %v785
  %1136 = vmatprep.subr.bf16.mxu0 %v790
  %1137 = vmatpush1.bf16.msra.mxu0 %v789
  %1138 = vmatprep.subr.bf16.mxu0 %v794
  %1139 = vmatpush1.bf16.msra.mxu0 %v793
  %1140 = vmatprep.subr.bf16.mxu0 %v798
  %1141 = vmatpush1.bf16.msra.mxu0 %v797
  %1142 = vmatprep.subr.bf16.mxu0 %v802
  %1143 = vmatpush1.bf16.msra.mxu0 %v801
  %1144 = vmatprep.subr.bf16.mxu0 %v806
  %1145 = vmatpush1.bf16.msra.mxu0 %v805
  %1146 = vmatprep.subr.bf16.mxu0 %v810
  %1147 = vmatpush1.bf16.msra.mxu0 %v809
  %1148 = vmatprep.subr.bf16.mxu0 %v814
  %1149 = vmatpush1.bf16.msra.mxu0 %v813
  %1150 = vmatprep.subr.bf16.mxu0 %v818
  %1151 = vmatpush1.bf16.msra.mxu0 %v817
  %1152 = vmatprep.subr.bf16.mxu0 %v822
  %1153 = vmatpush1.bf16.msra.mxu0 %v821
  %1154 = vmatprep.subr.bf16.mxu0 %v826
  %1155 = vmatpush1.bf16.msra.mxu0 %v825
  %1156 = vmatprep.subr.bf16.mxu0 %v830
  %1157 = vmatpush1.bf16.msra.mxu0 %v829
  %1158 = vmatprep.subr.bf16.mxu0 %v834
  %1159 = vmatpush1.bf16.msra.mxu0 %v833
  %1160 = vmatprep.subr.bf16.mxu0 %v838
  %1161 = vmatpush1.bf16.msra.mxu0 %v837
  %1162 = vmatprep.subr.bf16.mxu0 %v842
  %1163 = vmatpush1.bf16.msra.mxu0 %v841
  %1164 = vmatprep.subr.bf16.mxu0 %v846
  %1165 = vmatpush1.bf16.msra.mxu0 %v845
  %1166 = vmatprep.mubr.bf16.mxu0 %v322
  %1167 = vmatmul.mubr.bf16.gmra.mrb[0].mxu0 %v321
  %v1168 = vpop.f32.mrb[0].mxu0
  %v1169 = vadd.f32 %v1116, %v1168
  %v1170 = vpop.f32.mrb[0].mxu0
  %v1171 = vadd.f32 %v1118, %v1170
  %v1172 = vpop.f32.mrb[0].mxu0
  %v1173 = vadd.f32 %v1120, %v1172
  %v1174 = vpop.f32.mrb[0].mxu0
  %v1175 = vadd.f32 %v1122, %v1174
  %1176 = vmatprep.mubr.bf16.mxu0 %v326
  %1177 = vmatmul.mubr.bf16.gmra.mrb[0].mxu0 %v325
  %v1178 = vpop.f32.mrb[0].mxu0
  %v1179 = vadd.f32 %v1126, %v1178
  %v1180 = vpop.f32.mrb[0].mxu0
  %v1181 = vadd.f32 %v1128, %v1180
  %v1182 = vpop.f32.mrb[0].mxu0
  %v1183 = vadd.f32 %v1130, %v1182
  %v1184 = vpop.f32.mrb[0].mxu0
  %v1185 = vadd.f32 %v1132, %v1184
  %1186 = vdwg.mxu0
  %v1195 = vunpack.c.l.b16 %v23
  %v1196 = vunpack.c.h.b16 %v23
  %v1197 = vunpack.c.l.b16 %v24
  %v1198 = vunpack.c.h.b16 %v24
  %v1199 = vunpack.c.l.b16 %v25
  %v1200 = vunpack.c.h.b16 %v25
  %v1201 = vunpack.c.l.b16 %v26
  %v1202 = vunpack.c.h.b16 %v26
  %v1203 = vunpack.c.l.b16 %v27
  %v1204 = vunpack.c.h.b16 %v27
  %v1205 = vunpack.c.l.b16 %v28
  %v1206 = vunpack.c.h.b16 %v28
  %v1207 = vunpack.c.l.b16 %v29
  %v1208 = vunpack.c.h.b16 %v29
  %v1209 = vunpack.c.l.b16 %v30
  %v1210 = vunpack.c.h.b16 %v30
  %v1211 = vpack.c.b16 %v1199, %v1195
  %v1212 = vpack.c.b16 %v1200, %v1196
  %v1213 = vpack.c.b16 %v1201, %v1197
  %v1214 = vpack.c.b16 %v1202, %v1198
  %v1215 = vpack.c.b16 %v1207, %v1203
  %v1216 = vpack.c.b16 %v1208, %v1204
  %v1217 = vpack.c.b16 %v1209, %v1205
  %v1218 = vpack.c.b16 %v1210, %v1206
  %v1355 = vunpack.c.l.b16 %v31
  %v1356 = vunpack.c.h.b16 %v31
  %v1357 = vunpack.c.l.b16 %v32
  %v1358 = vunpack.c.h.b16 %v32
  %v1359 = vunpack.c.l.b16 %v33
  %v1360 = vunpack.c.h.b16 %v33
  %v1361 = vunpack.c.l.b16 %v34
  %v1362 = vunpack.c.h.b16 %v34
  %v1363 = vunpack.c.l.b16 %v35
  %v1364 = vunpack.c.h.b16 %v35
  %v1365 = vunpack.c.l.b16 %v36
  %v1366 = vunpack.c.h.b16 %v36
  %v1367 = vunpack.c.l.b16 %v37
  %v1368 = vunpack.c.h.b16 %v37
  %v1369 = vunpack.c.l.b16 %v38
  %v1370 = vunpack.c.h.b16 %v38
  %v1371 = vunpack.c.l.b16 %v39
  %v1372 = vunpack.c.h.b16 %v39
  %v1373 = vunpack.c.l.b16 %v40
  %v1374 = vunpack.c.h.b16 %v40
  %v1375 = vunpack.c.l.b16 %v41
  %v1376 = vunpack.c.h.b16 %v41
  %v1377 = vunpack.c.l.b16 %v42
  %v1378 = vunpack.c.h.b16 %v42
  %v1379 = vunpack.c.l.b16 %v43
  %v1380 = vunpack.c.h.b16 %v43
  %v1381 = vunpack.c.l.b16 %v44
  %v1382 = vunpack.c.h.b16 %v44
  %v1383 = vunpack.c.l.b16 %v45
  %v1384 = vunpack.c.h.b16 %v45
  %v1385 = vunpack.c.l.b16 %v46
  %v1386 = vunpack.c.h.b16 %v46
  %v1387 = vunpack.c.l.b16 %v47
  %v1388 = vunpack.c.h.b16 %v47
  %v1389 = vunpack.c.l.b16 %v48
  %v1390 = vunpack.c.h.b16 %v48
  %v1391 = vunpack.c.l.b16 %v49
  %v1392 = vunpack.c.h.b16 %v49
  %v1393 = vunpack.c.l.b16 %v50
  %v1394 = vunpack.c.h.b16 %v50
  %v1395 = vunpack.c.l.b16 %v51
  %v1396 = vunpack.c.h.b16 %v51
  %v1397 = vunpack.c.l.b16 %v52
  %v1398 = vunpack.c.h.b16 %v52
  %v1399 = vunpack.c.l.b16 %v53
  %v1400 = vunpack.c.h.b16 %v53
  %v1401 = vunpack.c.l.b16 %v54
  %v1402 = vunpack.c.h.b16 %v54
  %v1403 = vunpack.c.l.b16 %v55
  %v1404 = vunpack.c.h.b16 %v55
  %v1405 = vunpack.c.l.b16 %v56
  %v1406 = vunpack.c.h.b16 %v56
  %v1407 = vunpack.c.l.b16 %v57
  %v1408 = vunpack.c.h.b16 %v57
  %v1409 = vunpack.c.l.b16 %v58
  %v1410 = vunpack.c.h.b16 %v58
  %v1411 = vunpack.c.l.b16 %v59
  %v1412 = vunpack.c.h.b16 %v59
  %v1413 = vunpack.c.l.b16 %v60
  %v1414 = vunpack.c.h.b16 %v60
  %v1415 = vunpack.c.l.b16 %v61
  %v1416 = vunpack.c.h.b16 %v61
  %v1417 = vunpack.c.l.b16 %v62
  %v1418 = vunpack.c.h.b16 %v62
  %v1419 = vunpack.c.l.b16 %v63
  %v1420 = vunpack.c.h.b16 %v63
  %v1421 = vunpack.c.l.b16 %v64
  %v1422 = vunpack.c.h.b16 %v64
  %v1423 = vunpack.c.l.b16 %v65
  %v1424 = vunpack.c.h.b16 %v65
  %v1425 = vunpack.c.l.b16 %v66
  %v1426 = vunpack.c.h.b16 %v66
  %v1427 = vunpack.c.l.b16 %v67
  %v1428 = vunpack.c.h.b16 %v67
  %v1429 = vunpack.c.l.b16 %v68
  %v1430 = vunpack.c.h.b16 %v68
  %v1431 = vunpack.c.l.b16 %v69
  %v1432 = vunpack.c.h.b16 %v69
  %v1433 = vunpack.c.l.b16 %v70
  %v1434 = vunpack.c.h.b16 %v70
  %v1435 = vunpack.c.l.b16 %v71
  %v1436 = vunpack.c.h.b16 %v71
  %v1437 = vunpack.c.l.b16 %v72
  %v1438 = vunpack.c.h.b16 %v72
  %v1439 = vunpack.c.l.b16 %v73
  %v1440 = vunpack.c.h.b16 %v73
  %v1441 = vunpack.c.l.b16 %v74
  %v1442 = vunpack.c.h.b16 %v74
  %v1443 = vunpack.c.l.b16 %v75
  %v1444 = vunpack.c.h.b16 %v75
  %v1445 = vunpack.c.l.b16 %v76
  %v1446 = vunpack.c.h.b16 %v76
  %v1447 = vunpack.c.l.b16 %v77
  %v1448 = vunpack.c.h.b16 %v77
  %v1449 = vunpack.c.l.b16 %v78
  %v1450 = vunpack.c.h.b16 %v78
  %v1451 = vunpack.c.l.b16 %v79
  %v1452 = vunpack.c.h.b16 %v79
  %v1453 = vunpack.c.l.b16 %v80
  %v1454 = vunpack.c.h.b16 %v80
  %v1455 = vunpack.c.l.b16 %v81
  %v1456 = vunpack.c.h.b16 %v81
  %v1457 = vunpack.c.l.b16 %v82
  %v1458 = vunpack.c.h.b16 %v82
  %v1459 = vunpack.c.l.b16 %v83
  %v1460 = vunpack.c.h.b16 %v83
  %v1461 = vunpack.c.l.b16 %v84
  %v1462 = vunpack.c.h.b16 %v84
  %v1463 = vunpack.c.l.b16 %v85
  %v1464 = vunpack.c.h.b16 %v85
  %v1465 = vunpack.c.l.b16 %v86
  %v1466 = vunpack.c.h.b16 %v86
  %v1467 = vunpack.c.l.b16 %v87
  %v1468 = vunpack.c.h.b16 %v87
  %v1469 = vunpack.c.l.b16 %v88
  %v1470 = vunpack.c.h.b16 %v88
  %v1471 = vunpack.c.l.b16 %v89
  %v1472 = vunpack.c.h.b16 %v89
  %v1473 = vunpack.c.l.b16 %v90
  %v1474 = vunpack.c.h.b16 %v90
  %v1475 = vunpack.c.l.b16 %v91
  %v1476 = vunpack.c.h.b16 %v91
  %v1477 = vunpack.c.l.b16 %v92
  %v1478 = vunpack.c.h.b16 %v92
  %v1479 = vunpack.c.l.b16 %v93
  %v1480 = vunpack.c.h.b16 %v93
  %v1481 = vunpack.c.l.b16 %v94
  %v1482 = vunpack.c.h.b16 %v94
  %v1483 = vunpack.c.l.b16 %v95
  %v1484 = vunpack.c.h.b16 %v95
  %v1485 = vunpack.c.l.b16 %v96
  %v1486 = vunpack.c.h.b16 %v96
  %v1487 = vunpack.c.l.b16 %v97
  %v1488 = vunpack.c.h.b16 %v97
  %v1489 = vunpack.c.l.b16 %v98
  %v1490 = vunpack.c.h.b16 %v98
  %v1491 = vunpack.c.l.b16 %v99
  %v1492 = vunpack.c.h.b16 %v99
  %v1493 = vunpack.c.l.b16 %v100
  %v1494 = vunpack.c.h.b16 %v100
  %v1495 = vunpack.c.l.b16 %v101
  %v1496 = vunpack.c.h.b16 %v101
  %v1497 = vunpack.c.l.b16 %v102
  %v1498 = vunpack.c.h.b16 %v102
  %v1499 = vunpack.c.l.b16 %v103
  %v1500 = vunpack.c.h.b16 %v103
  %v1501 = vunpack.c.l.b16 %v104
  %v1502 = vunpack.c.h.b16 %v104
  %v1503 = vunpack.c.l.b16 %v105
  %v1504 = vunpack.c.h.b16 %v105
  %v1505 = vunpack.c.l.b16 %v106
  %v1506 = vunpack.c.h.b16 %v106
  %v1507 = vunpack.c.l.b16 %v107
  %v1508 = vunpack.c.h.b16 %v107
  %v1509 = vunpack.c.l.b16 %v108
  %v1510 = vunpack.c.h.b16 %v108
  %v1511 = vunpack.c.l.b16 %v109
  %v1512 = vunpack.c.h.b16 %v109
  %v1513 = vunpack.c.l.b16 %v110
  %v1514 = vunpack.c.h.b16 %v110
  %v1515 = vunpack.c.l.b16 %v111
  %v1516 = vunpack.c.h.b16 %v111
  %v1517 = vunpack.c.l.b16 %v112
  %v1518 = vunpack.c.h.b16 %v112
  %v1519 = vunpack.c.l.b16 %v113
  %v1520 = vunpack.c.h.b16 %v113
  %v1521 = vunpack.c.l.b16 %v114
  %v1522 = vunpack.c.h.b16 %v114
  %v1523 = vunpack.c.l.b16 %v115
  %v1524 = vunpack.c.h.b16 %v115
  %v1525 = vunpack.c.l.b16 %v116
  %v1526 = vunpack.c.h.b16 %v116
  %v1527 = vunpack.c.l.b16 %v117
  %v1528 = vunpack.c.h.b16 %v117
  %v1529 = vunpack.c.l.b16 %v118
  %v1530 = vunpack.c.h.b16 %v118
  %v1531 = vunpack.c.l.b16 %v119
  %v1532 = vunpack.c.h.b16 %v119
  %v1533 = vunpack.c.l.b16 %v120
  %v1534 = vunpack.c.h.b16 %v120
  %v1535 = vunpack.c.l.b16 %v121
  %v1536 = vunpack.c.h.b16 %v121
  %v1537 = vunpack.c.l.b16 %v122
  %v1538 = vunpack.c.h.b16 %v122
  %v1539 = vunpack.c.l.b16 %v123
  %v1540 = vunpack.c.h.b16 %v123
  %v1541 = vunpack.c.l.b16 %v124
  %v1542 = vunpack.c.h.b16 %v124
  %v1543 = vunpack.c.l.b16 %v125
  %v1544 = vunpack.c.h.b16 %v125
  %v1545 = vunpack.c.l.b16 %v126
  %v1546 = vunpack.c.h.b16 %v126
  %v1547 = vunpack.c.l.b16 %v127
  %v1548 = vunpack.c.h.b16 %v127
  %v1549 = vunpack.c.l.b16 %v128
  %v1550 = vunpack.c.h.b16 %v128
  %v1551 = vunpack.c.l.b16 %v129
  %v1552 = vunpack.c.h.b16 %v129
  %v1553 = vunpack.c.l.b16 %v130
  %v1554 = vunpack.c.h.b16 %v130
  %v1555 = vunpack.c.l.b16 %v131
  %v1556 = vunpack.c.h.b16 %v131
  %v1557 = vunpack.c.l.b16 %v132
  %v1558 = vunpack.c.h.b16 %v132
  %v1559 = vunpack.c.l.b16 %v133
  %v1560 = vunpack.c.h.b16 %v133
  %v1561 = vunpack.c.l.b16 %v134
  %v1562 = vunpack.c.h.b16 %v134
  %v1563 = vunpack.c.l.b16 %v135
  %v1564 = vunpack.c.h.b16 %v135
  %v1565 = vunpack.c.l.b16 %v136
  %v1566 = vunpack.c.h.b16 %v136
  %v1567 = vunpack.c.l.b16 %v137
  %v1568 = vunpack.c.h.b16 %v137
  %v1569 = vunpack.c.l.b16 %v138
  %v1570 = vunpack.c.h.b16 %v138
  %v1571 = vunpack.c.l.b16 %v139
  %v1572 = vunpack.c.h.b16 %v139
  %v1573 = vunpack.c.l.b16 %v140
  %v1574 = vunpack.c.h.b16 %v140
  %v1575 = vunpack.c.l.b16 %v141
  %v1576 = vunpack.c.h.b16 %v141
  %v1577 = vunpack.c.l.b16 %v142
  %v1578 = vunpack.c.h.b16 %v142
  %v1579 = vunpack.c.l.b16 %v143
  %v1580 = vunpack.c.h.b16 %v143
  %v1581 = vunpack.c.l.b16 %v144
  %v1582 = vunpack.c.h.b16 %v144
  %v1583 = vunpack.c.l.b16 %v145
  %v1584 = vunpack.c.h.b16 %v145
  %v1585 = vunpack.c.l.b16 %v146
  %v1586 = vunpack.c.h.b16 %v146
  %v1587 = vunpack.c.l.b16 %v147
  %v1588 = vunpack.c.h.b16 %v147
  %v1589 = vunpack.c.l.b16 %v148
  %v1590 = vunpack.c.h.b16 %v148
  %v1591 = vunpack.c.l.b16 %v149
  %v1592 = vunpack.c.h.b16 %v149
  %v1593 = vunpack.c.l.b16 %v150
  %v1594 = vunpack.c.h.b16 %v150
  %v1595 = vunpack.c.l.b16 %v151
  %v1596 = vunpack.c.h.b16 %v151
  %v1597 = vunpack.c.l.b16 %v152
  %v1598 = vunpack.c.h.b16 %v152
  %v1599 = vunpack.c.l.b16 %v153
  %v1600 = vunpack.c.h.b16 %v153
  %v1601 = vunpack.c.l.b16 %v154
  %v1602 = vunpack.c.h.b16 %v154
  %v1603 = vunpack.c.l.b16 %v155
  %v1604 = vunpack.c.h.b16 %v155
  %v1605 = vunpack.c.l.b16 %v156
  %v1606 = vunpack.c.h.b16 %v156
  %v1607 = vunpack.c.l.b16 %v157
  %v1608 = vunpack.c.h.b16 %v157
  %v1609 = vunpack.c.l.b16 %v158
  %v1610 = vunpack.c.h.b16 %v158
  %v1611 = vpack.c.b16 %v1359, %v1355
  %v1612 = vpack.c.b16 %v1360, %v1356
  %v1613 = vpack.c.b16 %v1361, %v1357
  %v1614 = vpack.c.b16 %v1362, %v1358
  %v1615 = vpack.c.b16 %v1367, %v1363
  %v1616 = vpack.c.b16 %v1368, %v1364
  %v1617 = vpack.c.b16 %v1369, %v1365
  %v1618 = vpack.c.b16 %v1370, %v1366
  %v1619 = vpack.c.b16 %v1375, %v1371
  %v1620 = vpack.c.b16 %v1376, %v1372
  %v1621 = vpack.c.b16 %v1377, %v1373
  %v1622 = vpack.c.b16 %v1378, %v1374
  %v1623 = vpack.c.b16 %v1383, %v1379
  %v1624 = vpack.c.b16 %v1384, %v1380
  %v1625 = vpack.c.b16 %v1385, %v1381
  %v1626 = vpack.c.b16 %v1386, %v1382
  %v1627 = vpack.c.b16 %v1391, %v1387
  %v1628 = vpack.c.b16 %v1392, %v1388
  %v1629 = vpack.c.b16 %v1393, %v1389
  %v1630 = vpack.c.b16 %v1394, %v1390
  %v1631 = vpack.c.b16 %v1399, %v1395
  %v1632 = vpack.c.b16 %v1400, %v1396
  %v1633 = vpack.c.b16 %v1401, %v1397
  %v1634 = vpack.c.b16 %v1402, %v1398
  %v1635 = vpack.c.b16 %v1407, %v1403
  %v1636 = vpack.c.b16 %v1408, %v1404
  %v1637 = vpack.c.b16 %v1409, %v1405
  %v1638 = vpack.c.b16 %v1410, %v1406
  %v1639 = vpack.c.b16 %v1415, %v1411
  %v1640 = vpack.c.b16 %v1416, %v1412
  %v1641 = vpack.c.b16 %v1417, %v1413
  %v1642 = vpack.c.b16 %v1418, %v1414
  %v1643 = vpack.c.b16 %v1423, %v1419
  %v1644 = vpack.c.b16 %v1424, %v1420
  %v1645 = vpack.c.b16 %v1425, %v1421
  %v1646 = vpack.c.b16 %v1426, %v1422
  %v1647 = vpack.c.b16 %v1431, %v1427
  %v1648 = vpack.c.b16 %v1432, %v1428
  %v1649 = vpack.c.b16 %v1433, %v1429
  %v1650 = vpack.c.b16 %v1434, %v1430
  %v1651 = vpack.c.b16 %v1439, %v1435
  %v1652 = vpack.c.b16 %v1440, %v1436
  %v1653 = vpack.c.b16 %v1441, %v1437
  %v1654 = vpack.c.b16 %v1442, %v1438
  %v1655 = vpack.c.b16 %v1447, %v1443
  %v1656 = vpack.c.b16 %v1448, %v1444
  %v1657 = vpack.c.b16 %v1449, %v1445
  %v1658 = vpack.c.b16 %v1450, %v1446
  %v1659 = vpack.c.b16 %v1455, %v1451
  %v1660 = vpack.c.b16 %v1456, %v1452
  %v1661 = vpack.c.b16 %v1457, %v1453
  %v1662 = vpack.c.b16 %v1458, %v1454
  %v1663 = vpack.c.b16 %v1463, %v1459
  %v1664 = vpack.c.b16 %v1464, %v1460
  %v1665 = vpack.c.b16 %v1465, %v1461
  %v1666 = vpack.c.b16 %v1466, %v1462
  %v1667 = vpack.c.b16 %v1471, %v1467
  %v1668 = vpack.c.b16 %v1472, %v1468
  %v1669 = vpack.c.b16 %v1473, %v1469
  %v1670 = vpack.c.b16 %v1474, %v1470
  %v1671 = vpack.c.b16 %v1479, %v1475
  %v1672 = vpack.c.b16 %v1480, %v1476
  %v1673 = vpack.c.b16 %v1481, %v1477
  %v1674 = vpack.c.b16 %v1482, %v1478
  %v1675 = vpack.c.b16 %v1487, %v1483
  %v1676 = vpack.c.b16 %v1488, %v1484
  %v1677 = vpack.c.b16 %v1489, %v1485
  %v1678 = vpack.c.b16 %v1490, %v1486
  %v1679 = vpack.c.b16 %v1495, %v1491
  %v1680 = vpack.c.b16 %v1496, %v1492
  %v1681 = vpack.c.b16 %v1497, %v1493
  %v1682 = vpack.c.b16 %v1498, %v1494
  %v1683 = vpack.c.b16 %v1503, %v1499
  %v1684 = vpack.c.b16 %v1504, %v1500
  %v1685 = vpack.c.b16 %v1505, %v1501
  %v1686 = vpack.c.b16 %v1506, %v1502
  %v1687 = vpack.c.b16 %v1511, %v1507
  %v1688 = vpack.c.b16 %v1512, %v1508
  %v1689 = vpack.c.b16 %v1513, %v1509
  %v1690 = vpack.c.b16 %v1514, %v1510
  %v1691 = vpack.c.b16 %v1519, %v1515
  %v1692 = vpack.c.b16 %v1520, %v1516
  %v1693 = vpack.c.b16 %v1521, %v1517
  %v1694 = vpack.c.b16 %v1522, %v1518
  %v1695 = vpack.c.b16 %v1527, %v1523
  %v1696 = vpack.c.b16 %v1528, %v1524
  %v1697 = vpack.c.b16 %v1529, %v1525
  %v1698 = vpack.c.b16 %v1530, %v1526
  %v1699 = vpack.c.b16 %v1535, %v1531
  %v1700 = vpack.c.b16 %v1536, %v1532
  %v1701 = vpack.c.b16 %v1537, %v1533
  %v1702 = vpack.c.b16 %v1538, %v1534
  %v1703 = vpack.c.b16 %v1543, %v1539
  %v1704 = vpack.c.b16 %v1544, %v1540
  %v1705 = vpack.c.b16 %v1545, %v1541
  %v1706 = vpack.c.b16 %v1546, %v1542
  %v1707 = vpack.c.b16 %v1551, %v1547
  %v1708 = vpack.c.b16 %v1552, %v1548
  %v1709 = vpack.c.b16 %v1553, %v1549
  %v1710 = vpack.c.b16 %v1554, %v1550
  %v1711 = vpack.c.b16 %v1559, %v1555
  %v1712 = vpack.c.b16 %v1560, %v1556
  %v1713 = vpack.c.b16 %v1561, %v1557
  %v1714 = vpack.c.b16 %v1562, %v1558
  %v1715 = vpack.c.b16 %v1567, %v1563
  %v1716 = vpack.c.b16 %v1568, %v1564
  %v1717 = vpack.c.b16 %v1569, %v1565
  %v1718 = vpack.c.b16 %v1570, %v1566
  %v1719 = vpack.c.b16 %v1575, %v1571
  %v1720 = vpack.c.b16 %v1576, %v1572
  %v1721 = vpack.c.b16 %v1577, %v1573
  %v1722 = vpack.c.b16 %v1578, %v1574
  %v1723 = vpack.c.b16 %v1583, %v1579
  %v1724 = vpack.c.b16 %v1584, %v1580
  %v1725 = vpack.c.b16 %v1585, %v1581
  %v1726 = vpack.c.b16 %v1586, %v1582
  %v1727 = vpack.c.b16 %v1591, %v1587
  %v1728 = vpack.c.b16 %v1592, %v1588
  %v1729 = vpack.c.b16 %v1593, %v1589
  %v1730 = vpack.c.b16 %v1594, %v1590
  %v1731 = vpack.c.b16 %v1599, %v1595
  %v1732 = vpack.c.b16 %v1600, %v1596
  %v1733 = vpack.c.b16 %v1601, %v1597
  %v1734 = vpack.c.b16 %v1602, %v1598
  %v1735 = vpack.c.b16 %v1607, %v1603
  %v1736 = vpack.c.b16 %v1608, %v1604
  %v1737 = vpack.c.b16 %v1609, %v1605
  %v1738 = vpack.c.b16 %v1610, %v1606
  %1867 = vmatprep.subr.bf16.mxu0 %v1612
  %1868 = vmatpush1.bf16.msra.mxu0 %v1611
  %1869 = vmatprep.subr.bf16.mxu0 %v1616
  %1870 = vmatpush1.bf16.msra.mxu0 %v1615
  %1871 = vmatprep.subr.bf16.mxu0 %v1620
  %1872 = vmatpush1.bf16.msra.mxu0 %v1619
  %1873 = vmatprep.subr.bf16.mxu0 %v1624
  %1874 = vmatpush1.bf16.msra.mxu0 %v1623
  %1875 = vmatprep.subr.bf16.mxu0 %v1628
  %1876 = vmatpush1.bf16.msra.mxu0 %v1627
  %1877 = vmatprep.subr.bf16.mxu0 %v1632
  %1878 = vmatpush1.bf16.msra.mxu0 %v1631
  %1879 = vmatprep.subr.bf16.mxu0 %v1636
  %1880 = vmatpush1.bf16.msra.mxu0 %v1635
  %1881 = vmatprep.subr.bf16.mxu0 %v1640
  %1882 = vmatpush1.bf16.msra.mxu0 %v1639
  %1883 = vmatprep.subr.bf16.mxu0 %v1644
  %1884 = vmatpush1.bf16.msra.mxu0 %v1643
  %1885 = vmatprep.subr.bf16.mxu0 %v1648
  %1886 = vmatpush1.bf16.msra.mxu0 %v1647
  %1887 = vmatprep.subr.bf16.mxu0 %v1652
  %1888 = vmatpush1.bf16.msra.mxu0 %v1651
  %1889 = vmatprep.subr.bf16.mxu0 %v1656
  %1890 = vmatpush1.bf16.msra.mxu0 %v1655
  %1891 = vmatprep.subr.bf16.mxu0 %v1660
  %1892 = vmatpush1.bf16.msra.mxu0 %v1659
  %1893 = vmatprep.subr.bf16.mxu0 %v1664
  %1894 = vmatpush1.bf16.msra.mxu0 %v1663
  %1895 = vmatprep.subr.bf16.mxu0 %v1668
  %1896 = vmatpush1.bf16.msra.mxu0 %v1667
  %1897 = vmatprep.subr.bf16.mxu0 %v1672
  %1898 = vmatpush1.bf16.msra.mxu0 %v1671
  %1899 = vmatprep.mubr.bf16.mxu0 %v1212
  %1900 = vmatmul.mubr.bf16.gmra.mrb[0].mxu0 %v1211
  %v1901 = vpop.f32.mrb[0].mxu0
  %v1902 = vadd.f32 %v1063, %v1901
  %v1903 = vpop.f32.mrb[0].mxu0
  %v1904 = vadd.f32 %v1065, %v1903
  %v1905 = vpop.f32.mrb[0].mxu0
  %v1906 = vadd.f32 %v1067, %v1905
  %v1907 = vpop.f32.mrb[0].mxu0
  %v1908 = vadd.f32 %v1069, %v1907
  %1909 = vmatprep.mubr.bf16.mxu0 %v1216
  %1910 = vmatmul.mubr.bf16.gmra.mrb[0].mxu0 %v1215
  %v1911 = vpop.f32.mrb[0].mxu0
  %v1912 = vadd.f32 %v1073, %v1911
  %v1913 = vpop.f32.mrb[0].mxu0
  %v1914 = vadd.f32 %v1075, %v1913
  %v1915 = vpop.f32.mrb[0].mxu0
  %v1916 = vadd.f32 %v1077, %v1915
  %v1917 = vpop.f32.mrb[0].mxu0
  %v1918 = vadd.f32 %v1079, %v1917
  %1919 = vdwg.mxu0
  %1920 = vmatprep.subr.bf16.mxu0 %v1676
  %1921 = vmatpush1.bf16.msra.mxu0 %v1675
  %1922 = vmatprep.subr.bf16.mxu0 %v1680
  %1923 = vmatpush1.bf16.msra.mxu0 %v1679
  %1924 = vmatprep.subr.bf16.mxu0 %v1684
  %1925 = vmatpush1.bf16.msra.mxu0 %v1683
  %1926 = vmatprep.subr.bf16.mxu0 %v1688
  %1927 = vmatpush1.bf16.msra.mxu0 %v1687
  %1928 = vmatprep.subr.bf16.mxu0 %v1692
  %1929 = vmatpush1.bf16.msra.mxu0 %v1691
  %1930 = vmatprep.subr.bf16.mxu0 %v1696
  %1931 = vmatpush1.bf16.msra.mxu0 %v1695
  %1932 = vmatprep.subr.bf16.mxu0 %v1700
  %1933 = vmatpush1.bf16.msra.mxu0 %v1699
  %1934 = vmatprep.subr.bf16.mxu0 %v1704
  %1935 = vmatpush1.bf16.msra.mxu0 %v1703
  %1936 = vmatprep.subr.bf16.mxu0 %v1708
  %1937 = vmatpush1.bf16.msra.mxu0 %v1707
  %1938 = vmatprep.subr.bf16.mxu0 %v1712
  %1939 = vmatpush1.bf16.msra.mxu0 %v1711
  %1940 = vmatprep.subr.bf16.mxu0 %v1716
  %1941 = vmatpush1.bf16.msra.mxu0 %v1715
  %1942 = vmatprep.subr.bf16.mxu0 %v1720
  %1943 = vmatpush1.bf16.msra.mxu0 %v1719
  %1944 = vmatprep.subr.bf16.mxu0 %v1724
  %1945 = vmatpush1.bf16.msra.mxu0 %v1723
  %1946 = vmatprep.subr.bf16.mxu0 %v1728
  %1947 = vmatpush1.bf16.msra.mxu0 %v1727
  %1948 = vmatprep.subr.bf16.mxu0 %v1732
  %1949 = vmatpush1.bf16.msra.mxu0 %v1731
  %1950 = vmatprep.subr.bf16.mxu0 %v1736
  %1951 = vmatpush1.bf16.msra.mxu0 %v1735
  %1952 = vmatprep.mubr.bf16.mxu0 %v1214
  %1953 = vmatmul.mubr.bf16.gmra.mrb[0].mxu0 %v1213
  %v1954 = vpop.f32.mrb[0].mxu0
  %v1955 = vadd.f32 %v1902, %v1954
  %v1956 = vpop.f32.mrb[0].mxu0
  %v1957 = vadd.f32 %v1904, %v1956
  %v1958 = vpop.f32.mrb[0].mxu0
  %v1959 = vadd.f32 %v1906, %v1958
  %v1960 = vpop.f32.mrb[0].mxu0
  %v1961 = vadd.f32 %v1908, %v1960
  %1962 = vmatprep.mubr.bf16.mxu0 %v1218
  %1963 = vmatmul.mubr.bf16.gmra.mrb[0].mxu0 %v1217
  %v1964 = vpop.f32.mrb[0].mxu0
  %v1965 = vadd.f32 %v1912, %v1964
  %v1966 = vpop.f32.mrb[0].mxu0
  %v1967 = vadd.f32 %v1914, %v1966
  %v1968 = vpop.f32.mrb[0].mxu0
  %v1969 = vadd.f32 %v1916, %v1968
  %v1970 = vpop.f32.mrb[0].mxu0
  %v1971 = vadd.f32 %v1918, %v1970
  %1972 = vdwg.mxu0
  %1973 = vmatprep.subr.bf16.mxu0 %v1614
  %1974 = vmatpush1.bf16.msra.mxu0 %v1613
  %1975 = vmatprep.subr.bf16.mxu0 %v1618
  %1976 = vmatpush1.bf16.msra.mxu0 %v1617
  %1977 = vmatprep.subr.bf16.mxu0 %v1622
  %1978 = vmatpush1.bf16.msra.mxu0 %v1621
  %1979 = vmatprep.subr.bf16.mxu0 %v1626
  %1980 = vmatpush1.bf16.msra.mxu0 %v1625
  %1981 = vmatprep.subr.bf16.mxu0 %v1630
  %1982 = vmatpush1.bf16.msra.mxu0 %v1629
  %1983 = vmatprep.subr.bf16.mxu0 %v1634
  %1984 = vmatpush1.bf16.msra.mxu0 %v1633
  %1985 = vmatprep.subr.bf16.mxu0 %v1638
  %1986 = vmatpush1.bf16.msra.mxu0 %v1637
  %1987 = vmatprep.subr.bf16.mxu0 %v1642
  %1988 = vmatpush1.bf16.msra.mxu0 %v1641
  %1989 = vmatprep.subr.bf16.mxu0 %v1646
  %1990 = vmatpush1.bf16.msra.mxu0 %v1645
  %1991 = vmatprep.subr.bf16.mxu0 %v1650
  %1992 = vmatpush1.bf16.msra.mxu0 %v1649
  %1993 = vmatprep.subr.bf16.mxu0 %v1654
  %1994 = vmatpush1.bf16.msra.mxu0 %v1653
  %1995 = vmatprep.subr.bf16.mxu0 %v1658
  %1996 = vmatpush1.bf16.msra.mxu0 %v1657
  %1997 = vmatprep.subr.bf16.mxu0 %v1662
  %1998 = vmatpush1.bf16.msra.mxu0 %v1661
  %1999 = vmatprep.subr.bf16.mxu0 %v1666
  %2000 = vmatpush1.bf16.msra.mxu0 %v1665
  %2001 = vmatprep.subr.bf16.mxu0 %v1670
  %2002 = vmatpush1.bf16.msra.mxu0 %v1669
  %2003 = vmatprep.subr.bf16.mxu0 %v1674
  %2004 = vmatpush1.bf16.msra.mxu0 %v1673
  %2005 = vmatprep.mubr.bf16.mxu0 %v1212
  %2006 = vmatmul.mubr.bf16.gmra.mrb[0].mxu0 %v1211
  %v2007 = vpop.f32.mrb[0].mxu0
  %v2008 = vadd.f32 %v1169, %v2007
  %v2009 = vpop.f32.mrb[0].mxu0
  %v2010 = vadd.f32 %v1171, %v2009
  %v2011 = vpop.f32.mrb[0].mxu0
  %v2012 = vadd.f32 %v1173, %v2011
  %v2013 = vpop.f32.mrb[0].mxu0
  %v2014 = vadd.f32 %v1175, %v2013
  %2015 = vmatprep.mubr.bf16.mxu0 %v1216
  %2016 = vmatmul.mubr.bf16.gmra.mrb[0].mxu0 %v1215
  %v2017 = vpop.f32.mrb[0].mxu0
  %v2018 = vadd.f32 %v1179, %v2017
  %v2019 = vpop.f32.mrb[0].mxu0
  %v2020 = vadd.f32 %v1181, %v2019
  %v2021 = vpop.f32.mrb[0].mxu0
  %v2022 = vadd.f32 %v1183, %v2021
  %v2023 = vpop.f32.mrb[0].mxu0
  %v2024 = vadd.f32 %v1185, %v2023
  %2025 = vdwg.mxu0
  %2026 = vmatprep.subr.bf16.mxu0 %v1678
  %2027 = vmatpush1.bf16.msra.mxu0 %v1677
  %2028 = vmatprep.subr.bf16.mxu0 %v1682
  %2029 = vmatpush1.bf16.msra.mxu0 %v1681
  %2030 = vmatprep.subr.bf16.mxu0 %v1686
  %2031 = vmatpush1.bf16.msra.mxu0 %v1685
  %2032 = vmatprep.subr.bf16.mxu0 %v1690
  %2033 = vmatpush1.bf16.msra.mxu0 %v1689
  %2034 = vmatprep.subr.bf16.mxu0 %v1694
  %2035 = vmatpush1.bf16.msra.mxu0 %v1693
  %2036 = vmatprep.subr.bf16.mxu0 %v1698
  %2037 = vmatpush1.bf16.msra.mxu0 %v1697
  %2038 = vmatprep.subr.bf16.mxu0 %v1702
  %2039 = vmatpush1.bf16.msra.mxu0 %v1701
  %2040 = vmatprep.subr.bf16.mxu0 %v1706
  %2041 = vmatpush1.bf16.msra.mxu0 %v1705
  %2042 = vmatprep.subr.bf16.mxu0 %v1710
  %2043 = vmatpush1.bf16.msra.mxu0 %v1709
  %2044 = vmatprep.subr.bf16.mxu0 %v1714
  %2045 = vmatpush1.bf16.msra.mxu0 %v1713
  %2046 = vmatprep.subr.bf16.mxu0 %v1718
  %2047 = vmatpush1.bf16.msra.mxu0 %v1717
  %2048 = vmatprep.subr.bf16.mxu0 %v1722
  %2049 = vmatpush1.bf16.msra.mxu0 %v1721
  %2050 = vmatprep.subr.bf16.mxu0 %v1726
  %2051 = vmatpush1.bf16.msra.mxu0 %v1725
  %2052 = vmatprep.subr.bf16.mxu0 %v1730
  %2053 = vmatpush1.bf16.msra.mxu0 %v1729
  %2054 = vmatprep.subr.bf16.mxu0 %v1734
  %2055 = vmatpush1.bf16.msra.mxu0 %v1733
  %2056 = vmatprep.subr.bf16.mxu0 %v1738
  %2057 = vmatpush1.bf16.msra.mxu0 %v1737
  %2058 = vmatprep.mubr.bf16.mxu0 %v1214
  %2059 = vmatmul.mubr.bf16.gmra.mrb[0].mxu0 %v1213
  %v2060 = vpop.f32.mrb[0].mxu0
  %v2061 = vadd.f32 %v2008, %v2060
  %v2062 = vpop.f32.mrb[0].mxu0
  %v2063 = vadd.f32 %v2010, %v2062
  %v2064 = vpop.f32.mrb[0].mxu0
  %v2065 = vadd.f32 %v2012, %v2064
  %v2066 = vpop.f32.mrb[0].mxu0
  %v2067 = vadd.f32 %v2014, %v2066
  %2068 = vmatprep.mubr.bf16.mxu0 %v1218
  %2069 = vmatmul.mubr.bf16.gmra.mrb[0].mxu0 %v1217
  %v2070 = vpop.f32.mrb[0].mxu0
  %v2071 = vadd.f32 %v2018, %v2070
  %v2072 = vpop.f32.mrb[0].mxu0
  %v2073 = vadd.f32 %v2020, %v2072
  %v2074 = vpop.f32.mrb[0].mxu0
  %v2075 = vadd.f32 %v2022, %v2074
  %v2076 = vpop.f32.mrb[0].mxu0
  %v2077 = vadd.f32 %v2024, %v2076
  %2078 = vdwg.mxu0
  %v2079 = vld [vmem:[%s4] sm:$0xf]
  %v2081 = vlaneseq
  %v2082 = vshrl.u32 %v2081, 7
  %v2083 = vsub.s32 0, %v2082
  %v2084 = vrot.slane %v2079, %v2083
  %v2085 = vlaneseq
  %v2086 = vshrl.u32 %v2085, 7
  %v2087 = vsub.s32 1, %v2086
  %v2088 = vrot.slane %v2079, %v2087
  %v2089 = vlaneseq
  %v2090 = vshrl.u32 %v2089, 7
  %v2091 = vsub.s32 2, %v2090
  %v2092 = vrot.slane %v2079, %v2091
  %v2093 = vlaneseq
  %v2094 = vshrl.u32 %v2093, 7
  %v2095 = vsub.s32 3, %v2094
  %v2096 = vrot.slane %v2079, %v2095
  %v2101 = vadd.f32 %v1955, %v2084
  %v2102 = vadd.f32 %v1957, %v2088
  %v2103 = vadd.f32 %v2061, %v2092
  %v2104 = vadd.f32 %v2063, %v2096
  %v2105 = vadd.f32 %v1959, %v2084
  %v2106 = vadd.f32 %v1961, %v2088
  %v2107 = vadd.f32 %v2065, %v2092
  %v2108 = vadd.f32 %v2067, %v2096
  %v2109 = vadd.f32 %v1965, %v2084
  %v2110 = vadd.f32 %v1967, %v2088
  %v2111 = vadd.f32 %v2071, %v2092
  %v2112 = vadd.f32 %v2073, %v2096
  %v2113 = vadd.f32 %v1969, %v2084
  %v2114 = vadd.f32 %v1971, %v2088
  %v2115 = vadd.f32 %v2075, %v2092
  %v2116 = vadd.f32 %v2077, %v2096
  %v2117 = vpack.c.bf16 %v2105, %v2101
  %v2118 = vpack.c.bf16 %v2106, %v2102
  %v2119 = vpack.c.bf16 %v2107, %v2103
  %v2120 = vpack.c.bf16 %v2108, %v2104
  %v2121 = vpack.c.bf16 %v2113, %v2109
  %v2122 = vpack.c.bf16 %v2114, %v2110
  %v2123 = vpack.c.bf16 %v2115, %v2111
  %v2124 = vpack.c.bf16 %v2116, %v2112
  %v2133 = vunpack.c.l.b16 %v2117
  %v2134 = vunpack.c.l.b16 %v2118
  %v2135 = vunpack.c.l.b16 %v2119
  %v2136 = vunpack.c.l.b16 %v2120
  %v2137 = vunpack.c.h.b16 %v2117
  %v2138 = vunpack.c.h.b16 %v2118
  %v2139 = vunpack.c.h.b16 %v2119
  %v2140 = vunpack.c.h.b16 %v2120
  %v2141 = vunpack.c.l.b16 %v2121
  %v2142 = vunpack.c.l.b16 %v2122
  %v2143 = vunpack.c.l.b16 %v2123
  %v2144 = vunpack.c.l.b16 %v2124
  %v2145 = vunpack.c.h.b16 %v2121
  %v2146 = vunpack.c.h.b16 %v2122
  %v2147 = vunpack.c.h.b16 %v2123
  %v2148 = vunpack.c.h.b16 %v2124
  %v2149 = vpack.c.b16 %v2134, %v2133
  %v2150 = vpack.c.b16 %v2136, %v2135
  %v2151 = vpack.c.b16 %v2138, %v2137
  %v2152 = vpack.c.b16 %v2140, %v2139
  %v2153 = vpack.c.b16 %v2142, %v2141
  %v2154 = vpack.c.b16 %v2144, %v2143
  %v2155 = vpack.c.b16 %v2146, %v2145
  %v2156 = vpack.c.b16 %v2148, %v2147
  %2165 = vst [vmem:[%s5] sm:$0xff] %v2149
  %2166 = vst [vmem:[%s5 + $0x8] sm:$0xff] %v2150
  %2167 = vst [vmem:[%s5 + $0x10] sm:$0xff] %v2151
  %2168 = vst [vmem:[%s5 + $0x18] sm:$0xff] %v2152
  %2169 = vst [vmem:[%s5 + $0x20] sm:$0xff] %v2153
  %2170 = vst [vmem:[%s5 + $0x28] sm:$0xff] %v2154
  %2171 = vst [vmem:[%s5 + $0x30] sm:$0xff] %v2155
  %2172 = vst [vmem:[%s5 + $0x38] sm:$0xff] %v2156
  %v2173 = vlaneseq
  %v2174 = vshrl.u32 %v2173, 7
  %v2175 = vadd.s32 %v2174, 8
  %v2176 = vadd.s32 %v2174, 16
  %v2177 = vadd.s32 %v2174, 24
  %s2178 = smul.u32 0, 32
  %v2179 = vstv %s2178
  %v2180 = vadd.s32 %v2174, %v2179
  %v2181 = vadd.s32 %v2175, %v2179
  %v2182 = vadd.s32 %v2176, %v2179
  %v2183 = vadd.s32 %v2177, %v2179
  %vm2184 = vcmp.lt.s32.totalorder %v2180, 32
  %vm2185 = vcmp.lt.s32.totalorder %v2181, 32
  %vm2186 = vcmp.lt.s32.totalorder %v2182, 32
  %vm2187 = vcmp.lt.s32.totalorder %v2183, 32
  %v2188 = vsel %vm2184, 1, 0
  %v2189 = vsel %vm2185, 1, 0
  %v2190 = vsel %vm2186, 1, 0
  %v2191 = vsel %vm2187, 1, 0
  %vm2192 = vcmp.eq.s32.totalorder %v2188, 1
  %vm2193 = vcmp.eq.s32.totalorder %v2189, 1
  %vm2194 = vcmp.eq.s32.totalorder %v2190, 1
  %vm2195 = vcmp.eq.s32.totalorder %v2191, 1
  %v2196 = vsel %vm2192, %v2101, 0.0
  %v2197 = vsel %vm2192, %v2102, 0.0
  %v2198 = vsel %vm2192, %v2103, 0.0
  %v2199 = vsel %vm2192, %v2104, 0.0
  %v2200 = vsel %vm2193, %v2105, 0.0
  %v2201 = vsel %vm2193, %v2106, 0.0
  %v2202 = vsel %vm2193, %v2107, 0.0
  %v2203 = vsel %vm2193, %v2108, 0.0
  %v2204 = vsel %vm2194, %v2109, 0.0
  %v2205 = vsel %vm2194, %v2110, 0.0
  %v2206 = vsel %vm2194, %v2111, 0.0
  %v2207 = vsel %vm2194, %v2112, 0.0
  %v2208 = vsel %vm2195, %v2113, 0.0
  %v2209 = vsel %vm2195, %v2114, 0.0
  %v2210 = vsel %vm2195, %v2115, 0.0
  %v2211 = vsel %vm2195, %v2116, 0.0
  %v2212 = vadd.f32 %v2196, %v2200
  %v2213 = vadd.f32 %v2212, %v2204
  %v2214 = vadd.f32 %v2213, %v2208
  %v2215 = vadd.f32 %v2197, %v2201
  %v2216 = vadd.f32 %v2215, %v2205
  %v2217 = vadd.f32 %v2216, %v2209
  %v2218 = vadd.f32 %v2198, %v2202
  %v2219 = vadd.f32 %v2218, %v2206
  %v2220 = vadd.f32 %v2219, %v2210
  %v2221 = vadd.f32 %v2199, %v2203
  %v2222 = vadd.f32 %v2221, %v2207
  %v2223 = vadd.f32 %v2222, %v2211
  %2224 = vst [vmem:[%s6] sm:$0xff] %v2214
  %2225 = vst [vmem:[%s6 + $0x8] sm:$0xff] %v2217
  %2226 = vst [vmem:[%s6 + $0x10] sm:$0xff] %v2220
  %2227 = vst [vmem:[%s6 + $0x18] sm:$0xff] %v2223
  %v2228 = vmul.f32 %v2196, %v2196
  %v2229 = vmul.f32 %v2197, %v2197
  %v2230 = vmul.f32 %v2198, %v2198
  %v2231 = vmul.f32 %v2199, %v2199
  %v2232 = vmul.f32 %v2200, %v2200
  %v2233 = vmul.f32 %v2201, %v2201
  %v2234 = vmul.f32 %v2202, %v2202
  %v2235 = vmul.f32 %v2203, %v2203
  %v2236 = vmul.f32 %v2204, %v2204
  %v2237 = vmul.f32 %v2205, %v2205
  %v2238 = vmul.f32 %v2206, %v2206
  %v2239 = vmul.f32 %v2207, %v2207
  %v2240 = vmul.f32 %v2208, %v2208
  %v2241 = vmul.f32 %v2209, %v2209
  %v2242 = vmul.f32 %v2210, %v2210
  %v2243 = vmul.f32 %v2211, %v2211
  %v2244 = vadd.f32 %v2228, %v2232
  %v2245 = vadd.f32 %v2244, %v2236
  %v2246 = vadd.f32 %v2245, %v2240
  %v2247 = vadd.f32 %v2229, %v2233
  %v2248 = vadd.f32 %v2247, %v2237
  %v2249 = vadd.f32 %v2248, %v2241
  %v2250 = vadd.f32 %v2230, %v2234
  %v2251 = vadd.f32 %v2250, %v2238
  %v2252 = vadd.f32 %v2251, %v2242
  %v2253 = vadd.f32 %v2231, %v2235
  %v2254 = vadd.f32 %v2253, %v2239
  %v2255 = vadd.f32 %v2254, %v2243
  %2256 = vst [vmem:[%s7] sm:$0xff] %v2246
  %2257 = vst [vmem:[%s7 + $0x8] sm:$0xff] %v2249
  %2258 = vst [vmem:[%s7 + $0x10] sm:$0xff] %v2252
  %2259 = vst [vmem:[%s7 + $0x18] sm:$0xff] %v2255
  // Predicated region
  $region22: #{layout_graph_model_forward.15} parent=0 // pred_check
    _
  $region23: #{layout_graph_model_forward.15} parent=0 // pred_check_branch
    %2261 = sbr.rel (0) target = $region25
  $region24: #{layout_graph_model_forward.15} parent=0 // pred_region
    _
  $region25: #{layout_graph_model_forward.15} parent=0 // pred_fallthru
    _
  // Predicated region
  $region26: #{layout_graph_model_forward.15} parent=0 // pred_check
    _
  $region27: #{layout_graph_model_forward.15} parent=0 // pred_check_branch
    %2263 = sbr.rel (0) target = $region29
  $region28: #{layout_graph_model_forward.15} parent=0 // pred_region
    _
  $region29: #{layout_graph_model_forward.15} parent=0 // pred_fallthru
    _
  // Predicated region
  $region30: #{layout_graph_model_forward.15} parent=0 // pred_check
    _
  $region31: #{layout_graph_model_forward.15} parent=0 // pred_check_branch
    %2265 = sbr.rel (0) target = $region33
  $region32: #{layout_graph_model_forward.15} parent=0 // pred_region
    _
  $region33: #{layout_graph_model_forward.15} parent=0 // pred_fallthru
    _
  // Predicated region
  $region34: #{layout_graph_model_forward.15} parent=0 // pred_check
    _
  $region35: #{layout_graph_model_forward.15} parent=0 // pred_check_branch
    %2267 = sbr.rel (0) target = $region37
  $region36: #{layout_graph_model_forward.15} parent=0 // pred_region
    _
  $region37: #{layout_graph_model_forward.15} parent=0 // pred_fallthru
    _
  // Predicated region
  $region38: #{layout_graph_model_forward.15} parent=0 // pred_check
    _
  $region39: #{layout_graph_model_forward.15} parent=0 // pred_check_branch
    %2269 = sbr.rel (0) target = $region41
  $region40: #{layout_graph_model_forward.15} parent=0 // pred_region
    _
  $region41: #{layout_graph_model_forward.15} parent=0 // pred_fallthru
    _
  // Predicated region
  $region42: #{layout_graph_model_forward.15} parent=0 // pred_check
    _
  $region43: #{layout_graph_model_forward.15} parent=0 // pred_check_branch
    %2271 = sbr.rel (0) target = $region45
  $region44: #{layout_graph_model_forward.15} parent=0 // pred_region
    _
  $region45: #{layout_graph_model_forward.15} parent=0 // pred_fallthru
    _

// kernel: layout_graph_model_forward.17
$region0: #{layout_graph_model_forward.17}
  #allocation0 [shape = 'u32[]', space=smem, size = 0x4, offset = 0x4, fixed_abs, tag = 'smem constant byte address 0x4 - core index']
  #allocation1 [shape = 'u32[144,128]{1,0:T(1,128)}', space=vmem, size = 0x12000, scoped, tag = 'internal scratch']
  %s0 = inlined_call_operand.vmem [shape: bf16[32,512], index: 0, kind: input, shape index: {}]
  %s1 = inlined_call_operand.vmem [shape: bf16[32,512], index: 1, kind: input, shape index: {}]
  %s2 = inlined_call_operand.vmem [shape: bf16[512,512], index: 2, kind: input, shape index: {}]
  %s3 = inlined_call_operand.vmem [shape: bf16[512,512], index: 3, kind: input, shape index: {}]
  %s4 = inlined_call_operand.vmem [shape: f32[1,512], index: 4, kind: input, shape index: {}]
  %s5 = inlined_call_operand.vmem [shape: f32[1,512], index: 5, kind: input, shape index: {}]
  %s6 = inlined_call_operand.vmem [shape: f32[32,1], index: 6, kind: output, shape index: {}]
  %s7 = sld [smem:[#allocation0]]
  $region34: #{layout_graph_model_forward.17} parent=0
    _
  %s9 = ssub.s32 1, %s7
  %s10 = scalar_select 0, %s9, %s7
  // Predicated region
  $region2: #{layout_graph_model_forward.17} parent=0 // pred_check
    _
  $region3: #{layout_graph_model_forward.17} parent=0 // pred_check_branch
    %12 = sbr.rel (0) target = $region5
  $region4: #{layout_graph_model_forward.17} parent=0 // pred_region
    _
  $region5: #{layout_graph_model_forward.17} parent=0 // pred_fallthru
    _
  // Predicated region
  $region6: #{layout_graph_model_forward.17} parent=0 // pred_check
    _
  $region7: #{layout_graph_model_forward.17} parent=0 // pred_check_branch
    %14 = sbr.rel (0) target = $region9
  $region8: #{layout_graph_model_forward.17} parent=0 // pred_region
    _
  $region9: #{layout_graph_model_forward.17} parent=0 // pred_fallthru
    _
  // Predicated region
  $region10: #{layout_graph_model_forward.17} parent=0 // pred_check
    _
  $region11: #{layout_graph_model_forward.17} parent=0 // pred_check_branch
    %16 = sbr.rel (0) target = $region13
  $region12: #{layout_graph_model_forward.17} parent=0 // pred_region
    _
  $region13: #{layout_graph_model_forward.17} parent=0 // pred_fallthru
    _
  // Predicated region
  $region14: #{layout_graph_model_forward.17} parent=0 // pred_check
    _
  $region15: #{layout_graph_model_forward.17} parent=0 // pred_check_branch
    %18 = sbr.rel (0) target = $region17
  $region16: #{layout_graph_model_forward.17} parent=0 // pred_region
    _
  $region17: #{layout_graph_model_forward.17} parent=0 // pred_fallthru
    _
  // Predicated region
  $region18: #{layout_graph_model_forward.17} parent=0 // pred_check
    _
  $region19: #{layout_graph_model_forward.17} parent=0 // pred_check_branch
    %20 = sbr.rel (0) target = $region21
  $region20: #{layout_graph_model_forward.17} parent=0 // pred_region
    _
  $region21: #{layout_graph_model_forward.17} parent=0 // pred_fallthru
    _
  // Predicated region
  $region22: #{layout_graph_model_forward.17} parent=0 // pred_check
    _
  $region23: #{layout_graph_model_forward.17} parent=0 // pred_check_branch
    %22 = sbr.rel (0) target = $region25
  $region24: #{layout_graph_model_forward.17} parent=0 // pred_region
    _
  $region25: #{layout_graph_model_forward.17} parent=0 // pred_fallthru
    _
  %v23 = vld [vmem:[%s0] sm:$0xff]
  %v24 = vld [vmem:[%s0 + $0x8] sm:$0xff]
  %v25 = vld [vmem:[%s0 + $0x10] sm:$0xff]
  %v26 = vld [vmem:[%s0 + $0x18] sm:$0xff]
  %v27 = vld [vmem:[%s0 + $0x20] sm:$0xff]
  %v28 = vld [vmem:[%s0 + $0x28] sm:$0xff]
  %v29 = vld [vmem:[%s0 + $0x30] sm:$0xff]
  %v30 = vld [vmem:[%s0 + $0x38] sm:$0xff]
  %v31 = vld [vmem:[%s2] sm:$0xff]
  %v32 = vld [vmem:[%s2 + $0x8] sm:$0xff]
  %v33 = vld [vmem:[%s2 + $0x10] sm:$0xff]
  %v34 = vld [vmem:[%s2 + $0x18] sm:$0xff]
  %v35 = vld [vmem:[%s2 + $0x20] sm:$0xff]
  %v36 = vld [vmem:[%s2 + $0x28] sm:$0xff]
  %v37 = vld [vmem:[%s2 + $0x30] sm:$0xff]
  %v38 = vld [vmem:[%s2 + $0x38] sm:$0xff]
  %v39 = vld [vmem:[%s2 + $0x40] sm:$0xff]
  %v40 = vld [vmem:[%s2 + $0x48] sm:$0xff]
  %v41 = vld [vmem:[%s2 + $0x50] sm:$0xff]
  %v42 = vld [vmem:[%s2 + $0x58] sm:$0xff]
  %v43 = vld [vmem:[%s2 + $0x60] sm:$0xff]
  %v44 = vld [vmem:[%s2 + $0x68] sm:$0xff]
  %v45 = vld [vmem:[%s2 + $0x70] sm:$0xff]
  %v46 = vld [vmem:[%s2 + $0x78] sm:$0xff]
  %v47 = vld [vmem:[%s2 + $0x80] sm:$0xff]
  %v48 = vld [vmem:[%s2 + $0x88] sm:$0xff]
  %v49 = vld [vmem:[%s2 + $0x90] sm:$0xff]
  %v50 = vld [vmem:[%s2 + $0x98] sm:$0xff]
  %v51 = vld [vmem:[%s2 + $0xa0] sm:$0xff]
  %v52 = vld [vmem:[%s2 + $0xa8] sm:$0xff]
  %v53 = vld [vmem:[%s2 + $0xb0] sm:$0xff]
  %v54 = vld [vmem:[%s2 + $0xb8] sm:$0xff]
  %v55 = vld [vmem:[%s2 + $0xc0] sm:$0xff]
  %v56 = vld [vmem:[%s2 + $0xc8] sm:$0xff]
  %v57 = vld [vmem:[%s2 + $0xd0] sm:$0xff]
  %v58 = vld [vmem:[%s2 + $0xd8] sm:$0xff]
  %v59 = vld [vmem:[%s2 + $0xe0] sm:$0xff]
  %v60 = vld [vmem:[%s2 + $0xe8] sm:$0xff]
  %v61 = vld [vmem:[%s2 + $0xf0] sm:$0xff]
  %v62 = vld [vmem:[%s2 + $0xf8] sm:$0xff]
  %v63 = vld [vmem:[%s2 + $0x100] sm:$0xff]
  %v64 = vld [vmem:[%s2 + $0x108] sm:$0xff]
  %v65 = vld [vmem:[%s2 + $0x110] sm:$0xff]
  %v66 = vld [vmem:[%s2 + $0x118] sm:$0xff]
  %v67 = vld [vmem:[%s2 + $0x120] sm:$0xff]
  %v68 = vld [vmem:[%s2 + $0x128] sm:$0xff]
  %v69 = vld [vmem:[%s2 + $0x130] sm:$0xff]
  %v70 = vld [vmem:[%s2 + $0x138] sm:$0xff]
  %v71 = vld [vmem:[%s2 + $0x140] sm:$0xff]
  %v72 = vld [vmem:[%s2 + $0x148] sm:$0xff]
  %v73 = vld [vmem:[%s2 + $0x150] sm:$0xff]
  %v74 = vld [vmem:[%s2 + $0x158] sm:$0xff]
  %v75 = vld [vmem:[%s2 + $0x160] sm:$0xff]
  %v76 = vld [vmem:[%s2 + $0x168] sm:$0xff]
  %v77 = vld [vmem:[%s2 + $0x170] sm:$0xff]
  %v78 = vld [vmem:[%s2 + $0x178] sm:$0xff]
  %v79 = vld [vmem:[%s2 + $0x180] sm:$0xff]
  %v80 = vld [vmem:[%s2 + $0x188] sm:$0xff]
  %v81 = vld [vmem:[%s2 + $0x190] sm:$0xff]
  %v82 = vld [vmem:[%s2 + $0x198] sm:$0xff]
  %v83 = vld [vmem:[%s2 + $0x1a0] sm:$0xff]
  %v84 = vld [vmem:[%s2 + $0x1a8] sm:$0xff]
  %v85 = vld [vmem:[%s2 + $0x1b0] sm:$0xff]
  %v86 = vld [vmem:[%s2 + $0x1b8] sm:$0xff]
  %v87 = vld [vmem:[%s2 + $0x1c0] sm:$0xff]
  %v88 = vld [vmem:[%s2 + $0x1c8] sm:$0xff]
  %v89 = vld [vmem:[%s2 + $0x1d0] sm:$0xff]
  %v90 = vld [vmem:[%s2 + $0x1d8] sm:$0xff]
  %v91 = vld [vmem:[%s2 + $0x1e0] sm:$0xff]
  %v92 = vld [vmem:[%s2 + $0x1e8] sm:$0xff]
  %v93 = vld [vmem:[%s2 + $0x1f0] sm:$0xff]
  %v94 = vld [vmem:[%s2 + $0x1f8] sm:$0xff]
  %v95 = vld [vmem:[%s2 + $0x200] sm:$0xff]
  %v96 = vld [vmem:[%s2 + $0x208] sm:$0xff]
  %v97 = vld [vmem:[%s2 + $0x210] sm:$0xff]
  %v98 = vld [vmem:[%s2 + $0x218] sm:$0xff]
  %v99 = vld [vmem:[%s2 + $0x220] sm:$0xff]
  %v100 = vld [vmem:[%s2 + $0x228] sm:$0xff]
  %v101 = vld [vmem:[%s2 + $0x230] sm:$0xff]
  %v102 = vld [vmem:[%s2 + $0x238] sm:$0xff]
  %v103 = vld [vmem:[%s2 + $0x240] sm:$0xff]
  %v104 = vld [vmem:[%s2 + $0x248] sm:$0xff]
  %v105 = vld [vmem:[%s2 + $0x250] sm:$0xff]
  %v106 = vld [vmem:[%s2 + $0x258] sm:$0xff]
  %v107 = vld [vmem:[%s2 + $0x260] sm:$0xff]
  %v108 = vld [vmem:[%s2 + $0x268] sm:$0xff]
  %v109 = vld [vmem:[%s2 + $0x270] sm:$0xff]
  %v110 = vld [vmem:[%s2 + $0x278] sm:$0xff]
  %v111 = vld [vmem:[%s2 + $0x280] sm:$0xff]
  %v112 = vld [vmem:[%s2 + $0x288] sm:$0xff]
  %v113 = vld [vmem:[%s2 + $0x290] sm:$0xff]
  %v114 = vld [vmem:[%s2 + $0x298] sm:$0xff]
  %v115 = vld [vmem:[%s2 + $0x2a0] sm:$0xff]
  %v116 = vld [vmem:[%s2 + $0x2a8] sm:$0xff]
  %v117 = vld [vmem:[%s2 + $0x2b0] sm:$0xff]
  %v118 = vld [vmem:[%s2 + $0x2b8] sm:$0xff]
  %v119 = vld [vmem:[%s2 + $0x2c0] sm:$0xff]
  %v120 = vld [vmem:[%s2 + $0x2c8] sm:$0xff]
  %v121 = vld [vmem:[%s2 + $0x2d0] sm:$0xff]
  %v122 = vld [vmem:[%s2 + $0x2d8] sm:$0xff]
  %v123 = vld [vmem:[%s2 + $0x2e0] sm:$0xff]
  %v124 = vld [vmem:[%s2 + $0x2e8] sm:$0xff]
  %v125 = vld [vmem:[%s2 + $0x2f0] sm:$0xff]
  %v126 = vld [vmem:[%s2 + $0x2f8] sm:$0xff]
  %v127 = vld [vmem:[%s2 + $0x300] sm:$0xff]
  %v128 = vld [vmem:[%s2 + $0x308] sm:$0xff]
  %v129 = vld [vmem:[%s2 + $0x310] sm:$0xff]
  %v130 = vld [vmem:[%s2 + $0x318] sm:$0xff]
  %v131 = vld [vmem:[%s2 + $0x320] sm:$0xff]
  %v132 = vld [vmem:[%s2 + $0x328] sm:$0xff]
  %v133 = vld [vmem:[%s2 + $0x330] sm:$0xff]
  %v134 = vld [vmem:[%s2 + $0x338] sm:$0xff]
  %v135 = vld [vmem:[%s2 + $0x340] sm:$0xff]
  %v136 = vld [vmem:[%s2 + $0x348] sm:$0xff]
  %v137 = vld [vmem:[%s2 + $0x350] sm:$0xff]
  %v138 = vld [vmem:[%s2 + $0x358] sm:$0xff]
  %v139 = vld [vmem:[%s2 + $0x360] sm:$0xff]
  %v140 = vld [vmem:[%s2 + $0x368] sm:$0xff]
  %v141 = vld [vmem:[%s2 + $0x370] sm:$0xff]
  %v142 = vld [vmem:[%s2 + $0x378] sm:$0xff]
  %v143 = vld [vmem:[%s2 + $0x380] sm:$0xff]
  %v144 = vld [vmem:[%s2 + $0x388] sm:$0xff]
  %v145 = vld [vmem:[%s2 + $0x390] sm:$0xff]
  %v146 = vld [vmem:[%s2 + $0x398] sm:$0xff]
  %v147 = vld [vmem:[%s2 + $0x3a0] sm:$0xff]
  %v148 = vld [vmem:[%s2 + $0x3a8] sm:$0xff]
  %v149 = vld [vmem:[%s2 + $0x3b0] sm:$0xff]
  %v150 = vld [vmem:[%s2 + $0x3b8] sm:$0xff]
  %v151 = vld [vmem:[%s2 + $0x3c0] sm:$0xff]
  %v152 = vld [vmem:[%s2 + $0x3c8] sm:$0xff]
  %v153 = vld [vmem:[%s2 + $0x3d0] sm:$0xff]
  %v154 = vld [vmem:[%s2 + $0x3d8] sm:$0xff]
  %v155 = vld [vmem:[%s2 + $0x3e0] sm:$0xff]
  %v156 = vld [vmem:[%s2 + $0x3e8] sm:$0xff]
  %v157 = vld [vmem:[%s2 + $0x3f0] sm:$0xff]
  %v158 = vld [vmem:[%s2 + $0x3f8] sm:$0xff]
  %v159 = vld [vmem:[%s1] sm:$0xff]
  %v160 = vld [vmem:[%s1 + $0x8] sm:$0xff]
  %v161 = vld [vmem:[%s1 + $0x10] sm:$0xff]
  %v162 = vld [vmem:[%s1 + $0x18] sm:$0xff]
  %v163 = vld [vmem:[%s1 + $0x20] sm:$0xff]
  %v164 = vld [vmem:[%s1 + $0x28] sm:$0xff]
  %v165 = vld [vmem:[%s1 + $0x30] sm:$0xff]
  %v166 = vld [vmem:[%s1 + $0x38] sm:$0xff]
  %v167 = vld [vmem:[%s3] sm:$0xff]
  %v168 = vld [vmem:[%s3 + $0x8] sm:$0xff]
  %v169 = vld [vmem:[%s3 + $0x10] sm:$0xff]
  %v170 = vld [vmem:[%s3 + $0x18] sm:$0xff]
  %v171 = vld [vmem:[%s3 + $0x20] sm:$0xff]
  %v172 = vld [vmem:[%s3 + $0x28] sm:$0xff]
  %v173 = vld [vmem:[%s3 + $0x30] sm:$0xff]
  %v174 = vld [vmem:[%s3 + $0x38] sm:$0xff]
  %v175 = vld [vmem:[%s3 + $0x40] sm:$0xff]
  %v176 = vld [vmem:[%s3 + $0x48] sm:$0xff]
  %v177 = vld [vmem:[%s3 + $0x50] sm:$0xff]
  %v178 = vld [vmem:[%s3 + $0x58] sm:$0xff]
  %v179 = vld [vmem:[%s3 + $0x60] sm:$0xff]
  %v180 = vld [vmem:[%s3 + $0x68] sm:$0xff]
  %v181 = vld [vmem:[%s3 + $0x70] sm:$0xff]
  %v182 = vld [vmem:[%s3 + $0x78] sm:$0xff]
  %v183 = vld [vmem:[%s3 + $0x80] sm:$0xff]
  %v184 = vld [vmem:[%s3 + $0x88] sm:$0xff]
  %v185 = vld [vmem:[%s3 + $0x90] sm:$0xff]
  %v186 = vld [vmem:[%s3 + $0x98] sm:$0xff]
  %v187 = vld [vmem:[%s3 + $0xa0] sm:$0xff]
  %v188 = vld [vmem:[%s3 + $0xa8] sm:$0xff]
  %v189 = vld [vmem:[%s3 + $0xb0] sm:$0xff]
  %v190 = vld [vmem:[%s3 + $0xb8] sm:$0xff]
  %v191 = vld [vmem:[%s3 + $0xc0] sm:$0xff]
  %v192 = vld [vmem:[%s3 + $0xc8] sm:$0xff]
  %v193 = vld [vmem:[%s3 + $0xd0] sm:$0xff]
  %v194 = vld [vmem:[%s3 + $0xd8] sm:$0xff]
  %v195 = vld [vmem:[%s3 + $0xe0] sm:$0xff]
  %v196 = vld [vmem:[%s3 + $0xe8] sm:$0xff]
  %v197 = vld [vmem:[%s3 + $0xf0] sm:$0xff]
  %v198 = vld [vmem:[%s3 + $0xf8] sm:$0xff]
  %v199 = vld [vmem:[%s3 + $0x100] sm:$0xff]
  %v200 = vld [vmem:[%s3 + $0x108] sm:$0xff]
  %v201 = vld [vmem:[%s3 + $0x110] sm:$0xff]
  %v202 = vld [vmem:[%s3 + $0x118] sm:$0xff]
  %v203 = vld [vmem:[%s3 + $0x120] sm:$0xff]
  %v204 = vld [vmem:[%s3 + $0x128] sm:$0xff]
  %v205 = vld [vmem:[%s3 + $0x130] sm:$0xff]
  %v206 = vld [vmem:[%s3 + $0x138] sm:$0xff]
  %v207 = vld [vmem:[%s3 + $0x140] sm:$0xff]
  %v208 = vld [vmem:[%s3 + $0x148] sm:$0xff]
  %v209 = vld [vmem:[%s3 + $0x150] sm:$0xff]
  %v210 = vld [vmem:[%s3 + $0x158] sm:$0xff]
  %v211 = vld [vmem:[%s3 + $0x160] sm:$0xff]
  %v212 = vld [vmem:[%s3 + $0x168] sm:$0xff]
  %v213 = vld [vmem:[%s3 + $0x170] sm:$0xff]
  %v214 = vld [vmem:[%s3 + $0x178] sm:$0xff]
  %v215 = vld [vmem:[%s3 + $0x180] sm:$0xff]
  %v216 = vld [vmem:[%s3 + $0x188] sm:$0xff]
  %v217 = vld [vmem:[%s3 + $0x190] sm:$0xff]
  %v218 = vld [vmem:[%s3 + $0x198] sm:$0xff]
  %v219 = vld [vmem:[%s3 + $0x1a0] sm:$0xff]
  %v220 = vld [vmem:[%s3 + $0x1a8] sm:$0xff]
  %v221 = vld [vmem:[%s3 + $0x1b0] sm:$0xff]
  %v222 = vld [vmem:[%s3 + $0x1b8] sm:$0xff]
  %v223 = vld [vmem:[%s3 + $0x1c0] sm:$0xff]
  %v224 = vld [vmem:[%s3 + $0x1c8] sm:$0xff]
  %v225 = vld [vmem:[%s3 + $0x1d0] sm:$0xff]
  %v226 = vld [vmem:[%s3 + $0x1d8] sm:$0xff]
  %v227 = vld [vmem:[%s3 + $0x1e0] sm:$0xff]
  %v228 = vld [vmem:[%s3 + $0x1e8] sm:$0xff]
  %v229 = vld [vmem:[%s3 + $0x1f0] sm:$0xff]
  %v230 = vld [vmem:[%s3 + $0x1f8] sm:$0xff]
  %v231 = vld [vmem:[%s3 + $0x200] sm:$0xff]
  %v232 = vld [vmem:[%s3 + $0x208] sm:$0xff]
  %v233 = vld [vmem:[%s3 + $0x210] sm:$0xff]
  %v234 = vld [vmem:[%s3 + $0x218] sm:$0xff]
  %v235 = vld [vmem:[%s3 + $0x220] sm:$0xff]
  %v236 = vld [vmem:[%s3 + $0x228] sm:$0xff]
  %v237 = vld [vmem:[%s3 + $0x230] sm:$0xff]
  %v238 = vld [vmem:[%s3 + $0x238] sm:$0xff]
  %v239 = vld [vmem:[%s3 + $0x240] sm:$0xff]
  %v240 = vld [vmem:[%s3 + $0x248] sm:$0xff]
  %v241 = vld [vmem:[%s3 + $0x250] sm:$0xff]
  %v242 = vld [vmem:[%s3 + $0x258] sm:$0xff]
  %v243 = vld [vmem:[%s3 + $0x260] sm:$0xff]
  %v244 = vld [vmem:[%s3 + $0x268] sm:$0xff]
  %v245 = vld [vmem:[%s3 + $0x270] sm:$0xff]
  %v246 = vld [vmem:[%s3 + $0x278] sm:$0xff]
  %v247 = vld [vmem:[%s3 + $0x280] sm:$0xff]
  %v248 = vld [vmem:[%s3 + $0x288] sm:$0xff]
  %v249 = vld [vmem:[%s3 + $0x290] sm:$0xff]
  %v250 = vld [vmem:[%s3 + $0x298] sm:$0xff]
  %v251 = vld [vmem:[%s3 + $0x2a0] sm:$0xff]
  %v252 = vld [vmem:[%s3 + $0x2a8] sm:$0xff]
  %v253 = vld [vmem:[%s3 + $0x2b0] sm:$0xff]
  %v254 = vld [vmem:[%s3 + $0x2b8] sm:$0xff]
  %v255 = vld [vmem:[%s3 + $0x2c0] sm:$0xff]
  %v256 = vld [vmem:[%s3 + $0x2c8] sm:$0xff]
  %v257 = vld [vmem:[%s3 + $0x2d0] sm:$0xff]
  %v258 = vld [vmem:[%s3 + $0x2d8] sm:$0xff]
  %v259 = vld [vmem:[%s3 + $0x2e0] sm:$0xff]
  %v260 = vld [vmem:[%s3 + $0x2e8] sm:$0xff]
  %v261 = vld [vmem:[%s3 + $0x2f0] sm:$0xff]
  %v262 = vld [vmem:[%s3 + $0x2f8] sm:$0xff]
  %v263 = vld [vmem:[%s3 + $0x300] sm:$0xff]
  %v264 = vld [vmem:[%s3 + $0x308] sm:$0xff]
  %v265 = vld [vmem:[%s3 + $0x310] sm:$0xff]
  %v266 = vld [vmem:[%s3 + $0x318] sm:$0xff]
  %v267 = vld [vmem:[%s3 + $0x320] sm:$0xff]
  %v268 = vld [vmem:[%s3 + $0x328] sm:$0xff]
  %v269 = vld [vmem:[%s3 + $0x330] sm:$0xff]
  %v270 = vld [vmem:[%s3 + $0x338] sm:$0xff]
  %v271 = vld [vmem:[%s3 + $0x340] sm:$0xff]
  %v272 = vld [vmem:[%s3 + $0x348] sm:$0xff]
  %v273 = vld [vmem:[%s3 + $0x350] sm:$0xff]
  %v274 = vld [vmem:[%s3 + $0x358] sm:$0xff]
  %v275 = vld [vmem:[%s3 + $0x360] sm:$0xff]
  %v276 = vld [vmem:[%s3 + $0x368] sm:$0xff]
  %v277 = vld [vmem:[%s3 + $0x370] sm:$0xff]
  %v278 = vld [vmem:[%s3 + $0x378] sm:$0xff]
  %v279 = vld [vmem:[%s3 + $0x380] sm:$0xff]
  %v280 = vld [vmem:[%s3 + $0x388] sm:$0xff]
  %v281 = vld [vmem:[%s3 + $0x390] sm:$0xff]
  %v282 = vld [vmem:[%s3 + $0x398] sm:$0xff]
  %v283 = vld [vmem:[%s3 + $0x3a0] sm:$0xff]
  %v284 = vld [vmem:[%s3 + $0x3a8] sm:$0xff]
  %v285 = vld [vmem:[%s3 + $0x3b0] sm:$0xff]
  %v286 = vld [vmem:[%s3 + $0x3b8] sm:$0xff]
  %v287 = vld [vmem:[%s3 + $0x3c0] sm:$0xff]
  %v288 = vld [vmem:[%s3 + $0x3c8] sm:$0xff]
  %v289 = vld [vmem:[%s3 + $0x3d0] sm:$0xff]
  %v290 = vld [vmem:[%s3 + $0x3d8] sm:$0xff]
  %v291 = vld [vmem:[%s3 + $0x3e0] sm:$0xff]
  %v292 = vld [vmem:[%s3 + $0x3e8] sm:$0xff]
  %v293 = vld [vmem:[%s3 + $0x3f0] sm:$0xff]
  %v294 = vld [vmem:[%s3 + $0x3f8] sm:$0xff]
  %v303 = vunpack.c.l.b16 %v159
  %v304 = vunpack.c.h.b16 %v159
  %v305 = vunpack.c.l.b16 %v160
  %v306 = vunpack.c.h.b16 %v160
  %v307 = vunpack.c.l.b16 %v161
  %v308 = vunpack.c.h.b16 %v161
  %v309 = vunpack.c.l.b16 %v162
  %v310 = vunpack.c.h.b16 %v162
  %v311 = vunpack.c.l.b16 %v163
  %v312 = vunpack.c.h.b16 %v163
  %v313 = vunpack.c.l.b16 %v164
  %v314 = vunpack.c.h.b16 %v164
  %v315 = vunpack.c.l.b16 %v165
  %v316 = vunpack.c.h.b16 %v165
  %v317 = vunpack.c.l.b16 %v166
  %v318 = vunpack.c.h.b16 %v166
  %v319 = vpack.c.b16 %v307, %v303
  %v320 = vpack.c.b16 %v308, %v304
  %v321 = vpack.c.b16 %v309, %v305
  %v322 = vpack.c.b16 %v310, %v306
  %v323 = vpack.c.b16 %v315, %v311
  %v324 = vpack.c.b16 %v316, %v312
  %v325 = vpack.c.b16 %v317, %v313
  %v326 = vpack.c.b16 %v318, %v314
  %v463 = vunpack.c.l.b16 %v167
  %v464 = vunpack.c.h.b16 %v167
  %v465 = vunpack.c.l.b16 %v168
  %v466 = vunpack.c.h.b16 %v168
  %v467 = vunpack.c.l.b16 %v169
  %v468 = vunpack.c.h.b16 %v169
  %v469 = vunpack.c.l.b16 %v170
  %v470 = vunpack.c.h.b16 %v170
  %v471 = vunpack.c.l.b16 %v171
  %v472 = vunpack.c.h.b16 %v171
  %v473 = vunpack.c.l.b16 %v172
  %v474 = vunpack.c.h.b16 %v172
  %v475 = vunpack.c.l.b16 %v173
  %v476 = vunpack.c.h.b16 %v173
  %v477 = vunpack.c.l.b16 %v174
  %v478 = vunpack.c.h.b16 %v174
  %v479 = vunpack.c.l.b16 %v175
  %v480 = vunpack.c.h.b16 %v175
  %v481 = vunpack.c.l.b16 %v176
  %v482 = vunpack.c.h.b16 %v176
  %v483 = vunpack.c.l.b16 %v177
  %v484 = vunpack.c.h.b16 %v177
  %v485 = vunpack.c.l.b16 %v178
  %v486 = vunpack.c.h.b16 %v178
  %v487 = vunpack.c.l.b16 %v179
  %v488 = vunpack.c.h.b16 %v179
  %v489 = vunpack.c.l.b16 %v180
  %v490 = vunpack.c.h.b16 %v180
  %v491 = vunpack.c.l.b16 %v181
  %v492 = vunpack.c.h.b16 %v181
  %v493 = vunpack.c.l.b16 %v182
  %v494 = vunpack.c.h.b16 %v182
  %v495 = vunpack.c.l.b16 %v183
  %v496 = vunpack.c.h.b16 %v183
  %v497 = vunpack.c.l.b16 %v184
  %v498 = vunpack.c.h.b16 %v184
  %v499 = vunpack.c.l.b16 %v185
  %v500 = vunpack.c.h.b16 %v185
  %v501 = vunpack.c.l.b16 %v186
  %v502 = vunpack.c.h.b16 %v186
  %v503 = vunpack.c.l.b16 %v187
  %v504 = vunpack.c.h.b16 %v187
  %v505 = vunpack.c.l.b16 %v188
  %v506 = vunpack.c.h.b16 %v188
  %v507 = vunpack.c.l.b16 %v189
  %v508 = vunpack.c.h.b16 %v189
  %v509 = vunpack.c.l.b16 %v190
  %v510 = vunpack.c.h.b16 %v190
  %v511 = vunpack.c.l.b16 %v191
  %v512 = vunpack.c.h.b16 %v191
  %v513 = vunpack.c.l.b16 %v192
  %v514 = vunpack.c.h.b16 %v192
  %v515 = vunpack.c.l.b16 %v193
  %v516 = vunpack.c.h.b16 %v193
  %v517 = vunpack.c.l.b16 %v194
  %v518 = vunpack.c.h.b16 %v194
  %v519 = vunpack.c.l.b16 %v195
  %v520 = vunpack.c.h.b16 %v195
  %v521 = vunpack.c.l.b16 %v196
  %v522 = vunpack.c.h.b16 %v196
  %v523 = vunpack.c.l.b16 %v197
  %v524 = vunpack.c.h.b16 %v197
  %v525 = vunpack.c.l.b16 %v198
  %v526 = vunpack.c.h.b16 %v198
  %v527 = vunpack.c.l.b16 %v199
  %v528 = vunpack.c.h.b16 %v199
  %v529 = vunpack.c.l.b16 %v200
  %v530 = vunpack.c.h.b16 %v200
  %v531 = vunpack.c.l.b16 %v201
  %v532 = vunpack.c.h.b16 %v201
  %v533 = vunpack.c.l.b16 %v202
  %v534 = vunpack.c.h.b16 %v202
  %v535 = vunpack.c.l.b16 %v203
  %v536 = vunpack.c.h.b16 %v203
  %v537 = vunpack.c.l.b16 %v204
  %v538 = vunpack.c.h.b16 %v204
  %v539 = vunpack.c.l.b16 %v205
  %v540 = vunpack.c.h.b16 %v205
  %v541 = vunpack.c.l.b16 %v206
  %v542 = vunpack.c.h.b16 %v206
  %v543 = vunpack.c.l.b16 %v207
  %v544 = vunpack.c.h.b16 %v207
  %v545 = vunpack.c.l.b16 %v208
  %v546 = vunpack.c.h.b16 %v208
  %v547 = vunpack.c.l.b16 %v209
  %v548 = vunpack.c.h.b16 %v209
  %v549 = vunpack.c.l.b16 %v210
  %v550 = vunpack.c.h.b16 %v210
  %v551 = vunpack.c.l.b16 %v211
  %v552 = vunpack.c.h.b16 %v211
  %v553 = vunpack.c.l.b16 %v212
  %v554 = vunpack.c.h.b16 %v212
  %v555 = vunpack.c.l.b16 %v213
  %v556 = vunpack.c.h.b16 %v213
  %v557 = vunpack.c.l.b16 %v214
  %v558 = vunpack.c.h.b16 %v214
  %v559 = vunpack.c.l.b16 %v215
  %v560 = vunpack.c.h.b16 %v215
  %v561 = vunpack.c.l.b16 %v216
  %v562 = vunpack.c.h.b16 %v216
  %v563 = vunpack.c.l.b16 %v217
  %v564 = vunpack.c.h.b16 %v217
  %v565 = vunpack.c.l.b16 %v218
  %v566 = vunpack.c.h.b16 %v218
  %v567 = vunpack.c.l.b16 %v219
  %v568 = vunpack.c.h.b16 %v219
  %v569 = vunpack.c.l.b16 %v220
  %v570 = vunpack.c.h.b16 %v220
  %v571 = vunpack.c.l.b16 %v221
  %v572 = vunpack.c.h.b16 %v221
  %v573 = vunpack.c.l.b16 %v222
  %v574 = vunpack.c.h.b16 %v222
  %v575 = vunpack.c.l.b16 %v223
  %v576 = vunpack.c.h.b16 %v223
  %v577 = vunpack.c.l.b16 %v224
  %v578 = vunpack.c.h.b16 %v224
  %v579 = vunpack.c.l.b16 %v225
  %v580 = vunpack.c.h.b16 %v225
  %v581 = vunpack.c.l.b16 %v226
  %v582 = vunpack.c.h.b16 %v226
  %v583 = vunpack.c.l.b16 %v227
  %v584 = vunpack.c.h.b16 %v227
  %v585 = vunpack.c.l.b16 %v228
  %v586 = vunpack.c.h.b16 %v228
  %v587 = vunpack.c.l.b16 %v229
  %v588 = vunpack.c.h.b16 %v229
  %v589 = vunpack.c.l.b16 %v230
  %v590 = vunpack.c.h.b16 %v230
  %v591 = vunpack.c.l.b16 %v231
  %v592 = vunpack.c.h.b16 %v231
  %v593 = vunpack.c.l.b16 %v232
  %v594 = vunpack.c.h.b16 %v232
  %v595 = vunpack.c.l.b16 %v233
  %v596 = vunpack.c.h.b16 %v233
  %v597 = vunpack.c.l.b16 %v234
  %v598 = vunpack.c.h.b16 %v234
  %v599 = vunpack.c.l.b16 %v235
  %v600 = vunpack.c.h.b16 %v235
  %v601 = vunpack.c.l.b16 %v236
  %v602 = vunpack.c.h.b16 %v236
  %v603 = vunpack.c.l.b16 %v237
  %v604 = vunpack.c.h.b16 %v237
  %v605 = vunpack.c.l.b16 %v238
  %v606 = vunpack.c.h.b16 %v238
  %v607 = vunpack.c.l.b16 %v239
  %v608 = vunpack.c.h.b16 %v239
  %v609 = vunpack.c.l.b16 %v240
  %v610 = vunpack.c.h.b16 %v240
  %v611 = vunpack.c.l.b16 %v241
  %v612 = vunpack.c.h.b16 %v241
  %v613 = vunpack.c.l.b16 %v242
  %v614 = vunpack.c.h.b16 %v242
  %v615 = vunpack.c.l.b16 %v243
  %v616 = vunpack.c.h.b16 %v243
  %v617 = vunpack.c.l.b16 %v244
  %v618 = vunpack.c.h.b16 %v244
  %v619 = vunpack.c.l.b16 %v245
  %v620 = vunpack.c.h.b16 %v245
  %v621 = vunpack.c.l.b16 %v246
  %v622 = vunpack.c.h.b16 %v246
  %v623 = vunpack.c.l.b16 %v247
  %v624 = vunpack.c.h.b16 %v247
  %v625 = vunpack.c.l.b16 %v248
  %v626 = vunpack.c.h.b16 %v248
  %v627 = vunpack.c.l.b16 %v249
  %v628 = vunpack.c.h.b16 %v249
  %v629 = vunpack.c.l.b16 %v250
  %v630 = vunpack.c.h.b16 %v250
  %v631 = vunpack.c.l.b16 %v251
  %v632 = vunpack.c.h.b16 %v251
  %v633 = vunpack.c.l.b16 %v252
  %v634 = vunpack.c.h.b16 %v252
  %v635 = vunpack.c.l.b16 %v253
  %v636 = vunpack.c.h.b16 %v253
  %v637 = vunpack.c.l.b16 %v254
  %v638 = vunpack.c.h.b16 %v254
  %v639 = vunpack.c.l.b16 %v255
  %v640 = vunpack.c.h.b16 %v255
  %v641 = vunpack.c.l.b16 %v256
  %v642 = vunpack.c.h.b16 %v256
  %v643 = vunpack.c.l.b16 %v257
  %v644 = vunpack.c.h.b16 %v257
  %v645 = vunpack.c.l.b16 %v258
  %v646 = vunpack.c.h.b16 %v258
  %v647 = vunpack.c.l.b16 %v259
  %v648 = vunpack.c.h.b16 %v259
  %v649 = vunpack.c.l.b16 %v260
  %v650 = vunpack.c.h.b16 %v260
  %v651 = vunpack.c.l.b16 %v261
  %v652 = vunpack.c.h.b16 %v261
  %v653 = vunpack.c.l.b16 %v262
  %v654 = vunpack.c.h.b16 %v262
  %v655 = vunpack.c.l.b16 %v263
  %v656 = vunpack.c.h.b16 %v263
  %v657 = vunpack.c.l.b16 %v264
  %v658 = vunpack.c.h.b16 %v264
  %v659 = vunpack.c.l.b16 %v265
  %v660 = vunpack.c.h.b16 %v265
  %v661 = vunpack.c.l.b16 %v266
  %v662 = vunpack.c.h.b16 %v266
  %v663 = vunpack.c.l.b16 %v267
  %v664 = vunpack.c.h.b16 %v267
  %v665 = vunpack.c.l.b16 %v268
  %v666 = vunpack.c.h.b16 %v268
  %v667 = vunpack.c.l.b16 %v269
  %v668 = vunpack.c.h.b16 %v269
  %v669 = vunpack.c.l.b16 %v270
  %v670 = vunpack.c.h.b16 %v270
  %v671 = vunpack.c.l.b16 %v271
  %v672 = vunpack.c.h.b16 %v271
  %v673 = vunpack.c.l.b16 %v272
  %v674 = vunpack.c.h.b16 %v272
  %v675 = vunpack.c.l.b16 %v273
  %v676 = vunpack.c.h.b16 %v273
  %v677 = vunpack.c.l.b16 %v274
  %v678 = vunpack.c.h.b16 %v274
  %v679 = vunpack.c.l.b16 %v275
  %v680 = vunpack.c.h.b16 %v275
  %v681 = vunpack.c.l.b16 %v276
  %v682 = vunpack.c.h.b16 %v276
  %v683 = vunpack.c.l.b16 %v277
  %v684 = vunpack.c.h.b16 %v277
  %v685 = vunpack.c.l.b16 %v278
  %v686 = vunpack.c.h.b16 %v278
  %v687 = vunpack.c.l.b16 %v279
  %v688 = vunpack.c.h.b16 %v279
  %v689 = vunpack.c.l.b16 %v280
  %v690 = vunpack.c.h.b16 %v280
  %v691 = vunpack.c.l.b16 %v281
  %v692 = vunpack.c.h.b16 %v281
  %v693 = vunpack.c.l.b16 %v282
  %v694 = vunpack.c.h.b16 %v282
  %v695 = vunpack.c.l.b16 %v283
  %v696 = vunpack.c.h.b16 %v283
  %v697 = vunpack.c.l.b16 %v284
  %v698 = vunpack.c.h.b16 %v284
  %v699 = vunpack.c.l.b16 %v285
  %v700 = vunpack.c.h.b16 %v285
  %v701 = vunpack.c.l.b16 %v286
  %v702 = vunpack.c.h.b16 %v286
  %v703 = vunpack.c.l.b16 %v287
  %v704 = vunpack.c.h.b16 %v287
  %v705 = vunpack.c.l.b16 %v288
  %v706 = vunpack.c.h.b16 %v288
  %v707 = vunpack.c.l.b16 %v289
  %v708 = vunpack.c.h.b16 %v289
  %v709 = vunpack.c.l.b16 %v290
  %v710 = vunpack.c.h.b16 %v290
  %v711 = vunpack.c.l.b16 %v291
  %v712 = vunpack.c.h.b16 %v291
  %v713 = vunpack.c.l.b16 %v292
  %v714 = vunpack.c.h.b16 %v292
  %v715 = vunpack.c.l.b16 %v293
  %v716 = vunpack.c.h.b16 %v293
  %v717 = vunpack.c.l.b16 %v294
  %v718 = vunpack.c.h.b16 %v294
  %v719 = vpack.c.b16 %v467, %v463
  %v720 = vpack.c.b16 %v468, %v464
  %v721 = vpack.c.b16 %v469, %v465
  %v722 = vpack.c.b16 %v470, %v466
  %v723 = vpack.c.b16 %v475, %v471
  %v724 = vpack.c.b16 %v476, %v472
  %v725 = vpack.c.b16 %v477, %v473
  %v726 = vpack.c.b16 %v478, %v474
  %v727 = vpack.c.b16 %v483, %v479
  %v728 = vpack.c.b16 %v484, %v480
  %v729 = vpack.c.b16 %v485, %v481
  %v730 = vpack.c.b16 %v486, %v482
  %v731 = vpack.c.b16 %v491, %v487
  %v732 = vpack.c.b16 %v492, %v488
  %v733 = vpack.c.b16 %v493, %v489
  %v734 = vpack.c.b16 %v494, %v490
  %v735 = vpack.c.b16 %v499, %v495
  %v736 = vpack.c.b16 %v500, %v496
  %v737 = vpack.c.b16 %v501, %v497
  %v738 = vpack.c.b16 %v502, %v498
  %v739 = vpack.c.b16 %v507, %v503
  %v740 = vpack.c.b16 %v508, %v504
  %v741 = vpack.c.b16 %v509, %v505
  %v742 = vpack.c.b16 %v510, %v506
  %v743 = vpack.c.b16 %v515, %v511
  %v744 = vpack.c.b16 %v516, %v512
  %v745 = vpack.c.b16 %v517, %v513
  %v746 = vpack.c.b16 %v518, %v514
  %v747 = vpack.c.b16 %v523, %v519
  %v748 = vpack.c.b16 %v524, %v520
  %v749 = vpack.c.b16 %v525, %v521
  %v750 = vpack.c.b16 %v526, %v522
  %v751 = vpack.c.b16 %v531, %v527
  %v752 = vpack.c.b16 %v532, %v528
  %v753 = vpack.c.b16 %v533, %v529
  %v754 = vpack.c.b16 %v534, %v530
  %v755 = vpack.c.b16 %v539, %v535
  %v756 = vpack.c.b16 %v540, %v536
  %v757 = vpack.c.b16 %v541, %v537
  %v758 = vpack.c.b16 %v542, %v538
  %v759 = vpack.c.b16 %v547, %v543
  %v760 = vpack.c.b16 %v548, %v544
  %v761 = vpack.c.b16 %v549, %v545
  %v762 = vpack.c.b16 %v550, %v546
  %v763 = vpack.c.b16 %v555, %v551
  %v764 = vpack.c.b16 %v556, %v552
  %v765 = vpack.c.b16 %v557, %v553
  %v766 = vpack.c.b16 %v558, %v554
  %v767 = vpack.c.b16 %v563, %v559
  %v768 = vpack.c.b16 %v564, %v560
  %v769 = vpack.c.b16 %v565, %v561
  %v770 = vpack.c.b16 %v566, %v562
  %v771 = vpack.c.b16 %v571, %v567
  %v772 = vpack.c.b16 %v572, %v568
  %v773 = vpack.c.b16 %v573, %v569
  %v774 = vpack.c.b16 %v574, %v570
  %v775 = vpack.c.b16 %v579, %v575
  %v776 = vpack.c.b16 %v580, %v576
  %v777 = vpack.c.b16 %v581, %v577
  %v778 = vpack.c.b16 %v582, %v578
  %v779 = vpack.c.b16 %v587, %v583
  %v780 = vpack.c.b16 %v588, %v584
  %v781 = vpack.c.b16 %v589, %v585
  %v782 = vpack.c.b16 %v590, %v586
  %v783 = vpack.c.b16 %v595, %v591
  %v784 = vpack.c.b16 %v596, %v592
  %v785 = vpack.c.b16 %v597, %v593
  %v786 = vpack.c.b16 %v598, %v594
  %v787 = vpack.c.b16 %v603, %v599
  %v788 = vpack.c.b16 %v604, %v600
  %v789 = vpack.c.b16 %v605, %v601
  %v790 = vpack.c.b16 %v606, %v602
  %v791 = vpack.c.b16 %v611, %v607
  %v792 = vpack.c.b16 %v612, %v608
  %v793 = vpack.c.b16 %v613, %v609
  %v794 = vpack.c.b16 %v614, %v610
  %v795 = vpack.c.b16 %v619, %v615
  %v796 = vpack.c.b16 %v620, %v616
  %v797 = vpack.c.b16 %v621, %v617
  %v798 = vpack.c.b16 %v622, %v618
  %v799 = vpack.c.b16 %v627, %v623
  %v800 = vpack.c.b16 %v628, %v624
  %v801 = vpack.c.b16 %v629, %v625
  %v802 = vpack.c.b16 %v630, %v626
  %v803 = vpack.c.b16 %v635, %v631
  %v804 = vpack.c.b16 %v636, %v632
  %v805 = vpack.c.b16 %v637, %v633
  %v806 = vpack.c.b16 %v638, %v634
  %v807 = vpack.c.b16 %v643, %v639
  %v808 = vpack.c.b16 %v644, %v640
  %v809 = vpack.c.b16 %v645, %v641
  %v810 = vpack.c.b16 %v646, %v642
  %v811 = vpack.c.b16 %v651, %v647
  %v812 = vpack.c.b16 %v652, %v648
  %v813 = vpack.c.b16 %v653, %v649
  %v814 = vpack.c.b16 %v654, %v650
  %v815 = vpack.c.b16 %v659, %v655
  %v816 = vpack.c.b16 %v660, %v656
  %v817 = vpack.c.b16 %v661, %v657
  %v818 = vpack.c.b16 %v662, %v658
  %v819 = vpack.c.b16 %v667, %v663
  %v820 = vpack.c.b16 %v668, %v664
  %v821 = vpack.c.b16 %v669, %v665
  %v822 = vpack.c.b16 %v670, %v666
  %v823 = vpack.c.b16 %v675, %v671
  %v824 = vpack.c.b16 %v676, %v672
  %v825 = vpack.c.b16 %v677, %v673
  %v826 = vpack.c.b16 %v678, %v674
  %v827 = vpack.c.b16 %v683, %v679
  %v828 = vpack.c.b16 %v684, %v680
  %v829 = vpack.c.b16 %v685, %v681
  %v830 = vpack.c.b16 %v686, %v682
  %v831 = vpack.c.b16 %v691, %v687
  %v832 = vpack.c.b16 %v692, %v688
  %v833 = vpack.c.b16 %v693, %v689
  %v834 = vpack.c.b16 %v694, %v690
  %v835 = vpack.c.b16 %v699, %v695
  %v836 = vpack.c.b16 %v700, %v696
  %v837 = vpack.c.b16 %v701, %v697
  %v838 = vpack.c.b16 %v702, %v698
  %v839 = vpack.c.b16 %v707, %v703
  %v840 = vpack.c.b16 %v708, %v704
  %v841 = vpack.c.b16 %v709, %v705
  %v842 = vpack.c.b16 %v710, %v706
  %v843 = vpack.c.b16 %v715, %v711
  %v844 = vpack.c.b16 %v716, %v712
  %v845 = vpack.c.b16 %v717, %v713
  %v846 = vpack.c.b16 %v718, %v714
  %975 = vmatprep.subr.bf16.mxu0 %v720
  %976 = vmatpush1.bf16.msra.mxu0 %v719
  %977 = vmatprep.subr.bf16.mxu0 %v724
  %978 = vmatpush1.bf16.msra.mxu0 %v723
  %979 = vmatprep.subr.bf16.mxu0 %v728
  %980 = vmatpush1.bf16.msra.mxu0 %v727
  %981 = vmatprep.subr.bf16.mxu0 %v732
  %982 = vmatpush1.bf16.msra.mxu0 %v731
  %983 = vmatprep.subr.bf16.mxu0 %v736
  %984 = vmatpush1.bf16.msra.mxu0 %v735
  %985 = vmatprep.subr.bf16.mxu0 %v740
  %986 = vmatpush1.bf16.msra.mxu0 %v739
  %987 = vmatprep.subr.bf16.mxu0 %v744
  %988 = vmatpush1.bf16.msra.mxu0 %v743
  %989 = vmatprep.subr.bf16.mxu0 %v748
  %990 = vmatpush1.bf16.msra.mxu0 %v747
  %991 = vmatprep.subr.bf16.mxu0 %v752
  %992 = vmatpush1.bf16.msra.mxu0 %v751
  %993 = vmatprep.subr.bf16.mxu0 %v756
  %994 = vmatpush1.bf16.msra.mxu0 %v755
  %995 = vmatprep.subr.bf16.mxu0 %v760
  %996 = vmatpush1.bf16.msra.mxu0 %v759
  %997 = vmatprep.subr.bf16.mxu0 %v764
  %998 = vmatpush1.bf16.msra.mxu0 %v763
  %999 = vmatprep.subr.bf16.mxu0 %v768
  %1000 = vmatpush1.bf16.msra.mxu0 %v767
  %1001 = vmatprep.subr.bf16.mxu0 %v772
  %1002 = vmatpush1.bf16.msra.mxu0 %v771
  %1003 = vmatprep.subr.bf16.mxu0 %v776
  %1004 = vmatpush1.bf16.msra.mxu0 %v775
  %1005 = vmatprep.subr.bf16.mxu0 %v780
  %1006 = vmatpush1.bf16.msra.mxu0 %v779
  %1007 = vmatprep.mubr.bf16.mxu0 %v320
  %1008 = vmatmul.mubr.bf16.gmra.mrb[0].mxu0 %v319
  %v1009 = vpop.f32.mrb[0].mxu0
  %v1010 = vadd.f32 0.0, %v1009
  %v1011 = vpop.f32.mrb[0].mxu0
  %v1012 = vadd.f32 0.0, %v1011
  %v1013 = vpop.f32.mrb[0].mxu0
  %v1014 = vadd.f32 0.0, %v1013
  %v1015 = vpop.f32.mrb[0].mxu0
  %v1016 = vadd.f32 0.0, %v1015
  %1017 = vmatprep.mubr.bf16.mxu0 %v324
  %1018 = vmatmul.mubr.bf16.gmra.mrb[0].mxu0 %v323
  %v1019 = vpop.f32.mrb[0].mxu0
  %v1020 = vadd.f32 0.0, %v1019
  %v1021 = vpop.f32.mrb[0].mxu0
  %v1022 = vadd.f32 0.0, %v1021
  %v1023 = vpop.f32.mrb[0].mxu0
  %v1024 = vadd.f32 0.0, %v1023
  %v1025 = vpop.f32.mrb[0].mxu0
  %v1026 = vadd.f32 0.0, %v1025
  %1027 = vdwg.mxu0
  %1028 = vmatprep.subr.bf16.mxu0 %v784
  %1029 = vmatpush1.bf16.msra.mxu0 %v783
  %1030 = vmatprep.subr.bf16.mxu0 %v788
  %1031 = vmatpush1.bf16.msra.mxu0 %v787
  %1032 = vmatprep.subr.bf16.mxu0 %v792
  %1033 = vmatpush1.bf16.msra.mxu0 %v791
  %1034 = vmatprep.subr.bf16.mxu0 %v796
  %1035 = vmatpush1.bf16.msra.mxu0 %v795
  %1036 = vmatprep.subr.bf16.mxu0 %v800
  %1037 = vmatpush1.bf16.msra.mxu0 %v799
  %1038 = vmatprep.subr.bf16.mxu0 %v804
  %1039 = vmatpush1.bf16.msra.mxu0 %v803
  %1040 = vmatprep.subr.bf16.mxu0 %v808
  %1041 = vmatpush1.bf16.msra.mxu0 %v807
  %1042 = vmatprep.subr.bf16.mxu0 %v812
  %1043 = vmatpush1.bf16.msra.mxu0 %v811
  %1044 = vmatprep.subr.bf16.mxu0 %v816
  %1045 = vmatpush1.bf16.msra.mxu0 %v815
  %1046 = vmatprep.subr.bf16.mxu0 %v820
  %1047 = vmatpush1.bf16.msra.mxu0 %v819
  %1048 = vmatprep.subr.bf16.mxu0 %v824
  %1049 = vmatpush1.bf16.msra.mxu0 %v823
  %1050 = vmatprep.subr.bf16.mxu0 %v828
  %1051 = vmatpush1.bf16.msra.mxu0 %v827
  %1052 = vmatprep.subr.bf16.mxu0 %v832
  %1053 = vmatpush1.bf16.msra.mxu0 %v831
  %1054 = vmatprep.subr.bf16.mxu0 %v836
  %1055 = vmatpush1.bf16.msra.mxu0 %v835
  %1056 = vmatprep.subr.bf16.mxu0 %v840
  %1057 = vmatpush1.bf16.msra.mxu0 %v839
  %1058 = vmatprep.subr.bf16.mxu0 %v844
  %1059 = vmatpush1.bf16.msra.mxu0 %v843
  %1060 = vmatprep.mubr.bf16.mxu0 %v322
  %1061 = vmatmul.mubr.bf16.gmra.mrb[0].mxu0 %v321
  %v1062 = vpop.f32.mrb[0].mxu0
  %v1063 = vadd.f32 %v1010, %v1062
  %v1064 = vpop.f32.mrb[0].mxu0
  %v1065 = vadd.f32 %v1012, %v1064
  %v1066 = vpop.f32.mrb[0].mxu0
  %v1067 = vadd.f32 %v1014, %v1066
  %v1068 = vpop.f32.mrb[0].mxu0
  %v1069 = vadd.f32 %v1016, %v1068
  %1070 = vmatprep.mubr.bf16.mxu0 %v326
  %1071 = vmatmul.mubr.bf16.gmra.mrb[0].mxu0 %v325
  %v1072 = vpop.f32.mrb[0].mxu0
  %v1073 = vadd.f32 %v1020, %v1072
  %v1074 = vpop.f32.mrb[0].mxu0
  %v1075 = vadd.f32 %v1022, %v1074
  %v1076 = vpop.f32.mrb[0].mxu0
  %v1077 = vadd.f32 %v1024, %v1076
  %v1078 = vpop.f32.mrb[0].mxu0
  %v1079 = vadd.f32 %v1026, %v1078
  %1080 = vdwg.mxu0
  %1081 = vmatprep.subr.bf16.mxu0 %v722
  %1082 = vmatpush1.bf16.msra.mxu0 %v721
  %1083 = vmatprep.subr.bf16.mxu0 %v726
  %1084 = vmatpush1.bf16.msra.mxu0 %v725
  %1085 = vmatprep.subr.bf16.mxu0 %v730
  %1086 = vmatpush1.bf16.msra.mxu0 %v729
  %1087 = vmatprep.subr.bf16.mxu0 %v734
  %1088 = vmatpush1.bf16.msra.mxu0 %v733
  %1089 = vmatprep.subr.bf16.mxu0 %v738
  %1090 = vmatpush1.bf16.msra.mxu0 %v737
  %1091 = vmatprep.subr.bf16.mxu0 %v742
  %1092 = vmatpush1.bf16.msra.mxu0 %v741
  %1093 = vmatprep.subr.bf16.mxu0 %v746
  %1094 = vmatpush1.bf16.msra.mxu0 %v745
  %1095 = vmatprep.subr.bf16.mxu0 %v750
  %1096 = vmatpush1.bf16.msra.mxu0 %v749
  %1097 = vmatprep.subr.bf16.mxu0 %v754
  %1098 = vmatpush1.bf16.msra.mxu0 %v753
  %1099 = vmatprep.subr.bf16.mxu0 %v758
  %1100 = vmatpush1.bf16.msra.mxu0 %v757
  %1101 = vmatprep.subr.bf16.mxu0 %v762
  %1102 = vmatpush1.bf16.msra.mxu0 %v761
  %1103 = vmatprep.subr.bf16.mxu0 %v766
  %1104 = vmatpush1.bf16.msra.mxu0 %v765
  %1105 = vmatprep.subr.bf16.mxu0 %v770
  %1106 = vmatpush1.bf16.msra.mxu0 %v769
  %1107 = vmatprep.subr.bf16.mxu0 %v774
  %1108 = vmatpush1.bf16.msra.mxu0 %v773
  %1109 = vmatprep.subr.bf16.mxu0 %v778
  %1110 = vmatpush1.bf16.msra.mxu0 %v777
  %1111 = vmatprep.subr.bf16.mxu0 %v782
  %1112 = vmatpush1.bf16.msra.mxu0 %v781
  %1113 = vmatprep.mubr.bf16.mxu0 %v320
  %1114 = vmatmul.mubr.bf16.gmra.mrb[0].mxu0 %v319
  %v1115 = vpop.f32.mrb[0].mxu0
  %v1116 = vadd.f32 0.0, %v1115
  %v1117 = vpop.f32.mrb[0].mxu0
  %v1118 = vadd.f32 0.0, %v1117
  %v1119 = vpop.f32.mrb[0].mxu0
  %v1120 = vadd.f32 0.0, %v1119
  %v1121 = vpop.f32.mrb[0].mxu0
  %v1122 = vadd.f32 0.0, %v1121
  %1123 = vmatprep.mubr.bf16.mxu0 %v324
  %1124 = vmatmul.mubr.bf16.gmra.mrb[0].mxu0 %v323
  %v1125 = vpop.f32.mrb[0].mxu0
  %v1126 = vadd.f32 0.0, %v1125
  %v1127 = vpop.f32.mrb[0].mxu0
  %v1128 = vadd.f32 0.0, %v1127
  %v1129 = vpop.f32.mrb[0].mxu0
  %v1130 = vadd.f32 0.0, %v1129
  %v1131 = vpop.f32.mrb[0].mxu0
  %v1132 = vadd.f32 0.0, %v1131
  %1133 = vdwg.mxu0
  %1134 = vmatprep.subr.bf16.mxu0 %v786
  %1135 = vmatpush1.bf16.msra.mxu0 %v785
  %1136 = vmatprep.subr.bf16.mxu0 %v790
  %1137 = vmatpush1.bf16.msra.mxu0 %v789
  %1138 = vmatprep.subr.bf16.mxu0 %v794
  %1139 = vmatpush1.bf16.msra.mxu0 %v793
  %1140 = vmatprep.subr.bf16.mxu0 %v798
  %1141 = vmatpush1.bf16.msra.mxu0 %v797
  %1142 = vmatprep.subr.bf16.mxu0 %v802
  %1143 = vmatpush1.bf16.msra.mxu0 %v801
  %1144 = vmatprep.subr.bf16.mxu0 %v806
  %1145 = vmatpush1.bf16.msra.mxu0 %v805
  %1146 = vmatprep.subr.bf16.mxu0 %v810
  %1147 = vmatpush1.bf16.msra.mxu0 %v809
  %1148 = vmatprep.subr.bf16.mxu0 %v814
  %1149 = vmatpush1.bf16.msra.mxu0 %v813
  %1150 = vmatprep.subr.bf16.mxu0 %v818
  %1151 = vmatpush1.bf16.msra.mxu0 %v817
  %1152 = vmatprep.subr.bf16.mxu0 %v822
  %1153 = vmatpush1.bf16.msra.mxu0 %v821
  %1154 = vmatprep.subr.bf16.mxu0 %v826
  %1155 = vmatpush1.bf16.msra.mxu0 %v825
  %1156 = vmatprep.subr.bf16.mxu0 %v830
  %1157 = vmatpush1.bf16.msra.mxu0 %v829
  %1158 = vmatprep.subr.bf16.mxu0 %v834
  %1159 = vmatpush1.bf16.msra.mxu0 %v833
  %1160 = vmatprep.subr.bf16.mxu0 %v838
  %1161 = vmatpush1.bf16.msra.mxu0 %v837
  %1162 = vmatprep.subr.bf16.mxu0 %v842
  %1163 = vmatpush1.bf16.msra.mxu0 %v841
  %1164 = vmatprep.subr.bf16.mxu0 %v846
  %1165 = vmatpush1.bf16.msra.mxu0 %v845
  %1166 = vmatprep.mubr.bf16.mxu0 %v322
  %1167 = vmatmul.mubr.bf16.gmra.mrb[0].mxu0 %v321
  %v1168 = vpop.f32.mrb[0].mxu0
  %v1169 = vadd.f32 %v1116, %v1168
  %v1170 = vpop.f32.mrb[0].mxu0
  %v1171 = vadd.f32 %v1118, %v1170
  %v1172 = vpop.f32.mrb[0].mxu0
  %v1173 = vadd.f32 %v1120, %v1172
  %v1174 = vpop.f32.mrb[0].mxu0
  %v1175 = vadd.f32 %v1122, %v1174
  %1176 = vmatprep.mubr.bf16.mxu0 %v326
  %1177 = vmatmul.mubr.bf16.gmra.mrb[0].mxu0 %v325
  %v1178 = vpop.f32.mrb[0].mxu0
  %v1179 = vadd.f32 %v1126, %v1178
  %v1180 = vpop.f32.mrb[0].mxu0
  %v1181 = vadd.f32 %v1128, %v1180
  %v1182 = vpop.f32.mrb[0].mxu0
  %v1183 = vadd.f32 %v1130, %v1182
  %v1184 = vpop.f32.mrb[0].mxu0
  %v1185 = vadd.f32 %v1132, %v1184
  %1186 = vdwg.mxu0
  %v1195 = vunpack.c.l.b16 %v23
  %v1196 = vunpack.c.h.b16 %v23
  %v1197 = vunpack.c.l.b16 %v24
  %v1198 = vunpack.c.h.b16 %v24
  %v1199 = vunpack.c.l.b16 %v25
  %v1200 = vunpack.c.h.b16 %v25
  %v1201 = vunpack.c.l.b16 %v26
  %v1202 = vunpack.c.h.b16 %v26
  %v1203 = vunpack.c.l.b16 %v27
  %v1204 = vunpack.c.h.b16 %v27
  %v1205 = vunpack.c.l.b16 %v28
  %v1206 = vunpack.c.h.b16 %v28
  %v1207 = vunpack.c.l.b16 %v29
  %v1208 = vunpack.c.h.b16 %v29
  %v1209 = vunpack.c.l.b16 %v30
  %v1210 = vunpack.c.h.b16 %v30
  %v1211 = vpack.c.b16 %v1199, %v1195
  %v1212 = vpack.c.b16 %v1200, %v1196
  %v1213 = vpack.c.b16 %v1201, %v1197
  %v1214 = vpack.c.b16 %v1202, %v1198
  %v1215 = vpack.c.b16 %v1207, %v1203
  %v1216 = vpack.c.b16 %v1208, %v1204
  %v1217 = vpack.c.b16 %v1209, %v1205
  %v1218 = vpack.c.b16 %v1210, %v1206
  %v1355 = vunpack.c.l.b16 %v31
  %v1356 = vunpack.c.h.b16 %v31
  %v1357 = vunpack.c.l.b16 %v32
  %v1358 = vunpack.c.h.b16 %v32
  %v1359 = vunpack.c.l.b16 %v33
  %v1360 = vunpack.c.h.b16 %v33
  %v1361 = vunpack.c.l.b16 %v34
  %v1362 = vunpack.c.h.b16 %v34
  %v1363 = vunpack.c.l.b16 %v35
  %v1364 = vunpack.c.h.b16 %v35
  %v1365 = vunpack.c.l.b16 %v36
  %v1366 = vunpack.c.h.b16 %v36
  %v1367 = vunpack.c.l.b16 %v37
  %v1368 = vunpack.c.h.b16 %v37
  %v1369 = vunpack.c.l.b16 %v38
  %v1370 = vunpack.c.h.b16 %v38
  %v1371 = vunpack.c.l.b16 %v39
  %v1372 = vunpack.c.h.b16 %v39
  %v1373 = vunpack.c.l.b16 %v40
  %v1374 = vunpack.c.h.b16 %v40
  %v1375 = vunpack.c.l.b16 %v41
  %v1376 = vunpack.c.h.b16 %v41
  %v1377 = vunpack.c.l.b16 %v42
  %v1378 = vunpack.c.h.b16 %v42
  %v1379 = vunpack.c.l.b16 %v43
  %v1380 = vunpack.c.h.b16 %v43
  %v1381 = vunpack.c.l.b16 %v44
  %v1382 = vunpack.c.h.b16 %v44
  %v1383 = vunpack.c.l.b16 %v45
  %v1384 = vunpack.c.h.b16 %v45
  %v1385 = vunpack.c.l.b16 %v46
  %v1386 = vunpack.c.h.b16 %v46
  %v1387 = vunpack.c.l.b16 %v47
  %v1388 = vunpack.c.h.b16 %v47
  %v1389 = vunpack.c.l.b16 %v48
  %v1390 = vunpack.c.h.b16 %v48
  %v1391 = vunpack.c.l.b16 %v49
  %v1392 = vunpack.c.h.b16 %v49
  %v1393 = vunpack.c.l.b16 %v50
  %v1394 = vunpack.c.h.b16 %v50
  %v1395 = vunpack.c.l.b16 %v51
  %v1396 = vunpack.c.h.b16 %v51
  %v1397 = vunpack.c.l.b16 %v52
  %v1398 = vunpack.c.h.b16 %v52
  %v1399 = vunpack.c.l.b16 %v53
  %v1400 = vunpack.c.h.b16 %v53
  %v1401 = vunpack.c.l.b16 %v54
  %v1402 = vunpack.c.h.b16 %v54
  %v1403 = vunpack.c.l.b16 %v55
  %v1404 = vunpack.c.h.b16 %v55
  %v1405 = vunpack.c.l.b16 %v56
  %v1406 = vunpack.c.h.b16 %v56
  %v1407 = vunpack.c.l.b16 %v57
  %v1408 = vunpack.c.h.b16 %v57
  %v1409 = vunpack.c.l.b16 %v58
  %v1410 = vunpack.c.h.b16 %v58
  %v1411 = vunpack.c.l.b16 %v59
  %v1412 = vunpack.c.h.b16 %v59
  %v1413 = vunpack.c.l.b16 %v60
  %v1414 = vunpack.c.h.b16 %v60
  %v1415 = vunpack.c.l.b16 %v61
  %v1416 = vunpack.c.h.b16 %v61
  %v1417 = vunpack.c.l.b16 %v62
  %v1418 = vunpack.c.h.b16 %v62
  %v1419 = vunpack.c.l.b16 %v63
  %v1420 = vunpack.c.h.b16 %v63
  %v1421 = vunpack.c.l.b16 %v64
  %v1422 = vunpack.c.h.b16 %v64
  %v1423 = vunpack.c.l.b16 %v65
  %v1424 = vunpack.c.h.b16 %v65
  %v1425 = vunpack.c.l.b16 %v66
  %v1426 = vunpack.c.h.b16 %v66
  %v1427 = vunpack.c.l.b16 %v67
  %v1428 = vunpack.c.h.b16 %v67
  %v1429 = vunpack.c.l.b16 %v68
  %v1430 = vunpack.c.h.b16 %v68
  %v1431 = vunpack.c.l.b16 %v69
  %v1432 = vunpack.c.h.b16 %v69
  %v1433 = vunpack.c.l.b16 %v70
  %v1434 = vunpack.c.h.b16 %v70
  %v1435 = vunpack.c.l.b16 %v71
  %v1436 = vunpack.c.h.b16 %v71
  %v1437 = vunpack.c.l.b16 %v72
  %v1438 = vunpack.c.h.b16 %v72
  %v1439 = vunpack.c.l.b16 %v73
  %v1440 = vunpack.c.h.b16 %v73
  %v1441 = vunpack.c.l.b16 %v74
  %v1442 = vunpack.c.h.b16 %v74
  %v1443 = vunpack.c.l.b16 %v75
  %v1444 = vunpack.c.h.b16 %v75
  %v1445 = vunpack.c.l.b16 %v76
  %v1446 = vunpack.c.h.b16 %v76
  %v1447 = vunpack.c.l.b16 %v77
  %v1448 = vunpack.c.h.b16 %v77
  %v1449 = vunpack.c.l.b16 %v78
  %v1450 = vunpack.c.h.b16 %v78
  %v1451 = vunpack.c.l.b16 %v79
  %v1452 = vunpack.c.h.b16 %v79
  %v1453 = vunpack.c.l.b16 %v80
  %v1454 = vunpack.c.h.b16 %v80
  %v1455 = vunpack.c.l.b16 %v81
  %v1456 = vunpack.c.h.b16 %v81
  %v1457 = vunpack.c.l.b16 %v82
  %v1458 = vunpack.c.h.b16 %v82
  %v1459 = vunpack.c.l.b16 %v83
  %v1460 = vunpack.c.h.b16 %v83
  %v1461 = vunpack.c.l.b16 %v84
  %v1462 = vunpack.c.h.b16 %v84
  %v1463 = vunpack.c.l.b16 %v85
  %v1464 = vunpack.c.h.b16 %v85
  %v1465 = vunpack.c.l.b16 %v86
  %v1466 = vunpack.c.h.b16 %v86
  %v1467 = vunpack.c.l.b16 %v87
  %v1468 = vunpack.c.h.b16 %v87
  %v1469 = vunpack.c.l.b16 %v88
  %v1470 = vunpack.c.h.b16 %v88
  %v1471 = vunpack.c.l.b16 %v89
  %v1472 = vunpack.c.h.b16 %v89
  %v1473 = vunpack.c.l.b16 %v90
  %v1474 = vunpack.c.h.b16 %v90
  %v1475 = vunpack.c.l.b16 %v91
  %v1476 = vunpack.c.h.b16 %v91
  %v1477 = vunpack.c.l.b16 %v92
  %v1478 = vunpack.c.h.b16 %v92
  %v1479 = vunpack.c.l.b16 %v93
  %v1480 = vunpack.c.h.b16 %v93
  %v1481 = vunpack.c.l.b16 %v94
  %v1482 = vunpack.c.h.b16 %v94
  %v1483 = vunpack.c.l.b16 %v95
  %v1484 = vunpack.c.h.b16 %v95
  %v1485 = vunpack.c.l.b16 %v96
  %v1486 = vunpack.c.h.b16 %v96
  %v1487 = vunpack.c.l.b16 %v97
  %v1488 = vunpack.c.h.b16 %v97
  %v1489 = vunpack.c.l.b16 %v98
  %v1490 = vunpack.c.h.b16 %v98
  %v1491 = vunpack.c.l.b16 %v99
  %v1492 = vunpack.c.h.b16 %v99
  %v1493 = vunpack.c.l.b16 %v100
  %v1494 = vunpack.c.h.b16 %v100
  %v1495 = vunpack.c.l.b16 %v101
  %v1496 = vunpack.c.h.b16 %v101
  %v1497 = vunpack.c.l.b16 %v102
  %v1498 = vunpack.c.h.b16 %v102
  %v1499 = vunpack.c.l.b16 %v103
  %v1500 = vunpack.c.h.b16 %v103
  %v1501 = vunpack.c.l.b16 %v104
  %v1502 = vunpack.c.h.b16 %v104
  %v1503 = vunpack.c.l.b16 %v105
  %v1504 = vunpack.c.h.b16 %v105
  %v1505 = vunpack.c.l.b16 %v106
  %v1506 = vunpack.c.h.b16 %v106
  %v1507 = vunpack.c.l.b16 %v107
  %v1508 = vunpack.c.h.b16 %v107
  %v1509 = vunpack.c.l.b16 %v108
  %v1510 = vunpack.c.h.b16 %v108
  %v1511 = vunpack.c.l.b16 %v109
  %v1512 = vunpack.c.h.b16 %v109
  %v1513 = vunpack.c.l.b16 %v110
  %v1514 = vunpack.c.h.b16 %v110
  %v1515 = vunpack.c.l.b16 %v111
  %v1516 = vunpack.c.h.b16 %v111
  %v1517 = vunpack.c.l.b16 %v112
  %v1518 = vunpack.c.h.b16 %v112
  %v1519 = vunpack.c.l.b16 %v113
  %v1520 = vunpack.c.h.b16 %v113
  %v1521 = vunpack.c.l.b16 %v114
  %v1522 = vunpack.c.h.b16 %v114
  %v1523 = vunpack.c.l.b16 %v115
  %v1524 = vunpack.c.h.b16 %v115
  %v1525 = vunpack.c.l.b16 %v116
  %v1526 = vunpack.c.h.b16 %v116
  %v1527 = vunpack.c.l.b16 %v117
  %v1528 = vunpack.c.h.b16 %v117
  %v1529 = vunpack.c.l.b16 %v118
  %v1530 = vunpack.c.h.b16 %v118
  %v1531 = vunpack.c.l.b16 %v119
  %v1532 = vunpack.c.h.b16 %v119
  %v1533 = vunpack.c.l.b16 %v120
  %v1534 = vunpack.c.h.b16 %v120
  %v1535 = vunpack.c.l.b16 %v121
  %v1536 = vunpack.c.h.b16 %v121
  %v1537 = vunpack.c.l.b16 %v122
  %v1538 = vunpack.c.h.b16 %v122
  %v1539 = vunpack.c.l.b16 %v123
  %v1540 = vunpack.c.h.b16 %v123
  %v1541 = vunpack.c.l.b16 %v124
  %v1542 = vunpack.c.h.b16 %v124
  %v1543 = vunpack.c.l.b16 %v125
  %v1544 = vunpack.c.h.b16 %v125
  %v1545 = vunpack.c.l.b16 %v126
  %v1546 = vunpack.c.h.b16 %v126
  %v1547 = vunpack.c.l.b16 %v127
  %v1548 = vunpack.c.h.b16 %v127
  %v1549 = vunpack.c.l.b16 %v128
  %v1550 = vunpack.c.h.b16 %v128
  %v1551 = vunpack.c.l.b16 %v129
  %v1552 = vunpack.c.h.b16 %v129
  %v1553 = vunpack.c.l.b16 %v130
  %v1554 = vunpack.c.h.b16 %v130
  %v1555 = vunpack.c.l.b16 %v131
  %v1556 = vunpack.c.h.b16 %v131
  %v1557 = vunpack.c.l.b16 %v132
  %v1558 = vunpack.c.h.b16 %v132
  %v1559 = vunpack.c.l.b16 %v133
  %v1560 = vunpack.c.h.b16 %v133
  %v1561 = vunpack.c.l.b16 %v134
  %v1562 = vunpack.c.h.b16 %v134
  %v1563 = vunpack.c.l.b16 %v135
  %v1564 = vunpack.c.h.b16 %v135
  %v1565 = vunpack.c.l.b16 %v136
  %v1566 = vunpack.c.h.b16 %v136
  %v1567 = vunpack.c.l.b16 %v137
  %v1568 = vunpack.c.h.b16 %v137
  %v1569 = vunpack.c.l.b16 %v138
  %v1570 = vunpack.c.h.b16 %v138
  %v1571 = vunpack.c.l.b16 %v139
  %v1572 = vunpack.c.h.b16 %v139
  %v1573 = vunpack.c.l.b16 %v140
  %v1574 = vunpack.c.h.b16 %v140
  %v1575 = vunpack.c.l.b16 %v141
  %v1576 = vunpack.c.h.b16 %v141
  %v1577 = vunpack.c.l.b16 %v142
  %v1578 = vunpack.c.h.b16 %v142
  %v1579 = vunpack.c.l.b16 %v143
  %v1580 = vunpack.c.h.b16 %v143
  %v1581 = vunpack.c.l.b16 %v144
  %v1582 = vunpack.c.h.b16 %v144
  %v1583 = vunpack.c.l.b16 %v145
  %v1584 = vunpack.c.h.b16 %v145
  %v1585 = vunpack.c.l.b16 %v146
  %v1586 = vunpack.c.h.b16 %v146
  %v1587 = vunpack.c.l.b16 %v147
  %v1588 = vunpack.c.h.b16 %v147
  %v1589 = vunpack.c.l.b16 %v148
  %v1590 = vunpack.c.h.b16 %v148
  %v1591 = vunpack.c.l.b16 %v149
  %v1592 = vunpack.c.h.b16 %v149
  %v1593 = vunpack.c.l.b16 %v150
  %v1594 = vunpack.c.h.b16 %v150
  %v1595 = vunpack.c.l.b16 %v151
  %v1596 = vunpack.c.h.b16 %v151
  %v1597 = vunpack.c.l.b16 %v152
  %v1598 = vunpack.c.h.b16 %v152
  %v1599 = vunpack.c.l.b16 %v153
  %v1600 = vunpack.c.h.b16 %v153
  %v1601 = vunpack.c.l.b16 %v154
  %v1602 = vunpack.c.h.b16 %v154
  %v1603 = vunpack.c.l.b16 %v155
  %v1604 = vunpack.c.h.b16 %v155
  %v1605 = vunpack.c.l.b16 %v156
  %v1606 = vunpack.c.h.b16 %v156
  %v1607 = vunpack.c.l.b16 %v157
  %v1608 = vunpack.c.h.b16 %v157
  %v1609 = vunpack.c.l.b16 %v158
  %v1610 = vunpack.c.h.b16 %v158
  %v1611 = vpack.c.b16 %v1359, %v1355
  %v1612 = vpack.c.b16 %v1360, %v1356
  %v1613 = vpack.c.b16 %v1361, %v1357
  %v1614 = vpack.c.b16 %v1362, %v1358
  %v1615 = vpack.c.b16 %v1367, %v1363
  %v1616 = vpack.c.b16 %v1368, %v1364
  %v1617 = vpack.c.b16 %v1369, %v1365
  %v1618 = vpack.c.b16 %v1370, %v1366
  %v1619 = vpack.c.b16 %v1375, %v1371
  %v1620 = vpack.c.b16 %v1376, %v1372
  %v1621 = vpack.c.b16 %v1377, %v1373
  %v1622 = vpack.c.b16 %v1378, %v1374
  %v1623 = vpack.c.b16 %v1383, %v1379
  %v1624 = vpack.c.b16 %v1384, %v1380
  %v1625 = vpack.c.b16 %v1385, %v1381
  %v1626 = vpack.c.b16 %v1386, %v1382
  %v1627 = vpack.c.b16 %v1391, %v1387
  %v1628 = vpack.c.b16 %v1392, %v1388
  %v1629 = vpack.c.b16 %v1393, %v1389
  %v1630 = vpack.c.b16 %v1394, %v1390
  %v1631 = vpack.c.b16 %v1399, %v1395
  %v1632 = vpack.c.b16 %v1400, %v1396
  %v1633 = vpack.c.b16 %v1401, %v1397
  %v1634 = vpack.c.b16 %v1402, %v1398
  %v1635 = vpack.c.b16 %v1407, %v1403
  %v1636 = vpack.c.b16 %v1408, %v1404
  %v1637 = vpack.c.b16 %v1409, %v1405
  %v1638 = vpack.c.b16 %v1410, %v1406
  %v1639 = vpack.c.b16 %v1415, %v1411
  %v1640 = vpack.c.b16 %v1416, %v1412
  %v1641 = vpack.c.b16 %v1417, %v1413
  %v1642 = vpack.c.b16 %v1418, %v1414
  %v1643 = vpack.c.b16 %v1423, %v1419
  %v1644 = vpack.c.b16 %v1424, %v1420
  %v1645 = vpack.c.b16 %v1425, %v1421
  %v1646 = vpack.c.b16 %v1426, %v1422
  %v1647 = vpack.c.b16 %v1431, %v1427
  %v1648 = vpack.c.b16 %v1432, %v1428
  %v1649 = vpack.c.b16 %v1433, %v1429
  %v1650 = vpack.c.b16 %v1434, %v1430
  %v1651 = vpack.c.b16 %v1439, %v1435
  %v1652 = vpack.c.b16 %v1440, %v1436
  %v1653 = vpack.c.b16 %v1441, %v1437
  %v1654 = vpack.c.b16 %v1442, %v1438
  %v1655 = vpack.c.b16 %v1447, %v1443
  %v1656 = vpack.c.b16 %v1448, %v1444
  %v1657 = vpack.c.b16 %v1449, %v1445
  %v1658 = vpack.c.b16 %v1450, %v1446
  %v1659 = vpack.c.b16 %v1455, %v1451
  %v1660 = vpack.c.b16 %v1456, %v1452
  %v1661 = vpack.c.b16 %v1457, %v1453
  %v1662 = vpack.c.b16 %v1458, %v1454
  %v1663 = vpack.c.b16 %v1463, %v1459
  %v1664 = vpack.c.b16 %v1464, %v1460
  %v1665 = vpack.c.b16 %v1465, %v1461
  %v1666 = vpack.c.b16 %v1466, %v1462
  %v1667 = vpack.c.b16 %v1471, %v1467
  %v1668 = vpack.c.b16 %v1472, %v1468
  %v1669 = vpack.c.b16 %v1473, %v1469
  %v1670 = vpack.c.b16 %v1474, %v1470
  %v1671 = vpack.c.b16 %v1479, %v1475
  %v1672 = vpack.c.b16 %v1480, %v1476
  %v1673 = vpack.c.b16 %v1481, %v1477
  %v1674 = vpack.c.b16 %v1482, %v1478
  %v1675 = vpack.c.b16 %v1487, %v1483
  %v1676 = vpack.c.b16 %v1488, %v1484
  %v1677 = vpack.c.b16 %v1489, %v1485
  %v1678 = vpack.c.b16 %v1490, %v1486
  %v1679 = vpack.c.b16 %v1495, %v1491
  %v1680 = vpack.c.b16 %v1496, %v1492
  %v1681 = vpack.c.b16 %v1497, %v1493
  %v1682 = vpack.c.b16 %v1498, %v1494
  %v1683 = vpack.c.b16 %v1503, %v1499
  %v1684 = vpack.c.b16 %v1504, %v1500
  %v1685 = vpack.c.b16 %v1505, %v1501
  %v1686 = vpack.c.b16 %v1506, %v1502
  %v1687 = vpack.c.b16 %v1511, %v1507
  %v1688 = vpack.c.b16 %v1512, %v1508
  %v1689 = vpack.c.b16 %v1513, %v1509
  %v1690 = vpack.c.b16 %v1514, %v1510
  %v1691 = vpack.c.b16 %v1519, %v1515
  %v1692 = vpack.c.b16 %v1520, %v1516
  %v1693 = vpack.c.b16 %v1521, %v1517
  %v1694 = vpack.c.b16 %v1522, %v1518
  %v1695 = vpack.c.b16 %v1527, %v1523
  %v1696 = vpack.c.b16 %v1528, %v1524
  %v1697 = vpack.c.b16 %v1529, %v1525
  %v1698 = vpack.c.b16 %v1530, %v1526
  %v1699 = vpack.c.b16 %v1535, %v1531
  %v1700 = vpack.c.b16 %v1536, %v1532
  %v1701 = vpack.c.b16 %v1537, %v1533
  %v1702 = vpack.c.b16 %v1538, %v1534
  %v1703 = vpack.c.b16 %v1543, %v1539
  %v1704 = vpack.c.b16 %v1544, %v1540
  %v1705 = vpack.c.b16 %v1545, %v1541
  %v1706 = vpack.c.b16 %v1546, %v1542
  %v1707 = vpack.c.b16 %v1551, %v1547
  %v1708 = vpack.c.b16 %v1552, %v1548
  %v1709 = vpack.c.b16 %v1553, %v1549
  %v1710 = vpack.c.b16 %v1554, %v1550
  %v1711 = vpack.c.b16 %v1559, %v1555
  %v1712 = vpack.c.b16 %v1560, %v1556
  %v1713 = vpack.c.b16 %v1561, %v1557
  %v1714 = vpack.c.b16 %v1562, %v1558
  %v1715 = vpack.c.b16 %v1567, %v1563
  %v1716 = vpack.c.b16 %v1568, %v1564
  %v1717 = vpack.c.b16 %v1569, %v1565
  %v1718 = vpack.c.b16 %v1570, %v1566
  %v1719 = vpack.c.b16 %v1575, %v1571
  %v1720 = vpack.c.b16 %v1576, %v1572
  %v1721 = vpack.c.b16 %v1577, %v1573
  %v1722 = vpack.c.b16 %v1578, %v1574
  %v1723 = vpack.c.b16 %v1583, %v1579
  %v1724 = vpack.c.b16 %v1584, %v1580
  %v1725 = vpack.c.b16 %v1585, %v1581
  %v1726 = vpack.c.b16 %v1586, %v1582
  %v1727 = vpack.c.b16 %v1591, %v1587
  %v1728 = vpack.c.b16 %v1592, %v1588
  %v1729 = vpack.c.b16 %v1593, %v1589
  %v1730 = vpack.c.b16 %v1594, %v1590
  %v1731 = vpack.c.b16 %v1599, %v1595
  %v1732 = vpack.c.b16 %v1600, %v1596
  %v1733 = vpack.c.b16 %v1601, %v1597
  %v1734 = vpack.c.b16 %v1602, %v1598
  %v1735 = vpack.c.b16 %v1607, %v1603
  %v1736 = vpack.c.b16 %v1608, %v1604
  %v1737 = vpack.c.b16 %v1609, %v1605
  %v1738 = vpack.c.b16 %v1610, %v1606
  %1867 = vmatprep.subr.bf16.mxu0 %v1612
  %1868 = vmatpush1.bf16.msra.mxu0 %v1611
  %1869 = vmatprep.subr.bf16.mxu0 %v1616
  %1870 = vmatpush1.bf16.msra.mxu0 %v1615
  %1871 = vmatprep.subr.bf16.mxu0 %v1620
  %1872 = vmatpush1.bf16.msra.mxu0 %v1619
  %1873 = vmatprep.subr.bf16.mxu0 %v1624
  %1874 = vmatpush1.bf16.msra.mxu0 %v1623
  %1875 = vmatprep.subr.bf16.mxu0 %v1628
  %1876 = vmatpush1.bf16.msra.mxu0 %v1627
  %1877 = vmatprep.subr.bf16.mxu0 %v1632
  %1878 = vmatpush1.bf16.msra.mxu0 %v1631
  %1879 = vmatprep.subr.bf16.mxu0 %v1636
  %1880 = vmatpush1.bf16.msra.mxu0 %v1635
  %1881 = vmatprep.subr.bf16.mxu0 %v1640
  %1882 = vmatpush1.bf16.msra.mxu0 %v1639
  %1883 = vmatprep.subr.bf16.mxu0 %v1644
  %1884 = vmatpush1.bf16.msra.mxu0 %v1643
  %1885 = vmatprep.subr.bf16.mxu0 %v1648
  %1886 = vmatpush1.bf16.msra.mxu0 %v1647
  %1887 = vmatprep.subr.bf16.mxu0 %v1652
  %1888 = vmatpush1.bf16.msra.mxu0 %v1651
  %1889 = vmatprep.subr.bf16.mxu0 %v1656
  %1890 = vmatpush1.bf16.msra.mxu0 %v1655
  %1891 = vmatprep.subr.bf16.mxu0 %v1660
  %1892 = vmatpush1.bf16.msra.mxu0 %v1659
  %1893 = vmatprep.subr.bf16.mxu0 %v1664
  %1894 = vmatpush1.bf16.msra.mxu0 %v1663
  %1895 = vmatprep.subr.bf16.mxu0 %v1668
  %1896 = vmatpush1.bf16.msra.mxu0 %v1667
  %1897 = vmatprep.subr.bf16.mxu0 %v1672
  %1898 = vmatpush1.bf16.msra.mxu0 %v1671
  %1899 = vmatprep.mubr.bf16.mxu0 %v1212
  %1900 = vmatmul.mubr.bf16.gmra.mrb[0].mxu0 %v1211
  %v1901 = vpop.f32.mrb[0].mxu0
  %v1902 = vadd.f32 %v1063, %v1901
  %v1903 = vpop.f32.mrb[0].mxu0
  %v1904 = vadd.f32 %v1065, %v1903
  %v1905 = vpop.f32.mrb[0].mxu0
  %v1906 = vadd.f32 %v1067, %v1905
  %v1907 = vpop.f32.mrb[0].mxu0
  %v1908 = vadd.f32 %v1069, %v1907
  %1909 = vmatprep.mubr.bf16.mxu0 %v1216
  %1910 = vmatmul.mubr.bf16.gmra.mrb[0].mxu0 %v1215
  %v1911 = vpop.f32.mrb[0].mxu0
  %v1912 = vadd.f32 %v1073, %v1911
  %v1913 = vpop.f32.mrb[0].mxu0
  %v1914 = vadd.f32 %v1075, %v1913
  %v1915 = vpop.f32.mrb[0].mxu0
  %v1916 = vadd.f32 %v1077, %v1915
  %v1917 = vpop.f32.mrb[0].mxu0
  %v1918 = vadd.f32 %v1079, %v1917
  %1919 = vdwg.mxu0
  %1920 = vmatprep.subr.bf16.mxu0 %v1676
  %1921 = vmatpush1.bf16.msra.mxu0 %v1675
  %1922 = vmatprep.subr.bf16.mxu0 %v1680
  %1923 = vmatpush1.bf16.msra.mxu0 %v1679
  %1924 = vmatprep.subr.bf16.mxu0 %v1684
  %1925 = vmatpush1.bf16.msra.mxu0 %v1683
  %1926 = vmatprep.subr.bf16.mxu0 %v1688
  %1927 = vmatpush1.bf16.msra.mxu0 %v1687
  %1928 = vmatprep.subr.bf16.mxu0 %v1692
  %1929 = vmatpush1.bf16.msra.mxu0 %v1691
  %1930 = vmatprep.subr.bf16.mxu0 %v1696
  %1931 = vmatpush1.bf16.msra.mxu0 %v1695
  %1932 = vmatprep.subr.bf16.mxu0 %v1700
  %1933 = vmatpush1.bf16.msra.mxu0 %v1699
  %1934 = vmatprep.subr.bf16.mxu0 %v1704
  %1935 = vmatpush1.bf16.msra.mxu0 %v1703
  %1936 = vmatprep.subr.bf16.mxu0 %v1708
  %1937 = vmatpush1.bf16.msra.mxu0 %v1707
  %1938 = vmatprep.subr.bf16.mxu0 %v1712
  %1939 = vmatpush1.bf16.msra.mxu0 %v1711
  %1940 = vmatprep.subr.bf16.mxu0 %v1716
  %1941 = vmatpush1.bf16.msra.mxu0 %v1715
  %1942 = vmatprep.subr.bf16.mxu0 %v1720
  %1943 = vmatpush1.bf16.msra.mxu0 %v1719
  %1944 = vmatprep.subr.bf16.mxu0 %v1724
  %1945 = vmatpush1.bf16.msra.mxu0 %v1723
  %1946 = vmatprep.subr.bf16.mxu0 %v1728
  %1947 = vmatpush1.bf16.msra.mxu0 %v1727
  %1948 = vmatprep.subr.bf16.mxu0 %v1732
  %1949 = vmatpush1.bf16.msra.mxu0 %v1731
  %1950 = vmatprep.subr.bf16.mxu0 %v1736
  %1951 = vmatpush1.bf16.msra.mxu0 %v1735
  %1952 = vmatprep.mubr.bf16.mxu0 %v1214
  %1953 = vmatmul.mubr.bf16.gmra.mrb[0].mxu0 %v1213
  %v1954 = vpop.f32.mrb[0].mxu0
  %v1955 = vadd.f32 %v1902, %v1954
  %v1956 = vpop.f32.mrb[0].mxu0
  %v1957 = vadd.f32 %v1904, %v1956
  %v1958 = vpop.f32.mrb[0].mxu0
  %v1959 = vadd.f32 %v1906, %v1958
  %v1960 = vpop.f32.mrb[0].mxu0
  %v1961 = vadd.f32 %v1908, %v1960
  %1962 = vmatprep.mubr.bf16.mxu0 %v1218
  %1963 = vmatmul.mubr.bf16.gmra.mrb[0].mxu0 %v1217
  %v1964 = vpop.f32.mrb[0].mxu0
  %v1965 = vadd.f32 %v1912, %v1964
  %v1966 = vpop.f32.mrb[0].mxu0
  %v1967 = vadd.f32 %v1914, %v1966
  %v1968 = vpop.f32.mrb[0].mxu0
  %v1969 = vadd.f32 %v1916, %v1968
  %v1970 = vpop.f32.mrb[0].mxu0
  %v1971 = vadd.f32 %v1918, %v1970
  %1972 = vdwg.mxu0
  %1973 = vmatprep.subr.bf16.mxu0 %v1614
  %1974 = vmatpush1.bf16.msra.mxu0 %v1613
  %1975 = vmatprep.subr.bf16.mxu0 %v1618
  %1976 = vmatpush1.bf16.msra.mxu0 %v1617
  %1977 = vmatprep.subr.bf16.mxu0 %v1622
  %1978 = vmatpush1.bf16.msra.mxu0 %v1621
  %1979 = vmatprep.subr.bf16.mxu0 %v1626
  %1980 = vmatpush1.bf16.msra.mxu0 %v1625
  %1981 = vmatprep.subr.bf16.mxu0 %v1630
  %1982 = vmatpush1.bf16.msra.mxu0 %v1629
  %1983 = vmatprep.subr.bf16.mxu0 %v1634
  %1984 = vmatpush1.bf16.msra.mxu0 %v1633
  %1985 = vmatprep.subr.bf16.mxu0 %v1638
  %1986 = vmatpush1.bf16.msra.mxu0 %v1637
  %1987 = vmatprep.subr.bf16.mxu0 %v1642
  %1988 = vmatpush1.bf16.msra.mxu0 %v1641
  %1989 = vmatprep.subr.bf16.mxu0 %v1646
  %1990 = vmatpush1.bf16.msra.mxu0 %v1645
  %1991 = vmatprep.subr.bf16.mxu0 %v1650
  %1992 = vmatpush1.bf16.msra.mxu0 %v1649
  %1993 = vmatprep.subr.bf16.mxu0 %v1654
  %1994 = vmatpush1.bf16.msra.mxu0 %v1653
  %1995 = vmatprep.subr.bf16.mxu0 %v1658
  %1996 = vmatpush1.bf16.msra.mxu0 %v1657
  %1997 = vmatprep.subr.bf16.mxu0 %v1662
  %1998 = vmatpush1.bf16.msra.mxu0 %v1661
  %1999 = vmatprep.subr.bf16.mxu0 %v1666
  %2000 = vmatpush1.bf16.msra.mxu0 %v1665
  %2001 = vmatprep.subr.bf16.mxu0 %v1670
  %2002 = vmatpush1.bf16.msra.mxu0 %v1669
  %2003 = vmatprep.subr.bf16.mxu0 %v1674
  %2004 = vmatpush1.bf16.msra.mxu0 %v1673
  %2005 = vmatprep.mubr.bf16.mxu0 %v1212
  %2006 = vmatmul.mubr.bf16.gmra.mrb[0].mxu0 %v1211
  %v2007 = vpop.f32.mrb[0].mxu0
  %v2008 = vadd.f32 %v1169, %v2007
  %v2009 = vpop.f32.mrb[0].mxu0
  %v2010 = vadd.f32 %v1171, %v2009
  %v2011 = vpop.f32.mrb[0].mxu0
  %v2012 = vadd.f32 %v1173, %v2011
  %v2013 = vpop.f32.mrb[0].mxu0
  %v2014 = vadd.f32 %v1175, %v2013
  %2015 = vmatprep.mubr.bf16.mxu0 %v1216
  %2016 = vmatmul.mubr.bf16.gmra.mrb[0].mxu0 %v1215
  %v2017 = vpop.f32.mrb[0].mxu0
  %v2018 = vadd.f32 %v1179, %v2017
  %v2019 = vpop.f32.mrb[0].mxu0
  %v2020 = vadd.f32 %v1181, %v2019
  %v2021 = vpop.f32.mrb[0].mxu0
  %v2022 = vadd.f32 %v1183, %v2021
  %v2023 = vpop.f32.mrb[0].mxu0
  %v2024 = vadd.f32 %v1185, %v2023
  %2025 = vdwg.mxu0
  %2026 = vmatprep.subr.bf16.mxu0 %v1678
  %2027 = vmatpush1.bf16.msra.mxu0 %v1677
  %2028 = vmatprep.subr.bf16.mxu0 %v1682
  %2029 = vmatpush1.bf16.msra.mxu0 %v1681
  %2030 = vmatprep.subr.bf16.mxu0 %v1686
  %2031 = vmatpush1.bf16.msra.mxu0 %v1685
  %2032 = vmatprep.subr.bf16.mxu0 %v1690
  %2033 = vmatpush1.bf16.msra.mxu0 %v1689
  %2034 = vmatprep.subr.bf16.mxu0 %v1694
  %2035 = vmatpush1.bf16.msra.mxu0 %v1693
  %2036 = vmatprep.subr.bf16.mxu0 %v1698
  %2037 = vmatpush1.bf16.msra.mxu0 %v1697
  %2038 = vmatprep.subr.bf16.mxu0 %v1702
  %2039 = vmatpush1.bf16.msra.mxu0 %v1701
  %2040 = vmatprep.subr.bf16.mxu0 %v1706
  %2041 = vmatpush1.bf16.msra.mxu0 %v1705
  %2042 = vmatprep.subr.bf16.mxu0 %v1710
  %2043 = vmatpush1.bf16.msra.mxu0 %v1709
  %2044 = vmatprep.subr.bf16.mxu0 %v1714
  %2045 = vmatpush1.bf16.msra.mxu0 %v1713
  %2046 = vmatprep.subr.bf16.mxu0 %v1718
  %2047 = vmatpush1.bf16.msra.mxu0 %v1717
  %2048 = vmatprep.subr.bf16.mxu0 %v1722
  %2049 = vmatpush1.bf16.msra.mxu0 %v1721
  %2050 = vmatprep.subr.bf16.mxu0 %v1726
  %2051 = vmatpush1.bf16.msra.mxu0 %v1725
  %2052 = vmatprep.subr.bf16.mxu0 %v1730
  %2053 = vmatpush1.bf16.msra.mxu0 %v1729
  %2054 = vmatprep.subr.bf16.mxu0 %v1734
  %2055 = vmatpush1.bf16.msra.mxu0 %v1733
  %2056 = vmatprep.subr.bf16.mxu0 %v1738
  %2057 = vmatpush1.bf16.msra.mxu0 %v1737
  %2058 = vmatprep.mubr.bf16.mxu0 %v1214
  %2059 = vmatmul.mubr.bf16.gmra.mrb[0].mxu0 %v1213
  %v2060 = vpop.f32.mrb[0].mxu0
  %v2061 = vadd.f32 %v2008, %v2060
  %v2062 = vpop.f32.mrb[0].mxu0
  %v2063 = vadd.f32 %v2010, %v2062
  %v2064 = vpop.f32.mrb[0].mxu0
  %v2065 = vadd.f32 %v2012, %v2064
  %v2066 = vpop.f32.mrb[0].mxu0
  %v2067 = vadd.f32 %v2014, %v2066
  %2068 = vmatprep.mubr.bf16.mxu0 %v1218
  %2069 = vmatmul.mubr.bf16.gmra.mrb[0].mxu0 %v1217
  %v2070 = vpop.f32.mrb[0].mxu0
  %v2071 = vadd.f32 %v2018, %v2070
  %v2072 = vpop.f32.mrb[0].mxu0
  %v2073 = vadd.f32 %v2020, %v2072
  %v2074 = vpop.f32.mrb[0].mxu0
  %v2075 = vadd.f32 %v2022, %v2074
  %v2076 = vpop.f32.mrb[0].mxu0
  %v2077 = vadd.f32 %v2024, %v2076
  %2078 = vdwg.mxu0
  %v2079 = vld [vmem:[%s4] sm:$0xf]
  %v2081 = vlaneseq
  %v2082 = vshrl.u32 %v2081, 7
  %v2083 = vsub.s32 0, %v2082
  %v2084 = vrot.slane %v2079, %v2083
  %v2085 = vlaneseq
  %v2086 = vshrl.u32 %v2085, 7
  %v2087 = vsub.s32 1, %v2086
  %v2088 = vrot.slane %v2079, %v2087
  %v2089 = vlaneseq
  %v2090 = vshrl.u32 %v2089, 7
  %v2091 = vsub.s32 2, %v2090
  %v2092 = vrot.slane %v2079, %v2091
  %v2093 = vlaneseq
  %v2094 = vshrl.u32 %v2093, 7
  %v2095 = vsub.s32 3, %v2094
  %v2096 = vrot.slane %v2079, %v2095
  %v2101 = vadd.f32 %v1955, %v2084
  %v2102 = vadd.f32 %v1957, %v2088
  %v2103 = vadd.f32 %v2061, %v2092
  %v2104 = vadd.f32 %v2063, %v2096
  %v2105 = vadd.f32 %v1959, %v2084
  %v2106 = vadd.f32 %v1961, %v2088
  %v2107 = vadd.f32 %v2065, %v2092
  %v2108 = vadd.f32 %v2067, %v2096
  %v2109 = vadd.f32 %v1965, %v2084
  %v2110 = vadd.f32 %v1967, %v2088
  %v2111 = vadd.f32 %v2071, %v2092
  %v2112 = vadd.f32 %v2073, %v2096
  %v2113 = vadd.f32 %v1969, %v2084
  %v2114 = vadd.f32 %v1971, %v2088
  %v2115 = vadd.f32 %v2075, %v2092
  %v2116 = vadd.f32 %v2077, %v2096
  %v2117 = vld [vmem:[%s5] sm:$0xf]
  %v2119 = vlaneseq
  %v2120 = vshrl.u32 %v2119, 7
  %v2121 = vsub.s32 0, %v2120
  %v2122 = vrot.slane %v2117, %v2121
  %v2123 = vlaneseq
  %v2124 = vshrl.u32 %v2123, 7
  %v2125 = vsub.s32 1, %v2124
  %v2126 = vrot.slane %v2117, %v2125
  %v2127 = vlaneseq
  %v2128 = vshrl.u32 %v2127, 7
  %v2129 = vsub.s32 2, %v2128
  %v2130 = vrot.slane %v2117, %v2129
  %v2131 = vlaneseq
  %v2132 = vshrl.u32 %v2131, 7
  %v2133 = vsub.s32 3, %v2132
  %v2134 = vrot.slane %v2117, %v2133
  %v2139 = vmul.f32 %v2101, %v2122
  %v2140 = vmul.f32 %v2102, %v2126
  %v2141 = vmul.f32 %v2103, %v2130
  %v2142 = vmul.f32 %v2104, %v2134
  %v2143 = vmul.f32 %v2105, %v2122
  %v2144 = vmul.f32 %v2106, %v2126
  %v2145 = vmul.f32 %v2107, %v2130
  %v2146 = vmul.f32 %v2108, %v2134
  %v2147 = vmul.f32 %v2109, %v2122
  %v2148 = vmul.f32 %v2110, %v2126
  %v2149 = vmul.f32 %v2111, %v2130
  %v2150 = vmul.f32 %v2112, %v2134
  %v2151 = vmul.f32 %v2113, %v2122
  %v2152 = vmul.f32 %v2114, %v2126
  %v2153 = vmul.f32 %v2115, %v2130
  %v2154 = vmul.f32 %v2116, %v2134
  %v2155 = vadd.f32 %v2139, %v2140
  %v2156 = vadd.f32 %v2155, %v2141
  %v2157 = vadd.f32 %v2156, %v2142
  %2158 = vadd.xlane.f32.xlu0 %v2157
  %v2159 = vpop.xlane.xlu0 %2158
  %v2160 = vadd.f32 %v2143, %v2144
  %v2161 = vadd.f32 %v2160, %v2145
  %v2162 = vadd.f32 %v2161, %v2146
  %2163 = vadd.xlane.f32.xlu0 %v2162
  %v2164 = vpop.xlane.xlu0 %2163
  %v2165 = vadd.f32 %v2147, %v2148
  %v2166 = vadd.f32 %v2165, %v2149
  %v2167 = vadd.f32 %v2166, %v2150
  %2168 = vadd.xlane.f32.xlu0 %v2167
  %v2169 = vpop.xlane.xlu0 %2168
  %v2170 = vadd.f32 %v2151, %v2152
  %v2171 = vadd.f32 %v2170, %v2153
  %v2172 = vadd.f32 %v2171, %v2154
  %2173 = vadd.xlane.f32.xlu0 %v2172
  %v2174 = vpop.xlane.xlu0 %2173
  %vm2175 = vcmask 7168
  %2176 = vst.msk [vmem:[%s6] sm:$0xff] %vm2175, %v2159
  %2177 = vst.msk [vmem:[%s6 + $0x8] sm:$0xff] %vm2175, %v2164
  %2178 = vst.msk [vmem:[%s6 + $0x10] sm:$0xff] %vm2175, %v2169
  %2179 = vst.msk [vmem:[%s6 + $0x18] sm:$0xff] %vm2175, %v2174
  // Predicated region
  $region26: #{layout_graph_model_forward.17} parent=0 // pred_check
    _
  $region27: #{layout_graph_model_forward.17} parent=0 // pred_check_branch
    %2181 = sbr.rel (0) target = $region29
  $region28: #{layout_graph_model_forward.17} parent=0 // pred_region
    _
  $region29: #{layout_graph_model_forward.17} parent=0 // pred_fallthru
    _
  // Predicated region
  $region30: #{layout_graph_model_forward.17} parent=0 // pred_check
    _
  $region31: #{layout_graph_model_forward.17} parent=0 // pred_check_branch
    %2183 = sbr.rel (0) target = $region33
  $region32: #{layout_graph_model_forward.17} parent=0 // pred_region
    _
  $region33: #{layout_graph_model_forward.17} parent=0 // pred_fallthru
    _

</llo_original>
